<compile_context>
chip_gen: v7x
topology: tpu7x:2x2x1
jax: 0.10.0
libtpu: 0.0.40
codegen_flags: <defaults>
</compile_context>

<pallas_src>
import functools
import math

import jax
import jax.numpy as jnp
from jax import lax
from jax.experimental import pallas as pl
from jax.experimental.pallas import tpu as pltpu

LN_EPS = 1e-12


# ------------------------------- fused kernel -------------------------------


def _set_decoder_kernel(*refs, num_layers, num_heads, hidden, eps):
    (enc_ref, bias_ref, rep_a_ref, rep_b_ref,
     qe_ref, ln0_g_ref, ln0_b_ref,
     sa_qkv_w, sa_qkv_b, sa_o_w, sa_o_b, sa_ln_g, sa_ln_b,
     ca_q_w, ca_q_b, ca_kv_w, ca_kv_b, ca_o_w, ca_o_b, ca_ln_g, ca_ln_b,
     ff_in_w, ff_in_b, ff_out_w, ff_out_b, ff_ln_g, ff_ln_b,
     cls_w, cls_b, m1_w, m1_b, m2_w, m2_b, m3_w,
     hs_out, cls_out, logits_out) = refs

    f32 = jnp.float32
    H = hidden
    dh = H // num_heads
    scale = 1.0 / math.sqrt(dh)

    enc = enc_ref[0].astype(f32)            # [L, H]
    bias = bias_ref[0].astype(f32)          # [1, L] (2-D mask) or [Q, L] (3-D mask, Q == L)

    def layer_norm(x, g, b):
        mu = jnp.mean(x, axis=-1, keepdims=True)
        xc = x - mu
        var = jnp.mean(xc * xc, axis=-1, keepdims=True)
        return xc * lax.rsqrt(var + eps) * g + b

    def gelu(x):                             # exact (erf) GELU, like HF BERT
        return 0.5 * x * (1.0 + lax.erf(x * (1.0 / math.sqrt(2.0))))

    def attend_project(q_all, k_all, v_all, o_w_all, add_bias):
        """Multi-head softmax(QK^T/sqrt(dh)+bias)V with the head concat folded into
        the output projection: concat_h(ctx_h) @ Wo == sum_h ctx_h @ Wo[h*dh:(h+1)*dh]."""
        out = None
        for h in range(num_heads):
            sl = slice(h * dh, (h + 1) * dh)
            qh, kh, vh = q_all[:, sl], k_all[:, sl], v_all[:, sl]
            s = lax.dot_general(qh, kh, (((1,), (1,)), ((), ())),
                                preferred_element_type=f32) * scale     # [Sq, Sk]
            if add_bias is not None:
                s = s + add_bias
            s = s - jnp.max(s, axis=-1, keepdims=True)
            p = jnp.exp(s)
            p = p * pl.reciprocal(jnp.sum(p, axis=-1, keepdims=True), approx=True)
            ctx_h = jnp.dot(p, vh, preferred_element_type=f32)          # [Sq, dh]
            contrib = jnp.dot(ctx_h, o_w_all[sl, :], preferred_element_type=f32)  # [Sq, H]
            out = contrib if out is None else out + contrib
        return out

    # hidden_states = dropout(LayerNorm(query_embed))  (dropout = identity in eval)
    hs = layer_norm(qe_ref[...].astype(f32),
                    ln0_g_ref[...].astype(f32), ln0_b_ref[...].astype(f32))     # [Q, H]

    for l in range(num_layers):
        # ---- self attention (no mask) ----
        qkv = jnp.dot(hs, sa_qkv_w[l].astype(f32),
                      preferred_element_type=f32) + sa_qkv_b[l].astype(f32)     # [Q, 3H]
        so = attend_project(qkv[:, 0:H], qkv[:, H:2 * H], qkv[:, 2 * H:3 * H],
                            sa_o_w[l].astype(f32), None) + sa_o_b[l].astype(f32)
        attn_out = layer_norm(so + hs, sa_ln_g[l].astype(f32), sa_ln_b[l].astype(f32))

        # ---- cross attention over encoder states ----
        qc = jnp.dot(attn_out, ca_q_w[l].astype(f32),
                     preferred_element_type=f32) + ca_q_b[l].astype(f32)        # [Q, H]
        kv = jnp.dot(enc, ca_kv_w[l].astype(f32),
                     preferred_element_type=f32) + ca_kv_b[l].astype(f32)       # [L, 2H]
        co = attend_project(qc, kv[:, 0:H], kv[:, H:2 * H],
                            ca_o_w[l].astype(f32), bias) + ca_o_b[l].astype(f32)
        cross_out = layer_norm(co + attn_out, ca_ln_g[l].astype(f32), ca_ln_b[l].astype(f32))

        # ---- feed forward ----
        inter = gelu(jnp.dot(cross_out, ff_in_w[l].astype(f32),
                             preferred_element_type=f32) + ff_in_b[l].astype(f32))
        ffn = jnp.dot(inter, ff_out_w[l].astype(f32),
                      preferred_element_type=f32) + ff_out_b[l].astype(f32)
        hs = layer_norm(ffn + cross_out, ff_ln_g[l].astype(f32), ff_ln_b[l].astype(f32))

    hs_out[0] = hs.astype(hs_out.dtype)

    cls = jnp.dot(hs, cls_w[...].astype(f32),
                  preferred_element_type=f32) + cls_b[...].astype(f32)
    cls_out[0] = cls.astype(cls_out.dtype)

    # ---- bilinear metric head ----
    # logits[k, q*L+l] = sum_d tanh(a[q,d] + bm[l,d]) * w3[k,d]
    a = jnp.dot(hs, m1_w[...].astype(f32),
                preferred_element_type=f32) + m1_b[...].astype(f32)             # [Q, 8H]
    bm = jnp.dot(enc, m2_w[...].astype(f32),
                 preferred_element_type=f32) + m2_b[...].astype(f32)            # [L, 8H]
    # selector matmuls expand (q, l) -> row q*L + l without any in-kernel reshape
    a_exp = jnp.dot(rep_a_ref[...].astype(f32), a, preferred_element_type=f32)  # [Q*L, 8H]
    b_exp = jnp.dot(rep_b_ref[...].astype(f32), bm, preferred_element_type=f32) # [Q*L, 8H]
    t = jnp.tanh(a_exp + b_exp)                                                 # [Q*L, 8H]
    lg = lax.dot_general(m3_w[...].astype(f32), t, (((1,), (1,)), ((), ())),
                         preferred_element_type=f32)                            # [8, Q*L]
    logits_out[0] = lg.astype(logits_out.dtype)


# ------------------------------ forward wrapper ------------------------------


def set_decoder_forward(params, encoder_hidden_states, encoder_attention_mask, cfg):
    B, L, H = encoder_hidden_states.shape
    Q = cfg["num_generated_triples"]
    heads = cfg["num_attention_heads"]
    nL = cfg["num_layers"]
    C = cfg["num_classes"]
    dtype = encoder_hidden_states.dtype

    # extended encoder attention mask -> additive bias (BERT semantics)
    m = encoder_attention_mask.astype(jnp.float32)
    if m.ndim == 2:                                        # [B, L] -> [B, 1, L]
        enc_bias = (1.0 - m)[:, None, :] * -10000.0
    elif m.ndim == 3:                                      # [B, L, L]; only valid when Q == L
        if Q != m.shape[1]:
            raise ValueError("3-D encoder_attention_mask requires num_generated_triples == enc_len")
        enc_bias = (1.0 - m) * -10000.0
    else:
        raise ValueError("Wrong shape for encoder_attention_mask")

    # ---- pack per-layer parameters into stacked, fused arrays (done once per call) ----
    lp = params["layers"]

    def stack(fn):
        return jnp.stack([fn(p) for p in lp], axis=0)

    def stack_b(fn):
        return jnp.stack([fn(p) for p in lp], axis=0)[:, None, :]

    sa_qkv_w = stack(lambda p: jnp.concatenate(
        [p["self"]["q_w"], p["self"]["k_w"], p["self"]["v_w"]], axis=1))        # [nL, H, 3H]
    sa_qkv_b = stack_b(lambda p: jnp.concatenate(
        [p["self"]["q_b"], p["self"]["k_b"], p["self"]["v_b"]], axis=0))        # [nL, 1, 3H]
    sa_o_w = stack(lambda p: p["self"]["o_w"])
    sa_o_b = stack_b(lambda p: p["self"]["o_b"])
    sa_ln_g = stack_b(lambda p: p["self"]["ln_g"])
    sa_ln_b = stack_b(lambda p: p["self"]["ln_b"])

    ca_q_w = stack(lambda p: p["cross"]["q_w"])
    ca_q_b = stack_b(lambda p: p["cross"]["q_b"])
    ca_kv_w = stack(lambda p: jnp.concatenate(
        [p["cross"]["k_w"], p["cross"]["v_w"]], axis=1))                        # [nL, H, 2H]
    ca_kv_b = stack_b(lambda p: jnp.concatenate(
        [p["cross"]["k_b"], p["cross"]["v_b"]], axis=0))                        # [nL, 1, 2H]
    ca_o_w = stack(lambda p: p["cross"]["o_w"])
    ca_o_b = stack_b(lambda p: p["cross"]["o_b"])
    ca_ln_g = stack_b(lambda p: p["cross"]["ln_g"])
    ca_ln_b = stack_b(lambda p: p["cross"]["ln_b"])

    ff_in_w = stack(lambda p: p["inter_w"])
    ff_in_b = stack_b(lambda p: p["inter_b"])
    ff_out_w = stack(lambda p: p["out_w"])
    ff_out_b = stack_b(lambda p: p["out_b"])
    ff_ln_g = stack_b(lambda p: p["out_ln_g"])
    ff_ln_b = stack_b(lambda p: p["out_ln_b"])

    # selector matrices for the metric-head (q, l) expansion (matmul-based, no in-kernel reshape)
    rep_a = jnp.repeat(jnp.eye(Q, dtype=jnp.float32), L, axis=0)                # [Q*L, Q]
    rep_b = jnp.tile(jnp.eye(L, dtype=jnp.float32), (Q, 1))                     # [Q*L, L]

    inputs = [
        encoder_hidden_states, enc_bias, rep_a, rep_b,
        params["query_embed"],
        params["ln_g"].reshape(1, H), params["ln_b"].reshape(1, H),
        sa_qkv_w, sa_qkv_b, sa_o_w, sa_o_b, sa_ln_g, sa_ln_b,
        ca_q_w, ca_q_b, ca_kv_w, ca_kv_b, ca_o_w, ca_o_b, ca_ln_g, ca_ln_b,
        ff_in_w, ff_in_b, ff_out_w, ff_out_b, ff_ln_g, ff_ln_b,
        params["cls_w"], params["cls_b"].reshape(1, C),
        params["m1_w"], params["m1_b"].reshape(1, -1),
        params["m2_w"], params["m2_b"].reshape(1, -1),
        params["m3_w"],
    ]

    def batch_spec(a):
        nd = a.ndim
        return pl.BlockSpec((1,) + a.shape[1:], lambda b, nd=nd: (b,) + (0,) * (nd - 1))

    def full_spec(a):
        nd = a.ndim
        return pl.BlockSpec(a.shape, lambda b, nd=nd: (0,) * nd)

    in_specs = [batch_spec(inputs[0]), batch_spec(inputs[1])] + [full_spec(x) for x in inputs[2:]]

    out_shapes = (
        jax.ShapeDtypeStruct((B, Q, H), dtype),
        jax.ShapeDtypeStruct((B, Q, C), dtype),
        jax.ShapeDtypeStruct((B, 8, Q * L), dtype),     # lane-dense metric logits
    )
    out_specs = (
        pl.BlockSpec((1, Q, H), lambda b: (b, 0, 0)),
        pl.BlockSpec((1, Q, C), lambda b: (b, 0, 0)),
        pl.BlockSpec((1, 8, Q * L), lambda b: (b, 0, 0)),
    )

    hs, class_logits, logits_flat = pl.pallas_call(
        functools.partial(_set_decoder_kernel, num_layers=nL, num_heads=heads,
                          hidden=H, eps=LN_EPS),
        out_shape=out_shapes,
        grid=(B,),
        in_specs=in_specs,
        out_specs=out_specs,
        compiler_params=pltpu.CompilerParams(dimension_semantics=("parallel",)),
    )(*inputs)

    logits = logits_flat.reshape(B, 8, Q, L)            # logits[:, k] == torch logits[:, :, :, k]
    return (
        hs,
        class_logits,
        logits[:, 0], logits[:, 1],   # sub start / end
        logits[:, 2], logits[:, 3],   # obj start / end
        logits[:, 4], logits[:, 5],   # aspect start / end
        logits[:, 6], logits[:, 7],   # opinion start / end
    )


# ------------------------------ parameter init ------------------------------


def init_params(key, cfg):
    H = cfg["hidden_size"]
    I = cfg["intermediate_size"]
    Q = cfg["num_generated_triples"]
    C = cfg["num_classes"]
    keys = iter(jax.random.split(key, 256))

    def lin(din, dout, scale=0.05):
        w = jax.random.normal(next(keys), (din, dout), jnp.float32) * scale
        b = jax.random.normal(next(keys), (dout,), jnp.float32) * scale
        return w, b

    def attn_params():
        p = {}
        p["q_w"], p["q_b"] = lin(H, H)
        p["k_w"], p["k_b"] = lin(H, H)
        p["v_w"], p["v_b"] = lin(H, H)
        p["o_w"], p["o_b"] = lin(H, H)
        p["ln_g"] = jnp.ones((H,), jnp.float32)
        p["ln_b"] = jnp.zeros((H,), jnp.float32)
        return p

    layers = []
    for _ in range(cfg["num_layers"]):
        lp = {"self": attn_params(), "cross": attn_params()}
        lp["inter_w"], lp["inter_b"] = lin(H, I)
        lp["out_w"], lp["out_b"] = lin(I, H)
        lp["out_ln_g"] = jnp.ones((H,), jnp.float32)
        lp["out_ln_b"] = jnp.zeros((H,), jnp.float32)
        layers.append(lp)

    params = {"layers": layers}
    params["query_embed"] = jax.random.normal(next(keys), (Q, H), jnp.float32) * 0.05
    params["ln_g"] = jnp.ones((H,), jnp.float32)
    params["ln_b"] = jnp.zeros((H,), jnp.float32)
    params["cls_w"], params["cls_b"] = lin(H, C)
    params["m1_w"], params["m1_b"] = lin(H, 8 * H)
    params["m2_w"], params["m2_b"] = lin(H, 8 * H)
    # metric_3: nn.Linear(8H, 8, bias=False) -> weight [8, 8H]
    params["m3_w"] = jax.random.normal(next(keys), (8, 8 * H), jnp.float32) * 0.05
    # TODO(synk): decoder2span (Linear(H, 4)) is defined in __init__ but never used in forward.
    return params


# ----------------------------------- main -----------------------------------

if __name__ == "__main__":
    cfg = dict(
        hidden_size=32,
        num_attention_heads=4,
        intermediate_size=64,
        num_generated_triples=8,
        num_layers=2,
        num_classes=5,
    )
    key = jax.random.PRNGKey(0)
    kp, ke = jax.random.split(key)
    params = init_params(kp, cfg)

    B, L, H = 2, 16, cfg["hidden_size"]
    encoder_hidden_states = jax.random.normal(ke, (B, L, H), jnp.float32)
    # 2-D mask path ([B, L]); last 3 positions padded out
    encoder_attention_mask = jnp.ones((B, L), jnp.float32).at[:, L - 3:].set(0.0)

    outs = set_decoder_forward(params, encoder_hidden_states, encoder_attention_mask, cfg)
    outs = jax.block_until_ready(outs)

    Qn = cfg["num_generated_triples"]
    assert outs[0].shape == (B, Qn, H)
    assert outs[1].shape == (B, Qn, cfg["num_classes"])
    for t in outs[2:]:
        assert t.shape == (B, Qn, L)
    assert all(bool(jnp.all(jnp.isfinite(t))) for t in outs)
    print("KERNEL_OK")
</pallas_src>

<mosaic_0001>
module attributes {stable_mosaic.version = 11 : i64} {
  func.func @_set_decoder_kernel(%arg0: i32, %arg1: memref<1x16x32xf32, #tpu.memory_space<vmem>>, %arg2: memref<1x1x16xf32, #tpu.memory_space<vmem>>, %arg3: memref<128x8xf32, #tpu.memory_space<vmem>>, %arg4: memref<128x16xf32, #tpu.memory_space<vmem>>, %arg5: memref<8x32xf32, #tpu.memory_space<vmem>>, %arg6: memref<1x32xf32, #tpu.memory_space<vmem>>, %arg7: memref<1x32xf32, #tpu.memory_space<vmem>>, %arg8: memref<2x32x96xf32, #tpu.memory_space<vmem>>, %arg9: memref<2x1x96xf32, #tpu.memory_space<vmem>>, %arg10: memref<2x32x32xf32, #tpu.memory_space<vmem>>, %arg11: memref<2x1x32xf32, #tpu.memory_space<vmem>>, %arg12: memref<2x1x32xf32, #tpu.memory_space<vmem>>, %arg13: memref<2x1x32xf32, #tpu.memory_space<vmem>>, %arg14: memref<2x32x32xf32, #tpu.memory_space<vmem>>, %arg15: memref<2x1x32xf32, #tpu.memory_space<vmem>>, %arg16: memref<2x32x64xf32, #tpu.memory_space<vmem>>, %arg17: memref<2x1x64xf32, #tpu.memory_space<vmem>>, %arg18: memref<2x32x32xf32, #tpu.memory_space<vmem>>, %arg19: memref<2x1x32xf32, #tpu.memory_space<vmem>>, %arg20: memref<2x1x32xf32, #tpu.memory_space<vmem>>, %arg21: memref<2x1x32xf32, #tpu.memory_space<vmem>>, %arg22: memref<2x32x64xf32, #tpu.memory_space<vmem>>, %arg23: memref<2x1x64xf32, #tpu.memory_space<vmem>>, %arg24: memref<2x64x32xf32, #tpu.memory_space<vmem>>, %arg25: memref<2x1x32xf32, #tpu.memory_space<vmem>>, %arg26: memref<2x1x32xf32, #tpu.memory_space<vmem>>, %arg27: memref<2x1x32xf32, #tpu.memory_space<vmem>>, %arg28: memref<32x5xf32, #tpu.memory_space<vmem>>, %arg29: memref<1x5xf32, #tpu.memory_space<vmem>>, %arg30: memref<32x256xf32, #tpu.memory_space<vmem>>, %arg31: memref<1x256xf32, #tpu.memory_space<vmem>>, %arg32: memref<32x256xf32, #tpu.memory_space<vmem>>, %arg33: memref<1x256xf32, #tpu.memory_space<vmem>>, %arg34: memref<8x256xf32, #tpu.memory_space<vmem>>, %arg35: memref<1x8x32xf32, #tpu.memory_space<vmem>>, %arg36: memref<1x8x5xf32, #tpu.memory_space<vmem>>, %arg37: memref<1x8x128xf32, #tpu.memory_space<vmem>>) attributes {dimension_semantics = [#tpu.dimension_semantics<parallel>], iteration_bounds = array<i64: 2>, scalar_prefetch = 0 : i64, scratch_operands = 0 : i64, tpu.core_type = #tpu.core_type<tc>, window_params = [{transform_indices = @transform_0, window_bounds = array<i64: 1, 16, 32>}, {transform_indices = @transform_1, window_bounds = array<i64: 1, 1, 16>}, {pipeline_mode = #tpu.pipeline_mode<synchronous>, transform_indices = @transform_2, window_bounds = array<i64: 128, 8>}, {pipeline_mode = #tpu.pipeline_mode<synchronous>, transform_indices = @transform_3, window_bounds = array<i64: 128, 16>}, {pipeline_mode = #tpu.pipeline_mode<synchronous>, transform_indices = @transform_4, window_bounds = array<i64: 8, 32>}, {pipeline_mode = #tpu.pipeline_mode<synchronous>, transform_indices = @transform_5, window_bounds = array<i64: 1, 32>}, {pipeline_mode = #tpu.pipeline_mode<synchronous>, transform_indices = @transform_6, window_bounds = array<i64: 1, 32>}, {pipeline_mode = #tpu.pipeline_mode<synchronous>, transform_indices = @transform_7, window_bounds = array<i64: 2, 32, 96>}, {pipeline_mode = #tpu.pipeline_mode<synchronous>, transform_indices = @transform_8, window_bounds = array<i64: 2, 1, 96>}, {pipeline_mode = #tpu.pipeline_mode<synchronous>, transform_indices = @transform_9, window_bounds = array<i64: 2, 32, 32>}, {pipeline_mode = #tpu.pipeline_mode<synchronous>, transform_indices = @transform_10, window_bounds = array<i64: 2, 1, 32>}, {pipeline_mode = #tpu.pipeline_mode<synchronous>, transform_indices = @transform_11, window_bounds = array<i64: 2, 1, 32>}, {pipeline_mode = #tpu.pipeline_mode<synchronous>, transform_indices = @transform_12, window_bounds = array<i64: 2, 1, 32>}, {pipeline_mode = #tpu.pipeline_mode<synchronous>, transform_indices = @transform_13, window_bounds = array<i64: 2, 32, 32>}, {pipeline_mode = #tpu.pipeline_mode<synchronous>, transform_indices = @transform_14, window_bounds = array<i64: 2, 1, 32>}, {pipeline_mode = #tpu.pipeline_mode<synchronous>, transform_indices = @transform_15, window_bounds = array<i64: 2, 32, 64>}, {pipeline_mode = #tpu.pipeline_mode<synchronous>, transform_indices = @transform_16, window_bounds = array<i64: 2, 1, 64>}, {pipeline_mode = #tpu.pipeline_mode<synchronous>, transform_indices = @transform_17, window_bounds = array<i64: 2, 32, 32>}, {pipeline_mode = #tpu.pipeline_mode<synchronous>, transform_indices = @transform_18, window_bounds = array<i64: 2, 1, 32>}, {pipeline_mode = #tpu.pipeline_mode<synchronous>, transform_indices = @transform_19, window_bounds = array<i64: 2, 1, 32>}, {pipeline_mode = #tpu.pipeline_mode<synchronous>, transform_indices = @transform_20, window_bounds = array<i64: 2, 1, 32>}, {pipeline_mode = #tpu.pipeline_mode<synchronous>, transform_indices = @transform_21, window_bounds = array<i64: 2, 32, 64>}, {pipeline_mode = #tpu.pipeline_mode<synchronous>, transform_indices = @transform_22, window_bounds = array<i64: 2, 1, 64>}, {pipeline_mode = #tpu.pipeline_mode<synchronous>, transform_indices = @transform_23, window_bounds = array<i64: 2, 64, 32>}, {pipeline_mode = #tpu.pipeline_mode<synchronous>, transform_indices = @transform_24, window_bounds = array<i64: 2, 1, 32>}, {pipeline_mode = #tpu.pipeline_mode<synchronous>, transform_indices = @transform_25, window_bounds = array<i64: 2, 1, 32>}, {pipeline_mode = #tpu.pipeline_mode<synchronous>, transform_indices = @transform_26, window_bounds = array<i64: 2, 1, 32>}, {pipeline_mode = #tpu.pipeline_mode<synchronous>, transform_indices = @transform_27, window_bounds = array<i64: 32, 5>}, {pipeline_mode = #tpu.pipeline_mode<synchronous>, transform_indices = @transform_28, window_bounds = array<i64: 1, 5>}, {pipeline_mode = #tpu.pipeline_mode<synchronous>, transform_indices = @transform_29, window_bounds = array<i64: 32, 256>}, {pipeline_mode = #tpu.pipeline_mode<synchronous>, transform_indices = @transform_30, window_bounds = array<i64: 1, 256>}, {pipeline_mode = #tpu.pipeline_mode<synchronous>, transform_indices = @transform_31, window_bounds = array<i64: 32, 256>}, {pipeline_mode = #tpu.pipeline_mode<synchronous>, transform_indices = @transform_32, window_bounds = array<i64: 1, 256>}, {pipeline_mode = #tpu.pipeline_mode<synchronous>, transform_indices = @transform_33, window_bounds = array<i64: 8, 256>}, {transform_indices = @transform_34, window_bounds = array<i64: 1, 8, 32>}, {transform_indices = @transform_35, window_bounds = array<i64: 1, 8, 5>}, {transform_indices = @transform_36, window_bounds = array<i64: 1, 8, 128>}]} {
    %c0 = arith.constant 0 : index
    %c0_0 = arith.constant 0 : index
    %c0_1 = arith.constant 0 : index
    %0 = vector.load %arg1[%c0, %c0_0, %c0_1] : memref<1x16x32xf32, #tpu.memory_space<vmem>>, vector<1x16x32xf32>
    %1 = vector.shape_cast %0 : vector<1x16x32xf32> to vector<16x32xf32>
    %c0_2 = arith.constant 0 : index
    %c0_3 = arith.constant 0 : index
    %c0_4 = arith.constant 0 : index
    %2 = vector.load %arg2[%c0_2, %c0_3, %c0_4] : memref<1x1x16xf32, #tpu.memory_space<vmem>>, vector<1x1x16xf32>
    %3 = vector.shape_cast %2 : vector<1x1x16xf32> to vector<1x16xf32>
    %c0_5 = arith.constant 0 : index
    %c0_6 = arith.constant 0 : index
    %4 = vector.load %arg5[%c0_5, %c0_6] : memref<8x32xf32, #tpu.memory_space<vmem>>, vector<8x32xf32>
    %c0_7 = arith.constant 0 : index
    %c0_8 = arith.constant 0 : index
    %5 = vector.load %arg6[%c0_7, %c0_8] : memref<1x32xf32, #tpu.memory_space<vmem>>, vector<1x32xf32>
    %c0_9 = arith.constant 0 : index
    %c0_10 = arith.constant 0 : index
    %6 = vector.load %arg7[%c0_9, %c0_10] : memref<1x32xf32, #tpu.memory_space<vmem>>, vector<1x32xf32>
    %cst = arith.constant dense<0.000000e+00> : vector<8xf32>
    %7 = vector.multi_reduction <add>, %4, %cst [1] : vector<8x32xf32> to vector<8xf32>
    %8 = vector.shape_cast %7 : vector<8xf32> to vector<8x1xf32>
    %cst_11 = arith.constant 3.200000e+01 : f32
    %9 = vector.broadcast %cst_11 : f32 to vector<8x1xf32>
    %10 = arith.divf %8, %9 : vector<8x1xf32>
    %11 = vector.broadcast %10 : vector<8x1xf32> to vector<8x32xf32>
    %12 = arith.subf %4, %11 : vector<8x32xf32>
    %13 = arith.mulf %12, %12 : vector<8x32xf32>
    %cst_12 = arith.constant dense<0.000000e+00> : vector<8xf32>
    %14 = vector.multi_reduction <add>, %13, %cst_12 [1] : vector<8x32xf32> to vector<8xf32>
    %15 = vector.shape_cast %14 : vector<8xf32> to vector<8x1xf32>
    %cst_13 = arith.constant 3.200000e+01 : f32
    %16 = vector.broadcast %cst_13 : f32 to vector<8x1xf32>
    %17 = arith.divf %15, %16 : vector<8x1xf32>
    %cst_14 = arith.constant 9.99999996E-13 : f32
    %18 = vector.broadcast %cst_14 : f32 to vector<8x1xf32>
    %19 = arith.addf %17, %18 : vector<8x1xf32>
    %20 = math.rsqrt %19 : vector<8x1xf32>
    %21 = vector.broadcast %20 : vector<8x1xf32> to vector<8x32xf32>
    %22 = arith.mulf %12, %21 : vector<8x32xf32>
    %23 = vector.broadcast %5 : vector<1x32xf32> to vector<8x32xf32>
    %24 = arith.mulf %22, %23 : vector<8x32xf32>
    %25 = vector.broadcast %6 : vector<1x32xf32> to vector<8x32xf32>
    %26 = arith.addf %24, %25 : vector<8x32xf32>
    %c0_15 = arith.constant 0 : index
    %c0_16 = arith.constant 0 : index
    %c0_17 = arith.constant 0 : index
    %27 = vector.load %arg8[%c0_15, %c0_16, %c0_17] : memref<2x32x96xf32, #tpu.memory_space<vmem>>, vector<1x32x96xf32>
    %28 = vector.shape_cast %27 : vector<1x32x96xf32> to vector<32x96xf32>
    %cst_18 = arith.constant dense<0.000000e+00> : vector<8x96xf32>
    %29 = tpu.matmul %26, %28, %cst_18 {dimension_numbers = #tpu.dot_dimension_numbers<[1], [0], [0], [1], [0, 0, 1, 1], [], []>} : vector<8x32xf32>, vector<32x96xf32>, vector<8x96xf32> -> vector<8x96xf32>
    %c0_19 = arith.constant 0 : index
    %c0_20 = arith.constant 0 : index
    %c0_21 = arith.constant 0 : index
    %30 = vector.load %arg9[%c0_19, %c0_20, %c0_21] : memref<2x1x96xf32, #tpu.memory_space<vmem>>, vector<1x1x96xf32>
    %31 = vector.shape_cast %30 : vector<1x1x96xf32> to vector<1x96xf32>
    %32 = vector.broadcast %31 : vector<1x96xf32> to vector<8x96xf32>
    %33 = arith.addf %29, %32 : vector<8x96xf32>
    %34 = vector.extract_strided_slice %33 {offsets = [0, 0], sizes = [8, 32], strides = [1, 1]} : vector<8x96xf32> to vector<8x32xf32>
    %35 = vector.extract_strided_slice %33 {offsets = [0, 32], sizes = [8, 32], strides = [1, 1]} : vector<8x96xf32> to vector<8x32xf32>
    %36 = vector.extract_strided_slice %33 {offsets = [0, 64], sizes = [8, 32], strides = [1, 1]} : vector<8x96xf32> to vector<8x32xf32>
    %c0_22 = arith.constant 0 : index
    %c0_23 = arith.constant 0 : index
    %c0_24 = arith.constant 0 : index
    %37 = vector.load %arg10[%c0_22, %c0_23, %c0_24] : memref<2x32x32xf32, #tpu.memory_space<vmem>>, vector<1x32x32xf32>
    %38 = vector.shape_cast %37 : vector<1x32x32xf32> to vector<32x32xf32>
    %39 = vector.extract_strided_slice %34 {offsets = [0, 0], sizes = [8, 8], strides = [1, 1]} : vector<8x32xf32> to vector<8x8xf32>
    %40 = vector.extract_strided_slice %35 {offsets = [0, 0], sizes = [8, 8], strides = [1, 1]} : vector<8x32xf32> to vector<8x8xf32>
    %41 = vector.extract_strided_slice %36 {offsets = [0, 0], sizes = [8, 8], strides = [1, 1]} : vector<8x32xf32> to vector<8x8xf32>
    %cst_25 = arith.constant dense<0.000000e+00> : vector<8x8xf32>
    %42 = tpu.matmul %39, %40, %cst_25 {dimension_numbers = #tpu.dot_dimension_numbers<[1], [1], [0], [0], [0, 0, 1, 0], [], []>} : vector<8x8xf32>, vector<8x8xf32>, vector<8x8xf32> -> vector<8x8xf32>
    %cst_26 = arith.constant 0.353553385 : f32
    %43 = vector.broadcast %cst_26 : f32 to vector<8x8xf32>
    %44 = arith.mulf %42, %43 : vector<8x8xf32>
    %cst_27 = arith.constant dense<0xFF800000> : vector<8xf32>
    %45 = vector.multi_reduction <maximumf>, %44, %cst_27 [1] : vector<8x8xf32> to vector<8xf32>
    %46 = vector.shape_cast %45 : vector<8xf32> to vector<8x1xf32>
    %47 = vector.broadcast %46 : vector<8x1xf32> to vector<8x8xf32>
    %48 = arith.subf %44, %47 : vector<8x8xf32>
    %49 = math.exp %48 : vector<8x8xf32>
    %cst_28 = arith.constant dense<0.000000e+00> : vector<8xf32>
    %50 = vector.multi_reduction <add>, %49, %cst_28 [1] : vector<8x8xf32> to vector<8xf32>
    %51 = vector.shape_cast %50 : vector<8xf32> to vector<8x1xf32>
    %52 = tpu.reciprocal %51 {approx = true} : vector<8x1xf32> -> vector<8x1xf32>
    %53 = vector.broadcast %52 : vector<8x1xf32> to vector<8x8xf32>
    %54 = arith.mulf %49, %53 : vector<8x8xf32>
    %cst_29 = arith.constant dense<0.000000e+00> : vector<8x8xf32>
    %55 = tpu.matmul %54, %41, %cst_29 {dimension_numbers = #tpu.dot_dimension_numbers<[1], [0], [0], [1], [0, 0, 1, 1], [], []>} : vector<8x8xf32>, vector<8x8xf32>, vector<8x8xf32> -> vector<8x8xf32>
    %56 = vector.extract_strided_slice %38 {offsets = [0, 0], sizes = [8, 32], strides = [1, 1]} : vector<32x32xf32> to vector<8x32xf32>
    %cst_30 = arith.constant dense<0.000000e+00> : vector<8x32xf32>
    %57 = tpu.matmul %55, %56, %cst_30 {dimension_numbers = #tpu.dot_dimension_numbers<[1], [0], [0], [1], [0, 0, 1, 1], [], []>} : vector<8x8xf32>, vector<8x32xf32>, vector<8x32xf32> -> vector<8x32xf32>
    %58 = vector.extract_strided_slice %34 {offsets = [0, 8], sizes = [8, 8], strides = [1, 1]} : vector<8x32xf32> to vector<8x8xf32>
    %59 = vector.extract_strided_slice %35 {offsets = [0, 8], sizes = [8, 8], strides = [1, 1]} : vector<8x32xf32> to vector<8x8xf32>
    %60 = vector.extract_strided_slice %36 {offsets = [0, 8], sizes = [8, 8], strides = [1, 1]} : vector<8x32xf32> to vector<8x8xf32>
    %cst_31 = arith.constant dense<0.000000e+00> : vector<8x8xf32>
    %61 = tpu.matmul %58, %59, %cst_31 {dimension_numbers = #tpu.dot_dimension_numbers<[1], [1], [0], [0], [0, 0, 1, 0], [], []>} : vector<8x8xf32>, vector<8x8xf32>, vector<8x8xf32> -> vector<8x8xf32>
    %cst_32 = arith.constant 0.353553385 : f32
    %62 = vector.broadcast %cst_32 : f32 to vector<8x8xf32>
    %63 = arith.mulf %61, %62 : vector<8x8xf32>
    %cst_33 = arith.constant dense<0xFF800000> : vector<8xf32>
    %64 = vector.multi_reduction <maximumf>, %63, %cst_33 [1] : vector<8x8xf32> to vector<8xf32>
    %65 = vector.shape_cast %64 : vector<8xf32> to vector<8x1xf32>
    %66 = vector.broadcast %65 : vector<8x1xf32> to vector<8x8xf32>
    %67 = arith.subf %63, %66 : vector<8x8xf32>
    %68 = math.exp %67 : vector<8x8xf32>
    %cst_34 = arith.constant dense<0.000000e+00> : vector<8xf32>
    %69 = vector.multi_reduction <add>, %68, %cst_34 [1] : vector<8x8xf32> to vector<8xf32>
    %70 = vector.shape_cast %69 : vector<8xf32> to vector<8x1xf32>
    %71 = tpu.reciprocal %70 {approx = true} : vector<8x1xf32> -> vector<8x1xf32>
    %72 = vector.broadcast %71 : vector<8x1xf32> to vector<8x8xf32>
    %73 = arith.mulf %68, %72 : vector<8x8xf32>
    %cst_35 = arith.constant dense<0.000000e+00> : vector<8x8xf32>
    %74 = tpu.matmul %73, %60, %cst_35 {dimension_numbers = #tpu.dot_dimension_numbers<[1], [0], [0], [1], [0, 0, 1, 1], [], []>} : vector<8x8xf32>, vector<8x8xf32>, vector<8x8xf32> -> vector<8x8xf32>
    %75 = vector.extract_strided_slice %38 {offsets = [8, 0], sizes = [8, 32], strides = [1, 1]} : vector<32x32xf32> to vector<8x32xf32>
    %cst_36 = arith.constant dense<0.000000e+00> : vector<8x32xf32>
    %76 = tpu.matmul %74, %75, %cst_36 {dimension_numbers = #tpu.dot_dimension_numbers<[1], [0], [0], [1], [0, 0, 1, 1], [], []>} : vector<8x8xf32>, vector<8x32xf32>, vector<8x32xf32> -> vector<8x32xf32>
    %77 = arith.addf %57, %76 : vector<8x32xf32>
    %78 = vector.extract_strided_slice %34 {offsets = [0, 16], sizes = [8, 8], strides = [1, 1]} : vector<8x32xf32> to vector<8x8xf32>
    %79 = vector.extract_strided_slice %35 {offsets = [0, 16], sizes = [8, 8], strides = [1, 1]} : vector<8x32xf32> to vector<8x8xf32>
    %80 = vector.extract_strided_slice %36 {offsets = [0, 16], sizes = [8, 8], strides = [1, 1]} : vector<8x32xf32> to vector<8x8xf32>
    %cst_37 = arith.constant dense<0.000000e+00> : vector<8x8xf32>
    %81 = tpu.matmul %78, %79, %cst_37 {dimension_numbers = #tpu.dot_dimension_numbers<[1], [1], [0], [0], [0, 0, 1, 0], [], []>} : vector<8x8xf32>, vector<8x8xf32>, vector<8x8xf32> -> vector<8x8xf32>
    %cst_38 = arith.constant 0.353553385 : f32
    %82 = vector.broadcast %cst_38 : f32 to vector<8x8xf32>
    %83 = arith.mulf %81, %82 : vector<8x8xf32>
    %cst_39 = arith.constant dense<0xFF800000> : vector<8xf32>
    %84 = vector.multi_reduction <maximumf>, %83, %cst_39 [1] : vector<8x8xf32> to vector<8xf32>
    %85 = vector.shape_cast %84 : vector<8xf32> to vector<8x1xf32>
    %86 = vector.broadcast %85 : vector<8x1xf32> to vector<8x8xf32>
    %87 = arith.subf %83, %86 : vector<8x8xf32>
    %88 = math.exp %87 : vector<8x8xf32>
    %cst_40 = arith.constant dense<0.000000e+00> : vector<8xf32>
    %89 = vector.multi_reduction <add>, %88, %cst_40 [1] : vector<8x8xf32> to vector<8xf32>
    %90 = vector.shape_cast %89 : vector<8xf32> to vector<8x1xf32>
    %91 = tpu.reciprocal %90 {approx = true} : vector<8x1xf32> -> vector<8x1xf32>
    %92 = vector.broadcast %91 : vector<8x1xf32> to vector<8x8xf32>
    %93 = arith.mulf %88, %92 : vector<8x8xf32>
    %cst_41 = arith.constant dense<0.000000e+00> : vector<8x8xf32>
    %94 = tpu.matmul %93, %80, %cst_41 {dimension_numbers = #tpu.dot_dimension_numbers<[1], [0], [0], [1], [0, 0, 1, 1], [], []>} : vector<8x8xf32>, vector<8x8xf32>, vector<8x8xf32> -> vector<8x8xf32>
    %95 = vector.extract_strided_slice %38 {offsets = [16, 0], sizes = [8, 32], strides = [1, 1]} : vector<32x32xf32> to vector<8x32xf32>
    %cst_42 = arith.constant dense<0.000000e+00> : vector<8x32xf32>
    %96 = tpu.matmul %94, %95, %cst_42 {dimension_numbers = #tpu.dot_dimension_numbers<[1], [0], [0], [1], [0, 0, 1, 1], [], []>} : vector<8x8xf32>, vector<8x32xf32>, vector<8x32xf32> -> vector<8x32xf32>
    %97 = arith.addf %77, %96 : vector<8x32xf32>
    %98 = vector.extract_strided_slice %34 {offsets = [0, 24], sizes = [8, 8], strides = [1, 1]} : vector<8x32xf32> to vector<8x8xf32>
    %99 = vector.extract_strided_slice %35 {offsets = [0, 24], sizes = [8, 8], strides = [1, 1]} : vector<8x32xf32> to vector<8x8xf32>
    %100 = vector.extract_strided_slice %36 {offsets = [0, 24], sizes = [8, 8], strides = [1, 1]} : vector<8x32xf32> to vector<8x8xf32>
    %cst_43 = arith.constant dense<0.000000e+00> : vector<8x8xf32>
    %101 = tpu.matmul %98, %99, %cst_43 {dimension_numbers = #tpu.dot_dimension_numbers<[1], [1], [0], [0], [0, 0, 1, 0], [], []>} : vector<8x8xf32>, vector<8x8xf32>, vector<8x8xf32> -> vector<8x8xf32>
    %cst_44 = arith.constant 0.353553385 : f32
    %102 = vector.broadcast %cst_44 : f32 to vector<8x8xf32>
    %103 = arith.mulf %101, %102 : vector<8x8xf32>
    %cst_45 = arith.constant dense<0xFF800000> : vector<8xf32>
    %104 = vector.multi_reduction <maximumf>, %103, %cst_45 [1] : vector<8x8xf32> to vector<8xf32>
    %105 = vector.shape_cast %104 : vector<8xf32> to vector<8x1xf32>
    %106 = vector.broadcast %105 : vector<8x1xf32> to vector<8x8xf32>
    %107 = arith.subf %103, %106 : vector<8x8xf32>
    %108 = math.exp %107 : vector<8x8xf32>
    %cst_46 = arith.constant dense<0.000000e+00> : vector<8xf32>
    %109 = vector.multi_reduction <add>, %108, %cst_46 [1] : vector<8x8xf32> to vector<8xf32>
    %110 = vector.shape_cast %109 : vector<8xf32> to vector<8x1xf32>
    %111 = tpu.reciprocal %110 {approx = true} : vector<8x1xf32> -> vector<8x1xf32>
    %112 = vector.broadcast %111 : vector<8x1xf32> to vector<8x8xf32>
    %113 = arith.mulf %108, %112 : vector<8x8xf32>
    %cst_47 = arith.constant dense<0.000000e+00> : vector<8x8xf32>
    %114 = tpu.matmul %113, %100, %cst_47 {dimension_numbers = #tpu.dot_dimension_numbers<[1], [0], [0], [1], [0, 0, 1, 1], [], []>} : vector<8x8xf32>, vector<8x8xf32>, vector<8x8xf32> -> vector<8x8xf32>
    %115 = vector.extract_strided_slice %38 {offsets = [24, 0], sizes = [8, 32], strides = [1, 1]} : vector<32x32xf32> to vector<8x32xf32>
    %cst_48 = arith.constant dense<0.000000e+00> : vector<8x32xf32>
    %116 = tpu.matmul %114, %115, %cst_48 {dimension_numbers = #tpu.dot_dimension_numbers<[1], [0], [0], [1], [0, 0, 1, 1], [], []>} : vector<8x8xf32>, vector<8x32xf32>, vector<8x32xf32> -> vector<8x32xf32>
    %117 = arith.addf %97, %116 : vector<8x32xf32>
    %c0_49 = arith.constant 0 : index
    %c0_50 = arith.constant 0 : index
    %c0_51 = arith.constant 0 : index
    %118 = vector.load %arg11[%c0_49, %c0_50, %c0_51] : memref<2x1x32xf32, #tpu.memory_space<vmem>>, vector<1x1x32xf32>
    %119 = vector.shape_cast %118 : vector<1x1x32xf32> to vector<1x32xf32>
    %120 = vector.broadcast %119 : vector<1x32xf32> to vector<8x32xf32>
    %121 = arith.addf %117, %120 : vector<8x32xf32>
    %122 = arith.addf %121, %26 : vector<8x32xf32>
    %c0_52 = arith.constant 0 : index
    %c0_53 = arith.constant 0 : index
    %c0_54 = arith.constant 0 : index
    %123 = vector.load %arg12[%c0_52, %c0_53, %c0_54] : memref<2x1x32xf32, #tpu.memory_space<vmem>>, vector<1x1x32xf32>
    %124 = vector.shape_cast %123 : vector<1x1x32xf32> to vector<1x32xf32>
    %c0_55 = arith.constant 0 : index
    %c0_56 = arith.constant 0 : index
    %c0_57 = arith.constant 0 : index
    %125 = vector.load %arg13[%c0_55, %c0_56, %c0_57] : memref<2x1x32xf32, #tpu.memory_space<vmem>>, vector<1x1x32xf32>
    %126 = vector.shape_cast %125 : vector<1x1x32xf32> to vector<1x32xf32>
    %cst_58 = arith.constant dense<0.000000e+00> : vector<8xf32>
    %127 = vector.multi_reduction <add>, %122, %cst_58 [1] : vector<8x32xf32> to vector<8xf32>
    %128 = vector.shape_cast %127 : vector<8xf32> to vector<8x1xf32>
    %cst_59 = arith.constant 3.200000e+01 : f32
    %129 = vector.broadcast %cst_59 : f32 to vector<8x1xf32>
    %130 = arith.divf %128, %129 : vector<8x1xf32>
    %131 = vector.broadcast %130 : vector<8x1xf32> to vector<8x32xf32>
    %132 = arith.subf %122, %131 : vector<8x32xf32>
    %133 = arith.mulf %132, %132 : vector<8x32xf32>
    %cst_60 = arith.constant dense<0.000000e+00> : vector<8xf32>
    %134 = vector.multi_reduction <add>, %133, %cst_60 [1] : vector<8x32xf32> to vector<8xf32>
    %135 = vector.shape_cast %134 : vector<8xf32> to vector<8x1xf32>
    %cst_61 = arith.constant 3.200000e+01 : f32
    %136 = vector.broadcast %cst_61 : f32 to vector<8x1xf32>
    %137 = arith.divf %135, %136 : vector<8x1xf32>
    %cst_62 = arith.constant 9.99999996E-13 : f32
    %138 = vector.broadcast %cst_62 : f32 to vector<8x1xf32>
    %139 = arith.addf %137, %138 : vector<8x1xf32>
    %140 = math.rsqrt %139 : vector<8x1xf32>
    %141 = vector.broadcast %140 : vector<8x1xf32> to vector<8x32xf32>
    %142 = arith.mulf %132, %141 : vector<8x32xf32>
    %143 = vector.broadcast %124 : vector<1x32xf32> to vector<8x32xf32>
    %144 = arith.mulf %142, %143 : vector<8x32xf32>
    %145 = vector.broadcast %126 : vector<1x32xf32> to vector<8x32xf32>
    %146 = arith.addf %144, %145 : vector<8x32xf32>
    %c0_63 = arith.constant 0 : index
    %c0_64 = arith.constant 0 : index
    %c0_65 = arith.constant 0 : index
    %147 = vector.load %arg14[%c0_63, %c0_64, %c0_65] : memref<2x32x32xf32, #tpu.memory_space<vmem>>, vector<1x32x32xf32>
    %148 = vector.shape_cast %147 : vector<1x32x32xf32> to vector<32x32xf32>
    %cst_66 = arith.constant dense<0.000000e+00> : vector<8x32xf32>
    %149 = tpu.matmul %146, %148, %cst_66 {dimension_numbers = #tpu.dot_dimension_numbers<[1], [0], [0], [1], [0, 0, 1, 1], [], []>} : vector<8x32xf32>, vector<32x32xf32>, vector<8x32xf32> -> vector<8x32xf32>
    %c0_67 = arith.constant 0 : index
    %c0_68 = arith.constant 0 : index
    %c0_69 = arith.constant 0 : index
    %150 = vector.load %arg15[%c0_67, %c0_68, %c0_69] : memref<2x1x32xf32, #tpu.memory_space<vmem>>, vector<1x1x32xf32>
    %151 = vector.shape_cast %150 : vector<1x1x32xf32> to vector<1x32xf32>
    %152 = vector.broadcast %151 : vector<1x32xf32> to vector<8x32xf32>
    %153 = arith.addf %149, %152 : vector<8x32xf32>
    %c0_70 = arith.constant 0 : index
    %c0_71 = arith.constant 0 : index
    %c0_72 = arith.constant 0 : index
    %154 = vector.load %arg16[%c0_70, %c0_71, %c0_72] : memref<2x32x64xf32, #tpu.memory_space<vmem>>, vector<1x32x64xf32>
    %155 = vector.shape_cast %154 : vector<1x32x64xf32> to vector<32x64xf32>
    %cst_73 = arith.constant dense<0.000000e+00> : vector<16x64xf32>
    %156 = tpu.matmul %1, %155, %cst_73 {dimension_numbers = #tpu.dot_dimension_numbers<[1], [0], [0], [1], [0, 0, 1, 1], [], []>} : vector<16x32xf32>, vector<32x64xf32>, vector<16x64xf32> -> vector<16x64xf32>
    %c0_74 = arith.constant 0 : index
    %c0_75 = arith.constant 0 : index
    %c0_76 = arith.constant 0 : index
    %157 = vector.load %arg17[%c0_74, %c0_75, %c0_76] : memref<2x1x64xf32, #tpu.memory_space<vmem>>, vector<1x1x64xf32>
    %158 = vector.shape_cast %157 : vector<1x1x64xf32> to vector<1x64xf32>
    %159 = vector.broadcast %158 : vector<1x64xf32> to vector<16x64xf32>
    %160 = arith.addf %156, %159 : vector<16x64xf32>
    %161 = vector.extract_strided_slice %160 {offsets = [0, 0], sizes = [16, 32], strides = [1, 1]} : vector<16x64xf32> to vector<16x32xf32>
    %162 = vector.extract_strided_slice %160 {offsets = [0, 32], sizes = [16, 32], strides = [1, 1]} : vector<16x64xf32> to vector<16x32xf32>
    %c0_77 = arith.constant 0 : index
    %c0_78 = arith.constant 0 : index
    %c0_79 = arith.constant 0 : index
    %163 = vector.load %arg18[%c0_77, %c0_78, %c0_79] : memref<2x32x32xf32, #tpu.memory_space<vmem>>, vector<1x32x32xf32>
    %164 = vector.shape_cast %163 : vector<1x32x32xf32> to vector<32x32xf32>
    %165 = vector.extract_strided_slice %153 {offsets = [0, 0], sizes = [8, 8], strides = [1, 1]} : vector<8x32xf32> to vector<8x8xf32>
    %166 = vector.extract_strided_slice %161 {offsets = [0, 0], sizes = [16, 8], strides = [1, 1]} : vector<16x32xf32> to vector<16x8xf32>
    %167 = vector.extract_strided_slice %162 {offsets = [0, 0], sizes = [16, 8], strides = [1, 1]} : vector<16x32xf32> to vector<16x8xf32>
    %cst_80 = arith.constant dense<0.000000e+00> : vector<8x16xf32>
    %168 = tpu.matmul %165, %166, %cst_80 {dimension_numbers = #tpu.dot_dimension_numbers<[1], [1], [0], [0], [0, 0, 1, 0], [], []>} : vector<8x8xf32>, vector<16x8xf32>, vector<8x16xf32> -> vector<8x16xf32>
    %cst_81 = arith.constant 0.353553385 : f32
    %169 = vector.broadcast %cst_81 : f32 to vector<8x16xf32>
    %170 = arith.mulf %168, %169 : vector<8x16xf32>
    %171 = vector.broadcast %3 : vector<1x16xf32> to vector<8x16xf32>
    %172 = arith.addf %170, %171 : vector<8x16xf32>
    %cst_82 = arith.constant dense<0xFF800000> : vector<8xf32>
    %173 = vector.multi_reduction <maximumf>, %172, %cst_82 [1] : vector<8x16xf32> to vector<8xf32>
    %174 = vector.shape_cast %173 : vector<8xf32> to vector<8x1xf32>
    %175 = vector.broadcast %174 : vector<8x1xf32> to vector<8x16xf32>
    %176 = arith.subf %172, %175 : vector<8x16xf32>
    %177 = math.exp %176 : vector<8x16xf32>
    %cst_83 = arith.constant dense<0.000000e+00> : vector<8xf32>
    %178 = vector.multi_reduction <add>, %177, %cst_83 [1] : vector<8x16xf32> to vector<8xf32>
    %179 = vector.shape_cast %178 : vector<8xf32> to vector<8x1xf32>
    %180 = tpu.reciprocal %179 {approx = true} : vector<8x1xf32> -> vector<8x1xf32>
    %181 = vector.broadcast %180 : vector<8x1xf32> to vector<8x16xf32>
    %182 = arith.mulf %177, %181 : vector<8x16xf32>
    %cst_84 = arith.constant dense<0.000000e+00> : vector<8x8xf32>
    %183 = tpu.matmul %182, %167, %cst_84 {dimension_numbers = #tpu.dot_dimension_numbers<[1], [0], [0], [1], [0, 0, 1, 1], [], []>} : vector<8x16xf32>, vector<16x8xf32>, vector<8x8xf32> -> vector<8x8xf32>
    %184 = vector.extract_strided_slice %164 {offsets = [0, 0], sizes = [8, 32], strides = [1, 1]} : vector<32x32xf32> to vector<8x32xf32>
    %cst_85 = arith.constant dense<0.000000e+00> : vector<8x32xf32>
    %185 = tpu.matmul %183, %184, %cst_85 {dimension_numbers = #tpu.dot_dimension_numbers<[1], [0], [0], [1], [0, 0, 1, 1], [], []>} : vector<8x8xf32>, vector<8x32xf32>, vector<8x32xf32> -> vector<8x32xf32>
    %186 = vector.extract_strided_slice %153 {offsets = [0, 8], sizes = [8, 8], strides = [1, 1]} : vector<8x32xf32> to vector<8x8xf32>
    %187 = vector.extract_strided_slice %161 {offsets = [0, 8], sizes = [16, 8], strides = [1, 1]} : vector<16x32xf32> to vector<16x8xf32>
    %188 = vector.extract_strided_slice %162 {offsets = [0, 8], sizes = [16, 8], strides = [1, 1]} : vector<16x32xf32> to vector<16x8xf32>
    %cst_86 = arith.constant dense<0.000000e+00> : vector<8x16xf32>
    %189 = tpu.matmul %186, %187, %cst_86 {dimension_numbers = #tpu.dot_dimension_numbers<[1], [1], [0], [0], [0, 0, 1, 0], [], []>} : vector<8x8xf32>, vector<16x8xf32>, vector<8x16xf32> -> vector<8x16xf32>
    %cst_87 = arith.constant 0.353553385 : f32
    %190 = vector.broadcast %cst_87 : f32 to vector<8x16xf32>
    %191 = arith.mulf %189, %190 : vector<8x16xf32>
    %192 = vector.broadcast %3 : vector<1x16xf32> to vector<8x16xf32>
    %193 = arith.addf %191, %192 : vector<8x16xf32>
    %cst_88 = arith.constant dense<0xFF800000> : vector<8xf32>
    %194 = vector.multi_reduction <maximumf>, %193, %cst_88 [1] : vector<8x16xf32> to vector<8xf32>
    %195 = vector.shape_cast %194 : vector<8xf32> to vector<8x1xf32>
    %196 = vector.broadcast %195 : vector<8x1xf32> to vector<8x16xf32>
    %197 = arith.subf %193, %196 : vector<8x16xf32>
    %198 = math.exp %197 : vector<8x16xf32>
    %cst_89 = arith.constant dense<0.000000e+00> : vector<8xf32>
    %199 = vector.multi_reduction <add>, %198, %cst_89 [1] : vector<8x16xf32> to vector<8xf32>
    %200 = vector.shape_cast %199 : vector<8xf32> to vector<8x1xf32>
    %201 = tpu.reciprocal %200 {approx = true} : vector<8x1xf32> -> vector<8x1xf32>
    %202 = vector.broadcast %201 : vector<8x1xf32> to vector<8x16xf32>
    %203 = arith.mulf %198, %202 : vector<8x16xf32>
    %cst_90 = arith.constant dense<0.000000e+00> : vector<8x8xf32>
    %204 = tpu.matmul %203, %188, %cst_90 {dimension_numbers = #tpu.dot_dimension_numbers<[1], [0], [0], [1], [0, 0, 1, 1], [], []>} : vector<8x16xf32>, vector<16x8xf32>, vector<8x8xf32> -> vector<8x8xf32>
    %205 = vector.extract_strided_slice %164 {offsets = [8, 0], sizes = [8, 32], strides = [1, 1]} : vector<32x32xf32> to vector<8x32xf32>
    %cst_91 = arith.constant dense<0.000000e+00> : vector<8x32xf32>
    %206 = tpu.matmul %204, %205, %cst_91 {dimension_numbers = #tpu.dot_dimension_numbers<[1], [0], [0], [1], [0, 0, 1, 1], [], []>} : vector<8x8xf32>, vector<8x32xf32>, vector<8x32xf32> -> vector<8x32xf32>
    %207 = arith.addf %185, %206 : vector<8x32xf32>
    %208 = vector.extract_strided_slice %153 {offsets = [0, 16], sizes = [8, 8], strides = [1, 1]} : vector<8x32xf32> to vector<8x8xf32>
    %209 = vector.extract_strided_slice %161 {offsets = [0, 16], sizes = [16, 8], strides = [1, 1]} : vector<16x32xf32> to vector<16x8xf32>
    %210 = vector.extract_strided_slice %162 {offsets = [0, 16], sizes = [16, 8], strides = [1, 1]} : vector<16x32xf32> to vector<16x8xf32>
    %cst_92 = arith.constant dense<0.000000e+00> : vector<8x16xf32>
    %211 = tpu.matmul %208, %209, %cst_92 {dimension_numbers = #tpu.dot_dimension_numbers<[1], [1], [0], [0], [0, 0, 1, 0], [], []>} : vector<8x8xf32>, vector<16x8xf32>, vector<8x16xf32> -> vector<8x16xf32>
    %cst_93 = arith.constant 0.353553385 : f32
    %212 = vector.broadcast %cst_93 : f32 to vector<8x16xf32>
    %213 = arith.mulf %211, %212 : vector<8x16xf32>
    %214 = vector.broadcast %3 : vector<1x16xf32> to vector<8x16xf32>
    %215 = arith.addf %213, %214 : vector<8x16xf32>
    %cst_94 = arith.constant dense<0xFF800000> : vector<8xf32>
    %216 = vector.multi_reduction <maximumf>, %215, %cst_94 [1] : vector<8x16xf32> to vector<8xf32>
    %217 = vector.shape_cast %216 : vector<8xf32> to vector<8x1xf32>
    %218 = vector.broadcast %217 : vector<8x1xf32> to vector<8x16xf32>
    %219 = arith.subf %215, %218 : vector<8x16xf32>
    %220 = math.exp %219 : vector<8x16xf32>
    %cst_95 = arith.constant dense<0.000000e+00> : vector<8xf32>
    %221 = vector.multi_reduction <add>, %220, %cst_95 [1] : vector<8x16xf32> to vector<8xf32>
    %222 = vector.shape_cast %221 : vector<8xf32> to vector<8x1xf32>
    %223 = tpu.reciprocal %222 {approx = true} : vector<8x1xf32> -> vector<8x1xf32>
    %224 = vector.broadcast %223 : vector<8x1xf32> to vector<8x16xf32>
    %225 = arith.mulf %220, %224 : vector<8x16xf32>
    %cst_96 = arith.constant dense<0.000000e+00> : vector<8x8xf32>
    %226 = tpu.matmul %225, %210, %cst_96 {dimension_numbers = #tpu.dot_dimension_numbers<[1], [0], [0], [1], [0, 0, 1, 1], [], []>} : vector<8x16xf32>, vector<16x8xf32>, vector<8x8xf32> -> vector<8x8xf32>
    %227 = vector.extract_strided_slice %164 {offsets = [16, 0], sizes = [8, 32], strides = [1, 1]} : vector<32x32xf32> to vector<8x32xf32>
    %cst_97 = arith.constant dense<0.000000e+00> : vector<8x32xf32>
    %228 = tpu.matmul %226, %227, %cst_97 {dimension_numbers = #tpu.dot_dimension_numbers<[1], [0], [0], [1], [0, 0, 1, 1], [], []>} : vector<8x8xf32>, vector<8x32xf32>, vector<8x32xf32> -> vector<8x32xf32>
    %229 = arith.addf %207, %228 : vector<8x32xf32>
    %230 = vector.extract_strided_slice %153 {offsets = [0, 24], sizes = [8, 8], strides = [1, 1]} : vector<8x32xf32> to vector<8x8xf32>
    %231 = vector.extract_strided_slice %161 {offsets = [0, 24], sizes = [16, 8], strides = [1, 1]} : vector<16x32xf32> to vector<16x8xf32>
    %232 = vector.extract_strided_slice %162 {offsets = [0, 24], sizes = [16, 8], strides = [1, 1]} : vector<16x32xf32> to vector<16x8xf32>
    %cst_98 = arith.constant dense<0.000000e+00> : vector<8x16xf32>
    %233 = tpu.matmul %230, %231, %cst_98 {dimension_numbers = #tpu.dot_dimension_numbers<[1], [1], [0], [0], [0, 0, 1, 0], [], []>} : vector<8x8xf32>, vector<16x8xf32>, vector<8x16xf32> -> vector<8x16xf32>
    %cst_99 = arith.constant 0.353553385 : f32
    %234 = vector.broadcast %cst_99 : f32 to vector<8x16xf32>
    %235 = arith.mulf %233, %234 : vector<8x16xf32>
    %236 = vector.broadcast %3 : vector<1x16xf32> to vector<8x16xf32>
    %237 = arith.addf %235, %236 : vector<8x16xf32>
    %cst_100 = arith.constant dense<0xFF800000> : vector<8xf32>
    %238 = vector.multi_reduction <maximumf>, %237, %cst_100 [1] : vector<8x16xf32> to vector<8xf32>
    %239 = vector.shape_cast %238 : vector<8xf32> to vector<8x1xf32>
    %240 = vector.broadcast %239 : vector<8x1xf32> to vector<8x16xf32>
    %241 = arith.subf %237, %240 : vector<8x16xf32>
    %242 = math.exp %241 : vector<8x16xf32>
    %cst_101 = arith.constant dense<0.000000e+00> : vector<8xf32>
    %243 = vector.multi_reduction <add>, %242, %cst_101 [1] : vector<8x16xf32> to vector<8xf32>
    %244 = vector.shape_cast %243 : vector<8xf32> to vector<8x1xf32>
    %245 = tpu.reciprocal %244 {approx = true} : vector<8x1xf32> -> vector<8x1xf32>
    %246 = vector.broadcast %245 : vector<8x1xf32> to vector<8x16xf32>
    %247 = arith.mulf %242, %246 : vector<8x16xf32>
    %cst_102 = arith.constant dense<0.000000e+00> : vector<8x8xf32>
    %248 = tpu.matmul %247, %232, %cst_102 {dimension_numbers = #tpu.dot_dimension_numbers<[1], [0], [0], [1], [0, 0, 1, 1], [], []>} : vector<8x16xf32>, vector<16x8xf32>, vector<8x8xf32> -> vector<8x8xf32>
    %249 = vector.extract_strided_slice %164 {offsets = [24, 0], sizes = [8, 32], strides = [1, 1]} : vector<32x32xf32> to vector<8x32xf32>
    %cst_103 = arith.constant dense<0.000000e+00> : vector<8x32xf32>
    %250 = tpu.matmul %248, %249, %cst_103 {dimension_numbers = #tpu.dot_dimension_numbers<[1], [0], [0], [1], [0, 0, 1, 1], [], []>} : vector<8x8xf32>, vector<8x32xf32>, vector<8x32xf32> -> vector<8x32xf32>
    %251 = arith.addf %229, %250 : vector<8x32xf32>
    %c0_104 = arith.constant 0 : index
    %c0_105 = arith.constant 0 : index
    %c0_106 = arith.constant 0 : index
    %252 = vector.load %arg19[%c0_104, %c0_105, %c0_106] : memref<2x1x32xf32, #tpu.memory_space<vmem>>, vector<1x1x32xf32>
    %253 = vector.shape_cast %252 : vector<1x1x32xf32> to vector<1x32xf32>
    %254 = vector.broadcast %253 : vector<1x32xf32> to vector<8x32xf32>
    %255 = arith.addf %251, %254 : vector<8x32xf32>
    %256 = arith.addf %255, %146 : vector<8x32xf32>
    %c0_107 = arith.constant 0 : index
    %c0_108 = arith.constant 0 : index
    %c0_109 = arith.constant 0 : index
    %257 = vector.load %arg20[%c0_107, %c0_108, %c0_109] : memref<2x1x32xf32, #tpu.memory_space<vmem>>, vector<1x1x32xf32>
    %258 = vector.shape_cast %257 : vector<1x1x32xf32> to vector<1x32xf32>
    %c0_110 = arith.constant 0 : index
    %c0_111 = arith.constant 0 : index
    %c0_112 = arith.constant 0 : index
    %259 = vector.load %arg21[%c0_110, %c0_111, %c0_112] : memref<2x1x32xf32, #tpu.memory_space<vmem>>, vector<1x1x32xf32>
    %260 = vector.shape_cast %259 : vector<1x1x32xf32> to vector<1x32xf32>
    %cst_113 = arith.constant dense<0.000000e+00> : vector<8xf32>
    %261 = vector.multi_reduction <add>, %256, %cst_113 [1] : vector<8x32xf32> to vector<8xf32>
    %262 = vector.shape_cast %261 : vector<8xf32> to vector<8x1xf32>
    %cst_114 = arith.constant 3.200000e+01 : f32
    %263 = vector.broadcast %cst_114 : f32 to vector<8x1xf32>
    %264 = arith.divf %262, %263 : vector<8x1xf32>
    %265 = vector.broadcast %264 : vector<8x1xf32> to vector<8x32xf32>
    %266 = arith.subf %256, %265 : vector<8x32xf32>
    %267 = arith.mulf %266, %266 : vector<8x32xf32>
    %cst_115 = arith.constant dense<0.000000e+00> : vector<8xf32>
    %268 = vector.multi_reduction <add>, %267, %cst_115 [1] : vector<8x32xf32> to vector<8xf32>
    %269 = vector.shape_cast %268 : vector<8xf32> to vector<8x1xf32>
    %cst_116 = arith.constant 3.200000e+01 : f32
    %270 = vector.broadcast %cst_116 : f32 to vector<8x1xf32>
    %271 = arith.divf %269, %270 : vector<8x1xf32>
    %cst_117 = arith.constant 9.99999996E-13 : f32
    %272 = vector.broadcast %cst_117 : f32 to vector<8x1xf32>
    %273 = arith.addf %271, %272 : vector<8x1xf32>
    %274 = math.rsqrt %273 : vector<8x1xf32>
    %275 = vector.broadcast %274 : vector<8x1xf32> to vector<8x32xf32>
    %276 = arith.mulf %266, %275 : vector<8x32xf32>
    %277 = vector.broadcast %258 : vector<1x32xf32> to vector<8x32xf32>
    %278 = arith.mulf %276, %277 : vector<8x32xf32>
    %279 = vector.broadcast %260 : vector<1x32xf32> to vector<8x32xf32>
    %280 = arith.addf %278, %279 : vector<8x32xf32>
    %c0_118 = arith.constant 0 : index
    %c0_119 = arith.constant 0 : index
    %c0_120 = arith.constant 0 : index
    %281 = vector.load %arg22[%c0_118, %c0_119, %c0_120] : memref<2x32x64xf32, #tpu.memory_space<vmem>>, vector<1x32x64xf32>
    %282 = vector.shape_cast %281 : vector<1x32x64xf32> to vector<32x64xf32>
    %cst_121 = arith.constant dense<0.000000e+00> : vector<8x64xf32>
    %283 = tpu.matmul %280, %282, %cst_121 {dimension_numbers = #tpu.dot_dimension_numbers<[1], [0], [0], [1], [0, 0, 1, 1], [], []>} : vector<8x32xf32>, vector<32x64xf32>, vector<8x64xf32> -> vector<8x64xf32>
    %c0_122 = arith.constant 0 : index
    %c0_123 = arith.constant 0 : index
    %c0_124 = arith.constant 0 : index
    %284 = vector.load %arg23[%c0_122, %c0_123, %c0_124] : memref<2x1x64xf32, #tpu.memory_space<vmem>>, vector<1x1x64xf32>
    %285 = vector.shape_cast %284 : vector<1x1x64xf32> to vector<1x64xf32>
    %286 = vector.broadcast %285 : vector<1x64xf32> to vector<8x64xf32>
    %287 = arith.addf %283, %286 : vector<8x64xf32>
    %cst_125 = arith.constant 5.000000e-01 : f32
    %288 = vector.broadcast %cst_125 : f32 to vector<8x64xf32>
    %289 = arith.mulf %288, %287 : vector<8x64xf32>
    %cst_126 = arith.constant 0.707106769 : f32
    %290 = vector.broadcast %cst_126 : f32 to vector<8x64xf32>
    %291 = arith.mulf %287, %290 : vector<8x64xf32>
    %292 = math.erf %291 : vector<8x64xf32>
    %cst_127 = arith.constant 1.000000e+00 : f32
    %293 = vector.broadcast %cst_127 : f32 to vector<8x64xf32>
    %294 = arith.addf %293, %292 : vector<8x64xf32>
    %295 = arith.mulf %289, %294 : vector<8x64xf32>
    %c0_128 = arith.constant 0 : index
    %c0_129 = arith.constant 0 : index
    %c0_130 = arith.constant 0 : index
    %296 = vector.load %arg24[%c0_128, %c0_129, %c0_130] : memref<2x64x32xf32, #tpu.memory_space<vmem>>, vector<1x64x32xf32>
    %297 = vector.shape_cast %296 : vector<1x64x32xf32> to vector<64x32xf32>
    %cst_131 = arith.constant dense<0.000000e+00> : vector<8x32xf32>
    %298 = tpu.matmul %295, %297, %cst_131 {dimension_numbers = #tpu.dot_dimension_numbers<[1], [0], [0], [1], [0, 0, 1, 1], [], []>} : vector<8x64xf32>, vector<64x32xf32>, vector<8x32xf32> -> vector<8x32xf32>
    %c0_132 = arith.constant 0 : index
    %c0_133 = arith.constant 0 : index
    %c0_134 = arith.constant 0 : index
    %299 = vector.load %arg25[%c0_132, %c0_133, %c0_134] : memref<2x1x32xf32, #tpu.memory_space<vmem>>, vector<1x1x32xf32>
    %300 = vector.shape_cast %299 : vector<1x1x32xf32> to vector<1x32xf32>
    %301 = vector.broadcast %300 : vector<1x32xf32> to vector<8x32xf32>
    %302 = arith.addf %298, %301 : vector<8x32xf32>
    %303 = arith.addf %302, %280 : vector<8x32xf32>
    %c0_135 = arith.constant 0 : index
    %c0_136 = arith.constant 0 : index
    %c0_137 = arith.constant 0 : index
    %304 = vector.load %arg26[%c0_135, %c0_136, %c0_137] : memref<2x1x32xf32, #tpu.memory_space<vmem>>, vector<1x1x32xf32>
    %305 = vector.shape_cast %304 : vector<1x1x32xf32> to vector<1x32xf32>
    %c0_138 = arith.constant 0 : index
    %c0_139 = arith.constant 0 : index
    %c0_140 = arith.constant 0 : index
    %306 = vector.load %arg27[%c0_138, %c0_139, %c0_140] : memref<2x1x32xf32, #tpu.memory_space<vmem>>, vector<1x1x32xf32>
    %307 = vector.shape_cast %306 : vector<1x1x32xf32> to vector<1x32xf32>
    %cst_141 = arith.constant dense<0.000000e+00> : vector<8xf32>
    %308 = vector.multi_reduction <add>, %303, %cst_141 [1] : vector<8x32xf32> to vector<8xf32>
    %309 = vector.shape_cast %308 : vector<8xf32> to vector<8x1xf32>
    %cst_142 = arith.constant 3.200000e+01 : f32
    %310 = vector.broadcast %cst_142 : f32 to vector<8x1xf32>
    %311 = arith.divf %309, %310 : vector<8x1xf32>
    %312 = vector.broadcast %311 : vector<8x1xf32> to vector<8x32xf32>
    %313 = arith.subf %303, %312 : vector<8x32xf32>
    %314 = arith.mulf %313, %313 : vector<8x32xf32>
    %cst_143 = arith.constant dense<0.000000e+00> : vector<8xf32>
    %315 = vector.multi_reduction <add>, %314, %cst_143 [1] : vector<8x32xf32> to vector<8xf32>
    %316 = vector.shape_cast %315 : vector<8xf32> to vector<8x1xf32>
    %cst_144 = arith.constant 3.200000e+01 : f32
    %317 = vector.broadcast %cst_144 : f32 to vector<8x1xf32>
    %318 = arith.divf %316, %317 : vector<8x1xf32>
    %cst_145 = arith.constant 9.99999996E-13 : f32
    %319 = vector.broadcast %cst_145 : f32 to vector<8x1xf32>
    %320 = arith.addf %318, %319 : vector<8x1xf32>
    %321 = math.rsqrt %320 : vector<8x1xf32>
    %322 = vector.broadcast %321 : vector<8x1xf32> to vector<8x32xf32>
    %323 = arith.mulf %313, %322 : vector<8x32xf32>
    %324 = vector.broadcast %305 : vector<1x32xf32> to vector<8x32xf32>
    %325 = arith.mulf %323, %324 : vector<8x32xf32>
    %326 = vector.broadcast %307 : vector<1x32xf32> to vector<8x32xf32>
    %327 = arith.addf %325, %326 : vector<8x32xf32>
    %c1 = arith.constant 1 : index
    %c0_146 = arith.constant 0 : index
    %c0_147 = arith.constant 0 : index
    %328 = vector.load %arg8[%c1, %c0_146, %c0_147] : memref<2x32x96xf32, #tpu.memory_space<vmem>>, vector<1x32x96xf32>
    %329 = vector.shape_cast %328 : vector<1x32x96xf32> to vector<32x96xf32>
    %cst_148 = arith.constant dense<0.000000e+00> : vector<8x96xf32>
    %330 = tpu.matmul %327, %329, %cst_148 {dimension_numbers = #tpu.dot_dimension_numbers<[1], [0], [0], [1], [0, 0, 1, 1], [], []>} : vector<8x32xf32>, vector<32x96xf32>, vector<8x96xf32> -> vector<8x96xf32>
    %c1_149 = arith.constant 1 : index
    %c0_150 = arith.constant 0 : index
    %c0_151 = arith.constant 0 : index
    %331 = vector.load %arg9[%c1_149, %c0_150, %c0_151] : memref<2x1x96xf32, #tpu.memory_space<vmem>>, vector<1x1x96xf32>
    %332 = vector.shape_cast %331 : vector<1x1x96xf32> to vector<1x96xf32>
    %333 = vector.broadcast %332 : vector<1x96xf32> to vector<8x96xf32>
    %334 = arith.addf %330, %333 : vector<8x96xf32>
    %335 = vector.extract_strided_slice %334 {offsets = [0, 0], sizes = [8, 32], strides = [1, 1]} : vector<8x96xf32> to vector<8x32xf32>
    %336 = vector.extract_strided_slice %334 {offsets = [0, 32], sizes = [8, 32], strides = [1, 1]} : vector<8x96xf32> to vector<8x32xf32>
    %337 = vector.extract_strided_slice %334 {offsets = [0, 64], sizes = [8, 32], strides = [1, 1]} : vector<8x96xf32> to vector<8x32xf32>
    %c1_152 = arith.constant 1 : index
    %c0_153 = arith.constant 0 : index
    %c0_154 = arith.constant 0 : index
    %338 = vector.load %arg10[%c1_152, %c0_153, %c0_154] : memref<2x32x32xf32, #tpu.memory_space<vmem>>, vector<1x32x32xf32>
    %339 = vector.shape_cast %338 : vector<1x32x32xf32> to vector<32x32xf32>
    %340 = vector.extract_strided_slice %335 {offsets = [0, 0], sizes = [8, 8], strides = [1, 1]} : vector<8x32xf32> to vector<8x8xf32>
    %341 = vector.extract_strided_slice %336 {offsets = [0, 0], sizes = [8, 8], strides = [1, 1]} : vector<8x32xf32> to vector<8x8xf32>
    %342 = vector.extract_strided_slice %337 {offsets = [0, 0], sizes = [8, 8], strides = [1, 1]} : vector<8x32xf32> to vector<8x8xf32>
    %cst_155 = arith.constant dense<0.000000e+00> : vector<8x8xf32>
    %343 = tpu.matmul %340, %341, %cst_155 {dimension_numbers = #tpu.dot_dimension_numbers<[1], [1], [0], [0], [0, 0, 1, 0], [], []>} : vector<8x8xf32>, vector<8x8xf32>, vector<8x8xf32> -> vector<8x8xf32>
    %cst_156 = arith.constant 0.353553385 : f32
    %344 = vector.broadcast %cst_156 : f32 to vector<8x8xf32>
    %345 = arith.mulf %343, %344 : vector<8x8xf32>
    %cst_157 = arith.constant dense<0xFF800000> : vector<8xf32>
    %346 = vector.multi_reduction <maximumf>, %345, %cst_157 [1] : vector<8x8xf32> to vector<8xf32>
    %347 = vector.shape_cast %346 : vector<8xf32> to vector<8x1xf32>
    %348 = vector.broadcast %347 : vector<8x1xf32> to vector<8x8xf32>
    %349 = arith.subf %345, %348 : vector<8x8xf32>
    %350 = math.exp %349 : vector<8x8xf32>
    %cst_158 = arith.constant dense<0.000000e+00> : vector<8xf32>
    %351 = vector.multi_reduction <add>, %350, %cst_158 [1] : vector<8x8xf32> to vector<8xf32>
    %352 = vector.shape_cast %351 : vector<8xf32> to vector<8x1xf32>
    %353 = tpu.reciprocal %352 {approx = true} : vector<8x1xf32> -> vector<8x1xf32>
    %354 = vector.broadcast %353 : vector<8x1xf32> to vector<8x8xf32>
    %355 = arith.mulf %350, %354 : vector<8x8xf32>
    %cst_159 = arith.constant dense<0.000000e+00> : vector<8x8xf32>
    %356 = tpu.matmul %355, %342, %cst_159 {dimension_numbers = #tpu.dot_dimension_numbers<[1], [0], [0], [1], [0, 0, 1, 1], [], []>} : vector<8x8xf32>, vector<8x8xf32>, vector<8x8xf32> -> vector<8x8xf32>
    %357 = vector.extract_strided_slice %339 {offsets = [0, 0], sizes = [8, 32], strides = [1, 1]} : vector<32x32xf32> to vector<8x32xf32>
    %cst_160 = arith.constant dense<0.000000e+00> : vector<8x32xf32>
    %358 = tpu.matmul %356, %357, %cst_160 {dimension_numbers = #tpu.dot_dimension_numbers<[1], [0], [0], [1], [0, 0, 1, 1], [], []>} : vector<8x8xf32>, vector<8x32xf32>, vector<8x32xf32> -> vector<8x32xf32>
    %359 = vector.extract_strided_slice %335 {offsets = [0, 8], sizes = [8, 8], strides = [1, 1]} : vector<8x32xf32> to vector<8x8xf32>
    %360 = vector.extract_strided_slice %336 {offsets = [0, 8], sizes = [8, 8], strides = [1, 1]} : vector<8x32xf32> to vector<8x8xf32>
    %361 = vector.extract_strided_slice %337 {offsets = [0, 8], sizes = [8, 8], strides = [1, 1]} : vector<8x32xf32> to vector<8x8xf32>
    %cst_161 = arith.constant dense<0.000000e+00> : vector<8x8xf32>
    %362 = tpu.matmul %359, %360, %cst_161 {dimension_numbers = #tpu.dot_dimension_numbers<[1], [1], [0], [0], [0, 0, 1, 0], [], []>} : vector<8x8xf32>, vector<8x8xf32>, vector<8x8xf32> -> vector<8x8xf32>
    %cst_162 = arith.constant 0.353553385 : f32
    %363 = vector.broadcast %cst_162 : f32 to vector<8x8xf32>
    %364 = arith.mulf %362, %363 : vector<8x8xf32>
    %cst_163 = arith.constant dense<0xFF800000> : vector<8xf32>
    %365 = vector.multi_reduction <maximumf>, %364, %cst_163 [1] : vector<8x8xf32> to vector<8xf32>
    %366 = vector.shape_cast %365 : vector<8xf32> to vector<8x1xf32>
    %367 = vector.broadcast %366 : vector<8x1xf32> to vector<8x8xf32>
    %368 = arith.subf %364, %367 : vector<8x8xf32>
    %369 = math.exp %368 : vector<8x8xf32>
    %cst_164 = arith.constant dense<0.000000e+00> : vector<8xf32>
    %370 = vector.multi_reduction <add>, %369, %cst_164 [1] : vector<8x8xf32> to vector<8xf32>
    %371 = vector.shape_cast %370 : vector<8xf32> to vector<8x1xf32>
    %372 = tpu.reciprocal %371 {approx = true} : vector<8x1xf32> -> vector<8x1xf32>
    %373 = vector.broadcast %372 : vector<8x1xf32> to vector<8x8xf32>
    %374 = arith.mulf %369, %373 : vector<8x8xf32>
    %cst_165 = arith.constant dense<0.000000e+00> : vector<8x8xf32>
    %375 = tpu.matmul %374, %361, %cst_165 {dimension_numbers = #tpu.dot_dimension_numbers<[1], [0], [0], [1], [0, 0, 1, 1], [], []>} : vector<8x8xf32>, vector<8x8xf32>, vector<8x8xf32> -> vector<8x8xf32>
    %376 = vector.extract_strided_slice %339 {offsets = [8, 0], sizes = [8, 32], strides = [1, 1]} : vector<32x32xf32> to vector<8x32xf32>
    %cst_166 = arith.constant dense<0.000000e+00> : vector<8x32xf32>
    %377 = tpu.matmul %375, %376, %cst_166 {dimension_numbers = #tpu.dot_dimension_numbers<[1], [0], [0], [1], [0, 0, 1, 1], [], []>} : vector<8x8xf32>, vector<8x32xf32>, vector<8x32xf32> -> vector<8x32xf32>
    %378 = arith.addf %358, %377 : vector<8x32xf32>
    %379 = vector.extract_strided_slice %335 {offsets = [0, 16], sizes = [8, 8], strides = [1, 1]} : vector<8x32xf32> to vector<8x8xf32>
    %380 = vector.extract_strided_slice %336 {offsets = [0, 16], sizes = [8, 8], strides = [1, 1]} : vector<8x32xf32> to vector<8x8xf32>
    %381 = vector.extract_strided_slice %337 {offsets = [0, 16], sizes = [8, 8], strides = [1, 1]} : vector<8x32xf32> to vector<8x8xf32>
    %cst_167 = arith.constant dense<0.000000e+00> : vector<8x8xf32>
    %382 = tpu.matmul %379, %380, %cst_167 {dimension_numbers = #tpu.dot_dimension_numbers<[1], [1], [0], [0], [0, 0, 1, 0], [], []>} : vector<8x8xf32>, vector<8x8xf32>, vector<8x8xf32> -> vector<8x8xf32>
    %cst_168 = arith.constant 0.353553385 : f32
    %383 = vector.broadcast %cst_168 : f32 to vector<8x8xf32>
    %384 = arith.mulf %382, %383 : vector<8x8xf32>
    %cst_169 = arith.constant dense<0xFF800000> : vector<8xf32>
    %385 = vector.multi_reduction <maximumf>, %384, %cst_169 [1] : vector<8x8xf32> to vector<8xf32>
    %386 = vector.shape_cast %385 : vector<8xf32> to vector<8x1xf32>
    %387 = vector.broadcast %386 : vector<8x1xf32> to vector<8x8xf32>
    %388 = arith.subf %384, %387 : vector<8x8xf32>
    %389 = math.exp %388 : vector<8x8xf32>
    %cst_170 = arith.constant dense<0.000000e+00> : vector<8xf32>
    %390 = vector.multi_reduction <add>, %389, %cst_170 [1] : vector<8x8xf32> to vector<8xf32>
    %391 = vector.shape_cast %390 : vector<8xf32> to vector<8x1xf32>
    %392 = tpu.reciprocal %391 {approx = true} : vector<8x1xf32> -> vector<8x1xf32>
    %393 = vector.broadcast %392 : vector<8x1xf32> to vector<8x8xf32>
    %394 = arith.mulf %389, %393 : vector<8x8xf32>
    %cst_171 = arith.constant dense<0.000000e+00> : vector<8x8xf32>
    %395 = tpu.matmul %394, %381, %cst_171 {dimension_numbers = #tpu.dot_dimension_numbers<[1], [0], [0], [1], [0, 0, 1, 1], [], []>} : vector<8x8xf32>, vector<8x8xf32>, vector<8x8xf32> -> vector<8x8xf32>
    %396 = vector.extract_strided_slice %339 {offsets = [16, 0], sizes = [8, 32], strides = [1, 1]} : vector<32x32xf32> to vector<8x32xf32>
    %cst_172 = arith.constant dense<0.000000e+00> : vector<8x32xf32>
    %397 = tpu.matmul %395, %396, %cst_172 {dimension_numbers = #tpu.dot_dimension_numbers<[1], [0], [0], [1], [0, 0, 1, 1], [], []>} : vector<8x8xf32>, vector<8x32xf32>, vector<8x32xf32> -> vector<8x32xf32>
    %398 = arith.addf %378, %397 : vector<8x32xf32>
    %399 = vector.extract_strided_slice %335 {offsets = [0, 24], sizes = [8, 8], strides = [1, 1]} : vector<8x32xf32> to vector<8x8xf32>
    %400 = vector.extract_strided_slice %336 {offsets = [0, 24], sizes = [8, 8], strides = [1, 1]} : vector<8x32xf32> to vector<8x8xf32>
    %401 = vector.extract_strided_slice %337 {offsets = [0, 24], sizes = [8, 8], strides = [1, 1]} : vector<8x32xf32> to vector<8x8xf32>
    %cst_173 = arith.constant dense<0.000000e+00> : vector<8x8xf32>
    %402 = tpu.matmul %399, %400, %cst_173 {dimension_numbers = #tpu.dot_dimension_numbers<[1], [1], [0], [0], [0, 0, 1, 0], [], []>} : vector<8x8xf32>, vector<8x8xf32>, vector<8x8xf32> -> vector<8x8xf32>
    %cst_174 = arith.constant 0.353553385 : f32
    %403 = vector.broadcast %cst_174 : f32 to vector<8x8xf32>
    %404 = arith.mulf %402, %403 : vector<8x8xf32>
    %cst_175 = arith.constant dense<0xFF800000> : vector<8xf32>
    %405 = vector.multi_reduction <maximumf>, %404, %cst_175 [1] : vector<8x8xf32> to vector<8xf32>
    %406 = vector.shape_cast %405 : vector<8xf32> to vector<8x1xf32>
    %407 = vector.broadcast %406 : vector<8x1xf32> to vector<8x8xf32>
    %408 = arith.subf %404, %407 : vector<8x8xf32>
    %409 = math.exp %408 : vector<8x8xf32>
    %cst_176 = arith.constant dense<0.000000e+00> : vector<8xf32>
    %410 = vector.multi_reduction <add>, %409, %cst_176 [1] : vector<8x8xf32> to vector<8xf32>
    %411 = vector.shape_cast %410 : vector<8xf32> to vector<8x1xf32>
    %412 = tpu.reciprocal %411 {approx = true} : vector<8x1xf32> -> vector<8x1xf32>
    %413 = vector.broadcast %412 : vector<8x1xf32> to vector<8x8xf32>
    %414 = arith.mulf %409, %413 : vector<8x8xf32>
    %cst_177 = arith.constant dense<0.000000e+00> : vector<8x8xf32>
    %415 = tpu.matmul %414, %401, %cst_177 {dimension_numbers = #tpu.dot_dimension_numbers<[1], [0], [0], [1], [0, 0, 1, 1], [], []>} : vector<8x8xf32>, vector<8x8xf32>, vector<8x8xf32> -> vector<8x8xf32>
    %416 = vector.extract_strided_slice %339 {offsets = [24, 0], sizes = [8, 32], strides = [1, 1]} : vector<32x32xf32> to vector<8x32xf32>
    %cst_178 = arith.constant dense<0.000000e+00> : vector<8x32xf32>
    %417 = tpu.matmul %415, %416, %cst_178 {dimension_numbers = #tpu.dot_dimension_numbers<[1], [0], [0], [1], [0, 0, 1, 1], [], []>} : vector<8x8xf32>, vector<8x32xf32>, vector<8x32xf32> -> vector<8x32xf32>
    %418 = arith.addf %398, %417 : vector<8x32xf32>
    %c1_179 = arith.constant 1 : index
    %c0_180 = arith.constant 0 : index
    %c0_181 = arith.constant 0 : index
    %419 = vector.load %arg11[%c1_179, %c0_180, %c0_181] : memref<2x1x32xf32, #tpu.memory_space<vmem>>, vector<1x1x32xf32>
    %420 = vector.shape_cast %419 : vector<1x1x32xf32> to vector<1x32xf32>
    %421 = vector.broadcast %420 : vector<1x32xf32> to vector<8x32xf32>
    %422 = arith.addf %418, %421 : vector<8x32xf32>
    %423 = arith.addf %422, %327 : vector<8x32xf32>
    %c1_182 = arith.constant 1 : index
    %c0_183 = arith.constant 0 : index
    %c0_184 = arith.constant 0 : index
    %424 = vector.load %arg12[%c1_182, %c0_183, %c0_184] : memref<2x1x32xf32, #tpu.memory_space<vmem>>, vector<1x1x32xf32>
    %425 = vector.shape_cast %424 : vector<1x1x32xf32> to vector<1x32xf32>
    %c1_185 = arith.constant 1 : index
    %c0_186 = arith.constant 0 : index
    %c0_187 = arith.constant 0 : index
    %426 = vector.load %arg13[%c1_185, %c0_186, %c0_187] : memref<2x1x32xf32, #tpu.memory_space<vmem>>, vector<1x1x32xf32>
    %427 = vector.shape_cast %426 : vector<1x1x32xf32> to vector<1x32xf32>
    %cst_188 = arith.constant dense<0.000000e+00> : vector<8xf32>
    %428 = vector.multi_reduction <add>, %423, %cst_188 [1] : vector<8x32xf32> to vector<8xf32>
    %429 = vector.shape_cast %428 : vector<8xf32> to vector<8x1xf32>
    %cst_189 = arith.constant 3.200000e+01 : f32
    %430 = vector.broadcast %cst_189 : f32 to vector<8x1xf32>
    %431 = arith.divf %429, %430 : vector<8x1xf32>
    %432 = vector.broadcast %431 : vector<8x1xf32> to vector<8x32xf32>
    %433 = arith.subf %423, %432 : vector<8x32xf32>
    %434 = arith.mulf %433, %433 : vector<8x32xf32>
    %cst_190 = arith.constant dense<0.000000e+00> : vector<8xf32>
    %435 = vector.multi_reduction <add>, %434, %cst_190 [1] : vector<8x32xf32> to vector<8xf32>
    %436 = vector.shape_cast %435 : vector<8xf32> to vector<8x1xf32>
    %cst_191 = arith.constant 3.200000e+01 : f32
    %437 = vector.broadcast %cst_191 : f32 to vector<8x1xf32>
    %438 = arith.divf %436, %437 : vector<8x1xf32>
    %cst_192 = arith.constant 9.99999996E-13 : f32
    %439 = vector.broadcast %cst_192 : f32 to vector<8x1xf32>
    %440 = arith.addf %438, %439 : vector<8x1xf32>
    %441 = math.rsqrt %440 : vector<8x1xf32>
    %442 = vector.broadcast %441 : vector<8x1xf32> to vector<8x32xf32>
    %443 = arith.mulf %433, %442 : vector<8x32xf32>
    %444 = vector.broadcast %425 : vector<1x32xf32> to vector<8x32xf32>
    %445 = arith.mulf %443, %444 : vector<8x32xf32>
    %446 = vector.broadcast %427 : vector<1x32xf32> to vector<8x32xf32>
    %447 = arith.addf %445, %446 : vector<8x32xf32>
    %c1_193 = arith.constant 1 : index
    %c0_194 = arith.constant 0 : index
    %c0_195 = arith.constant 0 : index
    %448 = vector.load %arg14[%c1_193, %c0_194, %c0_195] : memref<2x32x32xf32, #tpu.memory_space<vmem>>, vector<1x32x32xf32>
    %449 = vector.shape_cast %448 : vector<1x32x32xf32> to vector<32x32xf32>
    %cst_196 = arith.constant dense<0.000000e+00> : vector<8x32xf32>
    %450 = tpu.matmul %447, %449, %cst_196 {dimension_numbers = #tpu.dot_dimension_numbers<[1], [0], [0], [1], [0, 0, 1, 1], [], []>} : vector<8x32xf32>, vector<32x32xf32>, vector<8x32xf32> -> vector<8x32xf32>
    %c1_197 = arith.constant 1 : index
    %c0_198 = arith.constant 0 : index
    %c0_199 = arith.constant 0 : index
    %451 = vector.load %arg15[%c1_197, %c0_198, %c0_199] : memref<2x1x32xf32, #tpu.memory_space<vmem>>, vector<1x1x32xf32>
    %452 = vector.shape_cast %451 : vector<1x1x32xf32> to vector<1x32xf32>
    %453 = vector.broadcast %452 : vector<1x32xf32> to vector<8x32xf32>
    %454 = arith.addf %450, %453 : vector<8x32xf32>
    %c1_200 = arith.constant 1 : index
    %c0_201 = arith.constant 0 : index
    %c0_202 = arith.constant 0 : index
    %455 = vector.load %arg16[%c1_200, %c0_201, %c0_202] : memref<2x32x64xf32, #tpu.memory_space<vmem>>, vector<1x32x64xf32>
    %456 = vector.shape_cast %455 : vector<1x32x64xf32> to vector<32x64xf32>
    %cst_203 = arith.constant dense<0.000000e+00> : vector<16x64xf32>
    %457 = tpu.matmul %1, %456, %cst_203 {dimension_numbers = #tpu.dot_dimension_numbers<[1], [0], [0], [1], [0, 0, 1, 1], [], []>} : vector<16x32xf32>, vector<32x64xf32>, vector<16x64xf32> -> vector<16x64xf32>
    %c1_204 = arith.constant 1 : index
    %c0_205 = arith.constant 0 : index
    %c0_206 = arith.constant 0 : index
    %458 = vector.load %arg17[%c1_204, %c0_205, %c0_206] : memref<2x1x64xf32, #tpu.memory_space<vmem>>, vector<1x1x64xf32>
    %459 = vector.shape_cast %458 : vector<1x1x64xf32> to vector<1x64xf32>
    %460 = vector.broadcast %459 : vector<1x64xf32> to vector<16x64xf32>
    %461 = arith.addf %457, %460 : vector<16x64xf32>
    %462 = vector.extract_strided_slice %461 {offsets = [0, 0], sizes = [16, 32], strides = [1, 1]} : vector<16x64xf32> to vector<16x32xf32>
    %463 = vector.extract_strided_slice %461 {offsets = [0, 32], sizes = [16, 32], strides = [1, 1]} : vector<16x64xf32> to vector<16x32xf32>
    %c1_207 = arith.constant 1 : index
    %c0_208 = arith.constant 0 : index
    %c0_209 = arith.constant 0 : index
    %464 = vector.load %arg18[%c1_207, %c0_208, %c0_209] : memref<2x32x32xf32, #tpu.memory_space<vmem>>, vector<1x32x32xf32>
    %465 = vector.shape_cast %464 : vector<1x32x32xf32> to vector<32x32xf32>
    %466 = vector.extract_strided_slice %454 {offsets = [0, 0], sizes = [8, 8], strides = [1, 1]} : vector<8x32xf32> to vector<8x8xf32>
    %467 = vector.extract_strided_slice %462 {offsets = [0, 0], sizes = [16, 8], strides = [1, 1]} : vector<16x32xf32> to vector<16x8xf32>
    %468 = vector.extract_strided_slice %463 {offsets = [0, 0], sizes = [16, 8], strides = [1, 1]} : vector<16x32xf32> to vector<16x8xf32>
    %cst_210 = arith.constant dense<0.000000e+00> : vector<8x16xf32>
    %469 = tpu.matmul %466, %467, %cst_210 {dimension_numbers = #tpu.dot_dimension_numbers<[1], [1], [0], [0], [0, 0, 1, 0], [], []>} : vector<8x8xf32>, vector<16x8xf32>, vector<8x16xf32> -> vector<8x16xf32>
    %cst_211 = arith.constant 0.353553385 : f32
    %470 = vector.broadcast %cst_211 : f32 to vector<8x16xf32>
    %471 = arith.mulf %469, %470 : vector<8x16xf32>
    %472 = vector.broadcast %3 : vector<1x16xf32> to vector<8x16xf32>
    %473 = arith.addf %471, %472 : vector<8x16xf32>
    %cst_212 = arith.constant dense<0xFF800000> : vector<8xf32>
    %474 = vector.multi_reduction <maximumf>, %473, %cst_212 [1] : vector<8x16xf32> to vector<8xf32>
    %475 = vector.shape_cast %474 : vector<8xf32> to vector<8x1xf32>
    %476 = vector.broadcast %475 : vector<8x1xf32> to vector<8x16xf32>
    %477 = arith.subf %473, %476 : vector<8x16xf32>
    %478 = math.exp %477 : vector<8x16xf32>
    %cst_213 = arith.constant dense<0.000000e+00> : vector<8xf32>
    %479 = vector.multi_reduction <add>, %478, %cst_213 [1] : vector<8x16xf32> to vector<8xf32>
    %480 = vector.shape_cast %479 : vector<8xf32> to vector<8x1xf32>
    %481 = tpu.reciprocal %480 {approx = true} : vector<8x1xf32> -> vector<8x1xf32>
    %482 = vector.broadcast %481 : vector<8x1xf32> to vector<8x16xf32>
    %483 = arith.mulf %478, %482 : vector<8x16xf32>
    %cst_214 = arith.constant dense<0.000000e+00> : vector<8x8xf32>
    %484 = tpu.matmul %483, %468, %cst_214 {dimension_numbers = #tpu.dot_dimension_numbers<[1], [0], [0], [1], [0, 0, 1, 1], [], []>} : vector<8x16xf32>, vector<16x8xf32>, vector<8x8xf32> -> vector<8x8xf32>
    %485 = vector.extract_strided_slice %465 {offsets = [0, 0], sizes = [8, 32], strides = [1, 1]} : vector<32x32xf32> to vector<8x32xf32>
    %cst_215 = arith.constant dense<0.000000e+00> : vector<8x32xf32>
    %486 = tpu.matmul %484, %485, %cst_215 {dimension_numbers = #tpu.dot_dimension_numbers<[1], [0], [0], [1], [0, 0, 1, 1], [], []>} : vector<8x8xf32>, vector<8x32xf32>, vector<8x32xf32> -> vector<8x32xf32>
    %487 = vector.extract_strided_slice %454 {offsets = [0, 8], sizes = [8, 8], strides = [1, 1]} : vector<8x32xf32> to vector<8x8xf32>
    %488 = vector.extract_strided_slice %462 {offsets = [0, 8], sizes = [16, 8], strides = [1, 1]} : vector<16x32xf32> to vector<16x8xf32>
    %489 = vector.extract_strided_slice %463 {offsets = [0, 8], sizes = [16, 8], strides = [1, 1]} : vector<16x32xf32> to vector<16x8xf32>
    %cst_216 = arith.constant dense<0.000000e+00> : vector<8x16xf32>
    %490 = tpu.matmul %487, %488, %cst_216 {dimension_numbers = #tpu.dot_dimension_numbers<[1], [1], [0], [0], [0, 0, 1, 0], [], []>} : vector<8x8xf32>, vector<16x8xf32>, vector<8x16xf32> -> vector<8x16xf32>
    %cst_217 = arith.constant 0.353553385 : f32
    %491 = vector.broadcast %cst_217 : f32 to vector<8x16xf32>
    %492 = arith.mulf %490, %491 : vector<8x16xf32>
    %493 = vector.broadcast %3 : vector<1x16xf32> to vector<8x16xf32>
    %494 = arith.addf %492, %493 : vector<8x16xf32>
    %cst_218 = arith.constant dense<0xFF800000> : vector<8xf32>
    %495 = vector.multi_reduction <maximumf>, %494, %cst_218 [1] : vector<8x16xf32> to vector<8xf32>
    %496 = vector.shape_cast %495 : vector<8xf32> to vector<8x1xf32>
    %497 = vector.broadcast %496 : vector<8x1xf32> to vector<8x16xf32>
    %498 = arith.subf %494, %497 : vector<8x16xf32>
    %499 = math.exp %498 : vector<8x16xf32>
    %cst_219 = arith.constant dense<0.000000e+00> : vector<8xf32>
    %500 = vector.multi_reduction <add>, %499, %cst_219 [1] : vector<8x16xf32> to vector<8xf32>
    %501 = vector.shape_cast %500 : vector<8xf32> to vector<8x1xf32>
    %502 = tpu.reciprocal %501 {approx = true} : vector<8x1xf32> -> vector<8x1xf32>
    %503 = vector.broadcast %502 : vector<8x1xf32> to vector<8x16xf32>
    %504 = arith.mulf %499, %503 : vector<8x16xf32>
    %cst_220 = arith.constant dense<0.000000e+00> : vector<8x8xf32>
    %505 = tpu.matmul %504, %489, %cst_220 {dimension_numbers = #tpu.dot_dimension_numbers<[1], [0], [0], [1], [0, 0, 1, 1], [], []>} : vector<8x16xf32>, vector<16x8xf32>, vector<8x8xf32> -> vector<8x8xf32>
    %506 = vector.extract_strided_slice %465 {offsets = [8, 0], sizes = [8, 32], strides = [1, 1]} : vector<32x32xf32> to vector<8x32xf32>
    %cst_221 = arith.constant dense<0.000000e+00> : vector<8x32xf32>
    %507 = tpu.matmul %505, %506, %cst_221 {dimension_numbers = #tpu.dot_dimension_numbers<[1], [0], [0], [1], [0, 0, 1, 1], [], []>} : vector<8x8xf32>, vector<8x32xf32>, vector<8x32xf32> -> vector<8x32xf32>
    %508 = arith.addf %486, %507 : vector<8x32xf32>
    %509 = vector.extract_strided_slice %454 {offsets = [0, 16], sizes = [8, 8], strides = [1, 1]} : vector<8x32xf32> to vector<8x8xf32>
    %510 = vector.extract_strided_slice %462 {offsets = [0, 16], sizes = [16, 8], strides = [1, 1]} : vector<16x32xf32> to vector<16x8xf32>
    %511 = vector.extract_strided_slice %463 {offsets = [0, 16], sizes = [16, 8], strides = [1, 1]} : vector<16x32xf32> to vector<16x8xf32>
    %cst_222 = arith.constant dense<0.000000e+00> : vector<8x16xf32>
    %512 = tpu.matmul %509, %510, %cst_222 {dimension_numbers = #tpu.dot_dimension_numbers<[1], [1], [0], [0], [0, 0, 1, 0], [], []>} : vector<8x8xf32>, vector<16x8xf32>, vector<8x16xf32> -> vector<8x16xf32>
    %cst_223 = arith.constant 0.353553385 : f32
    %513 = vector.broadcast %cst_223 : f32 to vector<8x16xf32>
    %514 = arith.mulf %512, %513 : vector<8x16xf32>
    %515 = vector.broadcast %3 : vector<1x16xf32> to vector<8x16xf32>
    %516 = arith.addf %514, %515 : vector<8x16xf32>
    %cst_224 = arith.constant dense<0xFF800000> : vector<8xf32>
    %517 = vector.multi_reduction <maximumf>, %516, %cst_224 [1] : vector<8x16xf32> to vector<8xf32>
    %518 = vector.shape_cast %517 : vector<8xf32> to vector<8x1xf32>
    %519 = vector.broadcast %518 : vector<8x1xf32> to vector<8x16xf32>
    %520 = arith.subf %516, %519 : vector<8x16xf32>
    %521 = math.exp %520 : vector<8x16xf32>
    %cst_225 = arith.constant dense<0.000000e+00> : vector<8xf32>
    %522 = vector.multi_reduction <add>, %521, %cst_225 [1] : vector<8x16xf32> to vector<8xf32>
    %523 = vector.shape_cast %522 : vector<8xf32> to vector<8x1xf32>
    %524 = tpu.reciprocal %523 {approx = true} : vector<8x1xf32> -> vector<8x1xf32>
    %525 = vector.broadcast %524 : vector<8x1xf32> to vector<8x16xf32>
    %526 = arith.mulf %521, %525 : vector<8x16xf32>
    %cst_226 = arith.constant dense<0.000000e+00> : vector<8x8xf32>
    %527 = tpu.matmul %526, %511, %cst_226 {dimension_numbers = #tpu.dot_dimension_numbers<[1], [0], [0], [1], [0, 0, 1, 1], [], []>} : vector<8x16xf32>, vector<16x8xf32>, vector<8x8xf32> -> vector<8x8xf32>
    %528 = vector.extract_strided_slice %465 {offsets = [16, 0], sizes = [8, 32], strides = [1, 1]} : vector<32x32xf32> to vector<8x32xf32>
    %cst_227 = arith.constant dense<0.000000e+00> : vector<8x32xf32>
    %529 = tpu.matmul %527, %528, %cst_227 {dimension_numbers = #tpu.dot_dimension_numbers<[1], [0], [0], [1], [0, 0, 1, 1], [], []>} : vector<8x8xf32>, vector<8x32xf32>, vector<8x32xf32> -> vector<8x32xf32>
    %530 = arith.addf %508, %529 : vector<8x32xf32>
    %531 = vector.extract_strided_slice %454 {offsets = [0, 24], sizes = [8, 8], strides = [1, 1]} : vector<8x32xf32> to vector<8x8xf32>
    %532 = vector.extract_strided_slice %462 {offsets = [0, 24], sizes = [16, 8], strides = [1, 1]} : vector<16x32xf32> to vector<16x8xf32>
    %533 = vector.extract_strided_slice %463 {offsets = [0, 24], sizes = [16, 8], strides = [1, 1]} : vector<16x32xf32> to vector<16x8xf32>
    %cst_228 = arith.constant dense<0.000000e+00> : vector<8x16xf32>
    %534 = tpu.matmul %531, %532, %cst_228 {dimension_numbers = #tpu.dot_dimension_numbers<[1], [1], [0], [0], [0, 0, 1, 0], [], []>} : vector<8x8xf32>, vector<16x8xf32>, vector<8x16xf32> -> vector<8x16xf32>
    %cst_229 = arith.constant 0.353553385 : f32
    %535 = vector.broadcast %cst_229 : f32 to vector<8x16xf32>
    %536 = arith.mulf %534, %535 : vector<8x16xf32>
    %537 = vector.broadcast %3 : vector<1x16xf32> to vector<8x16xf32>
    %538 = arith.addf %536, %537 : vector<8x16xf32>
    %cst_230 = arith.constant dense<0xFF800000> : vector<8xf32>
    %539 = vector.multi_reduction <maximumf>, %538, %cst_230 [1] : vector<8x16xf32> to vector<8xf32>
    %540 = vector.shape_cast %539 : vector<8xf32> to vector<8x1xf32>
    %541 = vector.broadcast %540 : vector<8x1xf32> to vector<8x16xf32>
    %542 = arith.subf %538, %541 : vector<8x16xf32>
    %543 = math.exp %542 : vector<8x16xf32>
    %cst_231 = arith.constant dense<0.000000e+00> : vector<8xf32>
    %544 = vector.multi_reduction <add>, %543, %cst_231 [1] : vector<8x16xf32> to vector<8xf32>
    %545 = vector.shape_cast %544 : vector<8xf32> to vector<8x1xf32>
    %546 = tpu.reciprocal %545 {approx = true} : vector<8x1xf32> -> vector<8x1xf32>
    %547 = vector.broadcast %546 : vector<8x1xf32> to vector<8x16xf32>
    %548 = arith.mulf %543, %547 : vector<8x16xf32>
    %cst_232 = arith.constant dense<0.000000e+00> : vector<8x8xf32>
    %549 = tpu.matmul %548, %533, %cst_232 {dimension_numbers = #tpu.dot_dimension_numbers<[1], [0], [0], [1], [0, 0, 1, 1], [], []>} : vector<8x16xf32>, vector<16x8xf32>, vector<8x8xf32> -> vector<8x8xf32>
    %550 = vector.extract_strided_slice %465 {offsets = [24, 0], sizes = [8, 32], strides = [1, 1]} : vector<32x32xf32> to vector<8x32xf32>
    %cst_233 = arith.constant dense<0.000000e+00> : vector<8x32xf32>
    %551 = tpu.matmul %549, %550, %cst_233 {dimension_numbers = #tpu.dot_dimension_numbers<[1], [0], [0], [1], [0, 0, 1, 1], [], []>} : vector<8x8xf32>, vector<8x32xf32>, vector<8x32xf32> -> vector<8x32xf32>
    %552 = arith.addf %530, %551 : vector<8x32xf32>
    %c1_234 = arith.constant 1 : index
    %c0_235 = arith.constant 0 : index
    %c0_236 = arith.constant 0 : index
    %553 = vector.load %arg19[%c1_234, %c0_235, %c0_236] : memref<2x1x32xf32, #tpu.memory_space<vmem>>, vector<1x1x32xf32>
    %554 = vector.shape_cast %553 : vector<1x1x32xf32> to vector<1x32xf32>
    %555 = vector.broadcast %554 : vector<1x32xf32> to vector<8x32xf32>
    %556 = arith.addf %552, %555 : vector<8x32xf32>
    %557 = arith.addf %556, %447 : vector<8x32xf32>
    %c1_237 = arith.constant 1 : index
    %c0_238 = arith.constant 0 : index
    %c0_239 = arith.constant 0 : index
    %558 = vector.load %arg20[%c1_237, %c0_238, %c0_239] : memref<2x1x32xf32, #tpu.memory_space<vmem>>, vector<1x1x32xf32>
    %559 = vector.shape_cast %558 : vector<1x1x32xf32> to vector<1x32xf32>
    %c1_240 = arith.constant 1 : index
    %c0_241 = arith.constant 0 : index
    %c0_242 = arith.constant 0 : index
    %560 = vector.load %arg21[%c1_240, %c0_241, %c0_242] : memref<2x1x32xf32, #tpu.memory_space<vmem>>, vector<1x1x32xf32>
    %561 = vector.shape_cast %560 : vector<1x1x32xf32> to vector<1x32xf32>
    %cst_243 = arith.constant dense<0.000000e+00> : vector<8xf32>
    %562 = vector.multi_reduction <add>, %557, %cst_243 [1] : vector<8x32xf32> to vector<8xf32>
    %563 = vector.shape_cast %562 : vector<8xf32> to vector<8x1xf32>
    %cst_244 = arith.constant 3.200000e+01 : f32
    %564 = vector.broadcast %cst_244 : f32 to vector<8x1xf32>
    %565 = arith.divf %563, %564 : vector<8x1xf32>
    %566 = vector.broadcast %565 : vector<8x1xf32> to vector<8x32xf32>
    %567 = arith.subf %557, %566 : vector<8x32xf32>
    %568 = arith.mulf %567, %567 : vector<8x32xf32>
    %cst_245 = arith.constant dense<0.000000e+00> : vector<8xf32>
    %569 = vector.multi_reduction <add>, %568, %cst_245 [1] : vector<8x32xf32> to vector<8xf32>
    %570 = vector.shape_cast %569 : vector<8xf32> to vector<8x1xf32>
    %cst_246 = arith.constant 3.200000e+01 : f32
    %571 = vector.broadcast %cst_246 : f32 to vector<8x1xf32>
    %572 = arith.divf %570, %571 : vector<8x1xf32>
    %cst_247 = arith.constant 9.99999996E-13 : f32
    %573 = vector.broadcast %cst_247 : f32 to vector<8x1xf32>
    %574 = arith.addf %572, %573 : vector<8x1xf32>
    %575 = math.rsqrt %574 : vector<8x1xf32>
    %576 = vector.broadcast %575 : vector<8x1xf32> to vector<8x32xf32>
    %577 = arith.mulf %567, %576 : vector<8x32xf32>
    %578 = vector.broadcast %559 : vector<1x32xf32> to vector<8x32xf32>
    %579 = arith.mulf %577, %578 : vector<8x32xf32>
    %580 = vector.broadcast %561 : vector<1x32xf32> to vector<8x32xf32>
    %581 = arith.addf %579, %580 : vector<8x32xf32>
    %c1_248 = arith.constant 1 : index
    %c0_249 = arith.constant 0 : index
    %c0_250 = arith.constant 0 : index
    %582 = vector.load %arg22[%c1_248, %c0_249, %c0_250] : memref<2x32x64xf32, #tpu.memory_space<vmem>>, vector<1x32x64xf32>
    %583 = vector.shape_cast %582 : vector<1x32x64xf32> to vector<32x64xf32>
    %cst_251 = arith.constant dense<0.000000e+00> : vector<8x64xf32>
    %584 = tpu.matmul %581, %583, %cst_251 {dimension_numbers = #tpu.dot_dimension_numbers<[1], [0], [0], [1], [0, 0, 1, 1], [], []>} : vector<8x32xf32>, vector<32x64xf32>, vector<8x64xf32> -> vector<8x64xf32>
    %c1_252 = arith.constant 1 : index
    %c0_253 = arith.constant 0 : index
    %c0_254 = arith.constant 0 : index
    %585 = vector.load %arg23[%c1_252, %c0_253, %c0_254] : memref<2x1x64xf32, #tpu.memory_space<vmem>>, vector<1x1x64xf32>
    %586 = vector.shape_cast %585 : vector<1x1x64xf32> to vector<1x64xf32>
    %587 = vector.broadcast %586 : vector<1x64xf32> to vector<8x64xf32>
    %588 = arith.addf %584, %587 : vector<8x64xf32>
    %cst_255 = arith.constant 5.000000e-01 : f32
    %589 = vector.broadcast %cst_255 : f32 to vector<8x64xf32>
    %590 = arith.mulf %589, %588 : vector<8x64xf32>
    %cst_256 = arith.constant 0.707106769 : f32
    %591 = vector.broadcast %cst_256 : f32 to vector<8x64xf32>
    %592 = arith.mulf %588, %591 : vector<8x64xf32>
    %593 = math.erf %592 : vector<8x64xf32>
    %cst_257 = arith.constant 1.000000e+00 : f32
    %594 = vector.broadcast %cst_257 : f32 to vector<8x64xf32>
    %595 = arith.addf %594, %593 : vector<8x64xf32>
    %596 = arith.mulf %590, %595 : vector<8x64xf32>
    %c1_258 = arith.constant 1 : index
    %c0_259 = arith.constant 0 : index
    %c0_260 = arith.constant 0 : index
    %597 = vector.load %arg24[%c1_258, %c0_259, %c0_260] : memref<2x64x32xf32, #tpu.memory_space<vmem>>, vector<1x64x32xf32>
    %598 = vector.shape_cast %597 : vector<1x64x32xf32> to vector<64x32xf32>
    %cst_261 = arith.constant dense<0.000000e+00> : vector<8x32xf32>
    %599 = tpu.matmul %596, %598, %cst_261 {dimension_numbers = #tpu.dot_dimension_numbers<[1], [0], [0], [1], [0, 0, 1, 1], [], []>} : vector<8x64xf32>, vector<64x32xf32>, vector<8x32xf32> -> vector<8x32xf32>
    %c1_262 = arith.constant 1 : index
    %c0_263 = arith.constant 0 : index
    %c0_264 = arith.constant 0 : index
    %600 = vector.load %arg25[%c1_262, %c0_263, %c0_264] : memref<2x1x32xf32, #tpu.memory_space<vmem>>, vector<1x1x32xf32>
    %601 = vector.shape_cast %600 : vector<1x1x32xf32> to vector<1x32xf32>
    %602 = vector.broadcast %601 : vector<1x32xf32> to vector<8x32xf32>
    %603 = arith.addf %599, %602 : vector<8x32xf32>
    %604 = arith.addf %603, %581 : vector<8x32xf32>
    %c1_265 = arith.constant 1 : index
    %c0_266 = arith.constant 0 : index
    %c0_267 = arith.constant 0 : index
    %605 = vector.load %arg26[%c1_265, %c0_266, %c0_267] : memref<2x1x32xf32, #tpu.memory_space<vmem>>, vector<1x1x32xf32>
    %606 = vector.shape_cast %605 : vector<1x1x32xf32> to vector<1x32xf32>
    %c1_268 = arith.constant 1 : index
    %c0_269 = arith.constant 0 : index
    %c0_270 = arith.constant 0 : index
    %607 = vector.load %arg27[%c1_268, %c0_269, %c0_270] : memref<2x1x32xf32, #tpu.memory_space<vmem>>, vector<1x1x32xf32>
    %608 = vector.shape_cast %607 : vector<1x1x32xf32> to vector<1x32xf32>
    %cst_271 = arith.constant dense<0.000000e+00> : vector<8xf32>
    %609 = vector.multi_reduction <add>, %604, %cst_271 [1] : vector<8x32xf32> to vector<8xf32>
    %610 = vector.shape_cast %609 : vector<8xf32> to vector<8x1xf32>
    %cst_272 = arith.constant 3.200000e+01 : f32
    %611 = vector.broadcast %cst_272 : f32 to vector<8x1xf32>
    %612 = arith.divf %610, %611 : vector<8x1xf32>
    %613 = vector.broadcast %612 : vector<8x1xf32> to vector<8x32xf32>
    %614 = arith.subf %604, %613 : vector<8x32xf32>
    %615 = arith.mulf %614, %614 : vector<8x32xf32>
    %cst_273 = arith.constant dense<0.000000e+00> : vector<8xf32>
    %616 = vector.multi_reduction <add>, %615, %cst_273 [1] : vector<8x32xf32> to vector<8xf32>
    %617 = vector.shape_cast %616 : vector<8xf32> to vector<8x1xf32>
    %cst_274 = arith.constant 3.200000e+01 : f32
    %618 = vector.broadcast %cst_274 : f32 to vector<8x1xf32>
    %619 = arith.divf %617, %618 : vector<8x1xf32>
    %cst_275 = arith.constant 9.99999996E-13 : f32
    %620 = vector.broadcast %cst_275 : f32 to vector<8x1xf32>
    %621 = arith.addf %619, %620 : vector<8x1xf32>
    %622 = math.rsqrt %621 : vector<8x1xf32>
    %623 = vector.broadcast %622 : vector<8x1xf32> to vector<8x32xf32>
    %624 = arith.mulf %614, %623 : vector<8x32xf32>
    %625 = vector.broadcast %606 : vector<1x32xf32> to vector<8x32xf32>
    %626 = arith.mulf %624, %625 : vector<8x32xf32>
    %627 = vector.broadcast %608 : vector<1x32xf32> to vector<8x32xf32>
    %628 = arith.addf %626, %627 : vector<8x32xf32>
    %c0_276 = arith.constant 0 : index
    %c0_277 = arith.constant 0 : index
    %c0_278 = arith.constant 0 : index
    %629 = vector.load %arg35[%c0_276, %c0_277, %c0_278] : memref<1x8x32xf32, #tpu.memory_space<vmem>>, vector<1x8x32xf32>
    %630 = vector.shape_cast %629 : vector<1x8x32xf32> to vector<8x32xf32>
    %631 = vector.shape_cast %628 : vector<8x32xf32> to vector<1x8x32xf32>
    tpu.vector_store %arg35[%c0_276, %c0_277, %c0_278], %631 {strides = array<i32>} : memref<1x8x32xf32, #tpu.memory_space<vmem>>, vector<1x8x32xf32>,
    %c0_279 = arith.constant 0 : index
    %c0_280 = arith.constant 0 : index
    %632 = vector.load %arg28[%c0_279, %c0_280] : memref<32x5xf32, #tpu.memory_space<vmem>>, vector<32x5xf32>
    %cst_281 = arith.constant dense<0.000000e+00> : vector<8x5xf32>
    %633 = tpu.matmul %628, %632, %cst_281 {dimension_numbers = #tpu.dot_dimension_numbers<[1], [0], [0], [1], [0, 0, 1, 1], [], []>} : vector<8x32xf32>, vector<32x5xf32>, vector<8x5xf32> -> vector<8x5xf32>
    %c0_282 = arith.constant 0 : index
    %c0_283 = arith.constant 0 : index
    %634 = vector.load %arg29[%c0_282, %c0_283] : memref<1x5xf32, #tpu.memory_space<vmem>>, vector<1x5xf32>
    %635 = vector.broadcast %634 : vector<1x5xf32> to vector<8x5xf32>
    %636 = arith.addf %633, %635 : vector<8x5xf32>
    %c0_284 = arith.constant 0 : index
    %c0_285 = arith.constant 0 : index
    %c0_286 = arith.constant 0 : index
    %637 = vector.load %arg36[%c0_284, %c0_285, %c0_286] : memref<1x8x5xf32, #tpu.memory_space<vmem>>, vector<1x8x5xf32>
    %638 = vector.shape_cast %637 : vector<1x8x5xf32> to vector<8x5xf32>
    %639 = vector.shape_cast %636 : vector<8x5xf32> to vector<1x8x5xf32>
    tpu.vector_store %arg36[%c0_284, %c0_285, %c0_286], %639 {strides = array<i32>} : memref<1x8x5xf32, #tpu.memory_space<vmem>>, vector<1x8x5xf32>,
    %c0_287 = arith.constant 0 : index
    %c0_288 = arith.constant 0 : index
    %640 = vector.load %arg30[%c0_287, %c0_288] : memref<32x256xf32, #tpu.memory_space<vmem>>, vector<32x256xf32>
    %cst_289 = arith.constant dense<0.000000e+00> : vector<8x256xf32>
    %641 = tpu.matmul %628, %640, %cst_289 {dimension_numbers = #tpu.dot_dimension_numbers<[1], [0], [0], [1], [0, 0, 1, 1], [], []>} : vector<8x32xf32>, vector<32x256xf32>, vector<8x256xf32> -> vector<8x256xf32>
    %c0_290 = arith.constant 0 : index
    %c0_291 = arith.constant 0 : index
    %642 = vector.load %arg31[%c0_290, %c0_291] : memref<1x256xf32, #tpu.memory_space<vmem>>, vector<1x256xf32>
    %643 = vector.broadcast %642 : vector<1x256xf32> to vector<8x256xf32>
    %644 = arith.addf %641, %643 : vector<8x256xf32>
    %c0_292 = arith.constant 0 : index
    %c0_293 = arith.constant 0 : index
    %645 = vector.load %arg32[%c0_292, %c0_293] : memref<32x256xf32, #tpu.memory_space<vmem>>, vector<32x256xf32>
    %cst_294 = arith.constant dense<0.000000e+00> : vector<16x256xf32>
    %646 = tpu.matmul %1, %645, %cst_294 {dimension_numbers = #tpu.dot_dimension_numbers<[1], [0], [0], [1], [0, 0, 1, 1], [], []>} : vector<16x32xf32>, vector<32x256xf32>, vector<16x256xf32> -> vector<16x256xf32>
    %c0_295 = arith.constant 0 : index
    %c0_296 = arith.constant 0 : index
    %647 = vector.load %arg33[%c0_295, %c0_296] : memref<1x256xf32, #tpu.memory_space<vmem>>, vector<1x256xf32>
    %648 = vector.broadcast %647 : vector<1x256xf32> to vector<16x256xf32>
    %649 = arith.addf %646, %648 : vector<16x256xf32>
    %c0_297 = arith.constant 0 : index
    %c0_298 = arith.constant 0 : index
    %650 = vector.load %arg3[%c0_297, %c0_298] : memref<128x8xf32, #tpu.memory_space<vmem>>, vector<128x8xf32>
    %cst_299 = arith.constant dense<0.000000e+00> : vector<128x256xf32>
    %651 = tpu.matmul %650, %644, %cst_299 {dimension_numbers = #tpu.dot_dimension_numbers<[1], [0], [0], [1], [0, 0, 1, 1], [], []>} : vector<128x8xf32>, vector<8x256xf32>, vector<128x256xf32> -> vector<128x256xf32>
    %c0_300 = arith.constant 0 : index
    %c0_301 = arith.constant 0 : index
    %652 = vector.load %arg4[%c0_300, %c0_301] : memref<128x16xf32, #tpu.memory_space<vmem>>, vector<128x16xf32>
    %cst_302 = arith.constant dense<0.000000e+00> : vector<128x256xf32>
    %653 = tpu.matmul %652, %649, %cst_302 {dimension_numbers = #tpu.dot_dimension_numbers<[1], [0], [0], [1], [0, 0, 1, 1], [], []>} : vector<128x16xf32>, vector<16x256xf32>, vector<128x256xf32> -> vector<128x256xf32>
    %654 = arith.addf %651, %653 : vector<128x256xf32>
    %655 = math.tanh %654 : vector<128x256xf32>
    %c0_303 = arith.constant 0 : index
    %c0_304 = arith.constant 0 : index
    %656 = vector.load %arg34[%c0_303, %c0_304] : memref<8x256xf32, #tpu.memory_space<vmem>>, vector<8x256xf32>
    %cst_305 = arith.constant dense<0.000000e+00> : vector<8x128xf32>
    %657 = tpu.matmul %656, %655, %cst_305 {dimension_numbers = #tpu.dot_dimension_numbers<[1], [1], [0], [0], [0, 0, 1, 0], [], []>} : vector<8x256xf32>, vector<128x256xf32>, vector<8x128xf32> -> vector<8x128xf32>
    %c0_306 = arith.constant 0 : index
    %c0_307 = arith.constant 0 : index
    %c0_308 = arith.constant 0 : index
    %658 = vector.load %arg37[%c0_306, %c0_307, %c0_308] : memref<1x8x128xf32, #tpu.memory_space<vmem>>, vector<1x8x128xf32>
    %659 = vector.shape_cast %658 : vector<1x8x128xf32> to vector<8x128xf32>
    %660 = vector.shape_cast %657 : vector<8x128xf32> to vector<1x8x128xf32>
    tpu.vector_store %arg37[%c0_306, %c0_307, %c0_308], %660 {strides = array<i32>} : memref<1x8x128xf32, #tpu.memory_space<vmem>>, vector<1x8x128xf32>,
    return
  }
  func.func @transform_0(%arg0: i32) -> (i32, i32, i32) {
    %c0_i32 = arith.constant 0 : i32
    %c0_i32_0 = arith.constant 0 : i32
    %c0_i32_1 = arith.constant 0 : i32
    return %arg0, %c0_i32, %c0_i32_0 : i32, i32, i32
  }
  func.func @transform_1(%arg0: i32) -> (i32, i32, i32) {
    %c0_i32 = arith.constant 0 : i32
    %c0_i32_0 = arith.constant 0 : i32
    %c0_i32_1 = arith.constant 0 : i32
    return %arg0, %c0_i32, %c0_i32_0 : i32, i32, i32
  }
  func.func @transform_2(%arg0: i32) -> (i32, i32) {
    %c0_i32 = arith.constant 0 : i32
    %c0_i32_0 = arith.constant 0 : i32
    %c0_i32_1 = arith.constant 0 : i32
    return %c0_i32, %c0_i32_0 : i32, i32
  }
  func.func @transform_3(%arg0: i32) -> (i32, i32) {
    %c0_i32 = arith.constant 0 : i32
    %c0_i32_0 = arith.constant 0 : i32
    %c0_i32_1 = arith.constant 0 : i32
    return %c0_i32, %c0_i32_0 : i32, i32
  }
  func.func @transform_4(%arg0: i32) -> (i32, i32) {
    %c0_i32 = arith.constant 0 : i32
    %c0_i32_0 = arith.constant 0 : i32
    %c0_i32_1 = arith.constant 0 : i32
    return %c0_i32, %c0_i32_0 : i32, i32
  }
  func.func @transform_5(%arg0: i32) -> (i32, i32) {
    %c0_i32 = arith.constant 0 : i32
    %c0_i32_0 = arith.constant 0 : i32
    %c0_i32_1 = arith.constant 0 : i32
    return %c0_i32, %c0_i32_0 : i32, i32
  }
  func.func @transform_6(%arg0: i32) -> (i32, i32) {
    %c0_i32 = arith.constant 0 : i32
    %c0_i32_0 = arith.constant 0 : i32
    %c0_i32_1 = arith.constant 0 : i32
    return %c0_i32, %c0_i32_0 : i32, i32
  }
  func.func @transform_7(%arg0: i32) -> (i32, i32, i32) {
    %c0_i32 = arith.constant 0 : i32
    %c0_i32_0 = arith.constant 0 : i32
    %c0_i32_1 = arith.constant 0 : i32
    %c0_i32_2 = arith.constant 0 : i32
    return %c0_i32, %c0_i32_0, %c0_i32_1 : i32, i32, i32
  }
  func.func @transform_8(%arg0: i32) -> (i32, i32, i32) {
    %c0_i32 = arith.constant 0 : i32
    %c0_i32_0 = arith.constant 0 : i32
    %c0_i32_1 = arith.constant 0 : i32
    %c0_i32_2 = arith.constant 0 : i32
    return %c0_i32, %c0_i32_0, %c0_i32_1 : i32, i32, i32
  }
  func.func @transform_9(%arg0: i32) -> (i32, i32, i32) {
    %c0_i32 = arith.constant 0 : i32
    %c0_i32_0 = arith.constant 0 : i32
    %c0_i32_1 = arith.constant 0 : i32
    %c0_i32_2 = arith.constant 0 : i32
    return %c0_i32, %c0_i32_0, %c0_i32_1 : i32, i32, i32
  }
  func.func @transform_10(%arg0: i32) -> (i32, i32, i32) {
    %c0_i32 = arith.constant 0 : i32
    %c0_i32_0 = arith.constant 0 : i32
    %c0_i32_1 = arith.constant 0 : i32
    %c0_i32_2 = arith.constant 0 : i32
    return %c0_i32, %c0_i32_0, %c0_i32_1 : i32, i32, i32
  }
  func.func @transform_11(%arg0: i32) -> (i32, i32, i32) {
    %c0_i32 = arith.constant 0 : i32
    %c0_i32_0 = arith.constant 0 : i32
    %c0_i32_1 = arith.constant 0 : i32
    %c0_i32_2 = arith.constant 0 : i32
    return %c0_i32, %c0_i32_0, %c0_i32_1 : i32, i32, i32
  }
  func.func @transform_12(%arg0: i32) -> (i32, i32, i32) {
    %c0_i32 = arith.constant 0 : i32
    %c0_i32_0 = arith.constant 0 : i32
    %c0_i32_1 = arith.constant 0 : i32
    %c0_i32_2 = arith.constant 0 : i32
    return %c0_i32, %c0_i32_0, %c0_i32_1 : i32, i32, i32
  }
  func.func @transform_13(%arg0: i32) -> (i32, i32, i32) {
    %c0_i32 = arith.constant 0 : i32
    %c0_i32_0 = arith.constant 0 : i32
    %c0_i32_1 = arith.constant 0 : i32
    %c0_i32_2 = arith.constant 0 : i32
    return %c0_i32, %c0_i32_0, %c0_i32_1 : i32, i32, i32
  }
  func.func @transform_14(%arg0: i32) -> (i32, i32, i32) {
    %c0_i32 = arith.constant 0 : i32
    %c0_i32_0 = arith.constant 0 : i32
    %c0_i32_1 = arith.constant 0 : i32
    %c0_i32_2 = arith.constant 0 : i32
    return %c0_i32, %c0_i32_0, %c0_i32_1 : i32, i32, i32
  }
  func.func @transform_15(%arg0: i32) -> (i32, i32, i32) {
    %c0_i32 = arith.constant 0 : i32
    %c0_i32_0 = arith.constant 0 : i32
    %c0_i32_1 = arith.constant 0 : i32
    %c0_i32_2 = arith.constant 0 : i32
    return %c0_i32, %c0_i32_0, %c0_i32_1 : i32, i32, i32
  }
  func.func @transform_16(%arg0: i32) -> (i32, i32, i32) {
    %c0_i32 = arith.constant 0 : i32
    %c0_i32_0 = arith.constant 0 : i32
    %c0_i32_1 = arith.constant 0 : i32
    %c0_i32_2 = arith.constant 0 : i32
    return %c0_i32, %c0_i32_0, %c0_i32_1 : i32, i32, i32
  }
  func.func @transform_17(%arg0: i32) -> (i32, i32, i32) {
    %c0_i32 = arith.constant 0 : i32
    %c0_i32_0 = arith.constant 0 : i32
    %c0_i32_1 = arith.constant 0 : i32
    %c0_i32_2 = arith.constant 0 : i32
    return %c0_i32, %c0_i32_0, %c0_i32_1 : i32, i32, i32
  }
  func.func @transform_18(%arg0: i32) -> (i32, i32, i32) {
    %c0_i32 = arith.constant 0 : i32
    %c0_i32_0 = arith.constant 0 : i32
    %c0_i32_1 = arith.constant 0 : i32
    %c0_i32_2 = arith.constant 0 : i32
    return %c0_i32, %c0_i32_0, %c0_i32_1 : i32, i32, i32
  }
  func.func @transform_19(%arg0: i32) -> (i32, i32, i32) {
    %c0_i32 = arith.constant 0 : i32
    %c0_i32_0 = arith.constant 0 : i32
    %c0_i32_1 = arith.constant 0 : i32
    %c0_i32_2 = arith.constant 0 : i32
    return %c0_i32, %c0_i32_0, %c0_i32_1 : i32, i32, i32
  }
  func.func @transform_20(%arg0: i32) -> (i32, i32, i32) {
    %c0_i32 = arith.constant 0 : i32
    %c0_i32_0 = arith.constant 0 : i32
    %c0_i32_1 = arith.constant 0 : i32
    %c0_i32_2 = arith.constant 0 : i32
    return %c0_i32, %c0_i32_0, %c0_i32_1 : i32, i32, i32
  }
  func.func @transform_21(%arg0: i32) -> (i32, i32, i32) {
    %c0_i32 = arith.constant 0 : i32
    %c0_i32_0 = arith.constant 0 : i32
    %c0_i32_1 = arith.constant 0 : i32
    %c0_i32_2 = arith.constant 0 : i32
    return %c0_i32, %c0_i32_0, %c0_i32_1 : i32, i32, i32
  }
  func.func @transform_22(%arg0: i32) -> (i32, i32, i32) {
    %c0_i32 = arith.constant 0 : i32
    %c0_i32_0 = arith.constant 0 : i32
    %c0_i32_1 = arith.constant 0 : i32
    %c0_i32_2 = arith.constant 0 : i32
    return %c0_i32, %c0_i32_0, %c0_i32_1 : i32, i32, i32
  }
  func.func @transform_23(%arg0: i32) -> (i32, i32, i32) {
    %c0_i32 = arith.constant 0 : i32
    %c0_i32_0 = arith.constant 0 : i32
    %c0_i32_1 = arith.constant 0 : i32
    %c0_i32_2 = arith.constant 0 : i32
    return %c0_i32, %c0_i32_0, %c0_i32_1 : i32, i32, i32
  }
  func.func @transform_24(%arg0: i32) -> (i32, i32, i32) {
    %c0_i32 = arith.constant 0 : i32
    %c0_i32_0 = arith.constant 0 : i32
    %c0_i32_1 = arith.constant 0 : i32
    %c0_i32_2 = arith.constant 0 : i32
    return %c0_i32, %c0_i32_0, %c0_i32_1 : i32, i32, i32
  }
  func.func @transform_25(%arg0: i32) -> (i32, i32, i32) {
    %c0_i32 = arith.constant 0 : i32
    %c0_i32_0 = arith.constant 0 : i32
    %c0_i32_1 = arith.constant 0 : i32
    %c0_i32_2 = arith.constant 0 : i32
    return %c0_i32, %c0_i32_0, %c0_i32_1 : i32, i32, i32
  }
  func.func @transform_26(%arg0: i32) -> (i32, i32, i32) {
    %c0_i32 = arith.constant 0 : i32
    %c0_i32_0 = arith.constant 0 : i32
    %c0_i32_1 = arith.constant 0 : i32
    %c0_i32_2 = arith.constant 0 : i32
    return %c0_i32, %c0_i32_0, %c0_i32_1 : i32, i32, i32
  }
  func.func @transform_27(%arg0: i32) -> (i32, i32) {
    %c0_i32 = arith.constant 0 : i32
    %c0_i32_0 = arith.constant 0 : i32
    %c0_i32_1 = arith.constant 0 : i32
    return %c0_i32, %c0_i32_0 : i32, i32
  }
  func.func @transform_28(%arg0: i32) -> (i32, i32) {
    %c0_i32 = arith.constant 0 : i32
    %c0_i32_0 = arith.constant 0 : i32
    %c0_i32_1 = arith.constant 0 : i32
    return %c0_i32, %c0_i32_0 : i32, i32
  }
  func.func @transform_29(%arg0: i32) -> (i32, i32) {
    %c0_i32 = arith.constant 0 : i32
    %c0_i32_0 = arith.constant 0 : i32
    %c0_i32_1 = arith.constant 0 : i32
    return %c0_i32, %c0_i32_0 : i32, i32
  }
  func.func @transform_30(%arg0: i32) -> (i32, i32) {
    %c0_i32 = arith.constant 0 : i32
    %c0_i32_0 = arith.constant 0 : i32
    %c0_i32_1 = arith.constant 0 : i32
    return %c0_i32, %c0_i32_0 : i32, i32
  }
  func.func @transform_31(%arg0: i32) -> (i32, i32) {
    %c0_i32 = arith.constant 0 : i32
    %c0_i32_0 = arith.constant 0 : i32
    %c0_i32_1 = arith.constant 0 : i32
    return %c0_i32, %c0_i32_0 : i32, i32
  }
  func.func @transform_32(%arg0: i32) -> (i32, i32) {
    %c0_i32 = arith.constant 0 : i32
    %c0_i32_0 = arith.constant 0 : i32
    %c0_i32_1 = arith.constant 0 : i32
    return %c0_i32, %c0_i32_0 : i32, i32
  }
  func.func @transform_33(%arg0: i32) -> (i32, i32) {
    %c0_i32 = arith.constant 0 : i32
    %c0_i32_0 = arith.constant 0 : i32
    %c0_i32_1 = arith.constant 0 : i32
    return %c0_i32, %c0_i32_0 : i32, i32
  }
  func.func @transform_34(%arg0: i32) -> (i32, i32, i32) {
    %c0_i32 = arith.constant 0 : i32
    %c0_i32_0 = arith.constant 0 : i32
    %c0_i32_1 = arith.constant 0 : i32
    return %arg0, %c0_i32, %c0_i32_0 : i32, i32, i32
  }
  func.func @transform_35(%arg0: i32) -> (i32, i32, i32) {
    %c0_i32 = arith.constant 0 : i32
    %c0_i32_0 = arith.constant 0 : i32
    %c0_i32_1 = arith.constant 0 : i32
    return %arg0, %c0_i32, %c0_i32_0 : i32, i32, i32
  }
  func.func @transform_36(%arg0: i32) -> (i32, i32, i32) {
    %c0_i32 = arith.constant 0 : i32
    %c0_i32_0 = arith.constant 0 : i32
    %c0_i32_1 = arith.constant 0 : i32
    return %arg0, %c0_i32, %c0_i32_0 : i32, i32, i32
  }
}

</mosaic_0001>

<llo_original>
// kernel: tpu_custom_call.1
$region0: #{tpu_custom_call.1}
  #allocation0 [shape = 'u32[]', space=smem, size = 0x4, offset = 0x4, fixed_abs, tag = 'smem constant byte address 0x4 - core index']
  #allocation1 [shape = 'u32[144,128]{1,0:T(1,128)}', space=vmem, size = 0x12000, scoped, tag = 'internal scratch']
  %s0 = inlined_call_operand.smem [shape: u32[37], index: -1, kind: input, shape index: {}]
  %s1 = sld [smem:[%s0]]
  %s2 = scalar_lea.smem %s0, 1
  %s3 = sld [smem:[%s2]]
  %s4 = scalar_lea.smem %s0, 2
  %s5 = sld [smem:[%s4]]
  %s6 = scalar_lea.smem %s0, 3
  %s7 = sld [smem:[%s6]]
  %s8 = scalar_lea.smem %s0, 4
  %s9 = sld [smem:[%s8]]
  %s10 = scalar_lea.smem %s0, 5
  %s11 = sld [smem:[%s10]]
  %s12 = scalar_lea.smem %s0, 6
  %s13 = sld [smem:[%s12]]
  %s14 = scalar_lea.smem %s0, 7
  %s15 = sld [smem:[%s14]]
  %s16 = scalar_lea.smem %s0, 8
  %s17 = sld [smem:[%s16]]
  %s18 = scalar_lea.smem %s0, 9
  %s19 = sld [smem:[%s18]]
  %s20 = scalar_lea.smem %s0, 10
  %s21 = sld [smem:[%s20]]
  %s22 = scalar_lea.smem %s0, 11
  %s23 = sld [smem:[%s22]]
  %s24 = scalar_lea.smem %s0, 12
  %s25 = sld [smem:[%s24]]
  %s26 = scalar_lea.smem %s0, 13
  %s27 = sld [smem:[%s26]]
  %s28 = scalar_lea.smem %s0, 14
  %s29 = sld [smem:[%s28]]
  %s30 = scalar_lea.smem %s0, 15
  %s31 = sld [smem:[%s30]]
  %s32 = scalar_lea.smem %s0, 16
  %s33 = sld [smem:[%s32]]
  %s34 = scalar_lea.smem %s0, 17
  %s35 = sld [smem:[%s34]]
  %s36 = scalar_lea.smem %s0, 18
  %s37 = sld [smem:[%s36]]
  %s38 = scalar_lea.smem %s0, 19
  %s39 = sld [smem:[%s38]]
  %s40 = scalar_lea.smem %s0, 20
  %s41 = sld [smem:[%s40]]
  %s42 = scalar_lea.smem %s0, 21
  %s43 = sld [smem:[%s42]]
  %s44 = scalar_lea.smem %s0, 22
  %s45 = sld [smem:[%s44]]
  %s46 = scalar_lea.smem %s0, 23
  %s47 = sld [smem:[%s46]]
  %s48 = scalar_lea.smem %s0, 24
  %s49 = sld [smem:[%s48]]
  %s50 = scalar_lea.smem %s0, 25
  %s51 = sld [smem:[%s50]]
  %s52 = scalar_lea.smem %s0, 26
  %s53 = sld [smem:[%s52]]
  %s54 = scalar_lea.smem %s0, 27
  %s55 = sld [smem:[%s54]]
  %s56 = scalar_lea.smem %s0, 28
  %s57 = sld [smem:[%s56]]
  %s58 = scalar_lea.smem %s0, 29
  %s59 = sld [smem:[%s58]]
  %s60 = scalar_lea.smem %s0, 30
  %s61 = sld [smem:[%s60]]
  %s62 = scalar_lea.smem %s0, 31
  %s63 = sld [smem:[%s62]]
  %s64 = scalar_lea.smem %s0, 32
  %s65 = sld [smem:[%s64]]
  %s66 = scalar_lea.smem %s0, 33
  %s67 = sld [smem:[%s66]]
  %s68 = scalar_lea.smem %s0, 34
  %s69 = sld [smem:[%s68]]
  %s70 = scalar_lea.smem %s0, 35
  %s71 = sld [smem:[%s70]]
  %s72 = scalar_lea.smem %s0, 36
  %s73 = sld [smem:[%s72]]
  %74 = xla_tuple %s69, %s71, %s73
  %s75 = sld [smem:[#allocation0]]
  $region249: #{tpu_custom_call.1} parent=0
    _
  %s77 = ssub.s32 1, %s75
  %s78 = scalar_select 0, %s77, %s75
  $region1: #{tpu_custom_call.1} parent=0
    #allocation2 [shape = 'u8[16384]{0}', space=vmem, size = 0x4000, scoped, tag = 'input window, operand 0']
    #allocation3 [shape = 's32[2]{0}', space=sflag, size = 0x8, scoped, tag = 'scoped memory for tpu_custom_call.1']
    #allocation4 [shape = 's32[2]{0}', space=sflag, size = 0x8, scoped, tag = 'scoped memory for tpu_custom_call.1']
    #allocation5 [shape = 'u8[1024]{0}', space=vmem, size = 0x400, scoped, tag = 'input window, operand 1']
    #allocation6 [shape = 's32[2]{0}', space=sflag, size = 0x8, scoped, tag = 'scoped memory for tpu_custom_call.1']
    #allocation7 [shape = 'u8[4096]{0}', space=vmem, size = 0x1000, scoped, tag = 'input window, operand 4, single buffered']
    #allocation8 [shape = 'u8[512]{0}', space=vmem, size = 0x400, scoped, tag = 'input window, operand 5, single buffered']
    #allocation9 [shape = 's32[1]{0}', space=sflag, size = 0x4, scoped, tag = 'scoped memory for tpu_custom_call.1']
    #allocation10 [shape = 'u8[512]{0}', space=vmem, size = 0x400, scoped, tag = 'input window, operand 6, single buffered']
    #allocation11 [shape = 'u8[1024]{0}', space=vmem, size = 0x400, scoped, tag = 'input window, operand 10, single buffered']
    #allocation12 [shape = 's32[1]{0}', space=sflag, size = 0x4, scoped, tag = 'scoped memory for tpu_custom_call.1']
    #allocation13 [shape = 'u8[1024]{0}', space=vmem, size = 0x400, scoped, tag = 'input window, operand 11, single buffered']
    #allocation14 [shape = 'u8[1024]{0}', space=vmem, size = 0x400, scoped, tag = 'input window, operand 12, single buffered']
    #allocation15 [shape = 's32[1]{0}', space=sflag, size = 0x4, scoped, tag = 'scoped memory for tpu_custom_call.1']
    #allocation16 [shape = 'u8[1024]{0}', space=vmem, size = 0x400, scoped, tag = 'input window, operand 14, single buffered']
    #allocation17 [shape = 'u8[1024]{0}', space=vmem, size = 0x400, scoped, tag = 'input window, operand 16, single buffered']
    #allocation18 [shape = 's32[1]{0}', space=sflag, size = 0x4, scoped, tag = 'scoped memory for tpu_custom_call.1']
    #allocation19 [shape = 'u8[1024]{0}', space=vmem, size = 0x400, scoped, tag = 'input window, operand 18, single buffered']
    #allocation20 [shape = 'u8[1024]{0}', space=vmem, size = 0x400, scoped, tag = 'input window, operand 19, single buffered']
    #allocation21 [shape = 's32[1]{0}', space=sflag, size = 0x4, scoped, tag = 'scoped memory for tpu_custom_call.1']
    #allocation22 [shape = 'u8[1024]{0}', space=vmem, size = 0x400, scoped, tag = 'input window, operand 20, single buffered']
    #allocation23 [shape = 'u8[1024]{0}', space=vmem, size = 0x400, scoped, tag = 'input window, operand 22, single buffered']
    #allocation24 [shape = 's32[1]{0}', space=sflag, size = 0x4, scoped, tag = 'scoped memory for tpu_custom_call.1']
    #allocation25 [shape = 'u8[1024]{0}', space=vmem, size = 0x400, scoped, tag = 'input window, operand 24, single buffered']
    #allocation26 [shape = 'u8[1024]{0}', space=vmem, size = 0x400, scoped, tag = 'input window, operand 25, single buffered']
    #allocation27 [shape = 's32[1]{0}', space=sflag, size = 0x4, scoped, tag = 'scoped memory for tpu_custom_call.1']
    #allocation28 [shape = 'u8[8192]{0}', space=vmem, size = 0x2000, scoped, tag = 'output window, operand 0']
    #allocation29 [shape = 'u8[8192]{0}', space=vmem, size = 0x2000, scoped, tag = 'output window, operand 2']
    #allocation30 [shape = 's32[2]{0}', space=sflag, size = 0x8, scoped, tag = 'scoped memory for tpu_custom_call.1']
    %79 = vsyncpa [#allocation3], 0
    %s80 = scalar_lea.sflag [#allocation3], 1
    %81 = vsyncpa %s80, 0
    %82 = vsyncpa [#allocation6], 0
    %s83 = scalar_lea.sflag [#allocation6], 1
    %84 = vsyncpa %s83, 0
    %85 = vsyncpa [#allocation9], 0
    %86 = vsyncpa [#allocation12], 0
    %87 = vsyncpa [#allocation15], 0
    %88 = vsyncpa [#allocation18], 0
    %89 = vsyncpa [#allocation21], 0
    %90 = vsyncpa [#allocation24], 0
    %91 = vsyncpa [#allocation27], 0
    %92 = vsyncpa [#allocation4], 0
    %s93 = scalar_lea.sflag [#allocation4], 1
    %94 = vsyncpa %s93, 0
    %95 = vsyncpa [#allocation30], 0
    %s96 = scalar_lea.sflag [#allocation30], 1
    %97 = vsyncpa %s96, 0
    loop: start=0, step=1, limit=4
    $region2: #{tpu_custom_call.1} parent=1 // loop_pre_header
      _
    $region3: #{tpu_custom_call.1} parent=1 // loop_header
      %s99 = sphi 0, %s103
      %p100 = scmp.ge.s32.totalorder %s99, 4
      %s109 = sphi 0, %s111
      %s112 = sphi 0, %s109
      %s113 = sphi 0, %s112
      %s129 = sphi 0, %s113
      %s135 = sphi 0, %s137
      %s138 = sphi 0, %s135
      %s139 = sphi 0, %s138
      %s155 = sphi 0, %s139
      %s159 = sphi 0, %s159
      %s161 = sphi 0, %s159
      %s162 = sphi 0, %s161
      %s176 = sphi 0, %s162
      %s180 = sphi 0, %s180
      %s182 = sphi 0, %s180
      %s183 = sphi 0, %s182
      %s197 = sphi 0, %s183
      %s201 = sphi 0, %s201
      %s203 = sphi 0, %s201
      %s204 = sphi 0, %s203
      %s218 = sphi 0, %s204
      %s222 = sphi 0, %s222
      %s224 = sphi 0, %s222
      %s225 = sphi 0, %s224
      %s239 = sphi 0, %s225
      %s243 = sphi 0, %s243
      %s245 = sphi 0, %s243
      %s246 = sphi 0, %s245
      %s260 = sphi 0, %s246
      %s264 = sphi 0, %s264
      %s266 = sphi 0, %s264
      %s267 = sphi 0, %s266
      %s281 = sphi 0, %s267
      %s285 = sphi 0, %s285
      %s287 = sphi 0, %s285
      %s288 = sphi 0, %s287
      %s302 = sphi 0, %s288
      %s306 = sphi 0, %s306
      %s308 = sphi 0, %s306
      %s309 = sphi 0, %s308
      %s323 = sphi 0, %s309
      %s327 = sphi 0, %s327
      %s329 = sphi 0, %s327
      %s330 = sphi 0, %s329
      %s344 = sphi 0, %s330
      %s348 = sphi 0, %s348
      %s350 = sphi 0, %s348
      %s351 = sphi 0, %s350
      %s365 = sphi 0, %s351
      %s369 = sphi 0, %s369
      %s371 = sphi 0, %s369
      %s372 = sphi 0, %s371
      %s386 = sphi 0, %s372
      %s390 = sphi 0, %s390
      %s392 = sphi 0, %s390
      %s393 = sphi 0, %s392
      %s407 = sphi 0, %s393
      %s411 = sphi 0, %s411
      %s413 = sphi 0, %s411
      %s414 = sphi 0, %s413
      %s428 = sphi 0, %s414
      %s432 = sphi 0, %s432
      %s434 = sphi 0, %s432
      %s435 = sphi 0, %s434
      %s449 = sphi 0, %s435
      %s453 = sphi 0, %s453
      %s455 = sphi 0, %s453
      %s456 = sphi 0, %s455
      %s470 = sphi 0, %s456
      %s474 = sphi 0, %s474
      %s476 = sphi 0, %s474
      %s477 = sphi 0, %s476
      %s491 = sphi 0, %s477
      %s495 = sphi 0, %s495
      %s497 = sphi 0, %s495
      %s498 = sphi 0, %s497
      %s512 = sphi 0, %s498
      %s516 = sphi 0, %s516
      %s518 = sphi 0, %s516
      %s519 = sphi 0, %s518
      %s533 = sphi 0, %s519
      %s537 = sphi 0, %s537
      %s539 = sphi 0, %s537
      %s540 = sphi 0, %s539
      %s554 = sphi 0, %s540
      %s558 = sphi 0, %s558
      %s560 = sphi 0, %s558
      %s561 = sphi 0, %s560
      %s575 = sphi 0, %s561
      %s579 = sphi 0, %s579
      %s581 = sphi 0, %s579
      %s582 = sphi 0, %s581
      %s596 = sphi 0, %s582
      %s600 = sphi 0, %s600
      %s602 = sphi 0, %s600
      %s603 = sphi 0, %s602
      %s617 = sphi 0, %s603
      %s621 = sphi 0, %s621
      %s623 = sphi 0, %s621
      %s624 = sphi 0, %s623
      %s638 = sphi 0, %s624
      %s642 = sphi 0, %s642
      %s644 = sphi 0, %s642
      %s645 = sphi 0, %s644
      %s659 = sphi 0, %s645
      %s663 = sphi 0, %s663
      %s665 = sphi 0, %s663
      %s666 = sphi 0, %s665
      %s680 = sphi 0, %s666
      %s684 = sphi 0, %s684
      %s686 = sphi 0, %s684
      %s687 = sphi 0, %s686
      %s701 = sphi 0, %s687
      %s705 = sphi 0, %s705
      %s707 = sphi 0, %s705
      %s708 = sphi 0, %s707
      %s722 = sphi 0, %s708
      %s726 = sphi 0, %s726
      %s728 = sphi 0, %s726
      %s729 = sphi 0, %s728
      %s743 = sphi 0, %s729
      %s747 = sphi 0, %s747
      %s749 = sphi 0, %s747
      %s750 = sphi 0, %s749
      %s764 = sphi 0, %s750
      %s768 = sphi 0, %s768
      %s770 = sphi 0, %s768
      %s771 = sphi 0, %s770
      %s785 = sphi 0, %s771
      %s789 = sphi 0, %s789
      %s791 = sphi 0, %s789
      %s792 = sphi 0, %s791
      %s806 = sphi 0, %s792
      %s810 = sphi 0, %s810
      %s812 = sphi 0, %s810
      %s813 = sphi 0, %s812
      %s827 = sphi 0, %s813
      %s833 = sphi 0, %s835
      %s836 = sphi 0, %s833
      %s837 = sphi 0, %s836
      %s853 = sphi 0, %s837
      %s859 = sphi 0, %s861
      %s862 = sphi 0, %s859
      %s863 = sphi 0, %s862
      %s879 = sphi 0, %s863
      %s885 = sphi 0, %s887
      %s888 = sphi 0, %s885
      %s889 = sphi 0, %s888
      %s905 = sphi 0, %s889
    $region4: #{tpu_custom_call.1} parent=1 // loop_header_branch
      %102 = sbr.rel (%p100) target = $region8
    $region5: #{tpu_custom_call.1} parent=1 // loop_body
      %s104 = ssub.s32 %s99, 1
      %s105 = ssub.s32 %s99, 2
      %s106 = sadd.s32 %s99, 1
      %s107 = ssub.s32 %s99, %s106
      %p108 = scmp.eq.s32.totalorder %s107, 0
      %s110 = sadd.s32 %s109, 1
      %s111 = scalar_select %p108, %s109, %s110
      %p114 = pneg %p108
      %p115 = scmp.eq.s32.totalorder %s99, 1
      %p116 = por %p114, %p115
      %p117 = scmp.ne.s32.totalorder %s109, %s112
      %p118 = scmp.eq.s32.totalorder %s99, 0
      %p119 = por %p117, %p118
      %p120 = scmp.ne.s32.totalorder %s109, %s112
      %p121 = scmp.eq.s32.totalorder %s104, 1
      %p122 = por %p120, %p121
      %p123 = scmp.ne.s32.totalorder %s112, %s113
      %p124 = scmp.eq.s32.totalorder %s104, 0
      %p125 = por %p123, %p124
      %p126 = scmp.ne.s32.totalorder %s112, %s113
      %p127 = scmp.eq.s32.totalorder %s105, 1
      %p128 = por %p126, %p127
      %p130 = scmp.ne.s32.totalorder %s113, %s129
      %p131 = scmp.eq.s32.totalorder %s105, 0
      %p132 = por %p130, %p131
      %s133 = ssub.s32 %s99, %s106
      %p134 = scmp.eq.s32.totalorder %s133, 0
      %s136 = sadd.s32 %s135, 1
      %s137 = scalar_select %p134, %s135, %s136
      %p140 = pneg %p134
      %p141 = scmp.eq.s32.totalorder %s99, 1
      %p142 = por %p140, %p141
      %p143 = scmp.ne.s32.totalorder %s135, %s138
      %p144 = scmp.eq.s32.totalorder %s99, 0
      %p145 = por %p143, %p144
      %p146 = scmp.ne.s32.totalorder %s135, %s138
      %p147 = scmp.eq.s32.totalorder %s104, 1
      %p148 = por %p146, %p147
      %p149 = scmp.ne.s32.totalorder %s138, %s139
      %p150 = scmp.eq.s32.totalorder %s104, 0
      %p151 = por %p149, %p150
      %p152 = scmp.ne.s32.totalorder %s138, %s139
      %p153 = scmp.eq.s32.totalorder %s105, 1
      %p154 = por %p152, %p153
      %p156 = scmp.ne.s32.totalorder %s139, %s155
      %p157 = scmp.eq.s32.totalorder %s105, 0
      %p158 = por %p156, %p157
      %s160 = sadd.s32 %s159, 1
      %p163 = scmp.eq.s32.totalorder %s99, 1
      %p164 = scmp.ne.s32.totalorder %s159, %s161
      %p165 = scmp.eq.s32.totalorder %s99, 0
      %p166 = por %p164, %p165
      %p167 = scmp.ne.s32.totalorder %s159, %s161
      %p168 = scmp.eq.s32.totalorder %s104, 1
      %p169 = por %p167, %p168
      %p170 = scmp.ne.s32.totalorder %s161, %s162
      %p171 = scmp.eq.s32.totalorder %s104, 0
      %p172 = por %p170, %p171
      %p173 = scmp.ne.s32.totalorder %s161, %s162
      %p174 = scmp.eq.s32.totalorder %s105, 1
      %p175 = por %p173, %p174
      %p177 = scmp.ne.s32.totalorder %s162, %s176
      %p178 = scmp.eq.s32.totalorder %s105, 0
      %p179 = por %p177, %p178
      %s181 = sadd.s32 %s180, 1
      %p184 = scmp.eq.s32.totalorder %s99, 1
      %p185 = scmp.ne.s32.totalorder %s180, %s182
      %p186 = scmp.eq.s32.totalorder %s99, 0
      %p187 = por %p185, %p186
      %p188 = scmp.ne.s32.totalorder %s180, %s182
      %p189 = scmp.eq.s32.totalorder %s104, 1
      %p190 = por %p188, %p189
      %p191 = scmp.ne.s32.totalorder %s182, %s183
      %p192 = scmp.eq.s32.totalorder %s104, 0
      %p193 = por %p191, %p192
      %p194 = scmp.ne.s32.totalorder %s182, %s183
      %p195 = scmp.eq.s32.totalorder %s105, 1
      %p196 = por %p194, %p195
      %p198 = scmp.ne.s32.totalorder %s183, %s197
      %p199 = scmp.eq.s32.totalorder %s105, 0
      %p200 = por %p198, %p199
      %s202 = sadd.s32 %s201, 1
      %p205 = scmp.eq.s32.totalorder %s99, 1
      %p206 = scmp.ne.s32.totalorder %s201, %s203
      %p207 = scmp.eq.s32.totalorder %s99, 0
      %p208 = por %p206, %p207
      %p209 = scmp.ne.s32.totalorder %s201, %s203
      %p210 = scmp.eq.s32.totalorder %s104, 1
      %p211 = por %p209, %p210
      %p212 = scmp.ne.s32.totalorder %s203, %s204
      %p213 = scmp.eq.s32.totalorder %s104, 0
      %p214 = por %p212, %p213
      %p215 = scmp.ne.s32.totalorder %s203, %s204
      %p216 = scmp.eq.s32.totalorder %s105, 1
      %p217 = por %p215, %p216
      %p219 = scmp.ne.s32.totalorder %s204, %s218
      %p220 = scmp.eq.s32.totalorder %s105, 0
      %p221 = por %p219, %p220
      %s223 = sadd.s32 %s222, 1
      %p226 = scmp.eq.s32.totalorder %s99, 1
      %p227 = scmp.ne.s32.totalorder %s222, %s224
      %p228 = scmp.eq.s32.totalorder %s99, 0
      %p229 = por %p227, %p228
      %p230 = scmp.ne.s32.totalorder %s222, %s224
      %p231 = scmp.eq.s32.totalorder %s104, 1
      %p232 = por %p230, %p231
      %p233 = scmp.ne.s32.totalorder %s224, %s225
      %p234 = scmp.eq.s32.totalorder %s104, 0
      %p235 = por %p233, %p234
      %p236 = scmp.ne.s32.totalorder %s224, %s225
      %p237 = scmp.eq.s32.totalorder %s105, 1
      %p238 = por %p236, %p237
      %p240 = scmp.ne.s32.totalorder %s225, %s239
      %p241 = scmp.eq.s32.totalorder %s105, 0
      %p242 = por %p240, %p241
      %s244 = sadd.s32 %s243, 1
      %p247 = scmp.eq.s32.totalorder %s99, 1
      %p248 = scmp.ne.s32.totalorder %s243, %s245
      %p249 = scmp.eq.s32.totalorder %s99, 0
      %p250 = por %p248, %p249
      %p251 = scmp.ne.s32.totalorder %s243, %s245
      %p252 = scmp.eq.s32.totalorder %s104, 1
      %p253 = por %p251, %p252
      %p254 = scmp.ne.s32.totalorder %s245, %s246
      %p255 = scmp.eq.s32.totalorder %s104, 0
      %p256 = por %p254, %p255
      %p257 = scmp.ne.s32.totalorder %s245, %s246
      %p258 = scmp.eq.s32.totalorder %s105, 1
      %p259 = por %p257, %p258
      %p261 = scmp.ne.s32.totalorder %s246, %s260
      %p262 = scmp.eq.s32.totalorder %s105, 0
      %p263 = por %p261, %p262
      %s265 = sadd.s32 %s264, 1
      %p268 = scmp.eq.s32.totalorder %s99, 1
      %p269 = scmp.ne.s32.totalorder %s264, %s266
      %p270 = scmp.eq.s32.totalorder %s99, 0
      %p271 = por %p269, %p270
      %p272 = scmp.ne.s32.totalorder %s264, %s266
      %p273 = scmp.eq.s32.totalorder %s104, 1
      %p274 = por %p272, %p273
      %p275 = scmp.ne.s32.totalorder %s266, %s267
      %p276 = scmp.eq.s32.totalorder %s104, 0
      %p277 = por %p275, %p276
      %p278 = scmp.ne.s32.totalorder %s266, %s267
      %p279 = scmp.eq.s32.totalorder %s105, 1
      %p280 = por %p278, %p279
      %p282 = scmp.ne.s32.totalorder %s267, %s281
      %p283 = scmp.eq.s32.totalorder %s105, 0
      %p284 = por %p282, %p283
      %s286 = sadd.s32 %s285, 1
      %p289 = scmp.eq.s32.totalorder %s99, 1
      %p290 = scmp.ne.s32.totalorder %s285, %s287
      %p291 = scmp.eq.s32.totalorder %s99, 0
      %p292 = por %p290, %p291
      %p293 = scmp.ne.s32.totalorder %s285, %s287
      %p294 = scmp.eq.s32.totalorder %s104, 1
      %p295 = por %p293, %p294
      %p296 = scmp.ne.s32.totalorder %s287, %s288
      %p297 = scmp.eq.s32.totalorder %s104, 0
      %p298 = por %p296, %p297
      %p299 = scmp.ne.s32.totalorder %s287, %s288
      %p300 = scmp.eq.s32.totalorder %s105, 1
      %p301 = por %p299, %p300
      %p303 = scmp.ne.s32.totalorder %s288, %s302
      %p304 = scmp.eq.s32.totalorder %s105, 0
      %p305 = por %p303, %p304
      %s307 = sadd.s32 %s306, 1
      %p310 = scmp.eq.s32.totalorder %s99, 1
      %p311 = scmp.ne.s32.totalorder %s306, %s308
      %p312 = scmp.eq.s32.totalorder %s99, 0
      %p313 = por %p311, %p312
      %p314 = scmp.ne.s32.totalorder %s306, %s308
      %p315 = scmp.eq.s32.totalorder %s104, 1
      %p316 = por %p314, %p315
      %p317 = scmp.ne.s32.totalorder %s308, %s309
      %p318 = scmp.eq.s32.totalorder %s104, 0
      %p319 = por %p317, %p318
      %p320 = scmp.ne.s32.totalorder %s308, %s309
      %p321 = scmp.eq.s32.totalorder %s105, 1
      %p322 = por %p320, %p321
      %p324 = scmp.ne.s32.totalorder %s309, %s323
      %p325 = scmp.eq.s32.totalorder %s105, 0
      %p326 = por %p324, %p325
      %s328 = sadd.s32 %s327, 1
      %p331 = scmp.eq.s32.totalorder %s99, 1
      %p332 = scmp.ne.s32.totalorder %s327, %s329
      %p333 = scmp.eq.s32.totalorder %s99, 0
      %p334 = por %p332, %p333
      %p335 = scmp.ne.s32.totalorder %s327, %s329
      %p336 = scmp.eq.s32.totalorder %s104, 1
      %p337 = por %p335, %p336
      %p338 = scmp.ne.s32.totalorder %s329, %s330
      %p339 = scmp.eq.s32.totalorder %s104, 0
      %p340 = por %p338, %p339
      %p341 = scmp.ne.s32.totalorder %s329, %s330
      %p342 = scmp.eq.s32.totalorder %s105, 1
      %p343 = por %p341, %p342
      %p345 = scmp.ne.s32.totalorder %s330, %s344
      %p346 = scmp.eq.s32.totalorder %s105, 0
      %p347 = por %p345, %p346
      %s349 = sadd.s32 %s348, 1
      %p352 = scmp.eq.s32.totalorder %s99, 1
      %p353 = scmp.ne.s32.totalorder %s348, %s350
      %p354 = scmp.eq.s32.totalorder %s99, 0
      %p355 = por %p353, %p354
      %p356 = scmp.ne.s32.totalorder %s348, %s350
      %p357 = scmp.eq.s32.totalorder %s104, 1
      %p358 = por %p356, %p357
      %p359 = scmp.ne.s32.totalorder %s350, %s351
      %p360 = scmp.eq.s32.totalorder %s104, 0
      %p361 = por %p359, %p360
      %p362 = scmp.ne.s32.totalorder %s350, %s351
      %p363 = scmp.eq.s32.totalorder %s105, 1
      %p364 = por %p362, %p363
      %p366 = scmp.ne.s32.totalorder %s351, %s365
      %p367 = scmp.eq.s32.totalorder %s105, 0
      %p368 = por %p366, %p367
      %s370 = sadd.s32 %s369, 1
      %p373 = scmp.eq.s32.totalorder %s99, 1
      %p374 = scmp.ne.s32.totalorder %s369, %s371
      %p375 = scmp.eq.s32.totalorder %s99, 0
      %p376 = por %p374, %p375
      %p377 = scmp.ne.s32.totalorder %s369, %s371
      %p378 = scmp.eq.s32.totalorder %s104, 1
      %p379 = por %p377, %p378
      %p380 = scmp.ne.s32.totalorder %s371, %s372
      %p381 = scmp.eq.s32.totalorder %s104, 0
      %p382 = por %p380, %p381
      %p383 = scmp.ne.s32.totalorder %s371, %s372
      %p384 = scmp.eq.s32.totalorder %s105, 1
      %p385 = por %p383, %p384
      %p387 = scmp.ne.s32.totalorder %s372, %s386
      %p388 = scmp.eq.s32.totalorder %s105, 0
      %p389 = por %p387, %p388
      %s391 = sadd.s32 %s390, 1
      %p394 = scmp.eq.s32.totalorder %s99, 1
      %p395 = scmp.ne.s32.totalorder %s390, %s392
      %p396 = scmp.eq.s32.totalorder %s99, 0
      %p397 = por %p395, %p396
      %p398 = scmp.ne.s32.totalorder %s390, %s392
      %p399 = scmp.eq.s32.totalorder %s104, 1
      %p400 = por %p398, %p399
      %p401 = scmp.ne.s32.totalorder %s392, %s393
      %p402 = scmp.eq.s32.totalorder %s104, 0
      %p403 = por %p401, %p402
      %p404 = scmp.ne.s32.totalorder %s392, %s393
      %p405 = scmp.eq.s32.totalorder %s105, 1
      %p406 = por %p404, %p405
      %p408 = scmp.ne.s32.totalorder %s393, %s407
      %p409 = scmp.eq.s32.totalorder %s105, 0
      %p410 = por %p408, %p409
      %s412 = sadd.s32 %s411, 1
      %p415 = scmp.eq.s32.totalorder %s99, 1
      %p416 = scmp.ne.s32.totalorder %s411, %s413
      %p417 = scmp.eq.s32.totalorder %s99, 0
      %p418 = por %p416, %p417
      %p419 = scmp.ne.s32.totalorder %s411, %s413
      %p420 = scmp.eq.s32.totalorder %s104, 1
      %p421 = por %p419, %p420
      %p422 = scmp.ne.s32.totalorder %s413, %s414
      %p423 = scmp.eq.s32.totalorder %s104, 0
      %p424 = por %p422, %p423
      %p425 = scmp.ne.s32.totalorder %s413, %s414
      %p426 = scmp.eq.s32.totalorder %s105, 1
      %p427 = por %p425, %p426
      %p429 = scmp.ne.s32.totalorder %s414, %s428
      %p430 = scmp.eq.s32.totalorder %s105, 0
      %p431 = por %p429, %p430
      %s433 = sadd.s32 %s432, 1
      %p436 = scmp.eq.s32.totalorder %s99, 1
      %p437 = scmp.ne.s32.totalorder %s432, %s434
      %p438 = scmp.eq.s32.totalorder %s99, 0
      %p439 = por %p437, %p438
      %p440 = scmp.ne.s32.totalorder %s432, %s434
      %p441 = scmp.eq.s32.totalorder %s104, 1
      %p442 = por %p440, %p441
      %p443 = scmp.ne.s32.totalorder %s434, %s435
      %p444 = scmp.eq.s32.totalorder %s104, 0
      %p445 = por %p443, %p444
      %p446 = scmp.ne.s32.totalorder %s434, %s435
      %p447 = scmp.eq.s32.totalorder %s105, 1
      %p448 = por %p446, %p447
      %p450 = scmp.ne.s32.totalorder %s435, %s449
      %p451 = scmp.eq.s32.totalorder %s105, 0
      %p452 = por %p450, %p451
      %s454 = sadd.s32 %s453, 1
      %p457 = scmp.eq.s32.totalorder %s99, 1
      %p458 = scmp.ne.s32.totalorder %s453, %s455
      %p459 = scmp.eq.s32.totalorder %s99, 0
      %p460 = por %p458, %p459
      %p461 = scmp.ne.s32.totalorder %s453, %s455
      %p462 = scmp.eq.s32.totalorder %s104, 1
      %p463 = por %p461, %p462
      %p464 = scmp.ne.s32.totalorder %s455, %s456
      %p465 = scmp.eq.s32.totalorder %s104, 0
      %p466 = por %p464, %p465
      %p467 = scmp.ne.s32.totalorder %s455, %s456
      %p468 = scmp.eq.s32.totalorder %s105, 1
      %p469 = por %p467, %p468
      %p471 = scmp.ne.s32.totalorder %s456, %s470
      %p472 = scmp.eq.s32.totalorder %s105, 0
      %p473 = por %p471, %p472
      %s475 = sadd.s32 %s474, 1
      %p478 = scmp.eq.s32.totalorder %s99, 1
      %p479 = scmp.ne.s32.totalorder %s474, %s476
      %p480 = scmp.eq.s32.totalorder %s99, 0
      %p481 = por %p479, %p480
      %p482 = scmp.ne.s32.totalorder %s474, %s476
      %p483 = scmp.eq.s32.totalorder %s104, 1
      %p484 = por %p482, %p483
      %p485 = scmp.ne.s32.totalorder %s476, %s477
      %p486 = scmp.eq.s32.totalorder %s104, 0
      %p487 = por %p485, %p486
      %p488 = scmp.ne.s32.totalorder %s476, %s477
      %p489 = scmp.eq.s32.totalorder %s105, 1
      %p490 = por %p488, %p489
      %p492 = scmp.ne.s32.totalorder %s477, %s491
      %p493 = scmp.eq.s32.totalorder %s105, 0
      %p494 = por %p492, %p493
      %s496 = sadd.s32 %s495, 1
      %p499 = scmp.eq.s32.totalorder %s99, 1
      %p500 = scmp.ne.s32.totalorder %s495, %s497
      %p501 = scmp.eq.s32.totalorder %s99, 0
      %p502 = por %p500, %p501
      %p503 = scmp.ne.s32.totalorder %s495, %s497
      %p504 = scmp.eq.s32.totalorder %s104, 1
      %p505 = por %p503, %p504
      %p506 = scmp.ne.s32.totalorder %s497, %s498
      %p507 = scmp.eq.s32.totalorder %s104, 0
      %p508 = por %p506, %p507
      %p509 = scmp.ne.s32.totalorder %s497, %s498
      %p510 = scmp.eq.s32.totalorder %s105, 1
      %p511 = por %p509, %p510
      %p513 = scmp.ne.s32.totalorder %s498, %s512
      %p514 = scmp.eq.s32.totalorder %s105, 0
      %p515 = por %p513, %p514
      %s517 = sadd.s32 %s516, 1
      %p520 = scmp.eq.s32.totalorder %s99, 1
      %p521 = scmp.ne.s32.totalorder %s516, %s518
      %p522 = scmp.eq.s32.totalorder %s99, 0
      %p523 = por %p521, %p522
      %p524 = scmp.ne.s32.totalorder %s516, %s518
      %p525 = scmp.eq.s32.totalorder %s104, 1
      %p526 = por %p524, %p525
      %p527 = scmp.ne.s32.totalorder %s518, %s519
      %p528 = scmp.eq.s32.totalorder %s104, 0
      %p529 = por %p527, %p528
      %p530 = scmp.ne.s32.totalorder %s518, %s519
      %p531 = scmp.eq.s32.totalorder %s105, 1
      %p532 = por %p530, %p531
      %p534 = scmp.ne.s32.totalorder %s519, %s533
      %p535 = scmp.eq.s32.totalorder %s105, 0
      %p536 = por %p534, %p535
      %s538 = sadd.s32 %s537, 1
      %p541 = scmp.eq.s32.totalorder %s99, 1
      %p542 = scmp.ne.s32.totalorder %s537, %s539
      %p543 = scmp.eq.s32.totalorder %s99, 0
      %p544 = por %p542, %p543
      %p545 = scmp.ne.s32.totalorder %s537, %s539
      %p546 = scmp.eq.s32.totalorder %s104, 1
      %p547 = por %p545, %p546
      %p548 = scmp.ne.s32.totalorder %s539, %s540
      %p549 = scmp.eq.s32.totalorder %s104, 0
      %p550 = por %p548, %p549
      %p551 = scmp.ne.s32.totalorder %s539, %s540
      %p552 = scmp.eq.s32.totalorder %s105, 1
      %p553 = por %p551, %p552
      %p555 = scmp.ne.s32.totalorder %s540, %s554
      %p556 = scmp.eq.s32.totalorder %s105, 0
      %p557 = por %p555, %p556
      %s559 = sadd.s32 %s558, 1
      %p562 = scmp.eq.s32.totalorder %s99, 1
      %p563 = scmp.ne.s32.totalorder %s558, %s560
      %p564 = scmp.eq.s32.totalorder %s99, 0
      %p565 = por %p563, %p564
      %p566 = scmp.ne.s32.totalorder %s558, %s560
      %p567 = scmp.eq.s32.totalorder %s104, 1
      %p568 = por %p566, %p567
      %p569 = scmp.ne.s32.totalorder %s560, %s561
      %p570 = scmp.eq.s32.totalorder %s104, 0
      %p571 = por %p569, %p570
      %p572 = scmp.ne.s32.totalorder %s560, %s561
      %p573 = scmp.eq.s32.totalorder %s105, 1
      %p574 = por %p572, %p573
      %p576 = scmp.ne.s32.totalorder %s561, %s575
      %p577 = scmp.eq.s32.totalorder %s105, 0
      %p578 = por %p576, %p577
      %s580 = sadd.s32 %s579, 1
      %p583 = scmp.eq.s32.totalorder %s99, 1
      %p584 = scmp.ne.s32.totalorder %s579, %s581
      %p585 = scmp.eq.s32.totalorder %s99, 0
      %p586 = por %p584, %p585
      %p587 = scmp.ne.s32.totalorder %s579, %s581
      %p588 = scmp.eq.s32.totalorder %s104, 1
      %p589 = por %p587, %p588
      %p590 = scmp.ne.s32.totalorder %s581, %s582
      %p591 = scmp.eq.s32.totalorder %s104, 0
      %p592 = por %p590, %p591
      %p593 = scmp.ne.s32.totalorder %s581, %s582
      %p594 = scmp.eq.s32.totalorder %s105, 1
      %p595 = por %p593, %p594
      %p597 = scmp.ne.s32.totalorder %s582, %s596
      %p598 = scmp.eq.s32.totalorder %s105, 0
      %p599 = por %p597, %p598
      %s601 = sadd.s32 %s600, 1
      %p604 = scmp.eq.s32.totalorder %s99, 1
      %p605 = scmp.ne.s32.totalorder %s600, %s602
      %p606 = scmp.eq.s32.totalorder %s99, 0
      %p607 = por %p605, %p606
      %p608 = scmp.ne.s32.totalorder %s600, %s602
      %p609 = scmp.eq.s32.totalorder %s104, 1
      %p610 = por %p608, %p609
      %p611 = scmp.ne.s32.totalorder %s602, %s603
      %p612 = scmp.eq.s32.totalorder %s104, 0
      %p613 = por %p611, %p612
      %p614 = scmp.ne.s32.totalorder %s602, %s603
      %p615 = scmp.eq.s32.totalorder %s105, 1
      %p616 = por %p614, %p615
      %p618 = scmp.ne.s32.totalorder %s603, %s617
      %p619 = scmp.eq.s32.totalorder %s105, 0
      %p620 = por %p618, %p619
      %s622 = sadd.s32 %s621, 1
      %p625 = scmp.eq.s32.totalorder %s99, 1
      %p626 = scmp.ne.s32.totalorder %s621, %s623
      %p627 = scmp.eq.s32.totalorder %s99, 0
      %p628 = por %p626, %p627
      %p629 = scmp.ne.s32.totalorder %s621, %s623
      %p630 = scmp.eq.s32.totalorder %s104, 1
      %p631 = por %p629, %p630
      %p632 = scmp.ne.s32.totalorder %s623, %s624
      %p633 = scmp.eq.s32.totalorder %s104, 0
      %p634 = por %p632, %p633
      %p635 = scmp.ne.s32.totalorder %s623, %s624
      %p636 = scmp.eq.s32.totalorder %s105, 1
      %p637 = por %p635, %p636
      %p639 = scmp.ne.s32.totalorder %s624, %s638
      %p640 = scmp.eq.s32.totalorder %s105, 0
      %p641 = por %p639, %p640
      %s643 = sadd.s32 %s642, 1
      %p646 = scmp.eq.s32.totalorder %s99, 1
      %p647 = scmp.ne.s32.totalorder %s642, %s644
      %p648 = scmp.eq.s32.totalorder %s99, 0
      %p649 = por %p647, %p648
      %p650 = scmp.ne.s32.totalorder %s642, %s644
      %p651 = scmp.eq.s32.totalorder %s104, 1
      %p652 = por %p650, %p651
      %p653 = scmp.ne.s32.totalorder %s644, %s645
      %p654 = scmp.eq.s32.totalorder %s104, 0
      %p655 = por %p653, %p654
      %p656 = scmp.ne.s32.totalorder %s644, %s645
      %p657 = scmp.eq.s32.totalorder %s105, 1
      %p658 = por %p656, %p657
      %p660 = scmp.ne.s32.totalorder %s645, %s659
      %p661 = scmp.eq.s32.totalorder %s105, 0
      %p662 = por %p660, %p661
      %s664 = sadd.s32 %s663, 1
      %p667 = scmp.eq.s32.totalorder %s99, 1
      %p668 = scmp.ne.s32.totalorder %s663, %s665
      %p669 = scmp.eq.s32.totalorder %s99, 0
      %p670 = por %p668, %p669
      %p671 = scmp.ne.s32.totalorder %s663, %s665
      %p672 = scmp.eq.s32.totalorder %s104, 1
      %p673 = por %p671, %p672
      %p674 = scmp.ne.s32.totalorder %s665, %s666
      %p675 = scmp.eq.s32.totalorder %s104, 0
      %p676 = por %p674, %p675
      %p677 = scmp.ne.s32.totalorder %s665, %s666
      %p678 = scmp.eq.s32.totalorder %s105, 1
      %p679 = por %p677, %p678
      %p681 = scmp.ne.s32.totalorder %s666, %s680
      %p682 = scmp.eq.s32.totalorder %s105, 0
      %p683 = por %p681, %p682
      %s685 = sadd.s32 %s684, 1
      %p688 = scmp.eq.s32.totalorder %s99, 1
      %p689 = scmp.ne.s32.totalorder %s684, %s686
      %p690 = scmp.eq.s32.totalorder %s99, 0
      %p691 = por %p689, %p690
      %p692 = scmp.ne.s32.totalorder %s684, %s686
      %p693 = scmp.eq.s32.totalorder %s104, 1
      %p694 = por %p692, %p693
      %p695 = scmp.ne.s32.totalorder %s686, %s687
      %p696 = scmp.eq.s32.totalorder %s104, 0
      %p697 = por %p695, %p696
      %p698 = scmp.ne.s32.totalorder %s686, %s687
      %p699 = scmp.eq.s32.totalorder %s105, 1
      %p700 = por %p698, %p699
      %p702 = scmp.ne.s32.totalorder %s687, %s701
      %p703 = scmp.eq.s32.totalorder %s105, 0
      %p704 = por %p702, %p703
      %s706 = sadd.s32 %s705, 1
      %p709 = scmp.eq.s32.totalorder %s99, 1
      %p710 = scmp.ne.s32.totalorder %s705, %s707
      %p711 = scmp.eq.s32.totalorder %s99, 0
      %p712 = por %p710, %p711
      %p713 = scmp.ne.s32.totalorder %s705, %s707
      %p714 = scmp.eq.s32.totalorder %s104, 1
      %p715 = por %p713, %p714
      %p716 = scmp.ne.s32.totalorder %s707, %s708
      %p717 = scmp.eq.s32.totalorder %s104, 0
      %p718 = por %p716, %p717
      %p719 = scmp.ne.s32.totalorder %s707, %s708
      %p720 = scmp.eq.s32.totalorder %s105, 1
      %p721 = por %p719, %p720
      %p723 = scmp.ne.s32.totalorder %s708, %s722
      %p724 = scmp.eq.s32.totalorder %s105, 0
      %p725 = por %p723, %p724
      %s727 = sadd.s32 %s726, 1
      %p730 = scmp.eq.s32.totalorder %s99, 1
      %p731 = scmp.ne.s32.totalorder %s726, %s728
      %p732 = scmp.eq.s32.totalorder %s99, 0
      %p733 = por %p731, %p732
      %p734 = scmp.ne.s32.totalorder %s726, %s728
      %p735 = scmp.eq.s32.totalorder %s104, 1
      %p736 = por %p734, %p735
      %p737 = scmp.ne.s32.totalorder %s728, %s729
      %p738 = scmp.eq.s32.totalorder %s104, 0
      %p739 = por %p737, %p738
      %p740 = scmp.ne.s32.totalorder %s728, %s729
      %p741 = scmp.eq.s32.totalorder %s105, 1
      %p742 = por %p740, %p741
      %p744 = scmp.ne.s32.totalorder %s729, %s743
      %p745 = scmp.eq.s32.totalorder %s105, 0
      %p746 = por %p744, %p745
      %s748 = sadd.s32 %s747, 1
      %p751 = scmp.eq.s32.totalorder %s99, 1
      %p752 = scmp.ne.s32.totalorder %s747, %s749
      %p753 = scmp.eq.s32.totalorder %s99, 0
      %p754 = por %p752, %p753
      %p755 = scmp.ne.s32.totalorder %s747, %s749
      %p756 = scmp.eq.s32.totalorder %s104, 1
      %p757 = por %p755, %p756
      %p758 = scmp.ne.s32.totalorder %s749, %s750
      %p759 = scmp.eq.s32.totalorder %s104, 0
      %p760 = por %p758, %p759
      %p761 = scmp.ne.s32.totalorder %s749, %s750
      %p762 = scmp.eq.s32.totalorder %s105, 1
      %p763 = por %p761, %p762
      %p765 = scmp.ne.s32.totalorder %s750, %s764
      %p766 = scmp.eq.s32.totalorder %s105, 0
      %p767 = por %p765, %p766
      %s769 = sadd.s32 %s768, 1
      %p772 = scmp.eq.s32.totalorder %s99, 1
      %p773 = scmp.ne.s32.totalorder %s768, %s770
      %p774 = scmp.eq.s32.totalorder %s99, 0
      %p775 = por %p773, %p774
      %p776 = scmp.ne.s32.totalorder %s768, %s770
      %p777 = scmp.eq.s32.totalorder %s104, 1
      %p778 = por %p776, %p777
      %p779 = scmp.ne.s32.totalorder %s770, %s771
      %p780 = scmp.eq.s32.totalorder %s104, 0
      %p781 = por %p779, %p780
      %p782 = scmp.ne.s32.totalorder %s770, %s771
      %p783 = scmp.eq.s32.totalorder %s105, 1
      %p784 = por %p782, %p783
      %p786 = scmp.ne.s32.totalorder %s771, %s785
      %p787 = scmp.eq.s32.totalorder %s105, 0
      %p788 = por %p786, %p787
      %s790 = sadd.s32 %s789, 1
      %p793 = scmp.eq.s32.totalorder %s99, 1
      %p794 = scmp.ne.s32.totalorder %s789, %s791
      %p795 = scmp.eq.s32.totalorder %s99, 0
      %p796 = por %p794, %p795
      %p797 = scmp.ne.s32.totalorder %s789, %s791
      %p798 = scmp.eq.s32.totalorder %s104, 1
      %p799 = por %p797, %p798
      %p800 = scmp.ne.s32.totalorder %s791, %s792
      %p801 = scmp.eq.s32.totalorder %s104, 0
      %p802 = por %p800, %p801
      %p803 = scmp.ne.s32.totalorder %s791, %s792
      %p804 = scmp.eq.s32.totalorder %s105, 1
      %p805 = por %p803, %p804
      %p807 = scmp.ne.s32.totalorder %s792, %s806
      %p808 = scmp.eq.s32.totalorder %s105, 0
      %p809 = por %p807, %p808
      %s811 = sadd.s32 %s810, 1
      %p814 = scmp.eq.s32.totalorder %s99, 1
      %p815 = scmp.ne.s32.totalorder %s810, %s812
      %p816 = scmp.eq.s32.totalorder %s99, 0
      %p817 = por %p815, %p816
      %p818 = scmp.ne.s32.totalorder %s810, %s812
      %p819 = scmp.eq.s32.totalorder %s104, 1
      %p820 = por %p818, %p819
      %p821 = scmp.ne.s32.totalorder %s812, %s813
      %p822 = scmp.eq.s32.totalorder %s104, 0
      %p823 = por %p821, %p822
      %p824 = scmp.ne.s32.totalorder %s812, %s813
      %p825 = scmp.eq.s32.totalorder %s105, 1
      %p826 = por %p824, %p825
      %p828 = scmp.ne.s32.totalorder %s813, %s827
      %p829 = scmp.eq.s32.totalorder %s105, 0
      %p830 = por %p828, %p829
      %s831 = ssub.s32 %s99, %s106
      %p832 = scmp.eq.s32.totalorder %s831, 0
      %s834 = sadd.s32 %s833, 1
      %s835 = scalar_select %p832, %s833, %s834
      %p838 = pneg %p832
      %p839 = scmp.eq.s32.totalorder %s99, 1
      %p840 = por %p838, %p839
      %p841 = scmp.ne.s32.totalorder %s833, %s836
      %p842 = scmp.eq.s32.totalorder %s99, 0
      %p843 = por %p841, %p842
      %p844 = scmp.ne.s32.totalorder %s833, %s836
      %p845 = scmp.eq.s32.totalorder %s104, 1
      %p846 = por %p844, %p845
      %p847 = scmp.ne.s32.totalorder %s836, %s837
      %p848 = scmp.eq.s32.totalorder %s104, 0
      %p849 = por %p847, %p848
      %p850 = scmp.ne.s32.totalorder %s836, %s837
      %p851 = scmp.eq.s32.totalorder %s105, 1
      %p852 = por %p850, %p851
      %p854 = scmp.ne.s32.totalorder %s837, %s853
      %p855 = scmp.eq.s32.totalorder %s105, 0
      %p856 = por %p854, %p855
      %s857 = ssub.s32 %s99, %s106
      %p858 = scmp.eq.s32.totalorder %s857, 0
      %s860 = sadd.s32 %s859, 1
      %s861 = scalar_select %p858, %s859, %s860
      %p864 = pneg %p858
      %p865 = scmp.eq.s32.totalorder %s99, 1
      %p866 = por %p864, %p865
      %p867 = scmp.ne.s32.totalorder %s859, %s862
      %p868 = scmp.eq.s32.totalorder %s99, 0
      %p869 = por %p867, %p868
      %p870 = scmp.ne.s32.totalorder %s859, %s862
      %p871 = scmp.eq.s32.totalorder %s104, 1
      %p872 = por %p870, %p871
      %p873 = scmp.ne.s32.totalorder %s862, %s863
      %p874 = scmp.eq.s32.totalorder %s104, 0
      %p875 = por %p873, %p874
      %p876 = scmp.ne.s32.totalorder %s862, %s863
      %p877 = scmp.eq.s32.totalorder %s105, 1
      %p878 = por %p876, %p877
      %p880 = scmp.ne.s32.totalorder %s863, %s879
      %p881 = scmp.eq.s32.totalorder %s105, 0
      %p882 = por %p880, %p881
      %s883 = ssub.s32 %s99, %s106
      %p884 = scmp.eq.s32.totalorder %s883, 0
      %s886 = sadd.s32 %s885, 1
      %s887 = scalar_select %p884, %s885, %s886
      %p890 = pneg %p884
      %p891 = scmp.eq.s32.totalorder %s99, 1
      %p892 = por %p890, %p891
      %p893 = scmp.ne.s32.totalorder %s885, %s888
      %p894 = scmp.eq.s32.totalorder %s99, 0
      %p895 = por %p893, %p894
      %p896 = scmp.ne.s32.totalorder %s885, %s888
      %p897 = scmp.eq.s32.totalorder %s104, 1
      %p898 = por %p896, %p897
      %p899 = scmp.ne.s32.totalorder %s888, %s889
      %p900 = scmp.eq.s32.totalorder %s104, 0
      %p901 = por %p899, %p900
      %p902 = scmp.ne.s32.totalorder %s888, %s889
      %p903 = scmp.eq.s32.totalorder %s105, 1
      %p904 = por %p902, %p903
      %p906 = scmp.ne.s32.totalorder %s889, %s905
      %p907 = scmp.eq.s32.totalorder %s105, 0
      %p908 = por %p906, %p907
      %p909 = scmp.le.s32.totalorder 1, %s99
      %p910 = scmp.lt.s32.totalorder %s99, 3
      %p911 = pnand %p909, %p910
      %p912 = pneg %p911
      // Predicated region
      $region9: #{tpu_custom_call.1} parent=5 // pred_check
        _
      $region10: #{tpu_custom_call.1} parent=5 // pred_check_branch
        %914 = sbr.rel (%p911) target = $region12
      $region11: #{tpu_custom_call.1} parent=5 // pred_region
        %s915 = ssub.s32 %s99, 1
        // Predicated region
        $region13: #{tpu_custom_call.1} parent=11 // pred_check
          %p916 = pneg %p172
        $region14: #{tpu_custom_call.1} parent=11 // pred_check_branch
          %918 = sbr.rel (%p916) target = $region16
        $region15: #{tpu_custom_call.1} parent=11 // pred_region
          _
        $region16: #{tpu_custom_call.1} parent=11 // pred_fallthru
          _
        // Predicated region
        $region17: #{tpu_custom_call.1} parent=11 // pred_check
          %p919 = pneg %p193
        $region18: #{tpu_custom_call.1} parent=11 // pred_check_branch
          %921 = sbr.rel (%p919) target = $region20
        $region19: #{tpu_custom_call.1} parent=11 // pred_region
          _
        $region20: #{tpu_custom_call.1} parent=11 // pred_fallthru
          _
        // Predicated region
        $region21: #{tpu_custom_call.1} parent=11 // pred_check
          %p922 = pneg %p214
        $region22: #{tpu_custom_call.1} parent=11 // pred_check_branch
          %924 = sbr.rel (%p922) target = $region24
        $region23: #{tpu_custom_call.1} parent=11 // pred_region
          %s926 = ssub.s32 128, 128
          %927 = vsyncadd [#allocation6], %s926
          %s929 = sshll.u32 [#allocation7], 4
          %s930 = int_to_ptr.vmem [resolvable:$true] %s929
          %932 = dma.hbm_to_vmem [thread:$0]  %s9, 128, %s930, [#allocation6]
        $region24: #{tpu_custom_call.1} parent=11 // pred_fallthru
          _
        // Predicated region
        $region25: #{tpu_custom_call.1} parent=11 // pred_check
          %p933 = pneg %p235
        $region26: #{tpu_custom_call.1} parent=11 // pred_check_branch
          %935 = sbr.rel (%p933) target = $region28
        $region27: #{tpu_custom_call.1} parent=11 // pred_region
          %s937 = ssub.s32 16, 16
          %938 = vsyncadd [#allocation9], %s937
          %s940 = sshll.u32 [#allocation8], 4
          %s941 = int_to_ptr.vmem [resolvable:$true] %s940
          %943 = dma.hbm_to_vmem [thread:$0]  %s11, 16, %s941, [#allocation9]
        $region28: #{tpu_custom_call.1} parent=11 // pred_fallthru
          _
        // Predicated region
        $region29: #{tpu_custom_call.1} parent=11 // pred_check
          %p944 = pneg %p256
        $region30: #{tpu_custom_call.1} parent=11 // pred_check_branch
          %946 = sbr.rel (%p944) target = $region32
        $region31: #{tpu_custom_call.1} parent=11 // pred_region
          %s948 = ssub.s32 16, 16
          %949 = vsyncadd [#allocation9], %s948
          %s951 = sshll.u32 [#allocation10], 4
          %s952 = int_to_ptr.vmem [resolvable:$true] %s951
          %954 = dma.hbm_to_vmem [thread:$0]  %s13, 16, %s952, [#allocation9]
        $region32: #{tpu_custom_call.1} parent=11 // pred_fallthru
          _
        // Predicated region
        $region33: #{tpu_custom_call.1} parent=11 // pred_check
          %p955 = pneg %p277
        $region34: #{tpu_custom_call.1} parent=11 // pred_check_branch
          %957 = sbr.rel (%p955) target = $region36
        $region35: #{tpu_custom_call.1} parent=11 // pred_region
          _
        $region36: #{tpu_custom_call.1} parent=11 // pred_fallthru
          _
        // Predicated region
        $region37: #{tpu_custom_call.1} parent=11 // pred_check
          %p958 = pneg %p298
        $region38: #{tpu_custom_call.1} parent=11 // pred_check_branch
          %960 = sbr.rel (%p958) target = $region40
        $region39: #{tpu_custom_call.1} parent=11 // pred_region
          _
        $region40: #{tpu_custom_call.1} parent=11 // pred_fallthru
          _
        // Predicated region
        $region41: #{tpu_custom_call.1} parent=11 // pred_check
          %p961 = pneg %p319
        $region42: #{tpu_custom_call.1} parent=11 // pred_check_branch
          %963 = sbr.rel (%p961) target = $region44
        $region43: #{tpu_custom_call.1} parent=11 // pred_region
          _
        $region44: #{tpu_custom_call.1} parent=11 // pred_fallthru
          _
        // Predicated region
        $region45: #{tpu_custom_call.1} parent=11 // pred_check
          %p964 = pneg %p340
        $region46: #{tpu_custom_call.1} parent=11 // pred_check_branch
          %966 = sbr.rel (%p964) target = $region48
        $region47: #{tpu_custom_call.1} parent=11 // pred_region
          %s968 = ssub.s32 32, 32
          %969 = vsyncadd [#allocation12], %s968
          %s970 = sshll.u32 [#allocation11], 4
          %s971 = int_to_ptr.vmem [resolvable:$true] %s970
          %976 = dma.hbm_to_vmem [thread:$0]  %s21, 32, %s971, [#allocation12], 16, 16, 1
        $region48: #{tpu_custom_call.1} parent=11 // pred_fallthru
          _
        // Predicated region
        $region49: #{tpu_custom_call.1} parent=11 // pred_check
          %p977 = pneg %p361
        $region50: #{tpu_custom_call.1} parent=11 // pred_check_branch
          %979 = sbr.rel (%p977) target = $region52
        $region51: #{tpu_custom_call.1} parent=11 // pred_region
          %s981 = ssub.s32 32, 32
          %982 = vsyncadd [#allocation12], %s981
          %s983 = sshll.u32 [#allocation13], 4
          %s984 = int_to_ptr.vmem [resolvable:$true] %s983
          %989 = dma.hbm_to_vmem [thread:$0]  %s23, 32, %s984, [#allocation12], 16, 16, 1
        $region52: #{tpu_custom_call.1} parent=11 // pred_fallthru
          _
        // Predicated region
        $region53: #{tpu_custom_call.1} parent=11 // pred_check
          %p990 = pneg %p382
        $region54: #{tpu_custom_call.1} parent=11 // pred_check_branch
          %992 = sbr.rel (%p990) target = $region56
        $region55: #{tpu_custom_call.1} parent=11 // pred_region
          %s994 = ssub.s32 32, 32
          %995 = vsyncadd [#allocation15], %s994
          %s996 = sshll.u32 [#allocation14], 4
          %s997 = int_to_ptr.vmem [resolvable:$true] %s996
          %1002 = dma.hbm_to_vmem [thread:$0]  %s25, 32, %s997, [#allocation15], 16, 16, 1
        $region56: #{tpu_custom_call.1} parent=11 // pred_fallthru
          _
        // Predicated region
        $region57: #{tpu_custom_call.1} parent=11 // pred_check
          %p1003 = pneg %p403
        $region58: #{tpu_custom_call.1} parent=11 // pred_check_branch
          %1005 = sbr.rel (%p1003) target = $region60
        $region59: #{tpu_custom_call.1} parent=11 // pred_region
          _
        $region60: #{tpu_custom_call.1} parent=11 // pred_fallthru
          _
        // Predicated region
        $region61: #{tpu_custom_call.1} parent=11 // pred_check
          %p1006 = pneg %p424
        $region62: #{tpu_custom_call.1} parent=11 // pred_check_branch
          %1008 = sbr.rel (%p1006) target = $region64
        $region63: #{tpu_custom_call.1} parent=11 // pred_region
          %s1010 = ssub.s32 32, 32
          %1011 = vsyncadd [#allocation15], %s1010
          %s1012 = sshll.u32 [#allocation16], 4
          %s1013 = int_to_ptr.vmem [resolvable:$true] %s1012
          %1018 = dma.hbm_to_vmem [thread:$0]  %s29, 32, %s1013, [#allocation15], 16, 16, 1
        $region64: #{tpu_custom_call.1} parent=11 // pred_fallthru
          _
        // Predicated region
        $region65: #{tpu_custom_call.1} parent=11 // pred_check
          %p1019 = pneg %p445
        $region66: #{tpu_custom_call.1} parent=11 // pred_check_branch
          %1021 = sbr.rel (%p1019) target = $region68
        $region67: #{tpu_custom_call.1} parent=11 // pred_region
          _
        $region68: #{tpu_custom_call.1} parent=11 // pred_fallthru
          _
        // Predicated region
        $region69: #{tpu_custom_call.1} parent=11 // pred_check
          %p1022 = pneg %p466
        $region70: #{tpu_custom_call.1} parent=11 // pred_check_branch
          %1024 = sbr.rel (%p1022) target = $region72
        $region71: #{tpu_custom_call.1} parent=11 // pred_region
          %s1026 = ssub.s32 32, 32
          %1027 = vsyncadd [#allocation18], %s1026
          %s1028 = sshll.u32 [#allocation17], 4
          %s1029 = int_to_ptr.vmem [resolvable:$true] %s1028
          %1034 = dma.hbm_to_vmem [thread:$0]  %s33, 32, %s1029, [#allocation18], 16, 16, 1
        $region72: #{tpu_custom_call.1} parent=11 // pred_fallthru
          _
        // Predicated region
        $region73: #{tpu_custom_call.1} parent=11 // pred_check
          %p1035 = pneg %p487
        $region74: #{tpu_custom_call.1} parent=11 // pred_check_branch
          %1037 = sbr.rel (%p1035) target = $region76
        $region75: #{tpu_custom_call.1} parent=11 // pred_region
          _
        $region76: #{tpu_custom_call.1} parent=11 // pred_fallthru
          _
        // Predicated region
        $region77: #{tpu_custom_call.1} parent=11 // pred_check
          %p1038 = pneg %p508
        $region78: #{tpu_custom_call.1} parent=11 // pred_check_branch
          %1040 = sbr.rel (%p1038) target = $region80
        $region79: #{tpu_custom_call.1} parent=11 // pred_region
          %s1042 = ssub.s32 32, 32
          %1043 = vsyncadd [#allocation18], %s1042
          %s1044 = sshll.u32 [#allocation19], 4
          %s1045 = int_to_ptr.vmem [resolvable:$true] %s1044
          %1050 = dma.hbm_to_vmem [thread:$0]  %s37, 32, %s1045, [#allocation18], 16, 16, 1
        $region80: #{tpu_custom_call.1} parent=11 // pred_fallthru
          _
        // Predicated region
        $region81: #{tpu_custom_call.1} parent=11 // pred_check
          %p1051 = pneg %p529
        $region82: #{tpu_custom_call.1} parent=11 // pred_check_branch
          %1053 = sbr.rel (%p1051) target = $region84
        $region83: #{tpu_custom_call.1} parent=11 // pred_region
          %s1055 = ssub.s32 32, 32
          %1056 = vsyncadd [#allocation21], %s1055
          %s1057 = sshll.u32 [#allocation20], 4
          %s1058 = int_to_ptr.vmem [resolvable:$true] %s1057
          %1063 = dma.hbm_to_vmem [thread:$0]  %s39, 32, %s1058, [#allocation21], 16, 16, 1
        $region84: #{tpu_custom_call.1} parent=11 // pred_fallthru
          _
        // Predicated region
        $region85: #{tpu_custom_call.1} parent=11 // pred_check
          %p1064 = pneg %p550
        $region86: #{tpu_custom_call.1} parent=11 // pred_check_branch
          %1066 = sbr.rel (%p1064) target = $region88
        $region87: #{tpu_custom_call.1} parent=11 // pred_region
          %s1068 = ssub.s32 32, 32
          %1069 = vsyncadd [#allocation21], %s1068
          %s1070 = sshll.u32 [#allocation22], 4
          %s1071 = int_to_ptr.vmem [resolvable:$true] %s1070
          %1076 = dma.hbm_to_vmem [thread:$0]  %s41, 32, %s1071, [#allocation21], 16, 16, 1
        $region88: #{tpu_custom_call.1} parent=11 // pred_fallthru
          _
        // Predicated region
        $region89: #{tpu_custom_call.1} parent=11 // pred_check
          %p1077 = pneg %p571
        $region90: #{tpu_custom_call.1} parent=11 // pred_check_branch
          %1079 = sbr.rel (%p1077) target = $region92
        $region91: #{tpu_custom_call.1} parent=11 // pred_region
          _
        $region92: #{tpu_custom_call.1} parent=11 // pred_fallthru
          _
        // Predicated region
        $region93: #{tpu_custom_call.1} parent=11 // pred_check
          %p1080 = pneg %p592
        $region94: #{tpu_custom_call.1} parent=11 // pred_check_branch
          %1082 = sbr.rel (%p1080) target = $region96
        $region95: #{tpu_custom_call.1} parent=11 // pred_region
          %s1084 = ssub.s32 32, 32
          %1085 = vsyncadd [#allocation24], %s1084
          %s1086 = sshll.u32 [#allocation23], 4
          %s1087 = int_to_ptr.vmem [resolvable:$true] %s1086
          %1092 = dma.hbm_to_vmem [thread:$0]  %s45, 32, %s1087, [#allocation24], 16, 16, 1
        $region96: #{tpu_custom_call.1} parent=11 // pred_fallthru
          _
        // Predicated region
        $region97: #{tpu_custom_call.1} parent=11 // pred_check
          %p1093 = pneg %p613
        $region98: #{tpu_custom_call.1} parent=11 // pred_check_branch
          %1095 = sbr.rel (%p1093) target = $region100
        $region99: #{tpu_custom_call.1} parent=11 // pred_region
          _
        $region100: #{tpu_custom_call.1} parent=11 // pred_fallthru
          _
        // Predicated region
        $region101: #{tpu_custom_call.1} parent=11 // pred_check
          %p1096 = pneg %p634
        $region102: #{tpu_custom_call.1} parent=11 // pred_check_branch
          %1098 = sbr.rel (%p1096) target = $region104
        $region103: #{tpu_custom_call.1} parent=11 // pred_region
          %s1100 = ssub.s32 32, 32
          %1101 = vsyncadd [#allocation24], %s1100
          %s1102 = sshll.u32 [#allocation25], 4
          %s1103 = int_to_ptr.vmem [resolvable:$true] %s1102
          %1108 = dma.hbm_to_vmem [thread:$0]  %s49, 32, %s1103, [#allocation24], 16, 16, 1
        $region104: #{tpu_custom_call.1} parent=11 // pred_fallthru
          _
        // Predicated region
        $region105: #{tpu_custom_call.1} parent=11 // pred_check
          %p1109 = pneg %p655
        $region106: #{tpu_custom_call.1} parent=11 // pred_check_branch
          %1111 = sbr.rel (%p1109) target = $region108
        $region107: #{tpu_custom_call.1} parent=11 // pred_region
          %s1113 = ssub.s32 32, 32
          %1114 = vsyncadd [#allocation27], %s1113
          %s1115 = sshll.u32 [#allocation26], 4
          %s1116 = int_to_ptr.vmem [resolvable:$true] %s1115
          %1121 = dma.hbm_to_vmem [thread:$0]  %s51, 32, %s1116, [#allocation27], 16, 16, 1
        $region108: #{tpu_custom_call.1} parent=11 // pred_fallthru
          _
        // Predicated region
        $region109: #{tpu_custom_call.1} parent=11 // pred_check
          %p1122 = pneg %p676
        $region110: #{tpu_custom_call.1} parent=11 // pred_check_branch
          %1124 = sbr.rel (%p1122) target = $region112
        $region111: #{tpu_custom_call.1} parent=11 // pred_region
          _
        $region112: #{tpu_custom_call.1} parent=11 // pred_fallthru
          _
        // Predicated region
        $region113: #{tpu_custom_call.1} parent=11 // pred_check
          %p1125 = pneg %p697
        $region114: #{tpu_custom_call.1} parent=11 // pred_check_branch
          %1127 = sbr.rel (%p1125) target = $region116
        $region115: #{tpu_custom_call.1} parent=11 // pred_region
          _
        $region116: #{tpu_custom_call.1} parent=11 // pred_fallthru
          _
        // Predicated region
        $region117: #{tpu_custom_call.1} parent=11 // pred_check
          %p1128 = pneg %p718
        $region118: #{tpu_custom_call.1} parent=11 // pred_check_branch
          %1130 = sbr.rel (%p1128) target = $region120
        $region119: #{tpu_custom_call.1} parent=11 // pred_region
          _
        $region120: #{tpu_custom_call.1} parent=11 // pred_fallthru
          _
        // Predicated region
        $region121: #{tpu_custom_call.1} parent=11 // pred_check
          %p1131 = pneg %p739
        $region122: #{tpu_custom_call.1} parent=11 // pred_check_branch
          %1133 = sbr.rel (%p1131) target = $region124
        $region123: #{tpu_custom_call.1} parent=11 // pred_region
          _
        $region124: #{tpu_custom_call.1} parent=11 // pred_fallthru
          _
        // Predicated region
        $region125: #{tpu_custom_call.1} parent=11 // pred_check
          %p1134 = pneg %p760
        $region126: #{tpu_custom_call.1} parent=11 // pred_check_branch
          %1136 = sbr.rel (%p1134) target = $region128
        $region127: #{tpu_custom_call.1} parent=11 // pred_region
          _
        $region128: #{tpu_custom_call.1} parent=11 // pred_fallthru
          _
        // Predicated region
        $region129: #{tpu_custom_call.1} parent=11 // pred_check
          %p1137 = pneg %p781
        $region130: #{tpu_custom_call.1} parent=11 // pred_check_branch
          %1139 = sbr.rel (%p1137) target = $region132
        $region131: #{tpu_custom_call.1} parent=11 // pred_region
          _
        $region132: #{tpu_custom_call.1} parent=11 // pred_fallthru
          _
        // Predicated region
        $region133: #{tpu_custom_call.1} parent=11 // pred_check
          %p1140 = pneg %p802
        $region134: #{tpu_custom_call.1} parent=11 // pred_check_branch
          %1142 = sbr.rel (%p1140) target = $region136
        $region135: #{tpu_custom_call.1} parent=11 // pred_region
          _
        $region136: #{tpu_custom_call.1} parent=11 // pred_fallthru
          _
        // Predicated region
        $region137: #{tpu_custom_call.1} parent=11 // pred_check
          %p1143 = pneg %p823
        $region138: #{tpu_custom_call.1} parent=11 // pred_check_branch
          %1145 = sbr.rel (%p1143) target = $region140
        $region139: #{tpu_custom_call.1} parent=11 // pred_region
          _
        $region140: #{tpu_custom_call.1} parent=11 // pred_fallthru
          _
      $region12: #{tpu_custom_call.1} parent=5 // pred_fallthru
        _
      %p1146 = scmp.lt.s32.totalorder %s99, 2
      // Predicated region
      $region141: #{tpu_custom_call.1} parent=5 // pred_check
        %p1147 = pneg %p1146
      $region142: #{tpu_custom_call.1} parent=5 // pred_check_branch
        %1149 = sbr.rel (%p1147) target = $region144
      $region143: #{tpu_custom_call.1} parent=5 // pred_region
        // Predicated region
        $region145: #{tpu_custom_call.1} parent=143 // pred_check
          %p1150 = pneg %p119
        $region146: #{tpu_custom_call.1} parent=143 // pred_check_branch
          %1152 = sbr.rel (%p1150) target = $region148
        $region147: #{tpu_custom_call.1} parent=143 // pred_region
          %s1153 = sand.u32 %s109, 1
          %s1154 = scalar_lea.sflag [#allocation3], %s1153
          %s1155 = sand.u32 %s109, 1
          %s1156 = smul.addr %s1155, 16
          %s1157 = scalar_lea.vmem [#allocation2], %s1156
          %s1159 = ssub.s32 256, 256
          %1160 = vsyncadd %s1154, %s1159
          %s1161 = smul.addr %s99, 2
          %s1162 = smul.addr %s1161, 128
          %s1163 = scalar_lea.hbm %s1, %s1162
          %s1164 = sshll.u32 %s1157, 4
          %s1165 = int_to_ptr.vmem [resolvable:$true] %s1164
          %1170 = dma.hbm_to_vmem [thread:$0]  %s1163, 256, %s1165, %s1154, 128, 128, 8
        $region148: #{tpu_custom_call.1} parent=143 // pred_fallthru
          _
        // Predicated region
        $region149: #{tpu_custom_call.1} parent=143 // pred_check
          %p1171 = pneg %p145
        $region150: #{tpu_custom_call.1} parent=143 // pred_check_branch
          %1173 = sbr.rel (%p1171) target = $region152
        $region151: #{tpu_custom_call.1} parent=143 // pred_region
          %s1174 = sand.u32 %s99, 1
          %s1175 = scalar_lea.sflag [#allocation6], %s1174
          %s1176 = sand.u32 %s135, 1
          %s1177 = scalar_lea.vmem [#allocation5], %s1176
          %s1179 = ssub.s32 16, 16
          %1180 = vsyncadd %s1175, %s1179
          %s1181 = smul.addr %s99, 16
          %s1182 = scalar_lea.hbm %s3, %s1181
          %s1184 = sshll.u32 %s1177, 4
          %s1185 = int_to_ptr.vmem [resolvable:$true] %s1184
          %1187 = dma.hbm_to_vmem [thread:$0]  %s1182, 16, %s1185, %s1175
        $region152: #{tpu_custom_call.1} parent=143 // pred_fallthru
          _
      $region144: #{tpu_custom_call.1} parent=5 // pred_fallthru
        _
      %p1188 = scmp.le.s32.totalorder 1, %s99
      %p1189 = scmp.lt.s32.totalorder %s99, 3
      %p1190 = pnand %p1188, %p1189
      %p1191 = pneg %p1190
      // Predicated region
      $region153: #{tpu_custom_call.1} parent=5 // pred_check
        _
      $region154: #{tpu_custom_call.1} parent=5 // pred_check_branch
        %1193 = sbr.rel (%p1190) target = $region156
      $region155: #{tpu_custom_call.1} parent=5 // pred_region
        %s1194 = ssub.s32 %s99, 1
        %s1195 = sand.u32 %s112, 1
        %s1196 = scalar_lea.sflag [#allocation3], %s1195
        %s1197 = sand.u32 %s112, 1
        %s1198 = smul.addr %s1197, 16
        %s1199 = scalar_lea.vmem [#allocation2], %s1198
        // Predicated region
        $region157: #{tpu_custom_call.1} parent=155 // pred_check
          %p1200 = pneg %p125
        $region158: #{tpu_custom_call.1} parent=155 // pred_check_branch
          %1202 = sbr.rel (%p1200) target = $region160
        $region159: #{tpu_custom_call.1} parent=155 // pred_region
          %1203 = dma.done %s1196, 256
        $region160: #{tpu_custom_call.1} parent=155 // pred_fallthru
          _
        %s1204 = sand.u32 %s104, 1
        %s1205 = scalar_lea.sflag [#allocation6], %s1204
        %s1206 = sand.u32 %s138, 1
        %s1207 = scalar_lea.vmem [#allocation5], %s1206
        // Predicated region
        $region161: #{tpu_custom_call.1} parent=155 // pred_check
          %p1208 = pneg %p151
        $region162: #{tpu_custom_call.1} parent=155 // pred_check_branch
          %1210 = sbr.rel (%p1208) target = $region164
        $region163: #{tpu_custom_call.1} parent=155 // pred_region
          %1211 = dma.done %s1205, 16
        $region164: #{tpu_custom_call.1} parent=155 // pred_fallthru
          _
        // Predicated region
        $region165: #{tpu_custom_call.1} parent=155 // pred_check
          %p1212 = pneg %p214
        $region166: #{tpu_custom_call.1} parent=155 // pred_check_branch
          %1214 = sbr.rel (%p1212) target = $region168
        $region167: #{tpu_custom_call.1} parent=155 // pred_region
          %1215 = dma.done [#allocation6], 128
        $region168: #{tpu_custom_call.1} parent=155 // pred_fallthru
          _
        // Predicated region
        $region169: #{tpu_custom_call.1} parent=155 // pred_check
          %p1216 = pneg %p235
        $region170: #{tpu_custom_call.1} parent=155 // pred_check_branch
          %1218 = sbr.rel (%p1216) target = $region172
        $region171: #{tpu_custom_call.1} parent=155 // pred_region
          %1219 = dma.done [#allocation9], 16
        $region172: #{tpu_custom_call.1} parent=155 // pred_fallthru
          _
        // Predicated region
        $region173: #{tpu_custom_call.1} parent=155 // pred_check
          %p1220 = pneg %p256
        $region174: #{tpu_custom_call.1} parent=155 // pred_check_branch
          %1222 = sbr.rel (%p1220) target = $region176
        $region175: #{tpu_custom_call.1} parent=155 // pred_region
          %1223 = dma.done [#allocation9], 16
        $region176: #{tpu_custom_call.1} parent=155 // pred_fallthru
          _
        // Predicated region
        $region177: #{tpu_custom_call.1} parent=155 // pred_check
          %p1224 = pneg %p340
        $region178: #{tpu_custom_call.1} parent=155 // pred_check_branch
          %1226 = sbr.rel (%p1224) target = $region180
        $region179: #{tpu_custom_call.1} parent=155 // pred_region
          %1227 = dma.done [#allocation12], 32
        $region180: #{tpu_custom_call.1} parent=155 // pred_fallthru
          _
        // Predicated region
        $region181: #{tpu_custom_call.1} parent=155 // pred_check
          %p1228 = pneg %p361
        $region182: #{tpu_custom_call.1} parent=155 // pred_check_branch
          %1230 = sbr.rel (%p1228) target = $region184
        $region183: #{tpu_custom_call.1} parent=155 // pred_region
          %1231 = dma.done [#allocation12], 32
        $region184: #{tpu_custom_call.1} parent=155 // pred_fallthru
          _
        // Predicated region
        $region185: #{tpu_custom_call.1} parent=155 // pred_check
          %p1232 = pneg %p382
        $region186: #{tpu_custom_call.1} parent=155 // pred_check_branch
          %1234 = sbr.rel (%p1232) target = $region188
        $region187: #{tpu_custom_call.1} parent=155 // pred_region
          %1235 = dma.done [#allocation15], 32
        $region188: #{tpu_custom_call.1} parent=155 // pred_fallthru
          _
        // Predicated region
        $region189: #{tpu_custom_call.1} parent=155 // pred_check
          %p1236 = pneg %p424
        $region190: #{tpu_custom_call.1} parent=155 // pred_check_branch
          %1238 = sbr.rel (%p1236) target = $region192
        $region191: #{tpu_custom_call.1} parent=155 // pred_region
          %1239 = dma.done [#allocation15], 32
        $region192: #{tpu_custom_call.1} parent=155 // pred_fallthru
          _
        // Predicated region
        $region193: #{tpu_custom_call.1} parent=155 // pred_check
          %p1240 = pneg %p466
        $region194: #{tpu_custom_call.1} parent=155 // pred_check_branch
          %1242 = sbr.rel (%p1240) target = $region196
        $region195: #{tpu_custom_call.1} parent=155 // pred_region
          %1243 = dma.done [#allocation18], 32
        $region196: #{tpu_custom_call.1} parent=155 // pred_fallthru
          _
        // Predicated region
        $region197: #{tpu_custom_call.1} parent=155 // pred_check
          %p1244 = pneg %p508
        $region198: #{tpu_custom_call.1} parent=155 // pred_check_branch
          %1246 = sbr.rel (%p1244) target = $region200
        $region199: #{tpu_custom_call.1} parent=155 // pred_region
          %1247 = dma.done [#allocation18], 32
        $region200: #{tpu_custom_call.1} parent=155 // pred_fallthru
          _
        // Predicated region
        $region201: #{tpu_custom_call.1} parent=155 // pred_check
          %p1248 = pneg %p529
        $region202: #{tpu_custom_call.1} parent=155 // pred_check_branch
          %1250 = sbr.rel (%p1248) target = $region204
        $region203: #{tpu_custom_call.1} parent=155 // pred_region
          %1251 = dma.done [#allocation21], 32
        $region204: #{tpu_custom_call.1} parent=155 // pred_fallthru
          _
        // Predicated region
        $region205: #{tpu_custom_call.1} parent=155 // pred_check
          %p1252 = pneg %p550
        $region206: #{tpu_custom_call.1} parent=155 // pred_check_branch
          %1254 = sbr.rel (%p1252) target = $region208
        $region207: #{tpu_custom_call.1} parent=155 // pred_region
          %1255 = dma.done [#allocation21], 32
        $region208: #{tpu_custom_call.1} parent=155 // pred_fallthru
          _
        // Predicated region
        $region209: #{tpu_custom_call.1} parent=155 // pred_check
          %p1256 = pneg %p592
        $region210: #{tpu_custom_call.1} parent=155 // pred_check_branch
          %1258 = sbr.rel (%p1256) target = $region212
        $region211: #{tpu_custom_call.1} parent=155 // pred_region
          %1259 = dma.done [#allocation24], 32
        $region212: #{tpu_custom_call.1} parent=155 // pred_fallthru
          _
        // Predicated region
        $region213: #{tpu_custom_call.1} parent=155 // pred_check
          %p1260 = pneg %p634
        $region214: #{tpu_custom_call.1} parent=155 // pred_check_branch
          %1262 = sbr.rel (%p1260) target = $region216
        $region215: #{tpu_custom_call.1} parent=155 // pred_region
          %1263 = dma.done [#allocation24], 32
        $region216: #{tpu_custom_call.1} parent=155 // pred_fallthru
          _
        // Predicated region
        $region217: #{tpu_custom_call.1} parent=155 // pred_check
          %p1264 = pneg %p655
        $region218: #{tpu_custom_call.1} parent=155 // pred_check_branch
          %1266 = sbr.rel (%p1264) target = $region220
        $region219: #{tpu_custom_call.1} parent=155 // pred_region
          %1267 = dma.done [#allocation27], 32
        $region220: #{tpu_custom_call.1} parent=155 // pred_fallthru
          _
        %s1268 = sand.u32 %s112, 1
        %s1269 = scalar_lea.sflag [#allocation3], %s1268
        %s1270 = sand.u32 %s112, 1
        %s1271 = smul.addr %s1270, 16
        %s1272 = scalar_lea.vmem [#allocation2], %s1271
        %p1273 = pneg %p125
        %p1274 = pneg %p122
        %s1275 = sand.u32 %s104, 1
        %s1276 = scalar_lea.sflag [#allocation6], %s1275
        %s1277 = sand.u32 %s138, 1
        %s1278 = scalar_lea.vmem [#allocation5], %s1277
        %p1279 = pneg %p151
        %p1280 = pneg %p148
        %p1281 = pneg %p172
        %p1282 = pneg %p169
        %p1283 = pneg %p193
        %p1284 = pneg %p190
        %p1285 = pneg %p214
        %p1286 = pneg %p211
        %p1287 = pneg %p235
        %p1288 = pneg %p232
        %p1289 = pneg %p256
        %p1290 = pneg %p253
        %p1291 = pneg %p277
        %p1292 = pneg %p274
        %p1293 = pneg %p298
        %p1294 = pneg %p295
        %p1295 = pneg %p319
        %p1296 = pneg %p316
        %p1297 = pneg %p340
        %p1298 = pneg %p337
        %p1299 = pneg %p361
        %p1300 = pneg %p358
        %p1301 = pneg %p382
        %p1302 = pneg %p379
        %p1303 = pneg %p403
        %p1304 = pneg %p400
        %p1305 = pneg %p424
        %p1306 = pneg %p421
        %p1307 = pneg %p445
        %p1308 = pneg %p442
        %p1309 = pneg %p466
        %p1310 = pneg %p463
        %p1311 = pneg %p487
        %p1312 = pneg %p484
        %p1313 = pneg %p508
        %p1314 = pneg %p505
        %p1315 = pneg %p529
        %p1316 = pneg %p526
        %p1317 = pneg %p550
        %p1318 = pneg %p547
        %p1319 = pneg %p571
        %p1320 = pneg %p568
        %p1321 = pneg %p592
        %p1322 = pneg %p589
        %p1323 = pneg %p613
        %p1324 = pneg %p610
        %p1325 = pneg %p634
        %p1326 = pneg %p631
        %p1327 = pneg %p655
        %p1328 = pneg %p652
        %p1329 = pneg %p676
        %p1330 = pneg %p673
        %p1331 = pneg %p697
        %p1332 = pneg %p694
        %p1333 = pneg %p718
        %p1334 = pneg %p715
        %p1335 = pneg %p739
        %p1336 = pneg %p736
        %p1337 = pneg %p760
        %p1338 = pneg %p757
        %p1339 = pneg %p781
        %p1340 = pneg %p778
        %p1341 = pneg %p802
        %p1342 = pneg %p799
        %p1343 = pneg %p823
        %p1344 = pneg %p820
        %p1345 = pneg %p849
        %p1346 = pneg %p846
        %s1347 = sand.u32 %s836, 1
        %s1348 = scalar_lea.sflag [#allocation4], %s1347
        %s1349 = sand.u32 %s836, 1
        %s1350 = smul.addr %s1349, 8
        %s1351 = scalar_lea.vmem [#allocation28], %s1350
        %p1352 = pneg %p875
        %p1353 = pneg %p872
        %p1354 = scmp.lt.s32.totalorder %s104, 1
        %s1355 = scalar_select %p1354, %s104, 1
        %s1356 = smul.addr %s1355, 8
        %s1357 = scalar_lea.vmem %s71, %s1356
        %p1358 = pneg %p901
        %p1359 = pneg %p898
        %s1360 = sand.u32 %s888, 1
        %s1361 = scalar_lea.sflag [#allocation30], %s1360
        %s1362 = sand.u32 %s888, 1
        %s1363 = smul.addr %s1362, 8
        %s1364 = scalar_lea.vmem [#allocation29], %s1363
        %p1365 = scmp.lt.s32.totalorder %s104, 1
        %s1366 = scalar_select %p1365, %s104, 1
        %s1367 = smul.addr %s1366, 8
        %s1368 = scalar_lea.vmem %s71, %s1367
        %v1369 = vld [vmem:[%s1199] sm:$0xff]
        %v1370 = vld [vmem:[%s1199 + $0x8] sm:$0xff]
        %v1371 = vld [vmem:[%s1207] sm:$0x1]
        %v1372 = vld [vmem:[#allocation7] sm:$0xff]
        %v1373 = vld [vmem:[#allocation8] sm:$0x1]
        %v1374 = vld [vmem:[#allocation10] sm:$0x1]
        %vm1375 = vcmask 261120
        %v1376 = vsel %vm1375, %v1372, 0.0
        %1377 = vadd.xlane.f32.xlu0 %v1376
        %v1378 = vpop.xlane.xlu0 %1377
        %v1379 = vrcp.pop 32.0
        %v1380 = vmul.f32 %v1378, %v1379
        %v1381 = vsub.f32 %v1372, %v1380
        %v1382 = vmul.f32 %v1381, %v1381
        %v1383 = vsel %vm1375, %v1382, 0.0
        %1384 = vadd.xlane.f32.xlu0 %v1383
        %v1385 = vpop.xlane.xlu0 %1384
        %v1386 = vmul.f32 %v1385, %v1379
        %v1387 = vadd.f32 %v1386, 1e-12
        %v1388 = vrsqrt.pop %v1387
        %v1389 = vmul.f32 %v1381, %v1388
        %v1391 = vlaneseq
        %v1392 = vshrl.u32 %v1391, 7
        %v1393 = vsub.s32 0, %v1392
        %v1394 = vrot.slane %v1373, %v1393
        %v1396 = vmul.f32 %v1389, %v1394
        %v1398 = vlaneseq
        %v1399 = vshrl.u32 %v1398, 7
        %v1400 = vsub.s32 0, %v1399
        %v1401 = vrot.slane %v1374, %v1400
        %v1403 = vadd.f32 %v1396, %v1401
        %v1404 = vld [vmem:[%s15] sm:$0xff]
        %v1405 = vld [vmem:[%s15 + $0x8] sm:$0xff]
        %v1406 = vld [vmem:[%s15 + $0x10] sm:$0xff]
        %v1407 = vld [vmem:[%s15 + $0x18] sm:$0xff]
        %v1408 = vld [vmem:[%s17] sm:$0x1]
        %v1410 = vlaneseq
        %v1411 = vshrl.u32 %v1410, 7
        %v1412 = vsub.s32 0, %v1411
        %v1413 = vrot.slane %v1408, %v1412
        %v1416 = vsel %vm1375, %v1403, 0
        %1418 = vmatprep.subr.mxu0 0.0
        %1419 = vmatpush1.msra.mxu0 %v1404
        %1420 = vmatprep.subr.mxu0 0.0
        %1421 = vmatpush1.msra.mxu0 %v1405
        %1422 = vmatprep.subr.mxu0 0.0
        %1423 = vmatpush1.msra.mxu0 %v1406
        %1424 = vmatprep.subr.mxu0 0.0
        %1425 = vmatpush1.msra.mxu0 %v1407
        %1426 = vmatprep.subr.mxu0 0.0
        %1427 = vmatpush1.msra.mxu0 0.0
        %1428 = vmatprep.subr.mxu0 0.0
        %1429 = vmatpush1.msra.mxu0 0.0
        %1430 = vmatprep.subr.mxu0 0.0
        %1431 = vmatpush1.msra.mxu0 0.0
        %1432 = vmatprep.subr.mxu0 0.0
        %1433 = vmatpush1.msra.mxu0 0.0
        %1434 = vmatprep.subr.mxu0 0.0
        %1435 = vmatpush1.msra.mxu0 0.0
        %1436 = vmatprep.subr.mxu0 0.0
        %1437 = vmatpush1.msra.mxu0 0.0
        %1438 = vmatprep.subr.mxu0 0.0
        %1439 = vmatpush1.msra.mxu0 0.0
        %1440 = vmatprep.subr.mxu0 0.0
        %1441 = vmatpush1.msra.mxu0 0.0
        %1442 = vmatprep.subr.mxu0 0.0
        %1443 = vmatpush1.msra.mxu0 0.0
        %1444 = vmatprep.subr.mxu0 0.0
        %1445 = vmatpush1.msra.mxu0 0.0
        %1446 = vmatprep.subr.mxu0 0.0
        %1447 = vmatpush1.msra.mxu0 0.0
        %1448 = vmatprep.subr.mxu0 0.0
        %1449 = vmatpush1.msra.mxu0 0.0
        %1450 = vmatprep.subr.mxu0 0.0
        %1451 = vmatpush1.msra.mxu0 0.0
        %1452 = vmatprep.subr.mxu0 0.0
        %1453 = vmatpush1.msra.mxu0 0.0
        %1454 = vmatprep.subr.mxu0 0.0
        %1455 = vmatpush1.msra.mxu0 0.0
        %1456 = vmatprep.subr.mxu0 0.0
        %1457 = vmatpush1.msra.mxu0 0.0
        %1458 = vmatprep.subr.mxu0 0.0
        %1459 = vmatpush1.msra.mxu0 0.0
        %1460 = vmatprep.subr.mxu0 0.0
        %1461 = vmatpush1.msra.mxu0 0.0
        %1462 = vmatprep.subr.mxu0 0.0
        %1463 = vmatpush1.msra.mxu0 0.0
        %1464 = vmatprep.subr.mxu0 0.0
        %1465 = vmatpush1.msra.mxu0 0.0
        %1466 = vmatprep.subr.mxu0 0.0
        %1467 = vmatpush1.msra.mxu0 0.0
        %1468 = vmatprep.subr.mxu0 0.0
        %1469 = vmatpush1.msra.mxu0 0.0
        %1470 = vmatprep.subr.mxu0 0.0
        %1471 = vmatpush1.msra.mxu0 0.0
        %1472 = vmatprep.subr.mxu0 0.0
        %1473 = vmatpush1.msra.mxu0 0.0
        %1474 = vmatprep.subr.mxu0 0.0
        %1475 = vmatpush1.msra.mxu0 0.0
        %1476 = vmatprep.subr.mxu0 0.0
        %1477 = vmatpush1.msra.mxu0 0.0
        %1478 = vmatprep.subr.mxu0 0.0
        %1479 = vmatpush1.msra.mxu0 0.0
        %1480 = vmatprep.subr.mxu0 0.0
        %1481 = vmatpush1.msra.mxu0 0.0
        %1482 = vmatprep.mubr.f32.mxu0 0.0
        %1483 = vmatmul.mubr.f32.gmra.mrb[0].mxu0 %v1416
        %v1484 = vpop.f32.mrb[0].mxu0
        %v1485 = vadd.f32 %v1413, %v1484
        %v1486 = vpop.f32.mrb[0].mxu0
        %1487 = vdwg.mxu0
        %v1488 = vld [vmem:[%s19] sm:$0xff]
        %v1489 = vld [vmem:[%s19 + $0x8] sm:$0xff]
        %v1490 = vld [vmem:[%s19 + $0x10] sm:$0xff]
        %v1491 = vld [vmem:[%s19 + $0x18] sm:$0xff]
        %1493 = vrot.lane.b32.xlu0 %v1485, 96
        %v1494 = vpop.permute.xlu0 %1493
        %vm1495 = vcmask 64512
        %v1496 = vsel %vm1495, %v1485, 0
        %v1498 = vsel %vm1495, %v1494, 0
        %1500 = vmatprep.subr.mxu0 0.0
        %1501 = vmatpush1.xpose.msra.mxu0 %v1498
        %1502 = vmatprep.subr.mxu0 0.0
        %1503 = vmatpush1.xpose.msra.mxu0 0.0
        %1504 = vmatprep.subr.mxu0 0.0
        %1505 = vmatpush1.xpose.msra.mxu0 0.0
        %1506 = vmatprep.subr.mxu0 0.0
        %1507 = vmatpush1.xpose.msra.mxu0 0.0
        %1508 = vmatprep.subr.mxu0 0.0
        %1509 = vmatpush1.xpose.msra.mxu0 0.0
        %1510 = vmatprep.subr.mxu0 0.0
        %1511 = vmatpush1.xpose.msra.mxu0 0.0
        %1512 = vmatprep.subr.mxu0 0.0
        %1513 = vmatpush1.xpose.msra.mxu0 0.0
        %1514 = vmatprep.subr.mxu0 0.0
        %1515 = vmatpush1.xpose.msra.mxu0 0.0
        %1516 = vmatprep.subr.mxu0 0.0
        %1517 = vmatpush1.xpose.msra.mxu0 0.0
        %1518 = vmatprep.subr.mxu0 0.0
        %1519 = vmatpush1.xpose.msra.mxu0 0.0
        %1520 = vmatprep.subr.mxu0 0.0
        %1521 = vmatpush1.xpose.msra.mxu0 0.0
        %1522 = vmatprep.subr.mxu0 0.0
        %1523 = vmatpush1.xpose.msra.mxu0 0.0
        %1524 = vmatprep.subr.mxu0 0.0
        %1525 = vmatpush1.xpose.msra.mxu0 0.0
        %1526 = vmatprep.subr.mxu0 0.0
        %1527 = vmatpush1.xpose.msra.mxu0 0.0
        %1528 = vmatprep.subr.mxu0 0.0
        %1529 = vmatpush1.xpose.msra.mxu0 0.0
        %1530 = vmatprep.subr.mxu0 0.0
        %1531 = vmatpush1.xpose.msra.mxu0 0.0
        %1532 = vmatprep.subr.mxu0 0.0
        %1533 = vmatpush1.xpose.msra.mxu0 0.0
        %1534 = vmatprep.subr.mxu0 0.0
        %1535 = vmatpush1.xpose.msra.mxu0 0.0
        %1536 = vmatprep.subr.mxu0 0.0
        %1537 = vmatpush1.xpose.msra.mxu0 0.0
        %1538 = vmatprep.subr.mxu0 0.0
        %1539 = vmatpush1.xpose.msra.mxu0 0.0
        %1540 = vmatprep.subr.mxu0 0.0
        %1541 = vmatpush1.xpose.msra.mxu0 0.0
        %1542 = vmatprep.subr.mxu0 0.0
        %1543 = vmatpush1.xpose.msra.mxu0 0.0
        %1544 = vmatprep.subr.mxu0 0.0
        %1545 = vmatpush1.xpose.msra.mxu0 0.0
        %1546 = vmatprep.subr.mxu0 0.0
        %1547 = vmatpush1.xpose.msra.mxu0 0.0
        %1548 = vmatprep.subr.mxu0 0.0
        %1549 = vmatpush1.xpose.msra.mxu0 0.0
        %1550 = vmatprep.subr.mxu0 0.0
        %1551 = vmatpush1.xpose.msra.mxu0 0.0
        %1552 = vmatprep.subr.mxu0 0.0
        %1553 = vmatpush1.xpose.msra.mxu0 0.0
        %1554 = vmatprep.subr.mxu0 0.0
        %1555 = vmatpush1.xpose.msra.mxu0 0.0
        %1556 = vmatprep.subr.mxu0 0.0
        %1557 = vmatpush1.xpose.msra.mxu0 0.0
        %1558 = vmatprep.subr.mxu0 0.0
        %1559 = vmatpush1.xpose.msra.mxu0 0.0
        %1560 = vmatprep.subr.mxu0 0.0
        %1561 = vmatpush1.xpose.msra.mxu0 0.0
        %1562 = vmatprep.subr.mxu0 0.0
        %1563 = vmatpush1.xpose.msra.mxu0 0.0
        %1564 = vmatprep.mubr.f32.mxu0 0.0
        %1565 = vmatmul.mubr.f32.gmra.mrb[0].mxu0 %v1496
        %v1566 = vpop.f32.mrb[0].mxu0
        %v1567 = vadd.f32 0.0, %v1566
        %v1568 = vpop.f32.mrb[0].mxu0
        %1569 = vdwg.mxu0
        %v1570 = vmul.f32 %v1567, 0.35355338
        %v1571 = vsel %vm1495, %v1570, -inf
        %1572 = vmax.xlane.f32.xlu0 %v1571
        %v1573 = vpop.xlane.xlu0 %1572
        %v1574 = vsub.f32 %v1570, %v1573
        %v1575 = vmul.f32 %v1574, 1.442695
        %v1576 = vpow.pop %v1575
        %v1577 = vsel %vm1495, %v1576, 0.0
        %1578 = vadd.xlane.f32.xlu0 %v1577
        %v1579 = vpop.xlane.xlu0 %1578
        %v1580 = vrcp.pop %v1579
        %v1581 = vmul.f32 %v1576, %v1580
        %1582 = vrot.lane.b32.xlu0 %v1485, 64
        %v1583 = vpop.permute.xlu0 %1582
        %v1586 = vsel %vm1495, %v1581, 0
        %1588 = vmatprep.subr.mxu0 0.0
        %1589 = vmatpush1.msra.mxu0 %v1583
        %1590 = vmatprep.subr.mxu0 0.0
        %1591 = vmatpush1.msra.mxu0 0.0
        %1592 = vmatprep.subr.mxu0 0.0
        %1593 = vmatpush1.msra.mxu0 0.0
        %1594 = vmatprep.subr.mxu0 0.0
        %1595 = vmatpush1.msra.mxu0 0.0
        %1596 = vmatprep.subr.mxu0 0.0
        %1597 = vmatpush1.msra.mxu0 0.0
        %1598 = vmatprep.subr.mxu0 0.0
        %1599 = vmatpush1.msra.mxu0 0.0
        %1600 = vmatprep.subr.mxu0 0.0
        %1601 = vmatpush1.msra.mxu0 0.0
        %1602 = vmatprep.subr.mxu0 0.0
        %1603 = vmatpush1.msra.mxu0 0.0
        %1604 = vmatprep.subr.mxu0 0.0
        %1605 = vmatpush1.msra.mxu0 0.0
        %1606 = vmatprep.subr.mxu0 0.0
        %1607 = vmatpush1.msra.mxu0 0.0
        %1608 = vmatprep.subr.mxu0 0.0
        %1609 = vmatpush1.msra.mxu0 0.0
        %1610 = vmatprep.subr.mxu0 0.0
        %1611 = vmatpush1.msra.mxu0 0.0
        %1612 = vmatprep.subr.mxu0 0.0
        %1613 = vmatpush1.msra.mxu0 0.0
        %1614 = vmatprep.subr.mxu0 0.0
        %1615 = vmatpush1.msra.mxu0 0.0
        %1616 = vmatprep.subr.mxu0 0.0
        %1617 = vmatpush1.msra.mxu0 0.0
        %1618 = vmatprep.subr.mxu0 0.0
        %1619 = vmatpush1.msra.mxu0 0.0
        %1620 = vmatprep.subr.mxu0 0.0
        %1621 = vmatpush1.msra.mxu0 0.0
        %1622 = vmatprep.subr.mxu0 0.0
        %1623 = vmatpush1.msra.mxu0 0.0
        %1624 = vmatprep.subr.mxu0 0.0
        %1625 = vmatpush1.msra.mxu0 0.0
        %1626 = vmatprep.subr.mxu0 0.0
        %1627 = vmatpush1.msra.mxu0 0.0
        %1628 = vmatprep.subr.mxu0 0.0
        %1629 = vmatpush1.msra.mxu0 0.0
        %1630 = vmatprep.subr.mxu0 0.0
        %1631 = vmatpush1.msra.mxu0 0.0
        %1632 = vmatprep.subr.mxu0 0.0
        %1633 = vmatpush1.msra.mxu0 0.0
        %1634 = vmatprep.subr.mxu0 0.0
        %1635 = vmatpush1.msra.mxu0 0.0
        %1636 = vmatprep.subr.mxu0 0.0
        %1637 = vmatpush1.msra.mxu0 0.0
        %1638 = vmatprep.subr.mxu0 0.0
        %1639 = vmatpush1.msra.mxu0 0.0
        %1640 = vmatprep.subr.mxu0 0.0
        %1641 = vmatpush1.msra.mxu0 0.0
        %1642 = vmatprep.subr.mxu0 0.0
        %1643 = vmatpush1.msra.mxu0 0.0
        %1644 = vmatprep.subr.mxu0 0.0
        %1645 = vmatpush1.msra.mxu0 0.0
        %1646 = vmatprep.subr.mxu0 0.0
        %1647 = vmatpush1.msra.mxu0 0.0
        %1648 = vmatprep.subr.mxu0 0.0
        %1649 = vmatpush1.msra.mxu0 0.0
        %1650 = vmatprep.subr.mxu0 0.0
        %1651 = vmatpush1.msra.mxu0 0.0
        %1652 = vmatprep.mubr.f32.mxu0 0.0
        %1653 = vmatmul.mubr.f32.gmra.mrb[0].mxu0 %v1586
        %v1654 = vpop.f32.mrb[0].mxu0
        %v1655 = vadd.f32 0.0, %v1654
        %v1656 = vpop.f32.mrb[0].mxu0
        %1657 = vdwg.mxu0
        %1658 = vrot.lane.b32.xlu0 %v1485, 120
        %v1659 = vpop.permute.xlu0 %1658
        %1660 = vrot.lane.b32.xlu0 %v1485, 88
        %v1661 = vpop.permute.xlu0 %1660
        %v1662 = vsel %vm1495, %v1659, 0
        %v1664 = vsel %vm1495, %v1661, 0
        %1666 = vmatprep.subr.mxu0 0.0
        %1667 = vmatpush1.xpose.msra.mxu0 %v1664
        %1668 = vmatprep.subr.mxu0 0.0
        %1669 = vmatpush1.xpose.msra.mxu0 0.0
        %1670 = vmatprep.subr.mxu0 0.0
        %1671 = vmatpush1.xpose.msra.mxu0 0.0
        %1672 = vmatprep.subr.mxu0 0.0
        %1673 = vmatpush1.xpose.msra.mxu0 0.0
        %1674 = vmatprep.subr.mxu0 0.0
        %1675 = vmatpush1.xpose.msra.mxu0 0.0
        %1676 = vmatprep.subr.mxu0 0.0
        %1677 = vmatpush1.xpose.msra.mxu0 0.0
        %1678 = vmatprep.subr.mxu0 0.0
        %1679 = vmatpush1.xpose.msra.mxu0 0.0
        %1680 = vmatprep.subr.mxu0 0.0
        %1681 = vmatpush1.xpose.msra.mxu0 0.0
        %1682 = vmatprep.subr.mxu0 0.0
        %1683 = vmatpush1.xpose.msra.mxu0 0.0
        %1684 = vmatprep.subr.mxu0 0.0
        %1685 = vmatpush1.xpose.msra.mxu0 0.0
        %1686 = vmatprep.subr.mxu0 0.0
        %1687 = vmatpush1.xpose.msra.mxu0 0.0
        %1688 = vmatprep.subr.mxu0 0.0
        %1689 = vmatpush1.xpose.msra.mxu0 0.0
        %1690 = vmatprep.subr.mxu0 0.0
        %1691 = vmatpush1.xpose.msra.mxu0 0.0
        %1692 = vmatprep.subr.mxu0 0.0
        %1693 = vmatpush1.xpose.msra.mxu0 0.0
        %1694 = vmatprep.subr.mxu0 0.0
        %1695 = vmatpush1.xpose.msra.mxu0 0.0
        %1696 = vmatprep.subr.mxu0 0.0
        %1697 = vmatpush1.xpose.msra.mxu0 0.0
        %1698 = vmatprep.subr.mxu0 0.0
        %1699 = vmatpush1.xpose.msra.mxu0 0.0
        %1700 = vmatprep.subr.mxu0 0.0
        %1701 = vmatpush1.xpose.msra.mxu0 0.0
        %1702 = vmatprep.subr.mxu0 0.0
        %1703 = vmatpush1.xpose.msra.mxu0 0.0
        %1704 = vmatprep.subr.mxu0 0.0
        %1705 = vmatpush1.xpose.msra.mxu0 0.0
        %1706 = vmatprep.subr.mxu0 0.0
        %1707 = vmatpush1.xpose.msra.mxu0 0.0
        %1708 = vmatprep.subr.mxu0 0.0
        %1709 = vmatpush1.xpose.msra.mxu0 0.0
        %1710 = vmatprep.subr.mxu0 0.0
        %1711 = vmatpush1.xpose.msra.mxu0 0.0
        %1712 = vmatprep.subr.mxu0 0.0
        %1713 = vmatpush1.xpose.msra.mxu0 0.0
        %1714 = vmatprep.subr.mxu0 0.0
        %1715 = vmatpush1.xpose.msra.mxu0 0.0
        %1716 = vmatprep.subr.mxu0 0.0
        %1717 = vmatpush1.xpose.msra.mxu0 0.0
        %1718 = vmatprep.subr.mxu0 0.0
        %1719 = vmatpush1.xpose.msra.mxu0 0.0
        %1720 = vmatprep.subr.mxu0 0.0
        %1721 = vmatpush1.xpose.msra.mxu0 0.0
        %1722 = vmatprep.subr.mxu0 0.0
        %1723 = vmatpush1.xpose.msra.mxu0 0.0
        %1724 = vmatprep.subr.mxu0 0.0
        %1725 = vmatpush1.xpose.msra.mxu0 0.0
        %1726 = vmatprep.subr.mxu0 0.0
        %1727 = vmatpush1.xpose.msra.mxu0 0.0
        %1728 = vmatprep.subr.mxu0 0.0
        %1729 = vmatpush1.xpose.msra.mxu0 0.0
        %1730 = vmatprep.mubr.f32.mxu0 0.0
        %1731 = vmatmul.mubr.f32.gmra.mrb[0].mxu0 %v1662
        %v1732 = vpop.f32.mrb[0].mxu0
        %v1733 = vadd.f32 0.0, %v1732
        %v1734 = vpop.f32.mrb[0].mxu0
        %1735 = vdwg.mxu0
        %v1736 = vmul.f32 %v1733, 0.35355338
        %v1737 = vsel %vm1495, %v1736, -inf
        %1738 = vmax.xlane.f32.xlu0 %v1737
        %v1739 = vpop.xlane.xlu0 %1738
        %v1740 = vsub.f32 %v1736, %v1739
        %v1741 = vmul.f32 %v1740, 1.442695
        %v1742 = vpow.pop %v1741
        %v1743 = vsel %vm1495, %v1742, 0.0
        %1744 = vadd.xlane.f32.xlu0 %v1743
        %v1745 = vpop.xlane.xlu0 %1744
        %v1746 = vrcp.pop %v1745
        %v1747 = vmul.f32 %v1742, %v1746
        %1748 = vrot.lane.b32.xlu0 %v1485, 56
        %v1749 = vpop.permute.xlu0 %1748
        %v1752 = vsel %vm1495, %v1747, 0
        %1754 = vmatprep.subr.mxu0 0.0
        %1755 = vmatpush1.msra.mxu0 %v1749
        %1756 = vmatprep.subr.mxu0 0.0
        %1757 = vmatpush1.msra.mxu0 0.0
        %1758 = vmatprep.subr.mxu0 0.0
        %1759 = vmatpush1.msra.mxu0 0.0
        %1760 = vmatprep.subr.mxu0 0.0
        %1761 = vmatpush1.msra.mxu0 0.0
        %1762 = vmatprep.subr.mxu0 0.0
        %1763 = vmatpush1.msra.mxu0 0.0
        %1764 = vmatprep.subr.mxu0 0.0
        %1765 = vmatpush1.msra.mxu0 0.0
        %1766 = vmatprep.subr.mxu0 0.0
        %1767 = vmatpush1.msra.mxu0 0.0
        %1768 = vmatprep.subr.mxu0 0.0
        %1769 = vmatpush1.msra.mxu0 0.0
        %1770 = vmatprep.subr.mxu0 0.0
        %1771 = vmatpush1.msra.mxu0 0.0
        %1772 = vmatprep.subr.mxu0 0.0
        %1773 = vmatpush1.msra.mxu0 0.0
        %1774 = vmatprep.subr.mxu0 0.0
        %1775 = vmatpush1.msra.mxu0 0.0
        %1776 = vmatprep.subr.mxu0 0.0
        %1777 = vmatpush1.msra.mxu0 0.0
        %1778 = vmatprep.subr.mxu0 0.0
        %1779 = vmatpush1.msra.mxu0 0.0
        %1780 = vmatprep.subr.mxu0 0.0
        %1781 = vmatpush1.msra.mxu0 0.0
        %1782 = vmatprep.subr.mxu0 0.0
        %1783 = vmatpush1.msra.mxu0 0.0
        %1784 = vmatprep.subr.mxu0 0.0
        %1785 = vmatpush1.msra.mxu0 0.0
        %1786 = vmatprep.subr.mxu0 0.0
        %1787 = vmatpush1.msra.mxu0 0.0
        %1788 = vmatprep.subr.mxu0 0.0
        %1789 = vmatpush1.msra.mxu0 0.0
        %1790 = vmatprep.subr.mxu0 0.0
        %1791 = vmatpush1.msra.mxu0 0.0
        %1792 = vmatprep.subr.mxu0 0.0
        %1793 = vmatpush1.msra.mxu0 0.0
        %1794 = vmatprep.subr.mxu0 0.0
        %1795 = vmatpush1.msra.mxu0 0.0
        %1796 = vmatprep.subr.mxu0 0.0
        %1797 = vmatpush1.msra.mxu0 0.0
        %1798 = vmatprep.subr.mxu0 0.0
        %1799 = vmatpush1.msra.mxu0 0.0
        %1800 = vmatprep.subr.mxu0 0.0
        %1801 = vmatpush1.msra.mxu0 0.0
        %1802 = vmatprep.subr.mxu0 0.0
        %1803 = vmatpush1.msra.mxu0 0.0
        %1804 = vmatprep.subr.mxu0 0.0
        %1805 = vmatpush1.msra.mxu0 0.0
        %1806 = vmatprep.subr.mxu0 0.0
        %1807 = vmatpush1.msra.mxu0 0.0
        %1808 = vmatprep.subr.mxu0 0.0
        %1809 = vmatpush1.msra.mxu0 0.0
        %1810 = vmatprep.subr.mxu0 0.0
        %1811 = vmatpush1.msra.mxu0 0.0
        %1812 = vmatprep.subr.mxu0 0.0
        %1813 = vmatpush1.msra.mxu0 0.0
        %1814 = vmatprep.subr.mxu0 0.0
        %1815 = vmatpush1.msra.mxu0 0.0
        %1816 = vmatprep.subr.mxu0 0.0
        %1817 = vmatpush1.msra.mxu0 0.0
        %1818 = vmatprep.mubr.f32.mxu0 0.0
        %1819 = vmatmul.mubr.f32.gmra.mrb[0].mxu0 %v1752
        %v1820 = vpop.f32.mrb[0].mxu0
        %v1821 = vadd.f32 0.0, %v1820
        %v1822 = vpop.f32.mrb[0].mxu0
        %1823 = vdwg.mxu0
        %v1825 = vsel %vm1495, %v1821, 0
        %1827 = vmatprep.subr.mxu0 0.0
        %1828 = vmatpush1.msra.mxu0 %v1489
        %1829 = vmatprep.subr.mxu0 0.0
        %1830 = vmatpush1.msra.mxu0 0.0
        %1831 = vmatprep.subr.mxu0 0.0
        %1832 = vmatpush1.msra.mxu0 0.0
        %1833 = vmatprep.subr.mxu0 0.0
        %1834 = vmatpush1.msra.mxu0 0.0
        %1835 = vmatprep.subr.mxu0 0.0
        %1836 = vmatpush1.msra.mxu0 0.0
        %1837 = vmatprep.subr.mxu0 0.0
        %1838 = vmatpush1.msra.mxu0 0.0
        %1839 = vmatprep.subr.mxu0 0.0
        %1840 = vmatpush1.msra.mxu0 0.0
        %1841 = vmatprep.subr.mxu0 0.0
        %1842 = vmatpush1.msra.mxu0 0.0
        %1843 = vmatprep.subr.mxu0 0.0
        %1844 = vmatpush1.msra.mxu0 0.0
        %1845 = vmatprep.subr.mxu0 0.0
        %1846 = vmatpush1.msra.mxu0 0.0
        %1847 = vmatprep.subr.mxu0 0.0
        %1848 = vmatpush1.msra.mxu0 0.0
        %1849 = vmatprep.subr.mxu0 0.0
        %1850 = vmatpush1.msra.mxu0 0.0
        %1851 = vmatprep.subr.mxu0 0.0
        %1852 = vmatpush1.msra.mxu0 0.0
        %1853 = vmatprep.subr.mxu0 0.0
        %1854 = vmatpush1.msra.mxu0 0.0
        %1855 = vmatprep.subr.mxu0 0.0
        %1856 = vmatpush1.msra.mxu0 0.0
        %1857 = vmatprep.subr.mxu0 0.0
        %1858 = vmatpush1.msra.mxu0 0.0
        %1859 = vmatprep.subr.mxu0 0.0
        %1860 = vmatpush1.msra.mxu0 0.0
        %1861 = vmatprep.subr.mxu0 0.0
        %1862 = vmatpush1.msra.mxu0 0.0
        %1863 = vmatprep.subr.mxu0 0.0
        %1864 = vmatpush1.msra.mxu0 0.0
        %1865 = vmatprep.subr.mxu0 0.0
        %1866 = vmatpush1.msra.mxu0 0.0
        %1867 = vmatprep.subr.mxu0 0.0
        %1868 = vmatpush1.msra.mxu0 0.0
        %1869 = vmatprep.subr.mxu0 0.0
        %1870 = vmatpush1.msra.mxu0 0.0
        %1871 = vmatprep.subr.mxu0 0.0
        %1872 = vmatpush1.msra.mxu0 0.0
        %1873 = vmatprep.subr.mxu0 0.0
        %1874 = vmatpush1.msra.mxu0 0.0
        %1875 = vmatprep.subr.mxu0 0.0
        %1876 = vmatpush1.msra.mxu0 0.0
        %1877 = vmatprep.subr.mxu0 0.0
        %1878 = vmatpush1.msra.mxu0 0.0
        %1879 = vmatprep.subr.mxu0 0.0
        %1880 = vmatpush1.msra.mxu0 0.0
        %1881 = vmatprep.subr.mxu0 0.0
        %1882 = vmatpush1.msra.mxu0 0.0
        %1883 = vmatprep.subr.mxu0 0.0
        %1884 = vmatpush1.msra.mxu0 0.0
        %1885 = vmatprep.subr.mxu0 0.0
        %1886 = vmatpush1.msra.mxu0 0.0
        %1887 = vmatprep.subr.mxu0 0.0
        %1888 = vmatpush1.msra.mxu0 0.0
        %1889 = vmatprep.subr.mxu0 0.0
        %1890 = vmatpush1.msra.mxu0 0.0
        %1891 = vmatprep.mubr.f32.mxu0 0.0
        %1892 = vmatmul.mubr.f32.gmra.mrb[0].mxu0 %v1825
        %v1893 = vpop.f32.mrb[0].mxu0
        %v1894 = vadd.f32 0.0, %v1893
        %v1895 = vpop.f32.mrb[0].mxu0
        %1896 = vdwg.mxu0
        %v1898 = vsel %vm1495, %v1655, 0
        %1900 = vmatprep.subr.mxu0 0.0
        %1901 = vmatpush1.msra.mxu0 %v1488
        %1902 = vmatprep.subr.mxu0 0.0
        %1903 = vmatpush1.msra.mxu0 0.0
        %1904 = vmatprep.subr.mxu0 0.0
        %1905 = vmatpush1.msra.mxu0 0.0
        %1906 = vmatprep.subr.mxu0 0.0
        %1907 = vmatpush1.msra.mxu0 0.0
        %1908 = vmatprep.subr.mxu0 0.0
        %1909 = vmatpush1.msra.mxu0 0.0
        %1910 = vmatprep.subr.mxu0 0.0
        %1911 = vmatpush1.msra.mxu0 0.0
        %1912 = vmatprep.subr.mxu0 0.0
        %1913 = vmatpush1.msra.mxu0 0.0
        %1914 = vmatprep.subr.mxu0 0.0
        %1915 = vmatpush1.msra.mxu0 0.0
        %1916 = vmatprep.subr.mxu0 0.0
        %1917 = vmatpush1.msra.mxu0 0.0
        %1918 = vmatprep.subr.mxu0 0.0
        %1919 = vmatpush1.msra.mxu0 0.0
        %1920 = vmatprep.subr.mxu0 0.0
        %1921 = vmatpush1.msra.mxu0 0.0
        %1922 = vmatprep.subr.mxu0 0.0
        %1923 = vmatpush1.msra.mxu0 0.0
        %1924 = vmatprep.subr.mxu0 0.0
        %1925 = vmatpush1.msra.mxu0 0.0
        %1926 = vmatprep.subr.mxu0 0.0
        %1927 = vmatpush1.msra.mxu0 0.0
        %1928 = vmatprep.subr.mxu0 0.0
        %1929 = vmatpush1.msra.mxu0 0.0
        %1930 = vmatprep.subr.mxu0 0.0
        %1931 = vmatpush1.msra.mxu0 0.0
        %1932 = vmatprep.subr.mxu0 0.0
        %1933 = vmatpush1.msra.mxu0 0.0
        %1934 = vmatprep.subr.mxu0 0.0
        %1935 = vmatpush1.msra.mxu0 0.0
        %1936 = vmatprep.subr.mxu0 0.0
        %1937 = vmatpush1.msra.mxu0 0.0
        %1938 = vmatprep.subr.mxu0 0.0
        %1939 = vmatpush1.msra.mxu0 0.0
        %1940 = vmatprep.subr.mxu0 0.0
        %1941 = vmatpush1.msra.mxu0 0.0
        %1942 = vmatprep.subr.mxu0 0.0
        %1943 = vmatpush1.msra.mxu0 0.0
        %1944 = vmatprep.subr.mxu0 0.0
        %1945 = vmatpush1.msra.mxu0 0.0
        %1946 = vmatprep.subr.mxu0 0.0
        %1947 = vmatpush1.msra.mxu0 0.0
        %1948 = vmatprep.subr.mxu0 0.0
        %1949 = vmatpush1.msra.mxu0 0.0
        %1950 = vmatprep.subr.mxu0 0.0
        %1951 = vmatpush1.msra.mxu0 0.0
        %1952 = vmatprep.subr.mxu0 0.0
        %1953 = vmatpush1.msra.mxu0 0.0
        %1954 = vmatprep.subr.mxu0 0.0
        %1955 = vmatpush1.msra.mxu0 0.0
        %1956 = vmatprep.subr.mxu0 0.0
        %1957 = vmatpush1.msra.mxu0 0.0
        %1958 = vmatprep.subr.mxu0 0.0
        %1959 = vmatpush1.msra.mxu0 0.0
        %1960 = vmatprep.subr.mxu0 0.0
        %1961 = vmatpush1.msra.mxu0 0.0
        %1962 = vmatprep.subr.mxu0 0.0
        %1963 = vmatpush1.msra.mxu0 0.0
        %1964 = vmatprep.mubr.f32.mxu0 0.0
        %1965 = vmatmul.mubr.f32.gmra.mrb[0].mxu0 %v1898
        %v1966 = vpop.f32.mrb[0].mxu0
        %v1967 = vadd.f32 %v1894, %v1966
        %v1968 = vpop.f32.mrb[0].mxu0
        %1969 = vdwg.mxu0
        %1970 = vrot.lane.b32.xlu0 %v1485, 112
        %v1971 = vpop.permute.xlu0 %1970
        %1972 = vrot.lane.b32.xlu0 %v1485, 80
        %v1973 = vpop.permute.xlu0 %1972
        %v1974 = vsel %vm1495, %v1971, 0
        %v1976 = vsel %vm1495, %v1973, 0
        %1978 = vmatprep.subr.mxu0 0.0
        %1979 = vmatpush1.xpose.msra.mxu0 %v1976
        %1980 = vmatprep.subr.mxu0 0.0
        %1981 = vmatpush1.xpose.msra.mxu0 0.0
        %1982 = vmatprep.subr.mxu0 0.0
        %1983 = vmatpush1.xpose.msra.mxu0 0.0
        %1984 = vmatprep.subr.mxu0 0.0
        %1985 = vmatpush1.xpose.msra.mxu0 0.0
        %1986 = vmatprep.subr.mxu0 0.0
        %1987 = vmatpush1.xpose.msra.mxu0 0.0
        %1988 = vmatprep.subr.mxu0 0.0
        %1989 = vmatpush1.xpose.msra.mxu0 0.0
        %1990 = vmatprep.subr.mxu0 0.0
        %1991 = vmatpush1.xpose.msra.mxu0 0.0
        %1992 = vmatprep.subr.mxu0 0.0
        %1993 = vmatpush1.xpose.msra.mxu0 0.0
        %1994 = vmatprep.subr.mxu0 0.0
        %1995 = vmatpush1.xpose.msra.mxu0 0.0
        %1996 = vmatprep.subr.mxu0 0.0
        %1997 = vmatpush1.xpose.msra.mxu0 0.0
        %1998 = vmatprep.subr.mxu0 0.0
        %1999 = vmatpush1.xpose.msra.mxu0 0.0
        %2000 = vmatprep.subr.mxu0 0.0
        %2001 = vmatpush1.xpose.msra.mxu0 0.0
        %2002 = vmatprep.subr.mxu0 0.0
        %2003 = vmatpush1.xpose.msra.mxu0 0.0
        %2004 = vmatprep.subr.mxu0 0.0
        %2005 = vmatpush1.xpose.msra.mxu0 0.0
        %2006 = vmatprep.subr.mxu0 0.0
        %2007 = vmatpush1.xpose.msra.mxu0 0.0
        %2008 = vmatprep.subr.mxu0 0.0
        %2009 = vmatpush1.xpose.msra.mxu0 0.0
        %2010 = vmatprep.subr.mxu0 0.0
        %2011 = vmatpush1.xpose.msra.mxu0 0.0
        %2012 = vmatprep.subr.mxu0 0.0
        %2013 = vmatpush1.xpose.msra.mxu0 0.0
        %2014 = vmatprep.subr.mxu0 0.0
        %2015 = vmatpush1.xpose.msra.mxu0 0.0
        %2016 = vmatprep.subr.mxu0 0.0
        %2017 = vmatpush1.xpose.msra.mxu0 0.0
        %2018 = vmatprep.subr.mxu0 0.0
        %2019 = vmatpush1.xpose.msra.mxu0 0.0
        %2020 = vmatprep.subr.mxu0 0.0
        %2021 = vmatpush1.xpose.msra.mxu0 0.0
        %2022 = vmatprep.subr.mxu0 0.0
        %2023 = vmatpush1.xpose.msra.mxu0 0.0
        %2024 = vmatprep.subr.mxu0 0.0
        %2025 = vmatpush1.xpose.msra.mxu0 0.0
        %2026 = vmatprep.subr.mxu0 0.0
        %2027 = vmatpush1.xpose.msra.mxu0 0.0
        %2028 = vmatprep.subr.mxu0 0.0
        %2029 = vmatpush1.xpose.msra.mxu0 0.0
        %2030 = vmatprep.subr.mxu0 0.0
        %2031 = vmatpush1.xpose.msra.mxu0 0.0
        %2032 = vmatprep.subr.mxu0 0.0
        %2033 = vmatpush1.xpose.msra.mxu0 0.0
        %2034 = vmatprep.subr.mxu0 0.0
        %2035 = vmatpush1.xpose.msra.mxu0 0.0
        %2036 = vmatprep.subr.mxu0 0.0
        %2037 = vmatpush1.xpose.msra.mxu0 0.0
        %2038 = vmatprep.subr.mxu0 0.0
        %2039 = vmatpush1.xpose.msra.mxu0 0.0
        %2040 = vmatprep.subr.mxu0 0.0
        %2041 = vmatpush1.xpose.msra.mxu0 0.0
        %2042 = vmatprep.mubr.f32.mxu0 0.0
        %2043 = vmatmul.mubr.f32.gmra.mrb[0].mxu0 %v1974
        %v2044 = vpop.f32.mrb[0].mxu0
        %v2045 = vadd.f32 0.0, %v2044
        %v2046 = vpop.f32.mrb[0].mxu0
        %2047 = vdwg.mxu0
        %v2048 = vmul.f32 %v2045, 0.35355338
        %v2049 = vsel %vm1495, %v2048, -inf
        %2050 = vmax.xlane.f32.xlu0 %v2049
        %v2051 = vpop.xlane.xlu0 %2050
        %v2052 = vsub.f32 %v2048, %v2051
        %v2053 = vmul.f32 %v2052, 1.442695
        %v2054 = vpow.pop %v2053
        %v2055 = vsel %vm1495, %v2054, 0.0
        %2056 = vadd.xlane.f32.xlu0 %v2055
        %v2057 = vpop.xlane.xlu0 %2056
        %v2058 = vrcp.pop %v2057
        %v2059 = vmul.f32 %v2054, %v2058
        %2060 = vrot.lane.b32.xlu0 %v1485, 48
        %v2061 = vpop.permute.xlu0 %2060
        %v2064 = vsel %vm1495, %v2059, 0
        %2066 = vmatprep.subr.mxu0 0.0
        %2067 = vmatpush1.msra.mxu0 %v2061
        %2068 = vmatprep.subr.mxu0 0.0
        %2069 = vmatpush1.msra.mxu0 0.0
        %2070 = vmatprep.subr.mxu0 0.0
        %2071 = vmatpush1.msra.mxu0 0.0
        %2072 = vmatprep.subr.mxu0 0.0
        %2073 = vmatpush1.msra.mxu0 0.0
        %2074 = vmatprep.subr.mxu0 0.0
        %2075 = vmatpush1.msra.mxu0 0.0
        %2076 = vmatprep.subr.mxu0 0.0
        %2077 = vmatpush1.msra.mxu0 0.0
        %2078 = vmatprep.subr.mxu0 0.0
        %2079 = vmatpush1.msra.mxu0 0.0
        %2080 = vmatprep.subr.mxu0 0.0
        %2081 = vmatpush1.msra.mxu0 0.0
        %2082 = vmatprep.subr.mxu0 0.0
        %2083 = vmatpush1.msra.mxu0 0.0
        %2084 = vmatprep.subr.mxu0 0.0
        %2085 = vmatpush1.msra.mxu0 0.0
        %2086 = vmatprep.subr.mxu0 0.0
        %2087 = vmatpush1.msra.mxu0 0.0
        %2088 = vmatprep.subr.mxu0 0.0
        %2089 = vmatpush1.msra.mxu0 0.0
        %2090 = vmatprep.subr.mxu0 0.0
        %2091 = vmatpush1.msra.mxu0 0.0
        %2092 = vmatprep.subr.mxu0 0.0
        %2093 = vmatpush1.msra.mxu0 0.0
        %2094 = vmatprep.subr.mxu0 0.0
        %2095 = vmatpush1.msra.mxu0 0.0
        %2096 = vmatprep.subr.mxu0 0.0
        %2097 = vmatpush1.msra.mxu0 0.0
        %2098 = vmatprep.subr.mxu0 0.0
        %2099 = vmatpush1.msra.mxu0 0.0
        %2100 = vmatprep.subr.mxu0 0.0
        %2101 = vmatpush1.msra.mxu0 0.0
        %2102 = vmatprep.subr.mxu0 0.0
        %2103 = vmatpush1.msra.mxu0 0.0
        %2104 = vmatprep.subr.mxu0 0.0
        %2105 = vmatpush1.msra.mxu0 0.0
        %2106 = vmatprep.subr.mxu0 0.0
        %2107 = vmatpush1.msra.mxu0 0.0
        %2108 = vmatprep.subr.mxu0 0.0
        %2109 = vmatpush1.msra.mxu0 0.0
        %2110 = vmatprep.subr.mxu0 0.0
        %2111 = vmatpush1.msra.mxu0 0.0
        %2112 = vmatprep.subr.mxu0 0.0
        %2113 = vmatpush1.msra.mxu0 0.0
        %2114 = vmatprep.subr.mxu0 0.0
        %2115 = vmatpush1.msra.mxu0 0.0
        %2116 = vmatprep.subr.mxu0 0.0
        %2117 = vmatpush1.msra.mxu0 0.0
        %2118 = vmatprep.subr.mxu0 0.0
        %2119 = vmatpush1.msra.mxu0 0.0
        %2120 = vmatprep.subr.mxu0 0.0
        %2121 = vmatpush1.msra.mxu0 0.0
        %2122 = vmatprep.subr.mxu0 0.0
        %2123 = vmatpush1.msra.mxu0 0.0
        %2124 = vmatprep.subr.mxu0 0.0
        %2125 = vmatpush1.msra.mxu0 0.0
        %2126 = vmatprep.subr.mxu0 0.0
        %2127 = vmatpush1.msra.mxu0 0.0
        %2128 = vmatprep.subr.mxu0 0.0
        %2129 = vmatpush1.msra.mxu0 0.0
        %2130 = vmatprep.mubr.f32.mxu0 0.0
        %2131 = vmatmul.mubr.f32.gmra.mrb[0].mxu0 %v2064
        %v2132 = vpop.f32.mrb[0].mxu0
        %v2133 = vadd.f32 0.0, %v2132
        %v2134 = vpop.f32.mrb[0].mxu0
        %2135 = vdwg.mxu0
        %v2137 = vsel %vm1495, %v2133, 0
        %2139 = vmatprep.subr.mxu0 0.0
        %2140 = vmatpush1.msra.mxu0 %v1490
        %2141 = vmatprep.subr.mxu0 0.0
        %2142 = vmatpush1.msra.mxu0 0.0
        %2143 = vmatprep.subr.mxu0 0.0
        %2144 = vmatpush1.msra.mxu0 0.0
        %2145 = vmatprep.subr.mxu0 0.0
        %2146 = vmatpush1.msra.mxu0 0.0
        %2147 = vmatprep.subr.mxu0 0.0
        %2148 = vmatpush1.msra.mxu0 0.0
        %2149 = vmatprep.subr.mxu0 0.0
        %2150 = vmatpush1.msra.mxu0 0.0
        %2151 = vmatprep.subr.mxu0 0.0
        %2152 = vmatpush1.msra.mxu0 0.0
        %2153 = vmatprep.subr.mxu0 0.0
        %2154 = vmatpush1.msra.mxu0 0.0
        %2155 = vmatprep.subr.mxu0 0.0
        %2156 = vmatpush1.msra.mxu0 0.0
        %2157 = vmatprep.subr.mxu0 0.0
        %2158 = vmatpush1.msra.mxu0 0.0
        %2159 = vmatprep.subr.mxu0 0.0
        %2160 = vmatpush1.msra.mxu0 0.0
        %2161 = vmatprep.subr.mxu0 0.0
        %2162 = vmatpush1.msra.mxu0 0.0
        %2163 = vmatprep.subr.mxu0 0.0
        %2164 = vmatpush1.msra.mxu0 0.0
        %2165 = vmatprep.subr.mxu0 0.0
        %2166 = vmatpush1.msra.mxu0 0.0
        %2167 = vmatprep.subr.mxu0 0.0
        %2168 = vmatpush1.msra.mxu0 0.0
        %2169 = vmatprep.subr.mxu0 0.0
        %2170 = vmatpush1.msra.mxu0 0.0
        %2171 = vmatprep.subr.mxu0 0.0
        %2172 = vmatpush1.msra.mxu0 0.0
        %2173 = vmatprep.subr.mxu0 0.0
        %2174 = vmatpush1.msra.mxu0 0.0
        %2175 = vmatprep.subr.mxu0 0.0
        %2176 = vmatpush1.msra.mxu0 0.0
        %2177 = vmatprep.subr.mxu0 0.0
        %2178 = vmatpush1.msra.mxu0 0.0
        %2179 = vmatprep.subr.mxu0 0.0
        %2180 = vmatpush1.msra.mxu0 0.0
        %2181 = vmatprep.subr.mxu0 0.0
        %2182 = vmatpush1.msra.mxu0 0.0
        %2183 = vmatprep.subr.mxu0 0.0
        %2184 = vmatpush1.msra.mxu0 0.0
        %2185 = vmatprep.subr.mxu0 0.0
        %2186 = vmatpush1.msra.mxu0 0.0
        %2187 = vmatprep.subr.mxu0 0.0
        %2188 = vmatpush1.msra.mxu0 0.0
        %2189 = vmatprep.subr.mxu0 0.0
        %2190 = vmatpush1.msra.mxu0 0.0
        %2191 = vmatprep.subr.mxu0 0.0
        %2192 = vmatpush1.msra.mxu0 0.0
        %2193 = vmatprep.subr.mxu0 0.0
        %2194 = vmatpush1.msra.mxu0 0.0
        %2195 = vmatprep.subr.mxu0 0.0
        %2196 = vmatpush1.msra.mxu0 0.0
        %2197 = vmatprep.subr.mxu0 0.0
        %2198 = vmatpush1.msra.mxu0 0.0
        %2199 = vmatprep.subr.mxu0 0.0
        %2200 = vmatpush1.msra.mxu0 0.0
        %2201 = vmatprep.subr.mxu0 0.0
        %2202 = vmatpush1.msra.mxu0 0.0
        %2203 = vmatprep.mubr.f32.mxu0 0.0
        %2204 = vmatmul.mubr.f32.gmra.mrb[0].mxu0 %v2137
        %v2205 = vpop.f32.mrb[0].mxu0
        %v2206 = vadd.f32 0.0, %v2205
        %v2207 = vpop.f32.mrb[0].mxu0
        %2208 = vdwg.mxu0
        %v2209 = vadd.f32 %v1967, %v2206
        %2210 = vrot.lane.b32.xlu0 %v1485, 104
        %v2211 = vpop.permute.xlu0 %2210
        %2212 = vrot.lane.b32.xlu0 %v1485, 72
        %v2213 = vpop.permute.xlu0 %2212
        %v2214 = vsel %vm1495, %v2211, 0
        %v2216 = vsel %vm1495, %v2213, 0
        %2218 = vmatprep.subr.mxu0 0.0
        %2219 = vmatpush1.xpose.msra.mxu0 %v2216
        %2220 = vmatprep.subr.mxu0 0.0
        %2221 = vmatpush1.xpose.msra.mxu0 0.0
        %2222 = vmatprep.subr.mxu0 0.0
        %2223 = vmatpush1.xpose.msra.mxu0 0.0
        %2224 = vmatprep.subr.mxu0 0.0
        %2225 = vmatpush1.xpose.msra.mxu0 0.0
        %2226 = vmatprep.subr.mxu0 0.0
        %2227 = vmatpush1.xpose.msra.mxu0 0.0
        %2228 = vmatprep.subr.mxu0 0.0
        %2229 = vmatpush1.xpose.msra.mxu0 0.0
        %2230 = vmatprep.subr.mxu0 0.0
        %2231 = vmatpush1.xpose.msra.mxu0 0.0
        %2232 = vmatprep.subr.mxu0 0.0
        %2233 = vmatpush1.xpose.msra.mxu0 0.0
        %2234 = vmatprep.subr.mxu0 0.0
        %2235 = vmatpush1.xpose.msra.mxu0 0.0
        %2236 = vmatprep.subr.mxu0 0.0
        %2237 = vmatpush1.xpose.msra.mxu0 0.0
        %2238 = vmatprep.subr.mxu0 0.0
        %2239 = vmatpush1.xpose.msra.mxu0 0.0
        %2240 = vmatprep.subr.mxu0 0.0
        %2241 = vmatpush1.xpose.msra.mxu0 0.0
        %2242 = vmatprep.subr.mxu0 0.0
        %2243 = vmatpush1.xpose.msra.mxu0 0.0
        %2244 = vmatprep.subr.mxu0 0.0
        %2245 = vmatpush1.xpose.msra.mxu0 0.0
        %2246 = vmatprep.subr.mxu0 0.0
        %2247 = vmatpush1.xpose.msra.mxu0 0.0
        %2248 = vmatprep.subr.mxu0 0.0
        %2249 = vmatpush1.xpose.msra.mxu0 0.0
        %2250 = vmatprep.subr.mxu0 0.0
        %2251 = vmatpush1.xpose.msra.mxu0 0.0
        %2252 = vmatprep.subr.mxu0 0.0
        %2253 = vmatpush1.xpose.msra.mxu0 0.0
        %2254 = vmatprep.subr.mxu0 0.0
        %2255 = vmatpush1.xpose.msra.mxu0 0.0
        %2256 = vmatprep.subr.mxu0 0.0
        %2257 = vmatpush1.xpose.msra.mxu0 0.0
        %2258 = vmatprep.subr.mxu0 0.0
        %2259 = vmatpush1.xpose.msra.mxu0 0.0
        %2260 = vmatprep.subr.mxu0 0.0
        %2261 = vmatpush1.xpose.msra.mxu0 0.0
        %2262 = vmatprep.subr.mxu0 0.0
        %2263 = vmatpush1.xpose.msra.mxu0 0.0
        %2264 = vmatprep.subr.mxu0 0.0
        %2265 = vmatpush1.xpose.msra.mxu0 0.0
        %2266 = vmatprep.subr.mxu0 0.0
        %2267 = vmatpush1.xpose.msra.mxu0 0.0
        %2268 = vmatprep.subr.mxu0 0.0
        %2269 = vmatpush1.xpose.msra.mxu0 0.0
        %2270 = vmatprep.subr.mxu0 0.0
        %2271 = vmatpush1.xpose.msra.mxu0 0.0
        %2272 = vmatprep.subr.mxu0 0.0
        %2273 = vmatpush1.xpose.msra.mxu0 0.0
        %2274 = vmatprep.subr.mxu0 0.0
        %2275 = vmatpush1.xpose.msra.mxu0 0.0
        %2276 = vmatprep.subr.mxu0 0.0
        %2277 = vmatpush1.xpose.msra.mxu0 0.0
        %2278 = vmatprep.subr.mxu0 0.0
        %2279 = vmatpush1.xpose.msra.mxu0 0.0
        %2280 = vmatprep.subr.mxu0 0.0
        %2281 = vmatpush1.xpose.msra.mxu0 0.0
        %2282 = vmatprep.mubr.f32.mxu0 0.0
        %2283 = vmatmul.mubr.f32.gmra.mrb[0].mxu0 %v2214
        %v2284 = vpop.f32.mrb[0].mxu0
        %v2285 = vadd.f32 0.0, %v2284
        %v2286 = vpop.f32.mrb[0].mxu0
        %2287 = vdwg.mxu0
        %v2288 = vmul.f32 %v2285, 0.35355338
        %v2289 = vsel %vm1495, %v2288, -inf
        %2290 = vmax.xlane.f32.xlu0 %v2289
        %v2291 = vpop.xlane.xlu0 %2290
        %v2292 = vsub.f32 %v2288, %v2291
        %v2293 = vmul.f32 %v2292, 1.442695
        %v2294 = vpow.pop %v2293
        %v2295 = vsel %vm1495, %v2294, 0.0
        %2296 = vadd.xlane.f32.xlu0 %v2295
        %v2297 = vpop.xlane.xlu0 %2296
        %v2298 = vrcp.pop %v2297
        %v2299 = vmul.f32 %v2294, %v2298
        %2300 = vrot.lane.b32.xlu0 %v1485, 40
        %v2301 = vpop.permute.xlu0 %2300
        %v2304 = vsel %vm1495, %v2299, 0
        %2306 = vmatprep.subr.mxu0 0.0
        %2307 = vmatpush1.msra.mxu0 %v2301
        %2308 = vmatprep.subr.mxu0 0.0
        %2309 = vmatpush1.msra.mxu0 0.0
        %2310 = vmatprep.subr.mxu0 0.0
        %2311 = vmatpush1.msra.mxu0 0.0
        %2312 = vmatprep.subr.mxu0 0.0
        %2313 = vmatpush1.msra.mxu0 0.0
        %2314 = vmatprep.subr.mxu0 0.0
        %2315 = vmatpush1.msra.mxu0 0.0
        %2316 = vmatprep.subr.mxu0 0.0
        %2317 = vmatpush1.msra.mxu0 0.0
        %2318 = vmatprep.subr.mxu0 0.0
        %2319 = vmatpush1.msra.mxu0 0.0
        %2320 = vmatprep.subr.mxu0 0.0
        %2321 = vmatpush1.msra.mxu0 0.0
        %2322 = vmatprep.subr.mxu0 0.0
        %2323 = vmatpush1.msra.mxu0 0.0
        %2324 = vmatprep.subr.mxu0 0.0
        %2325 = vmatpush1.msra.mxu0 0.0
        %2326 = vmatprep.subr.mxu0 0.0
        %2327 = vmatpush1.msra.mxu0 0.0
        %2328 = vmatprep.subr.mxu0 0.0
        %2329 = vmatpush1.msra.mxu0 0.0
        %2330 = vmatprep.subr.mxu0 0.0
        %2331 = vmatpush1.msra.mxu0 0.0
        %2332 = vmatprep.subr.mxu0 0.0
        %2333 = vmatpush1.msra.mxu0 0.0
        %2334 = vmatprep.subr.mxu0 0.0
        %2335 = vmatpush1.msra.mxu0 0.0
        %2336 = vmatprep.subr.mxu0 0.0
        %2337 = vmatpush1.msra.mxu0 0.0
        %2338 = vmatprep.subr.mxu0 0.0
        %2339 = vmatpush1.msra.mxu0 0.0
        %2340 = vmatprep.subr.mxu0 0.0
        %2341 = vmatpush1.msra.mxu0 0.0
        %2342 = vmatprep.subr.mxu0 0.0
        %2343 = vmatpush1.msra.mxu0 0.0
        %2344 = vmatprep.subr.mxu0 0.0
        %2345 = vmatpush1.msra.mxu0 0.0
        %2346 = vmatprep.subr.mxu0 0.0
        %2347 = vmatpush1.msra.mxu0 0.0
        %2348 = vmatprep.subr.mxu0 0.0
        %2349 = vmatpush1.msra.mxu0 0.0
        %2350 = vmatprep.subr.mxu0 0.0
        %2351 = vmatpush1.msra.mxu0 0.0
        %2352 = vmatprep.subr.mxu0 0.0
        %2353 = vmatpush1.msra.mxu0 0.0
        %2354 = vmatprep.subr.mxu0 0.0
        %2355 = vmatpush1.msra.mxu0 0.0
        %2356 = vmatprep.subr.mxu0 0.0
        %2357 = vmatpush1.msra.mxu0 0.0
        %2358 = vmatprep.subr.mxu0 0.0
        %2359 = vmatpush1.msra.mxu0 0.0
        %2360 = vmatprep.subr.mxu0 0.0
        %2361 = vmatpush1.msra.mxu0 0.0
        %2362 = vmatprep.subr.mxu0 0.0
        %2363 = vmatpush1.msra.mxu0 0.0
        %2364 = vmatprep.subr.mxu0 0.0
        %2365 = vmatpush1.msra.mxu0 0.0
        %2366 = vmatprep.subr.mxu0 0.0
        %2367 = vmatpush1.msra.mxu0 0.0
        %2368 = vmatprep.subr.mxu0 0.0
        %2369 = vmatpush1.msra.mxu0 0.0
        %2370 = vmatprep.mubr.f32.mxu0 0.0
        %2371 = vmatmul.mubr.f32.gmra.mrb[0].mxu0 %v2304
        %v2372 = vpop.f32.mrb[0].mxu0
        %v2373 = vadd.f32 0.0, %v2372
        %v2374 = vpop.f32.mrb[0].mxu0
        %2375 = vdwg.mxu0
        %v2377 = vsel %vm1495, %v2373, 0
        %2379 = vmatprep.subr.mxu0 0.0
        %2380 = vmatpush1.msra.mxu0 %v1491
        %2381 = vmatprep.subr.mxu0 0.0
        %2382 = vmatpush1.msra.mxu0 0.0
        %2383 = vmatprep.subr.mxu0 0.0
        %2384 = vmatpush1.msra.mxu0 0.0
        %2385 = vmatprep.subr.mxu0 0.0
        %2386 = vmatpush1.msra.mxu0 0.0
        %2387 = vmatprep.subr.mxu0 0.0
        %2388 = vmatpush1.msra.mxu0 0.0
        %2389 = vmatprep.subr.mxu0 0.0
        %2390 = vmatpush1.msra.mxu0 0.0
        %2391 = vmatprep.subr.mxu0 0.0
        %2392 = vmatpush1.msra.mxu0 0.0
        %2393 = vmatprep.subr.mxu0 0.0
        %2394 = vmatpush1.msra.mxu0 0.0
        %2395 = vmatprep.subr.mxu0 0.0
        %2396 = vmatpush1.msra.mxu0 0.0
        %2397 = vmatprep.subr.mxu0 0.0
        %2398 = vmatpush1.msra.mxu0 0.0
        %2399 = vmatprep.subr.mxu0 0.0
        %2400 = vmatpush1.msra.mxu0 0.0
        %2401 = vmatprep.subr.mxu0 0.0
        %2402 = vmatpush1.msra.mxu0 0.0
        %2403 = vmatprep.subr.mxu0 0.0
        %2404 = vmatpush1.msra.mxu0 0.0
        %2405 = vmatprep.subr.mxu0 0.0
        %2406 = vmatpush1.msra.mxu0 0.0
        %2407 = vmatprep.subr.mxu0 0.0
        %2408 = vmatpush1.msra.mxu0 0.0
        %2409 = vmatprep.subr.mxu0 0.0
        %2410 = vmatpush1.msra.mxu0 0.0
        %2411 = vmatprep.subr.mxu0 0.0
        %2412 = vmatpush1.msra.mxu0 0.0
        %2413 = vmatprep.subr.mxu0 0.0
        %2414 = vmatpush1.msra.mxu0 0.0
        %2415 = vmatprep.subr.mxu0 0.0
        %2416 = vmatpush1.msra.mxu0 0.0
        %2417 = vmatprep.subr.mxu0 0.0
        %2418 = vmatpush1.msra.mxu0 0.0
        %2419 = vmatprep.subr.mxu0 0.0
        %2420 = vmatpush1.msra.mxu0 0.0
        %2421 = vmatprep.subr.mxu0 0.0
        %2422 = vmatpush1.msra.mxu0 0.0
        %2423 = vmatprep.subr.mxu0 0.0
        %2424 = vmatpush1.msra.mxu0 0.0
        %2425 = vmatprep.subr.mxu0 0.0
        %2426 = vmatpush1.msra.mxu0 0.0
        %2427 = vmatprep.subr.mxu0 0.0
        %2428 = vmatpush1.msra.mxu0 0.0
        %2429 = vmatprep.subr.mxu0 0.0
        %2430 = vmatpush1.msra.mxu0 0.0
        %2431 = vmatprep.subr.mxu0 0.0
        %2432 = vmatpush1.msra.mxu0 0.0
        %2433 = vmatprep.subr.mxu0 0.0
        %2434 = vmatpush1.msra.mxu0 0.0
        %2435 = vmatprep.subr.mxu0 0.0
        %2436 = vmatpush1.msra.mxu0 0.0
        %2437 = vmatprep.subr.mxu0 0.0
        %2438 = vmatpush1.msra.mxu0 0.0
        %2439 = vmatprep.subr.mxu0 0.0
        %2440 = vmatpush1.msra.mxu0 0.0
        %2441 = vmatprep.subr.mxu0 0.0
        %2442 = vmatpush1.msra.mxu0 0.0
        %2443 = vmatprep.mubr.f32.mxu0 0.0
        %2444 = vmatmul.mubr.f32.gmra.mrb[0].mxu0 %v2377
        %v2445 = vpop.f32.mrb[0].mxu0
        %v2446 = vadd.f32 0.0, %v2445
        %v2447 = vpop.f32.mrb[0].mxu0
        %2448 = vdwg.mxu0
        %v2449 = vadd.f32 %v2209, %v2446
        %v2450 = vld [vmem:[#allocation11] sm:$0x1]
        %v2452 = vlaneseq
        %v2453 = vshrl.u32 %v2452, 7
        %v2454 = vsub.s32 0, %v2453
        %v2455 = vrot.slane %v2450, %v2454
        %v2457 = vadd.f32 %v2449, %v2455
        %v2458 = vadd.f32 %v2457, %v1403
        %v2459 = vld [vmem:[#allocation13] sm:$0x1]
        %v2460 = vld [vmem:[#allocation14] sm:$0x1]
        %v2461 = vsel %vm1375, %v2458, 0.0
        %2462 = vadd.xlane.f32.xlu0 %v2461
        %v2463 = vpop.xlane.xlu0 %2462
        %v2464 = vmul.f32 %v2463, %v1379
        %v2465 = vsub.f32 %v2458, %v2464
        %v2466 = vmul.f32 %v2465, %v2465
        %v2467 = vsel %vm1375, %v2466, 0.0
        %2468 = vadd.xlane.f32.xlu0 %v2467
        %v2469 = vpop.xlane.xlu0 %2468
        %v2470 = vmul.f32 %v2469, %v1379
        %v2471 = vadd.f32 %v2470, 1e-12
        %v2472 = vrsqrt.pop %v2471
        %v2473 = vmul.f32 %v2465, %v2472
        %v2475 = vlaneseq
        %v2476 = vshrl.u32 %v2475, 7
        %v2477 = vsub.s32 0, %v2476
        %v2478 = vrot.slane %v2459, %v2477
        %v2480 = vmul.f32 %v2473, %v2478
        %v2482 = vlaneseq
        %v2483 = vshrl.u32 %v2482, 7
        %v2484 = vsub.s32 0, %v2483
        %v2485 = vrot.slane %v2460, %v2484
        %v2487 = vadd.f32 %v2480, %v2485
        %v2488 = vld [vmem:[%s27] sm:$0xff]
        %v2489 = vld [vmem:[%s27 + $0x8] sm:$0xff]
        %v2490 = vld [vmem:[%s27 + $0x10] sm:$0xff]
        %v2491 = vld [vmem:[%s27 + $0x18] sm:$0xff]
        %v2492 = vld [vmem:[#allocation16] sm:$0x1]
        %v2494 = vlaneseq
        %v2495 = vshrl.u32 %v2494, 7
        %v2496 = vsub.s32 0, %v2495
        %v2497 = vrot.slane %v2492, %v2496
        %v2500 = vsel %vm1375, %v2487, 0
        %2502 = vmatprep.subr.mxu0 0.0
        %2503 = vmatpush1.msra.mxu0 %v2488
        %2504 = vmatprep.subr.mxu0 0.0
        %2505 = vmatpush1.msra.mxu0 %v2489
        %2506 = vmatprep.subr.mxu0 0.0
        %2507 = vmatpush1.msra.mxu0 %v2490
        %2508 = vmatprep.subr.mxu0 0.0
        %2509 = vmatpush1.msra.mxu0 %v2491
        %2510 = vmatprep.subr.mxu0 0.0
        %2511 = vmatpush1.msra.mxu0 0.0
        %2512 = vmatprep.subr.mxu0 0.0
        %2513 = vmatpush1.msra.mxu0 0.0
        %2514 = vmatprep.subr.mxu0 0.0
        %2515 = vmatpush1.msra.mxu0 0.0
        %2516 = vmatprep.subr.mxu0 0.0
        %2517 = vmatpush1.msra.mxu0 0.0
        %2518 = vmatprep.subr.mxu0 0.0
        %2519 = vmatpush1.msra.mxu0 0.0
        %2520 = vmatprep.subr.mxu0 0.0
        %2521 = vmatpush1.msra.mxu0 0.0
        %2522 = vmatprep.subr.mxu0 0.0
        %2523 = vmatpush1.msra.mxu0 0.0
        %2524 = vmatprep.subr.mxu0 0.0
        %2525 = vmatpush1.msra.mxu0 0.0
        %2526 = vmatprep.subr.mxu0 0.0
        %2527 = vmatpush1.msra.mxu0 0.0
        %2528 = vmatprep.subr.mxu0 0.0
        %2529 = vmatpush1.msra.mxu0 0.0
        %2530 = vmatprep.subr.mxu0 0.0
        %2531 = vmatpush1.msra.mxu0 0.0
        %2532 = vmatprep.subr.mxu0 0.0
        %2533 = vmatpush1.msra.mxu0 0.0
        %2534 = vmatprep.subr.mxu0 0.0
        %2535 = vmatpush1.msra.mxu0 0.0
        %2536 = vmatprep.subr.mxu0 0.0
        %2537 = vmatpush1.msra.mxu0 0.0
        %2538 = vmatprep.subr.mxu0 0.0
        %2539 = vmatpush1.msra.mxu0 0.0
        %2540 = vmatprep.subr.mxu0 0.0
        %2541 = vmatpush1.msra.mxu0 0.0
        %2542 = vmatprep.subr.mxu0 0.0
        %2543 = vmatpush1.msra.mxu0 0.0
        %2544 = vmatprep.subr.mxu0 0.0
        %2545 = vmatpush1.msra.mxu0 0.0
        %2546 = vmatprep.subr.mxu0 0.0
        %2547 = vmatpush1.msra.mxu0 0.0
        %2548 = vmatprep.subr.mxu0 0.0
        %2549 = vmatpush1.msra.mxu0 0.0
        %2550 = vmatprep.subr.mxu0 0.0
        %2551 = vmatpush1.msra.mxu0 0.0
        %2552 = vmatprep.subr.mxu0 0.0
        %2553 = vmatpush1.msra.mxu0 0.0
        %2554 = vmatprep.subr.mxu0 0.0
        %2555 = vmatpush1.msra.mxu0 0.0
        %2556 = vmatprep.subr.mxu0 0.0
        %2557 = vmatpush1.msra.mxu0 0.0
        %2558 = vmatprep.subr.mxu0 0.0
        %2559 = vmatpush1.msra.mxu0 0.0
        %2560 = vmatprep.subr.mxu0 0.0
        %2561 = vmatpush1.msra.mxu0 0.0
        %2562 = vmatprep.subr.mxu0 0.0
        %2563 = vmatpush1.msra.mxu0 0.0
        %2564 = vmatprep.subr.mxu0 0.0
        %2565 = vmatpush1.msra.mxu0 0.0
        %2566 = vmatprep.mubr.f32.mxu0 0.0
        %2567 = vmatmul.mubr.f32.gmra.mrb[0].mxu0 %v2500
        %v2568 = vpop.f32.mrb[0].mxu0
        %v2569 = vadd.f32 %v2497, %v2568
        %v2570 = vpop.f32.mrb[0].mxu0
        %2571 = vdwg.mxu0
        %v2572 = vld [vmem:[%s31] sm:$0xff]
        %v2573 = vld [vmem:[%s31 + $0x8] sm:$0xff]
        %v2574 = vld [vmem:[%s31 + $0x10] sm:$0xff]
        %v2575 = vld [vmem:[%s31 + $0x18] sm:$0xff]
        %v2576 = vld [vmem:[#allocation17] sm:$0x1]
        %v2578 = vlaneseq
        %v2579 = vshrl.u32 %v2578, 7
        %v2580 = vsub.s32 0, %v2579
        %v2581 = vrot.slane %v2576, %v2580
        %v2584 = vsel %vm1375, %v1369, 0
        %v2587 = vsel %vm1375, %v1370, 0
        %2589 = vmatprep.subr.mxu0 0.0
        %2590 = vmatpush1.msra.mxu0 %v2572
        %2591 = vmatprep.subr.mxu0 0.0
        %2592 = vmatpush1.msra.mxu0 %v2573
        %2593 = vmatprep.subr.mxu0 0.0
        %2594 = vmatpush1.msra.mxu0 %v2574
        %2595 = vmatprep.subr.mxu0 0.0
        %2596 = vmatpush1.msra.mxu0 %v2575
        %2597 = vmatprep.subr.mxu0 0.0
        %2598 = vmatpush1.msra.mxu0 0.0
        %2599 = vmatprep.subr.mxu0 0.0
        %2600 = vmatpush1.msra.mxu0 0.0
        %2601 = vmatprep.subr.mxu0 0.0
        %2602 = vmatpush1.msra.mxu0 0.0
        %2603 = vmatprep.subr.mxu0 0.0
        %2604 = vmatpush1.msra.mxu0 0.0
        %2605 = vmatprep.subr.mxu0 0.0
        %2606 = vmatpush1.msra.mxu0 0.0
        %2607 = vmatprep.subr.mxu0 0.0
        %2608 = vmatpush1.msra.mxu0 0.0
        %2609 = vmatprep.subr.mxu0 0.0
        %2610 = vmatpush1.msra.mxu0 0.0
        %2611 = vmatprep.subr.mxu0 0.0
        %2612 = vmatpush1.msra.mxu0 0.0
        %2613 = vmatprep.subr.mxu0 0.0
        %2614 = vmatpush1.msra.mxu0 0.0
        %2615 = vmatprep.subr.mxu0 0.0
        %2616 = vmatpush1.msra.mxu0 0.0
        %2617 = vmatprep.subr.mxu0 0.0
        %2618 = vmatpush1.msra.mxu0 0.0
        %2619 = vmatprep.subr.mxu0 0.0
        %2620 = vmatpush1.msra.mxu0 0.0
        %2621 = vmatprep.subr.mxu0 0.0
        %2622 = vmatpush1.msra.mxu0 0.0
        %2623 = vmatprep.subr.mxu0 0.0
        %2624 = vmatpush1.msra.mxu0 0.0
        %2625 = vmatprep.subr.mxu0 0.0
        %2626 = vmatpush1.msra.mxu0 0.0
        %2627 = vmatprep.subr.mxu0 0.0
        %2628 = vmatpush1.msra.mxu0 0.0
        %2629 = vmatprep.subr.mxu0 0.0
        %2630 = vmatpush1.msra.mxu0 0.0
        %2631 = vmatprep.subr.mxu0 0.0
        %2632 = vmatpush1.msra.mxu0 0.0
        %2633 = vmatprep.subr.mxu0 0.0
        %2634 = vmatpush1.msra.mxu0 0.0
        %2635 = vmatprep.subr.mxu0 0.0
        %2636 = vmatpush1.msra.mxu0 0.0
        %2637 = vmatprep.subr.mxu0 0.0
        %2638 = vmatpush1.msra.mxu0 0.0
        %2639 = vmatprep.subr.mxu0 0.0
        %2640 = vmatpush1.msra.mxu0 0.0
        %2641 = vmatprep.subr.mxu0 0.0
        %2642 = vmatpush1.msra.mxu0 0.0
        %2643 = vmatprep.subr.mxu0 0.0
        %2644 = vmatpush1.msra.mxu0 0.0
        %2645 = vmatprep.subr.mxu0 0.0
        %2646 = vmatpush1.msra.mxu0 0.0
        %2647 = vmatprep.subr.mxu0 0.0
        %2648 = vmatpush1.msra.mxu0 0.0
        %2649 = vmatprep.subr.mxu0 0.0
        %2650 = vmatpush1.msra.mxu0 0.0
        %2651 = vmatprep.subr.mxu0 0.0
        %2652 = vmatpush1.msra.mxu0 0.0
        %2653 = vmatprep.mubr.f32.mxu0 0.0
        %2654 = vmatmul.mubr.f32.gmra.mrb[0].mxu0 %v2584
        %v2655 = vpop.f32.mrb[0].mxu0
        %v2656 = vadd.f32 %v2581, %v2655
        %v2657 = vpop.f32.mrb[0].mxu0
        %2658 = vmatprep.mubr.f32.mxu0 0.0
        %2659 = vmatmul.mubr.f32.gmra.mrb[0].mxu0 %v2587
        %v2660 = vpop.f32.mrb[0].mxu0
        %v2661 = vadd.f32 %v2581, %v2660
        %v2662 = vpop.f32.mrb[0].mxu0
        %2663 = vdwg.mxu0
        %v2664 = vld [vmem:[%s35] sm:$0xff]
        %v2665 = vld [vmem:[%s35 + $0x8] sm:$0xff]
        %v2666 = vld [vmem:[%s35 + $0x10] sm:$0xff]
        %v2667 = vld [vmem:[%s35 + $0x18] sm:$0xff]
        %v2669 = vsel %vm1495, %v2569, 0
        %v2672 = vsel %vm1495, %v2656, 0
        %v2675 = vsel %vm1495, %v2661, 0
        %2677 = vmatprep.subr.mxu0 0.0
        %2678 = vmatpush1.xpose.msra.mxu0 %v2672
        %2679 = vmatprep.subr.mxu0 0.0
        %2680 = vmatpush1.xpose.msra.mxu0 %v2675
        %2681 = vmatprep.subr.mxu0 0.0
        %2682 = vmatpush1.xpose.msra.mxu0 0.0
        %2683 = vmatprep.subr.mxu0 0.0
        %2684 = vmatpush1.xpose.msra.mxu0 0.0
        %2685 = vmatprep.subr.mxu0 0.0
        %2686 = vmatpush1.xpose.msra.mxu0 0.0
        %2687 = vmatprep.subr.mxu0 0.0
        %2688 = vmatpush1.xpose.msra.mxu0 0.0
        %2689 = vmatprep.subr.mxu0 0.0
        %2690 = vmatpush1.xpose.msra.mxu0 0.0
        %2691 = vmatprep.subr.mxu0 0.0
        %2692 = vmatpush1.xpose.msra.mxu0 0.0
        %2693 = vmatprep.subr.mxu0 0.0
        %2694 = vmatpush1.xpose.msra.mxu0 0.0
        %2695 = vmatprep.subr.mxu0 0.0
        %2696 = vmatpush1.xpose.msra.mxu0 0.0
        %2697 = vmatprep.subr.mxu0 0.0
        %2698 = vmatpush1.xpose.msra.mxu0 0.0
        %2699 = vmatprep.subr.mxu0 0.0
        %2700 = vmatpush1.xpose.msra.mxu0 0.0
        %2701 = vmatprep.subr.mxu0 0.0
        %2702 = vmatpush1.xpose.msra.mxu0 0.0
        %2703 = vmatprep.subr.mxu0 0.0
        %2704 = vmatpush1.xpose.msra.mxu0 0.0
        %2705 = vmatprep.subr.mxu0 0.0
        %2706 = vmatpush1.xpose.msra.mxu0 0.0
        %2707 = vmatprep.subr.mxu0 0.0
        %2708 = vmatpush1.xpose.msra.mxu0 0.0
        %2709 = vmatprep.subr.mxu0 0.0
        %2710 = vmatpush1.xpose.msra.mxu0 0.0
        %2711 = vmatprep.subr.mxu0 0.0
        %2712 = vmatpush1.xpose.msra.mxu0 0.0
        %2713 = vmatprep.subr.mxu0 0.0
        %2714 = vmatpush1.xpose.msra.mxu0 0.0
        %2715 = vmatprep.subr.mxu0 0.0
        %2716 = vmatpush1.xpose.msra.mxu0 0.0
        %2717 = vmatprep.subr.mxu0 0.0
        %2718 = vmatpush1.xpose.msra.mxu0 0.0
        %2719 = vmatprep.subr.mxu0 0.0
        %2720 = vmatpush1.xpose.msra.mxu0 0.0
        %2721 = vmatprep.subr.mxu0 0.0
        %2722 = vmatpush1.xpose.msra.mxu0 0.0
        %2723 = vmatprep.subr.mxu0 0.0
        %2724 = vmatpush1.xpose.msra.mxu0 0.0
        %2725 = vmatprep.subr.mxu0 0.0
        %2726 = vmatpush1.xpose.msra.mxu0 0.0
        %2727 = vmatprep.subr.mxu0 0.0
        %2728 = vmatpush1.xpose.msra.mxu0 0.0
        %2729 = vmatprep.subr.mxu0 0.0
        %2730 = vmatpush1.xpose.msra.mxu0 0.0
        %2731 = vmatprep.subr.mxu0 0.0
        %2732 = vmatpush1.xpose.msra.mxu0 0.0
        %2733 = vmatprep.subr.mxu0 0.0
        %2734 = vmatpush1.xpose.msra.mxu0 0.0
        %2735 = vmatprep.subr.mxu0 0.0
        %2736 = vmatpush1.xpose.msra.mxu0 0.0
        %2737 = vmatprep.subr.mxu0 0.0
        %2738 = vmatpush1.xpose.msra.mxu0 0.0
        %2739 = vmatprep.subr.mxu0 0.0
        %2740 = vmatpush1.xpose.msra.mxu0 0.0
        %2741 = vmatprep.mubr.f32.mxu0 0.0
        %2742 = vmatmul.mubr.f32.gmra.mrb[0].mxu0 %v2669
        %v2743 = vpop.f32.mrb[0].mxu0
        %v2744 = vadd.f32 0.0, %v2743
        %v2745 = vpop.f32.mrb[0].mxu0
        %2746 = vdwg.mxu0
        %v2747 = vmul.f32 %v2744, 0.35355338
        %v2749 = vlaneseq
        %v2750 = vshrl.u32 %v2749, 7
        %v2751 = vsub.s32 0, %v2750
        %v2752 = vrot.slane %v1371, %v2751
        %v2754 = vadd.f32 %v2747, %v2752
        %vm2755 = vcmask 130048
        %v2756 = vsel %vm2755, %v2754, -inf
        %2757 = vmax.xlane.f32.xlu0 %v2756
        %v2758 = vpop.xlane.xlu0 %2757
        %v2759 = vsub.f32 %v2754, %v2758
        %v2760 = vmul.f32 %v2759, 1.442695
        %v2761 = vpow.pop %v2760
        %v2762 = vsel %vm2755, %v2761, 0.0
        %2763 = vadd.xlane.f32.xlu0 %v2762
        %v2764 = vpop.xlane.xlu0 %2763
        %v2765 = vrcp.pop %v2764
        %v2766 = vmul.f32 %v2761, %v2765
        %2767 = vrot.lane.b32.xlu0 %v2656, 96
        %v2768 = vpop.permute.xlu0 %2767
        %2769 = vrot.lane.b32.xlu0 %v2661, 96
        %v2770 = vpop.permute.xlu0 %2769
        %v2774 = vsel %vm2755, %v2766, 0
        %2776 = vmatprep.subr.mxu0 0.0
        %2777 = vmatpush1.msra.mxu0 %v2768
        %2778 = vmatprep.subr.mxu0 0.0
        %2779 = vmatpush1.msra.mxu0 %v2770
        %2780 = vmatprep.subr.mxu0 0.0
        %2781 = vmatpush1.msra.mxu0 0.0
        %2782 = vmatprep.subr.mxu0 0.0
        %2783 = vmatpush1.msra.mxu0 0.0
        %2784 = vmatprep.subr.mxu0 0.0
        %2785 = vmatpush1.msra.mxu0 0.0
        %2786 = vmatprep.subr.mxu0 0.0
        %2787 = vmatpush1.msra.mxu0 0.0
        %2788 = vmatprep.subr.mxu0 0.0
        %2789 = vmatpush1.msra.mxu0 0.0
        %2790 = vmatprep.subr.mxu0 0.0
        %2791 = vmatpush1.msra.mxu0 0.0
        %2792 = vmatprep.subr.mxu0 0.0
        %2793 = vmatpush1.msra.mxu0 0.0
        %2794 = vmatprep.subr.mxu0 0.0
        %2795 = vmatpush1.msra.mxu0 0.0
        %2796 = vmatprep.subr.mxu0 0.0
        %2797 = vmatpush1.msra.mxu0 0.0
        %2798 = vmatprep.subr.mxu0 0.0
        %2799 = vmatpush1.msra.mxu0 0.0
        %2800 = vmatprep.subr.mxu0 0.0
        %2801 = vmatpush1.msra.mxu0 0.0
        %2802 = vmatprep.subr.mxu0 0.0
        %2803 = vmatpush1.msra.mxu0 0.0
        %2804 = vmatprep.subr.mxu0 0.0
        %2805 = vmatpush1.msra.mxu0 0.0
        %2806 = vmatprep.subr.mxu0 0.0
        %2807 = vmatpush1.msra.mxu0 0.0
        %2808 = vmatprep.subr.mxu0 0.0
        %2809 = vmatpush1.msra.mxu0 0.0
        %2810 = vmatprep.subr.mxu0 0.0
        %2811 = vmatpush1.msra.mxu0 0.0
        %2812 = vmatprep.subr.mxu0 0.0
        %2813 = vmatpush1.msra.mxu0 0.0
        %2814 = vmatprep.subr.mxu0 0.0
        %2815 = vmatpush1.msra.mxu0 0.0
        %2816 = vmatprep.subr.mxu0 0.0
        %2817 = vmatpush1.msra.mxu0 0.0
        %2818 = vmatprep.subr.mxu0 0.0
        %2819 = vmatpush1.msra.mxu0 0.0
        %2820 = vmatprep.subr.mxu0 0.0
        %2821 = vmatpush1.msra.mxu0 0.0
        %2822 = vmatprep.subr.mxu0 0.0
        %2823 = vmatpush1.msra.mxu0 0.0
        %2824 = vmatprep.subr.mxu0 0.0
        %2825 = vmatpush1.msra.mxu0 0.0
        %2826 = vmatprep.subr.mxu0 0.0
        %2827 = vmatpush1.msra.mxu0 0.0
        %2828 = vmatprep.subr.mxu0 0.0
        %2829 = vmatpush1.msra.mxu0 0.0
        %2830 = vmatprep.subr.mxu0 0.0
        %2831 = vmatpush1.msra.mxu0 0.0
        %2832 = vmatprep.subr.mxu0 0.0
        %2833 = vmatpush1.msra.mxu0 0.0
        %2834 = vmatprep.subr.mxu0 0.0
        %2835 = vmatpush1.msra.mxu0 0.0
        %2836 = vmatprep.subr.mxu0 0.0
        %2837 = vmatpush1.msra.mxu0 0.0
        %2838 = vmatprep.subr.mxu0 0.0
        %2839 = vmatpush1.msra.mxu0 0.0
        %2840 = vmatprep.mubr.f32.mxu0 0.0
        %2841 = vmatmul.mubr.f32.gmra.mrb[0].mxu0 %v2774
        %v2842 = vpop.f32.mrb[0].mxu0
        %v2843 = vadd.f32 0.0, %v2842
        %v2844 = vpop.f32.mrb[0].mxu0
        %2845 = vdwg.mxu0
        %2846 = vrot.lane.b32.xlu0 %v2569, 120
        %v2847 = vpop.permute.xlu0 %2846
        %2848 = vrot.lane.b32.xlu0 %v2656, 120
        %v2849 = vpop.permute.xlu0 %2848
        %2850 = vrot.lane.b32.xlu0 %v2661, 120
        %v2851 = vpop.permute.xlu0 %2850
        %v2852 = vsel %vm1495, %v2847, 0
        %v2854 = vsel %vm1495, %v2849, 0
        %v2856 = vsel %vm1495, %v2851, 0
        %2858 = vmatprep.subr.mxu0 0.0
        %2859 = vmatpush1.xpose.msra.mxu0 %v2854
        %2860 = vmatprep.subr.mxu0 0.0
        %2861 = vmatpush1.xpose.msra.mxu0 %v2856
        %2862 = vmatprep.subr.mxu0 0.0
        %2863 = vmatpush1.xpose.msra.mxu0 0.0
        %2864 = vmatprep.subr.mxu0 0.0
        %2865 = vmatpush1.xpose.msra.mxu0 0.0
        %2866 = vmatprep.subr.mxu0 0.0
        %2867 = vmatpush1.xpose.msra.mxu0 0.0
        %2868 = vmatprep.subr.mxu0 0.0
        %2869 = vmatpush1.xpose.msra.mxu0 0.0
        %2870 = vmatprep.subr.mxu0 0.0
        %2871 = vmatpush1.xpose.msra.mxu0 0.0
        %2872 = vmatprep.subr.mxu0 0.0
        %2873 = vmatpush1.xpose.msra.mxu0 0.0
        %2874 = vmatprep.subr.mxu0 0.0
        %2875 = vmatpush1.xpose.msra.mxu0 0.0
        %2876 = vmatprep.subr.mxu0 0.0
        %2877 = vmatpush1.xpose.msra.mxu0 0.0
        %2878 = vmatprep.subr.mxu0 0.0
        %2879 = vmatpush1.xpose.msra.mxu0 0.0
        %2880 = vmatprep.subr.mxu0 0.0
        %2881 = vmatpush1.xpose.msra.mxu0 0.0
        %2882 = vmatprep.subr.mxu0 0.0
        %2883 = vmatpush1.xpose.msra.mxu0 0.0
        %2884 = vmatprep.subr.mxu0 0.0
        %2885 = vmatpush1.xpose.msra.mxu0 0.0
        %2886 = vmatprep.subr.mxu0 0.0
        %2887 = vmatpush1.xpose.msra.mxu0 0.0
        %2888 = vmatprep.subr.mxu0 0.0
        %2889 = vmatpush1.xpose.msra.mxu0 0.0
        %2890 = vmatprep.subr.mxu0 0.0
        %2891 = vmatpush1.xpose.msra.mxu0 0.0
        %2892 = vmatprep.subr.mxu0 0.0
        %2893 = vmatpush1.xpose.msra.mxu0 0.0
        %2894 = vmatprep.subr.mxu0 0.0
        %2895 = vmatpush1.xpose.msra.mxu0 0.0
        %2896 = vmatprep.subr.mxu0 0.0
        %2897 = vmatpush1.xpose.msra.mxu0 0.0
        %2898 = vmatprep.subr.mxu0 0.0
        %2899 = vmatpush1.xpose.msra.mxu0 0.0
        %2900 = vmatprep.subr.mxu0 0.0
        %2901 = vmatpush1.xpose.msra.mxu0 0.0
        %2902 = vmatprep.subr.mxu0 0.0
        %2903 = vmatpush1.xpose.msra.mxu0 0.0
        %2904 = vmatprep.subr.mxu0 0.0
        %2905 = vmatpush1.xpose.msra.mxu0 0.0
        %2906 = vmatprep.subr.mxu0 0.0
        %2907 = vmatpush1.xpose.msra.mxu0 0.0
        %2908 = vmatprep.subr.mxu0 0.0
        %2909 = vmatpush1.xpose.msra.mxu0 0.0
        %2910 = vmatprep.subr.mxu0 0.0
        %2911 = vmatpush1.xpose.msra.mxu0 0.0
        %2912 = vmatprep.subr.mxu0 0.0
        %2913 = vmatpush1.xpose.msra.mxu0 0.0
        %2914 = vmatprep.subr.mxu0 0.0
        %2915 = vmatpush1.xpose.msra.mxu0 0.0
        %2916 = vmatprep.subr.mxu0 0.0
        %2917 = vmatpush1.xpose.msra.mxu0 0.0
        %2918 = vmatprep.subr.mxu0 0.0
        %2919 = vmatpush1.xpose.msra.mxu0 0.0
        %2920 = vmatprep.subr.mxu0 0.0
        %2921 = vmatpush1.xpose.msra.mxu0 0.0
        %2922 = vmatprep.mubr.f32.mxu0 0.0
        %2923 = vmatmul.mubr.f32.gmra.mrb[0].mxu0 %v2852
        %v2924 = vpop.f32.mrb[0].mxu0
        %v2925 = vadd.f32 0.0, %v2924
        %v2926 = vpop.f32.mrb[0].mxu0
        %2927 = vdwg.mxu0
        %v2928 = vmul.f32 %v2925, 0.35355338
        %v2929 = vadd.f32 %v2928, %v2752
        %v2930 = vsel %vm2755, %v2929, -inf
        %2931 = vmax.xlane.f32.xlu0 %v2930
        %v2932 = vpop.xlane.xlu0 %2931
        %v2933 = vsub.f32 %v2929, %v2932
        %v2934 = vmul.f32 %v2933, 1.442695
        %v2935 = vpow.pop %v2934
        %v2936 = vsel %vm2755, %v2935, 0.0
        %2937 = vadd.xlane.f32.xlu0 %v2936
        %v2938 = vpop.xlane.xlu0 %2937
        %v2939 = vrcp.pop %v2938
        %v2940 = vmul.f32 %v2935, %v2939
        %2941 = vrot.lane.b32.xlu0 %v2656, 88
        %v2942 = vpop.permute.xlu0 %2941
        %2943 = vrot.lane.b32.xlu0 %v2661, 88
        %v2944 = vpop.permute.xlu0 %2943
        %v2948 = vsel %vm2755, %v2940, 0
        %2950 = vmatprep.subr.mxu0 0.0
        %2951 = vmatpush1.msra.mxu0 %v2942
        %2952 = vmatprep.subr.mxu0 0.0
        %2953 = vmatpush1.msra.mxu0 %v2944
        %2954 = vmatprep.subr.mxu0 0.0
        %2955 = vmatpush1.msra.mxu0 0.0
        %2956 = vmatprep.subr.mxu0 0.0
        %2957 = vmatpush1.msra.mxu0 0.0
        %2958 = vmatprep.subr.mxu0 0.0
        %2959 = vmatpush1.msra.mxu0 0.0
        %2960 = vmatprep.subr.mxu0 0.0
        %2961 = vmatpush1.msra.mxu0 0.0
        %2962 = vmatprep.subr.mxu0 0.0
        %2963 = vmatpush1.msra.mxu0 0.0
        %2964 = vmatprep.subr.mxu0 0.0
        %2965 = vmatpush1.msra.mxu0 0.0
        %2966 = vmatprep.subr.mxu0 0.0
        %2967 = vmatpush1.msra.mxu0 0.0
        %2968 = vmatprep.subr.mxu0 0.0
        %2969 = vmatpush1.msra.mxu0 0.0
        %2970 = vmatprep.subr.mxu0 0.0
        %2971 = vmatpush1.msra.mxu0 0.0
        %2972 = vmatprep.subr.mxu0 0.0
        %2973 = vmatpush1.msra.mxu0 0.0
        %2974 = vmatprep.subr.mxu0 0.0
        %2975 = vmatpush1.msra.mxu0 0.0
        %2976 = vmatprep.subr.mxu0 0.0
        %2977 = vmatpush1.msra.mxu0 0.0
        %2978 = vmatprep.subr.mxu0 0.0
        %2979 = vmatpush1.msra.mxu0 0.0
        %2980 = vmatprep.subr.mxu0 0.0
        %2981 = vmatpush1.msra.mxu0 0.0
        %2982 = vmatprep.subr.mxu0 0.0
        %2983 = vmatpush1.msra.mxu0 0.0
        %2984 = vmatprep.subr.mxu0 0.0
        %2985 = vmatpush1.msra.mxu0 0.0
        %2986 = vmatprep.subr.mxu0 0.0
        %2987 = vmatpush1.msra.mxu0 0.0
        %2988 = vmatprep.subr.mxu0 0.0
        %2989 = vmatpush1.msra.mxu0 0.0
        %2990 = vmatprep.subr.mxu0 0.0
        %2991 = vmatpush1.msra.mxu0 0.0
        %2992 = vmatprep.subr.mxu0 0.0
        %2993 = vmatpush1.msra.mxu0 0.0
        %2994 = vmatprep.subr.mxu0 0.0
        %2995 = vmatpush1.msra.mxu0 0.0
        %2996 = vmatprep.subr.mxu0 0.0
        %2997 = vmatpush1.msra.mxu0 0.0
        %2998 = vmatprep.subr.mxu0 0.0
        %2999 = vmatpush1.msra.mxu0 0.0
        %3000 = vmatprep.subr.mxu0 0.0
        %3001 = vmatpush1.msra.mxu0 0.0
        %3002 = vmatprep.subr.mxu0 0.0
        %3003 = vmatpush1.msra.mxu0 0.0
        %3004 = vmatprep.subr.mxu0 0.0
        %3005 = vmatpush1.msra.mxu0 0.0
        %3006 = vmatprep.subr.mxu0 0.0
        %3007 = vmatpush1.msra.mxu0 0.0
        %3008 = vmatprep.subr.mxu0 0.0
        %3009 = vmatpush1.msra.mxu0 0.0
        %3010 = vmatprep.subr.mxu0 0.0
        %3011 = vmatpush1.msra.mxu0 0.0
        %3012 = vmatprep.subr.mxu0 0.0
        %3013 = vmatpush1.msra.mxu0 0.0
        %3014 = vmatprep.mubr.f32.mxu0 0.0
        %3015 = vmatmul.mubr.f32.gmra.mrb[0].mxu0 %v2948
        %v3016 = vpop.f32.mrb[0].mxu0
        %v3017 = vadd.f32 0.0, %v3016
        %v3018 = vpop.f32.mrb[0].mxu0
        %3019 = vdwg.mxu0
        %v3021 = vsel %vm1495, %v3017, 0
        %3023 = vmatprep.subr.mxu0 0.0
        %3024 = vmatpush1.msra.mxu0 %v2665
        %3025 = vmatprep.subr.mxu0 0.0
        %3026 = vmatpush1.msra.mxu0 0.0
        %3027 = vmatprep.subr.mxu0 0.0
        %3028 = vmatpush1.msra.mxu0 0.0
        %3029 = vmatprep.subr.mxu0 0.0
        %3030 = vmatpush1.msra.mxu0 0.0
        %3031 = vmatprep.subr.mxu0 0.0
        %3032 = vmatpush1.msra.mxu0 0.0
        %3033 = vmatprep.subr.mxu0 0.0
        %3034 = vmatpush1.msra.mxu0 0.0
        %3035 = vmatprep.subr.mxu0 0.0
        %3036 = vmatpush1.msra.mxu0 0.0
        %3037 = vmatprep.subr.mxu0 0.0
        %3038 = vmatpush1.msra.mxu0 0.0
        %3039 = vmatprep.subr.mxu0 0.0
        %3040 = vmatpush1.msra.mxu0 0.0
        %3041 = vmatprep.subr.mxu0 0.0
        %3042 = vmatpush1.msra.mxu0 0.0
        %3043 = vmatprep.subr.mxu0 0.0
        %3044 = vmatpush1.msra.mxu0 0.0
        %3045 = vmatprep.subr.mxu0 0.0
        %3046 = vmatpush1.msra.mxu0 0.0
        %3047 = vmatprep.subr.mxu0 0.0
        %3048 = vmatpush1.msra.mxu0 0.0
        %3049 = vmatprep.subr.mxu0 0.0
        %3050 = vmatpush1.msra.mxu0 0.0
        %3051 = vmatprep.subr.mxu0 0.0
        %3052 = vmatpush1.msra.mxu0 0.0
        %3053 = vmatprep.subr.mxu0 0.0
        %3054 = vmatpush1.msra.mxu0 0.0
        %3055 = vmatprep.subr.mxu0 0.0
        %3056 = vmatpush1.msra.mxu0 0.0
        %3057 = vmatprep.subr.mxu0 0.0
        %3058 = vmatpush1.msra.mxu0 0.0
        %3059 = vmatprep.subr.mxu0 0.0
        %3060 = vmatpush1.msra.mxu0 0.0
        %3061 = vmatprep.subr.mxu0 0.0
        %3062 = vmatpush1.msra.mxu0 0.0
        %3063 = vmatprep.subr.mxu0 0.0
        %3064 = vmatpush1.msra.mxu0 0.0
        %3065 = vmatprep.subr.mxu0 0.0
        %3066 = vmatpush1.msra.mxu0 0.0
        %3067 = vmatprep.subr.mxu0 0.0
        %3068 = vmatpush1.msra.mxu0 0.0
        %3069 = vmatprep.subr.mxu0 0.0
        %3070 = vmatpush1.msra.mxu0 0.0
        %3071 = vmatprep.subr.mxu0 0.0
        %3072 = vmatpush1.msra.mxu0 0.0
        %3073 = vmatprep.subr.mxu0 0.0
        %3074 = vmatpush1.msra.mxu0 0.0
        %3075 = vmatprep.subr.mxu0 0.0
        %3076 = vmatpush1.msra.mxu0 0.0
        %3077 = vmatprep.subr.mxu0 0.0
        %3078 = vmatpush1.msra.mxu0 0.0
        %3079 = vmatprep.subr.mxu0 0.0
        %3080 = vmatpush1.msra.mxu0 0.0
        %3081 = vmatprep.subr.mxu0 0.0
        %3082 = vmatpush1.msra.mxu0 0.0
        %3083 = vmatprep.subr.mxu0 0.0
        %3084 = vmatpush1.msra.mxu0 0.0
        %3085 = vmatprep.subr.mxu0 0.0
        %3086 = vmatpush1.msra.mxu0 0.0
        %3087 = vmatprep.mubr.f32.mxu0 0.0
        %3088 = vmatmul.mubr.f32.gmra.mrb[0].mxu0 %v3021
        %v3089 = vpop.f32.mrb[0].mxu0
        %v3090 = vadd.f32 0.0, %v3089
        %v3091 = vpop.f32.mrb[0].mxu0
        %3092 = vdwg.mxu0
        %v3094 = vsel %vm1495, %v2843, 0
        %3096 = vmatprep.subr.mxu0 0.0
        %3097 = vmatpush1.msra.mxu0 %v2664
        %3098 = vmatprep.subr.mxu0 0.0
        %3099 = vmatpush1.msra.mxu0 0.0
        %3100 = vmatprep.subr.mxu0 0.0
        %3101 = vmatpush1.msra.mxu0 0.0
        %3102 = vmatprep.subr.mxu0 0.0
        %3103 = vmatpush1.msra.mxu0 0.0
        %3104 = vmatprep.subr.mxu0 0.0
        %3105 = vmatpush1.msra.mxu0 0.0
        %3106 = vmatprep.subr.mxu0 0.0
        %3107 = vmatpush1.msra.mxu0 0.0
        %3108 = vmatprep.subr.mxu0 0.0
        %3109 = vmatpush1.msra.mxu0 0.0
        %3110 = vmatprep.subr.mxu0 0.0
        %3111 = vmatpush1.msra.mxu0 0.0
        %3112 = vmatprep.subr.mxu0 0.0
        %3113 = vmatpush1.msra.mxu0 0.0
        %3114 = vmatprep.subr.mxu0 0.0
        %3115 = vmatpush1.msra.mxu0 0.0
        %3116 = vmatprep.subr.mxu0 0.0
        %3117 = vmatpush1.msra.mxu0 0.0
        %3118 = vmatprep.subr.mxu0 0.0
        %3119 = vmatpush1.msra.mxu0 0.0
        %3120 = vmatprep.subr.mxu0 0.0
        %3121 = vmatpush1.msra.mxu0 0.0
        %3122 = vmatprep.subr.mxu0 0.0
        %3123 = vmatpush1.msra.mxu0 0.0
        %3124 = vmatprep.subr.mxu0 0.0
        %3125 = vmatpush1.msra.mxu0 0.0
        %3126 = vmatprep.subr.mxu0 0.0
        %3127 = vmatpush1.msra.mxu0 0.0
        %3128 = vmatprep.subr.mxu0 0.0
        %3129 = vmatpush1.msra.mxu0 0.0
        %3130 = vmatprep.subr.mxu0 0.0
        %3131 = vmatpush1.msra.mxu0 0.0
        %3132 = vmatprep.subr.mxu0 0.0
        %3133 = vmatpush1.msra.mxu0 0.0
        %3134 = vmatprep.subr.mxu0 0.0
        %3135 = vmatpush1.msra.mxu0 0.0
        %3136 = vmatprep.subr.mxu0 0.0
        %3137 = vmatpush1.msra.mxu0 0.0
        %3138 = vmatprep.subr.mxu0 0.0
        %3139 = vmatpush1.msra.mxu0 0.0
        %3140 = vmatprep.subr.mxu0 0.0
        %3141 = vmatpush1.msra.mxu0 0.0
        %3142 = vmatprep.subr.mxu0 0.0
        %3143 = vmatpush1.msra.mxu0 0.0
        %3144 = vmatprep.subr.mxu0 0.0
        %3145 = vmatpush1.msra.mxu0 0.0
        %3146 = vmatprep.subr.mxu0 0.0
        %3147 = vmatpush1.msra.mxu0 0.0
        %3148 = vmatprep.subr.mxu0 0.0
        %3149 = vmatpush1.msra.mxu0 0.0
        %3150 = vmatprep.subr.mxu0 0.0
        %3151 = vmatpush1.msra.mxu0 0.0
        %3152 = vmatprep.subr.mxu0 0.0
        %3153 = vmatpush1.msra.mxu0 0.0
        %3154 = vmatprep.subr.mxu0 0.0
        %3155 = vmatpush1.msra.mxu0 0.0
        %3156 = vmatprep.subr.mxu0 0.0
        %3157 = vmatpush1.msra.mxu0 0.0
        %3158 = vmatprep.subr.mxu0 0.0
        %3159 = vmatpush1.msra.mxu0 0.0
        %3160 = vmatprep.mubr.f32.mxu0 0.0
        %3161 = vmatmul.mubr.f32.gmra.mrb[0].mxu0 %v3094
        %v3162 = vpop.f32.mrb[0].mxu0
        %v3163 = vadd.f32 %v3090, %v3162
        %v3164 = vpop.f32.mrb[0].mxu0
        %3165 = vdwg.mxu0
        %3166 = vrot.lane.b32.xlu0 %v2569, 112
        %v3167 = vpop.permute.xlu0 %3166
        %3168 = vrot.lane.b32.xlu0 %v2656, 112
        %v3169 = vpop.permute.xlu0 %3168
        %3170 = vrot.lane.b32.xlu0 %v2661, 112
        %v3171 = vpop.permute.xlu0 %3170
        %v3172 = vsel %vm1495, %v3167, 0
        %v3174 = vsel %vm1495, %v3169, 0
        %v3176 = vsel %vm1495, %v3171, 0
        %3178 = vmatprep.subr.mxu0 0.0
        %3179 = vmatpush1.xpose.msra.mxu0 %v3174
        %3180 = vmatprep.subr.mxu0 0.0
        %3181 = vmatpush1.xpose.msra.mxu0 %v3176
        %3182 = vmatprep.subr.mxu0 0.0
        %3183 = vmatpush1.xpose.msra.mxu0 0.0
        %3184 = vmatprep.subr.mxu0 0.0
        %3185 = vmatpush1.xpose.msra.mxu0 0.0
        %3186 = vmatprep.subr.mxu0 0.0
        %3187 = vmatpush1.xpose.msra.mxu0 0.0
        %3188 = vmatprep.subr.mxu0 0.0
        %3189 = vmatpush1.xpose.msra.mxu0 0.0
        %3190 = vmatprep.subr.mxu0 0.0
        %3191 = vmatpush1.xpose.msra.mxu0 0.0
        %3192 = vmatprep.subr.mxu0 0.0
        %3193 = vmatpush1.xpose.msra.mxu0 0.0
        %3194 = vmatprep.subr.mxu0 0.0
        %3195 = vmatpush1.xpose.msra.mxu0 0.0
        %3196 = vmatprep.subr.mxu0 0.0
        %3197 = vmatpush1.xpose.msra.mxu0 0.0
        %3198 = vmatprep.subr.mxu0 0.0
        %3199 = vmatpush1.xpose.msra.mxu0 0.0
        %3200 = vmatprep.subr.mxu0 0.0
        %3201 = vmatpush1.xpose.msra.mxu0 0.0
        %3202 = vmatprep.subr.mxu0 0.0
        %3203 = vmatpush1.xpose.msra.mxu0 0.0
        %3204 = vmatprep.subr.mxu0 0.0
        %3205 = vmatpush1.xpose.msra.mxu0 0.0
        %3206 = vmatprep.subr.mxu0 0.0
        %3207 = vmatpush1.xpose.msra.mxu0 0.0
        %3208 = vmatprep.subr.mxu0 0.0
        %3209 = vmatpush1.xpose.msra.mxu0 0.0
        %3210 = vmatprep.subr.mxu0 0.0
        %3211 = vmatpush1.xpose.msra.mxu0 0.0
        %3212 = vmatprep.subr.mxu0 0.0
        %3213 = vmatpush1.xpose.msra.mxu0 0.0
        %3214 = vmatprep.subr.mxu0 0.0
        %3215 = vmatpush1.xpose.msra.mxu0 0.0
        %3216 = vmatprep.subr.mxu0 0.0
        %3217 = vmatpush1.xpose.msra.mxu0 0.0
        %3218 = vmatprep.subr.mxu0 0.0
        %3219 = vmatpush1.xpose.msra.mxu0 0.0
        %3220 = vmatprep.subr.mxu0 0.0
        %3221 = vmatpush1.xpose.msra.mxu0 0.0
        %3222 = vmatprep.subr.mxu0 0.0
        %3223 = vmatpush1.xpose.msra.mxu0 0.0
        %3224 = vmatprep.subr.mxu0 0.0
        %3225 = vmatpush1.xpose.msra.mxu0 0.0
        %3226 = vmatprep.subr.mxu0 0.0
        %3227 = vmatpush1.xpose.msra.mxu0 0.0
        %3228 = vmatprep.subr.mxu0 0.0
        %3229 = vmatpush1.xpose.msra.mxu0 0.0
        %3230 = vmatprep.subr.mxu0 0.0
        %3231 = vmatpush1.xpose.msra.mxu0 0.0
        %3232 = vmatprep.subr.mxu0 0.0
        %3233 = vmatpush1.xpose.msra.mxu0 0.0
        %3234 = vmatprep.subr.mxu0 0.0
        %3235 = vmatpush1.xpose.msra.mxu0 0.0
        %3236 = vmatprep.subr.mxu0 0.0
        %3237 = vmatpush1.xpose.msra.mxu0 0.0
        %3238 = vmatprep.subr.mxu0 0.0
        %3239 = vmatpush1.xpose.msra.mxu0 0.0
        %3240 = vmatprep.subr.mxu0 0.0
        %3241 = vmatpush1.xpose.msra.mxu0 0.0
        %3242 = vmatprep.mubr.f32.mxu0 0.0
        %3243 = vmatmul.mubr.f32.gmra.mrb[0].mxu0 %v3172
        %v3244 = vpop.f32.mrb[0].mxu0
        %v3245 = vadd.f32 0.0, %v3244
        %v3246 = vpop.f32.mrb[0].mxu0
        %3247 = vdwg.mxu0
        %v3248 = vmul.f32 %v3245, 0.35355338
        %v3249 = vadd.f32 %v3248, %v2752
        %v3250 = vsel %vm2755, %v3249, -inf
        %3251 = vmax.xlane.f32.xlu0 %v3250
        %v3252 = vpop.xlane.xlu0 %3251
        %v3253 = vsub.f32 %v3249, %v3252
        %v3254 = vmul.f32 %v3253, 1.442695
        %v3255 = vpow.pop %v3254
        %v3256 = vsel %vm2755, %v3255, 0.0
        %3257 = vadd.xlane.f32.xlu0 %v3256
        %v3258 = vpop.xlane.xlu0 %3257
        %v3259 = vrcp.pop %v3258
        %v3260 = vmul.f32 %v3255, %v3259
        %3261 = vrot.lane.b32.xlu0 %v2656, 80
        %v3262 = vpop.permute.xlu0 %3261
        %3263 = vrot.lane.b32.xlu0 %v2661, 80
        %v3264 = vpop.permute.xlu0 %3263
        %v3268 = vsel %vm2755, %v3260, 0
        %3270 = vmatprep.subr.mxu0 0.0
        %3271 = vmatpush1.msra.mxu0 %v3262
        %3272 = vmatprep.subr.mxu0 0.0
        %3273 = vmatpush1.msra.mxu0 %v3264
        %3274 = vmatprep.subr.mxu0 0.0
        %3275 = vmatpush1.msra.mxu0 0.0
        %3276 = vmatprep.subr.mxu0 0.0
        %3277 = vmatpush1.msra.mxu0 0.0
        %3278 = vmatprep.subr.mxu0 0.0
        %3279 = vmatpush1.msra.mxu0 0.0
        %3280 = vmatprep.subr.mxu0 0.0
        %3281 = vmatpush1.msra.mxu0 0.0
        %3282 = vmatprep.subr.mxu0 0.0
        %3283 = vmatpush1.msra.mxu0 0.0
        %3284 = vmatprep.subr.mxu0 0.0
        %3285 = vmatpush1.msra.mxu0 0.0
        %3286 = vmatprep.subr.mxu0 0.0
        %3287 = vmatpush1.msra.mxu0 0.0
        %3288 = vmatprep.subr.mxu0 0.0
        %3289 = vmatpush1.msra.mxu0 0.0
        %3290 = vmatprep.subr.mxu0 0.0
        %3291 = vmatpush1.msra.mxu0 0.0
        %3292 = vmatprep.subr.mxu0 0.0
        %3293 = vmatpush1.msra.mxu0 0.0
        %3294 = vmatprep.subr.mxu0 0.0
        %3295 = vmatpush1.msra.mxu0 0.0
        %3296 = vmatprep.subr.mxu0 0.0
        %3297 = vmatpush1.msra.mxu0 0.0
        %3298 = vmatprep.subr.mxu0 0.0
        %3299 = vmatpush1.msra.mxu0 0.0
        %3300 = vmatprep.subr.mxu0 0.0
        %3301 = vmatpush1.msra.mxu0 0.0
        %3302 = vmatprep.subr.mxu0 0.0
        %3303 = vmatpush1.msra.mxu0 0.0
        %3304 = vmatprep.subr.mxu0 0.0
        %3305 = vmatpush1.msra.mxu0 0.0
        %3306 = vmatprep.subr.mxu0 0.0
        %3307 = vmatpush1.msra.mxu0 0.0
        %3308 = vmatprep.subr.mxu0 0.0
        %3309 = vmatpush1.msra.mxu0 0.0
        %3310 = vmatprep.subr.mxu0 0.0
        %3311 = vmatpush1.msra.mxu0 0.0
        %3312 = vmatprep.subr.mxu0 0.0
        %3313 = vmatpush1.msra.mxu0 0.0
        %3314 = vmatprep.subr.mxu0 0.0
        %3315 = vmatpush1.msra.mxu0 0.0
        %3316 = vmatprep.subr.mxu0 0.0
        %3317 = vmatpush1.msra.mxu0 0.0
        %3318 = vmatprep.subr.mxu0 0.0
        %3319 = vmatpush1.msra.mxu0 0.0
        %3320 = vmatprep.subr.mxu0 0.0
        %3321 = vmatpush1.msra.mxu0 0.0
        %3322 = vmatprep.subr.mxu0 0.0
        %3323 = vmatpush1.msra.mxu0 0.0
        %3324 = vmatprep.subr.mxu0 0.0
        %3325 = vmatpush1.msra.mxu0 0.0
        %3326 = vmatprep.subr.mxu0 0.0
        %3327 = vmatpush1.msra.mxu0 0.0
        %3328 = vmatprep.subr.mxu0 0.0
        %3329 = vmatpush1.msra.mxu0 0.0
        %3330 = vmatprep.subr.mxu0 0.0
        %3331 = vmatpush1.msra.mxu0 0.0
        %3332 = vmatprep.subr.mxu0 0.0
        %3333 = vmatpush1.msra.mxu0 0.0
        %3334 = vmatprep.mubr.f32.mxu0 0.0
        %3335 = vmatmul.mubr.f32.gmra.mrb[0].mxu0 %v3268
        %v3336 = vpop.f32.mrb[0].mxu0
        %v3337 = vadd.f32 0.0, %v3336
        %v3338 = vpop.f32.mrb[0].mxu0
        %3339 = vdwg.mxu0
        %v3341 = vsel %vm1495, %v3337, 0
        %3343 = vmatprep.subr.mxu0 0.0
        %3344 = vmatpush1.msra.mxu0 %v2666
        %3345 = vmatprep.subr.mxu0 0.0
        %3346 = vmatpush1.msra.mxu0 0.0
        %3347 = vmatprep.subr.mxu0 0.0
        %3348 = vmatpush1.msra.mxu0 0.0
        %3349 = vmatprep.subr.mxu0 0.0
        %3350 = vmatpush1.msra.mxu0 0.0
        %3351 = vmatprep.subr.mxu0 0.0
        %3352 = vmatpush1.msra.mxu0 0.0
        %3353 = vmatprep.subr.mxu0 0.0
        %3354 = vmatpush1.msra.mxu0 0.0
        %3355 = vmatprep.subr.mxu0 0.0
        %3356 = vmatpush1.msra.mxu0 0.0
        %3357 = vmatprep.subr.mxu0 0.0
        %3358 = vmatpush1.msra.mxu0 0.0
        %3359 = vmatprep.subr.mxu0 0.0
        %3360 = vmatpush1.msra.mxu0 0.0
        %3361 = vmatprep.subr.mxu0 0.0
        %3362 = vmatpush1.msra.mxu0 0.0
        %3363 = vmatprep.subr.mxu0 0.0
        %3364 = vmatpush1.msra.mxu0 0.0
        %3365 = vmatprep.subr.mxu0 0.0
        %3366 = vmatpush1.msra.mxu0 0.0
        %3367 = vmatprep.subr.mxu0 0.0
        %3368 = vmatpush1.msra.mxu0 0.0
        %3369 = vmatprep.subr.mxu0 0.0
        %3370 = vmatpush1.msra.mxu0 0.0
        %3371 = vmatprep.subr.mxu0 0.0
        %3372 = vmatpush1.msra.mxu0 0.0
        %3373 = vmatprep.subr.mxu0 0.0
        %3374 = vmatpush1.msra.mxu0 0.0
        %3375 = vmatprep.subr.mxu0 0.0
        %3376 = vmatpush1.msra.mxu0 0.0
        %3377 = vmatprep.subr.mxu0 0.0
        %3378 = vmatpush1.msra.mxu0 0.0
        %3379 = vmatprep.subr.mxu0 0.0
        %3380 = vmatpush1.msra.mxu0 0.0
        %3381 = vmatprep.subr.mxu0 0.0
        %3382 = vmatpush1.msra.mxu0 0.0
        %3383 = vmatprep.subr.mxu0 0.0
        %3384 = vmatpush1.msra.mxu0 0.0
        %3385 = vmatprep.subr.mxu0 0.0
        %3386 = vmatpush1.msra.mxu0 0.0
        %3387 = vmatprep.subr.mxu0 0.0
        %3388 = vmatpush1.msra.mxu0 0.0
        %3389 = vmatprep.subr.mxu0 0.0
        %3390 = vmatpush1.msra.mxu0 0.0
        %3391 = vmatprep.subr.mxu0 0.0
        %3392 = vmatpush1.msra.mxu0 0.0
        %3393 = vmatprep.subr.mxu0 0.0
        %3394 = vmatpush1.msra.mxu0 0.0
        %3395 = vmatprep.subr.mxu0 0.0
        %3396 = vmatpush1.msra.mxu0 0.0
        %3397 = vmatprep.subr.mxu0 0.0
        %3398 = vmatpush1.msra.mxu0 0.0
        %3399 = vmatprep.subr.mxu0 0.0
        %3400 = vmatpush1.msra.mxu0 0.0
        %3401 = vmatprep.subr.mxu0 0.0
        %3402 = vmatpush1.msra.mxu0 0.0
        %3403 = vmatprep.subr.mxu0 0.0
        %3404 = vmatpush1.msra.mxu0 0.0
        %3405 = vmatprep.subr.mxu0 0.0
        %3406 = vmatpush1.msra.mxu0 0.0
        %3407 = vmatprep.mubr.f32.mxu0 0.0
        %3408 = vmatmul.mubr.f32.gmra.mrb[0].mxu0 %v3341
        %v3409 = vpop.f32.mrb[0].mxu0
        %v3410 = vadd.f32 0.0, %v3409
        %v3411 = vpop.f32.mrb[0].mxu0
        %3412 = vdwg.mxu0
        %v3413 = vadd.f32 %v3163, %v3410
        %3414 = vrot.lane.b32.xlu0 %v2569, 104
        %v3415 = vpop.permute.xlu0 %3414
        %3416 = vrot.lane.b32.xlu0 %v2656, 104
        %v3417 = vpop.permute.xlu0 %3416
        %3418 = vrot.lane.b32.xlu0 %v2661, 104
        %v3419 = vpop.permute.xlu0 %3418
        %v3420 = vsel %vm1495, %v3415, 0
        %v3422 = vsel %vm1495, %v3417, 0
        %v3424 = vsel %vm1495, %v3419, 0
        %3426 = vmatprep.subr.mxu0 0.0
        %3427 = vmatpush1.xpose.msra.mxu0 %v3422
        %3428 = vmatprep.subr.mxu0 0.0
        %3429 = vmatpush1.xpose.msra.mxu0 %v3424
        %3430 = vmatprep.subr.mxu0 0.0
        %3431 = vmatpush1.xpose.msra.mxu0 0.0
        %3432 = vmatprep.subr.mxu0 0.0
        %3433 = vmatpush1.xpose.msra.mxu0 0.0
        %3434 = vmatprep.subr.mxu0 0.0
        %3435 = vmatpush1.xpose.msra.mxu0 0.0
        %3436 = vmatprep.subr.mxu0 0.0
        %3437 = vmatpush1.xpose.msra.mxu0 0.0
        %3438 = vmatprep.subr.mxu0 0.0
        %3439 = vmatpush1.xpose.msra.mxu0 0.0
        %3440 = vmatprep.subr.mxu0 0.0
        %3441 = vmatpush1.xpose.msra.mxu0 0.0
        %3442 = vmatprep.subr.mxu0 0.0
        %3443 = vmatpush1.xpose.msra.mxu0 0.0
        %3444 = vmatprep.subr.mxu0 0.0
        %3445 = vmatpush1.xpose.msra.mxu0 0.0
        %3446 = vmatprep.subr.mxu0 0.0
        %3447 = vmatpush1.xpose.msra.mxu0 0.0
        %3448 = vmatprep.subr.mxu0 0.0
        %3449 = vmatpush1.xpose.msra.mxu0 0.0
        %3450 = vmatprep.subr.mxu0 0.0
        %3451 = vmatpush1.xpose.msra.mxu0 0.0
        %3452 = vmatprep.subr.mxu0 0.0
        %3453 = vmatpush1.xpose.msra.mxu0 0.0
        %3454 = vmatprep.subr.mxu0 0.0
        %3455 = vmatpush1.xpose.msra.mxu0 0.0
        %3456 = vmatprep.subr.mxu0 0.0
        %3457 = vmatpush1.xpose.msra.mxu0 0.0
        %3458 = vmatprep.subr.mxu0 0.0
        %3459 = vmatpush1.xpose.msra.mxu0 0.0
        %3460 = vmatprep.subr.mxu0 0.0
        %3461 = vmatpush1.xpose.msra.mxu0 0.0
        %3462 = vmatprep.subr.mxu0 0.0
        %3463 = vmatpush1.xpose.msra.mxu0 0.0
        %3464 = vmatprep.subr.mxu0 0.0
        %3465 = vmatpush1.xpose.msra.mxu0 0.0
        %3466 = vmatprep.subr.mxu0 0.0
        %3467 = vmatpush1.xpose.msra.mxu0 0.0
        %3468 = vmatprep.subr.mxu0 0.0
        %3469 = vmatpush1.xpose.msra.mxu0 0.0
        %3470 = vmatprep.subr.mxu0 0.0
        %3471 = vmatpush1.xpose.msra.mxu0 0.0
        %3472 = vmatprep.subr.mxu0 0.0
        %3473 = vmatpush1.xpose.msra.mxu0 0.0
        %3474 = vmatprep.subr.mxu0 0.0
        %3475 = vmatpush1.xpose.msra.mxu0 0.0
        %3476 = vmatprep.subr.mxu0 0.0
        %3477 = vmatpush1.xpose.msra.mxu0 0.0
        %3478 = vmatprep.subr.mxu0 0.0
        %3479 = vmatpush1.xpose.msra.mxu0 0.0
        %3480 = vmatprep.subr.mxu0 0.0
        %3481 = vmatpush1.xpose.msra.mxu0 0.0
        %3482 = vmatprep.subr.mxu0 0.0
        %3483 = vmatpush1.xpose.msra.mxu0 0.0
        %3484 = vmatprep.subr.mxu0 0.0
        %3485 = vmatpush1.xpose.msra.mxu0 0.0
        %3486 = vmatprep.subr.mxu0 0.0
        %3487 = vmatpush1.xpose.msra.mxu0 0.0
        %3488 = vmatprep.subr.mxu0 0.0
        %3489 = vmatpush1.xpose.msra.mxu0 0.0
        %3490 = vmatprep.mubr.f32.mxu0 0.0
        %3491 = vmatmul.mubr.f32.gmra.mrb[0].mxu0 %v3420
        %v3492 = vpop.f32.mrb[0].mxu0
        %v3493 = vadd.f32 0.0, %v3492
        %v3494 = vpop.f32.mrb[0].mxu0
        %3495 = vdwg.mxu0
        %v3496 = vmul.f32 %v3493, 0.35355338
        %v3497 = vadd.f32 %v3496, %v2752
        %v3498 = vsel %vm2755, %v3497, -inf
        %3499 = vmax.xlane.f32.xlu0 %v3498
        %v3500 = vpop.xlane.xlu0 %3499
        %v3501 = vsub.f32 %v3497, %v3500
        %v3502 = vmul.f32 %v3501, 1.442695
        %v3503 = vpow.pop %v3502
        %v3504 = vsel %vm2755, %v3503, 0.0
        %3505 = vadd.xlane.f32.xlu0 %v3504
        %v3506 = vpop.xlane.xlu0 %3505
        %v3507 = vrcp.pop %v3506
        %v3508 = vmul.f32 %v3503, %v3507
        %3509 = vrot.lane.b32.xlu0 %v2656, 72
        %v3510 = vpop.permute.xlu0 %3509
        %3511 = vrot.lane.b32.xlu0 %v2661, 72
        %v3512 = vpop.permute.xlu0 %3511
        %v3516 = vsel %vm2755, %v3508, 0
        %3518 = vmatprep.subr.mxu0 0.0
        %3519 = vmatpush1.msra.mxu0 %v3510
        %3520 = vmatprep.subr.mxu0 0.0
        %3521 = vmatpush1.msra.mxu0 %v3512
        %3522 = vmatprep.subr.mxu0 0.0
        %3523 = vmatpush1.msra.mxu0 0.0
        %3524 = vmatprep.subr.mxu0 0.0
        %3525 = vmatpush1.msra.mxu0 0.0
        %3526 = vmatprep.subr.mxu0 0.0
        %3527 = vmatpush1.msra.mxu0 0.0
        %3528 = vmatprep.subr.mxu0 0.0
        %3529 = vmatpush1.msra.mxu0 0.0
        %3530 = vmatprep.subr.mxu0 0.0
        %3531 = vmatpush1.msra.mxu0 0.0
        %3532 = vmatprep.subr.mxu0 0.0
        %3533 = vmatpush1.msra.mxu0 0.0
        %3534 = vmatprep.subr.mxu0 0.0
        %3535 = vmatpush1.msra.mxu0 0.0
        %3536 = vmatprep.subr.mxu0 0.0
        %3537 = vmatpush1.msra.mxu0 0.0
        %3538 = vmatprep.subr.mxu0 0.0
        %3539 = vmatpush1.msra.mxu0 0.0
        %3540 = vmatprep.subr.mxu0 0.0
        %3541 = vmatpush1.msra.mxu0 0.0
        %3542 = vmatprep.subr.mxu0 0.0
        %3543 = vmatpush1.msra.mxu0 0.0
        %3544 = vmatprep.subr.mxu0 0.0
        %3545 = vmatpush1.msra.mxu0 0.0
        %3546 = vmatprep.subr.mxu0 0.0
        %3547 = vmatpush1.msra.mxu0 0.0
        %3548 = vmatprep.subr.mxu0 0.0
        %3549 = vmatpush1.msra.mxu0 0.0
        %3550 = vmatprep.subr.mxu0 0.0
        %3551 = vmatpush1.msra.mxu0 0.0
        %3552 = vmatprep.subr.mxu0 0.0
        %3553 = vmatpush1.msra.mxu0 0.0
        %3554 = vmatprep.subr.mxu0 0.0
        %3555 = vmatpush1.msra.mxu0 0.0
        %3556 = vmatprep.subr.mxu0 0.0
        %3557 = vmatpush1.msra.mxu0 0.0
        %3558 = vmatprep.subr.mxu0 0.0
        %3559 = vmatpush1.msra.mxu0 0.0
        %3560 = vmatprep.subr.mxu0 0.0
        %3561 = vmatpush1.msra.mxu0 0.0
        %3562 = vmatprep.subr.mxu0 0.0
        %3563 = vmatpush1.msra.mxu0 0.0
        %3564 = vmatprep.subr.mxu0 0.0
        %3565 = vmatpush1.msra.mxu0 0.0
        %3566 = vmatprep.subr.mxu0 0.0
        %3567 = vmatpush1.msra.mxu0 0.0
        %3568 = vmatprep.subr.mxu0 0.0
        %3569 = vmatpush1.msra.mxu0 0.0
        %3570 = vmatprep.subr.mxu0 0.0
        %3571 = vmatpush1.msra.mxu0 0.0
        %3572 = vmatprep.subr.mxu0 0.0
        %3573 = vmatpush1.msra.mxu0 0.0
        %3574 = vmatprep.subr.mxu0 0.0
        %3575 = vmatpush1.msra.mxu0 0.0
        %3576 = vmatprep.subr.mxu0 0.0
        %3577 = vmatpush1.msra.mxu0 0.0
        %3578 = vmatprep.subr.mxu0 0.0
        %3579 = vmatpush1.msra.mxu0 0.0
        %3580 = vmatprep.subr.mxu0 0.0
        %3581 = vmatpush1.msra.mxu0 0.0
        %3582 = vmatprep.mubr.f32.mxu0 0.0
        %3583 = vmatmul.mubr.f32.gmra.mrb[0].mxu0 %v3516
        %v3584 = vpop.f32.mrb[0].mxu0
        %v3585 = vadd.f32 0.0, %v3584
        %v3586 = vpop.f32.mrb[0].mxu0
        %3587 = vdwg.mxu0
        %v3589 = vsel %vm1495, %v3585, 0
        %3591 = vmatprep.subr.mxu0 0.0
        %3592 = vmatpush1.msra.mxu0 %v2667
        %3593 = vmatprep.subr.mxu0 0.0
        %3594 = vmatpush1.msra.mxu0 0.0
        %3595 = vmatprep.subr.mxu0 0.0
        %3596 = vmatpush1.msra.mxu0 0.0
        %3597 = vmatprep.subr.mxu0 0.0
        %3598 = vmatpush1.msra.mxu0 0.0
        %3599 = vmatprep.subr.mxu0 0.0
        %3600 = vmatpush1.msra.mxu0 0.0
        %3601 = vmatprep.subr.mxu0 0.0
        %3602 = vmatpush1.msra.mxu0 0.0
        %3603 = vmatprep.subr.mxu0 0.0
        %3604 = vmatpush1.msra.mxu0 0.0
        %3605 = vmatprep.subr.mxu0 0.0
        %3606 = vmatpush1.msra.mxu0 0.0
        %3607 = vmatprep.subr.mxu0 0.0
        %3608 = vmatpush1.msra.mxu0 0.0
        %3609 = vmatprep.subr.mxu0 0.0
        %3610 = vmatpush1.msra.mxu0 0.0
        %3611 = vmatprep.subr.mxu0 0.0
        %3612 = vmatpush1.msra.mxu0 0.0
        %3613 = vmatprep.subr.mxu0 0.0
        %3614 = vmatpush1.msra.mxu0 0.0
        %3615 = vmatprep.subr.mxu0 0.0
        %3616 = vmatpush1.msra.mxu0 0.0
        %3617 = vmatprep.subr.mxu0 0.0
        %3618 = vmatpush1.msra.mxu0 0.0
        %3619 = vmatprep.subr.mxu0 0.0
        %3620 = vmatpush1.msra.mxu0 0.0
        %3621 = vmatprep.subr.mxu0 0.0
        %3622 = vmatpush1.msra.mxu0 0.0
        %3623 = vmatprep.subr.mxu0 0.0
        %3624 = vmatpush1.msra.mxu0 0.0
        %3625 = vmatprep.subr.mxu0 0.0
        %3626 = vmatpush1.msra.mxu0 0.0
        %3627 = vmatprep.subr.mxu0 0.0
        %3628 = vmatpush1.msra.mxu0 0.0
        %3629 = vmatprep.subr.mxu0 0.0
        %3630 = vmatpush1.msra.mxu0 0.0
        %3631 = vmatprep.subr.mxu0 0.0
        %3632 = vmatpush1.msra.mxu0 0.0
        %3633 = vmatprep.subr.mxu0 0.0
        %3634 = vmatpush1.msra.mxu0 0.0
        %3635 = vmatprep.subr.mxu0 0.0
        %3636 = vmatpush1.msra.mxu0 0.0
        %3637 = vmatprep.subr.mxu0 0.0
        %3638 = vmatpush1.msra.mxu0 0.0
        %3639 = vmatprep.subr.mxu0 0.0
        %3640 = vmatpush1.msra.mxu0 0.0
        %3641 = vmatprep.subr.mxu0 0.0
        %3642 = vmatpush1.msra.mxu0 0.0
        %3643 = vmatprep.subr.mxu0 0.0
        %3644 = vmatpush1.msra.mxu0 0.0
        %3645 = vmatprep.subr.mxu0 0.0
        %3646 = vmatpush1.msra.mxu0 0.0
        %3647 = vmatprep.subr.mxu0 0.0
        %3648 = vmatpush1.msra.mxu0 0.0
        %3649 = vmatprep.subr.mxu0 0.0
        %3650 = vmatpush1.msra.mxu0 0.0
        %3651 = vmatprep.subr.mxu0 0.0
        %3652 = vmatpush1.msra.mxu0 0.0
        %3653 = vmatprep.subr.mxu0 0.0
        %3654 = vmatpush1.msra.mxu0 0.0
        %3655 = vmatprep.mubr.f32.mxu0 0.0
        %3656 = vmatmul.mubr.f32.gmra.mrb[0].mxu0 %v3589
        %v3657 = vpop.f32.mrb[0].mxu0
        %v3658 = vadd.f32 0.0, %v3657
        %v3659 = vpop.f32.mrb[0].mxu0
        %3660 = vdwg.mxu0
        %v3661 = vadd.f32 %v3413, %v3658
        %v3662 = vld [vmem:[#allocation19] sm:$0x1]
        %v3664 = vlaneseq
        %v3665 = vshrl.u32 %v3664, 7
        %v3666 = vsub.s32 0, %v3665
        %v3667 = vrot.slane %v3662, %v3666
        %v3669 = vadd.f32 %v3661, %v3667
        %v3670 = vadd.f32 %v3669, %v2487
        %v3671 = vld [vmem:[#allocation20] sm:$0x1]
        %v3672 = vld [vmem:[#allocation22] sm:$0x1]
        %v3673 = vsel %vm1375, %v3670, 0.0
        %3674 = vadd.xlane.f32.xlu0 %v3673
        %v3675 = vpop.xlane.xlu0 %3674
        %v3676 = vmul.f32 %v3675, %v1379
        %v3677 = vsub.f32 %v3670, %v3676
        %v3678 = vmul.f32 %v3677, %v3677
        %v3679 = vsel %vm1375, %v3678, 0.0
        %3680 = vadd.xlane.f32.xlu0 %v3679
        %v3681 = vpop.xlane.xlu0 %3680
        %v3682 = vmul.f32 %v3681, %v1379
        %v3683 = vadd.f32 %v3682, 1e-12
        %v3684 = vrsqrt.pop %v3683
        %v3685 = vmul.f32 %v3677, %v3684
        %v3687 = vlaneseq
        %v3688 = vshrl.u32 %v3687, 7
        %v3689 = vsub.s32 0, %v3688
        %v3690 = vrot.slane %v3671, %v3689
        %v3692 = vmul.f32 %v3685, %v3690
        %v3694 = vlaneseq
        %v3695 = vshrl.u32 %v3694, 7
        %v3696 = vsub.s32 0, %v3695
        %v3697 = vrot.slane %v3672, %v3696
        %v3699 = vadd.f32 %v3692, %v3697
        %v3700 = vld [vmem:[%s43] sm:$0xff]
        %v3701 = vld [vmem:[%s43 + $0x8] sm:$0xff]
        %v3702 = vld [vmem:[%s43 + $0x10] sm:$0xff]
        %v3703 = vld [vmem:[%s43 + $0x18] sm:$0xff]
        %v3704 = vld [vmem:[#allocation23] sm:$0x1]
        %v3706 = vlaneseq
        %v3707 = vshrl.u32 %v3706, 7
        %v3708 = vsub.s32 0, %v3707
        %v3709 = vrot.slane %v3704, %v3708
        %v3712 = vsel %vm1375, %v3699, 0
        %3714 = vmatprep.subr.mxu0 0.0
        %3715 = vmatpush1.msra.mxu0 %v3700
        %3716 = vmatprep.subr.mxu0 0.0
        %3717 = vmatpush1.msra.mxu0 %v3701
        %3718 = vmatprep.subr.mxu0 0.0
        %3719 = vmatpush1.msra.mxu0 %v3702
        %3720 = vmatprep.subr.mxu0 0.0
        %3721 = vmatpush1.msra.mxu0 %v3703
        %3722 = vmatprep.subr.mxu0 0.0
        %3723 = vmatpush1.msra.mxu0 0.0
        %3724 = vmatprep.subr.mxu0 0.0
        %3725 = vmatpush1.msra.mxu0 0.0
        %3726 = vmatprep.subr.mxu0 0.0
        %3727 = vmatpush1.msra.mxu0 0.0
        %3728 = vmatprep.subr.mxu0 0.0
        %3729 = vmatpush1.msra.mxu0 0.0
        %3730 = vmatprep.subr.mxu0 0.0
        %3731 = vmatpush1.msra.mxu0 0.0
        %3732 = vmatprep.subr.mxu0 0.0
        %3733 = vmatpush1.msra.mxu0 0.0
        %3734 = vmatprep.subr.mxu0 0.0
        %3735 = vmatpush1.msra.mxu0 0.0
        %3736 = vmatprep.subr.mxu0 0.0
        %3737 = vmatpush1.msra.mxu0 0.0
        %3738 = vmatprep.subr.mxu0 0.0
        %3739 = vmatpush1.msra.mxu0 0.0
        %3740 = vmatprep.subr.mxu0 0.0
        %3741 = vmatpush1.msra.mxu0 0.0
        %3742 = vmatprep.subr.mxu0 0.0
        %3743 = vmatpush1.msra.mxu0 0.0
        %3744 = vmatprep.subr.mxu0 0.0
        %3745 = vmatpush1.msra.mxu0 0.0
        %3746 = vmatprep.subr.mxu0 0.0
        %3747 = vmatpush1.msra.mxu0 0.0
        %3748 = vmatprep.subr.mxu0 0.0
        %3749 = vmatpush1.msra.mxu0 0.0
        %3750 = vmatprep.subr.mxu0 0.0
        %3751 = vmatpush1.msra.mxu0 0.0
        %3752 = vmatprep.subr.mxu0 0.0
        %3753 = vmatpush1.msra.mxu0 0.0
        %3754 = vmatprep.subr.mxu0 0.0
        %3755 = vmatpush1.msra.mxu0 0.0
        %3756 = vmatprep.subr.mxu0 0.0
        %3757 = vmatpush1.msra.mxu0 0.0
        %3758 = vmatprep.subr.mxu0 0.0
        %3759 = vmatpush1.msra.mxu0 0.0
        %3760 = vmatprep.subr.mxu0 0.0
        %3761 = vmatpush1.msra.mxu0 0.0
        %3762 = vmatprep.subr.mxu0 0.0
        %3763 = vmatpush1.msra.mxu0 0.0
        %3764 = vmatprep.subr.mxu0 0.0
        %3765 = vmatpush1.msra.mxu0 0.0
        %3766 = vmatprep.subr.mxu0 0.0
        %3767 = vmatpush1.msra.mxu0 0.0
        %3768 = vmatprep.subr.mxu0 0.0
        %3769 = vmatpush1.msra.mxu0 0.0
        %3770 = vmatprep.subr.mxu0 0.0
        %3771 = vmatpush1.msra.mxu0 0.0
        %3772 = vmatprep.subr.mxu0 0.0
        %3773 = vmatpush1.msra.mxu0 0.0
        %3774 = vmatprep.subr.mxu0 0.0
        %3775 = vmatpush1.msra.mxu0 0.0
        %3776 = vmatprep.subr.mxu0 0.0
        %3777 = vmatpush1.msra.mxu0 0.0
        %3778 = vmatprep.mubr.f32.mxu0 0.0
        %3779 = vmatmul.mubr.f32.gmra.mrb[0].mxu0 %v3712
        %v3780 = vpop.f32.mrb[0].mxu0
        %v3781 = vadd.f32 %v3709, %v3780
        %v3782 = vpop.f32.mrb[0].mxu0
        %3783 = vdwg.mxu0
        %v3784 = vmul.f32 %v3781, 0.5
        %v3785 = vmul.f32 %v3781, 0.70710677
        %v3786 = verf.f32.pop %v3785
        %v3787 = vadd.f32 %v3786, 1.0
        %v3788 = vmul.f32 %v3784, %v3787
        %v3789 = vld [vmem:[%s47] sm:$0xff]
        %v3790 = vld [vmem:[%s47 + $0x8] sm:$0xff]
        %v3791 = vld [vmem:[%s47 + $0x10] sm:$0xff]
        %v3792 = vld [vmem:[%s47 + $0x18] sm:$0xff]
        %v3793 = vld [vmem:[%s47 + $0x20] sm:$0xff]
        %v3794 = vld [vmem:[%s47 + $0x28] sm:$0xff]
        %v3795 = vld [vmem:[%s47 + $0x30] sm:$0xff]
        %v3796 = vld [vmem:[%s47 + $0x38] sm:$0xff]
        %v3797 = vld [vmem:[#allocation25] sm:$0x1]
        %v3799 = vlaneseq
        %v3800 = vshrl.u32 %v3799, 7
        %v3801 = vsub.s32 0, %v3800
        %v3802 = vrot.slane %v3797, %v3801
        %vm3804 = vcmask 523264
        %v3806 = vsel %vm3804, %v3788, 0
        %3808 = vmatprep.subr.mxu0 0.0
        %3809 = vmatpush1.msra.mxu0 %v3789
        %3810 = vmatprep.subr.mxu0 0.0
        %3811 = vmatpush1.msra.mxu0 %v3790
        %3812 = vmatprep.subr.mxu0 0.0
        %3813 = vmatpush1.msra.mxu0 %v3791
        %3814 = vmatprep.subr.mxu0 0.0
        %3815 = vmatpush1.msra.mxu0 %v3792
        %3816 = vmatprep.subr.mxu0 0.0
        %3817 = vmatpush1.msra.mxu0 %v3793
        %3818 = vmatprep.subr.mxu0 0.0
        %3819 = vmatpush1.msra.mxu0 %v3794
        %3820 = vmatprep.subr.mxu0 0.0
        %3821 = vmatpush1.msra.mxu0 %v3795
        %3822 = vmatprep.subr.mxu0 0.0
        %3823 = vmatpush1.msra.mxu0 %v3796
        %3824 = vmatprep.subr.mxu0 0.0
        %3825 = vmatpush1.msra.mxu0 0.0
        %3826 = vmatprep.subr.mxu0 0.0
        %3827 = vmatpush1.msra.mxu0 0.0
        %3828 = vmatprep.subr.mxu0 0.0
        %3829 = vmatpush1.msra.mxu0 0.0
        %3830 = vmatprep.subr.mxu0 0.0
        %3831 = vmatpush1.msra.mxu0 0.0
        %3832 = vmatprep.subr.mxu0 0.0
        %3833 = vmatpush1.msra.mxu0 0.0
        %3834 = vmatprep.subr.mxu0 0.0
        %3835 = vmatpush1.msra.mxu0 0.0
        %3836 = vmatprep.subr.mxu0 0.0
        %3837 = vmatpush1.msra.mxu0 0.0
        %3838 = vmatprep.subr.mxu0 0.0
        %3839 = vmatpush1.msra.mxu0 0.0
        %3840 = vmatprep.subr.mxu0 0.0
        %3841 = vmatpush1.msra.mxu0 0.0
        %3842 = vmatprep.subr.mxu0 0.0
        %3843 = vmatpush1.msra.mxu0 0.0
        %3844 = vmatprep.subr.mxu0 0.0
        %3845 = vmatpush1.msra.mxu0 0.0
        %3846 = vmatprep.subr.mxu0 0.0
        %3847 = vmatpush1.msra.mxu0 0.0
        %3848 = vmatprep.subr.mxu0 0.0
        %3849 = vmatpush1.msra.mxu0 0.0
        %3850 = vmatprep.subr.mxu0 0.0
        %3851 = vmatpush1.msra.mxu0 0.0
        %3852 = vmatprep.subr.mxu0 0.0
        %3853 = vmatpush1.msra.mxu0 0.0
        %3854 = vmatprep.subr.mxu0 0.0
        %3855 = vmatpush1.msra.mxu0 0.0
        %3856 = vmatprep.subr.mxu0 0.0
        %3857 = vmatpush1.msra.mxu0 0.0
        %3858 = vmatprep.subr.mxu0 0.0
        %3859 = vmatpush1.msra.mxu0 0.0
        %3860 = vmatprep.subr.mxu0 0.0
        %3861 = vmatpush1.msra.mxu0 0.0
        %3862 = vmatprep.subr.mxu0 0.0
        %3863 = vmatpush1.msra.mxu0 0.0
        %3864 = vmatprep.subr.mxu0 0.0
        %3865 = vmatpush1.msra.mxu0 0.0
        %3866 = vmatprep.subr.mxu0 0.0
        %3867 = vmatpush1.msra.mxu0 0.0
        %3868 = vmatprep.subr.mxu0 0.0
        %3869 = vmatpush1.msra.mxu0 0.0
        %3870 = vmatprep.subr.mxu0 0.0
        %3871 = vmatpush1.msra.mxu0 0.0
        %3872 = vmatprep.mubr.f32.mxu0 0.0
        %3873 = vmatmul.mubr.f32.gmra.mrb[0].mxu0 %v3806
        %v3874 = vpop.f32.mrb[0].mxu0
        %v3875 = vadd.f32 %v3802, %v3874
        %v3876 = vpop.f32.mrb[0].mxu0
        %3877 = vdwg.mxu0
        %v3878 = vadd.f32 %v3875, %v3699
        %v3879 = vld [vmem:[#allocation26] sm:$0x1]
        %v3880 = vld [vmem:[%s53] sm:$0x1]
        %v3881 = vsel %vm1375, %v3878, 0.0
        %3882 = vadd.xlane.f32.xlu0 %v3881
        %v3883 = vpop.xlane.xlu0 %3882
        %v3884 = vmul.f32 %v3883, %v1379
        %v3885 = vsub.f32 %v3878, %v3884
        %v3886 = vmul.f32 %v3885, %v3885
        %v3887 = vsel %vm1375, %v3886, 0.0
        %3888 = vadd.xlane.f32.xlu0 %v3887
        %v3889 = vpop.xlane.xlu0 %3888
        %v3890 = vmul.f32 %v3889, %v1379
        %v3891 = vadd.f32 %v3890, 1e-12
        %v3892 = vrsqrt.pop %v3891
        %v3893 = vmul.f32 %v3885, %v3892
        %v3895 = vlaneseq
        %v3896 = vshrl.u32 %v3895, 7
        %v3897 = vsub.s32 0, %v3896
        %v3898 = vrot.slane %v3879, %v3897
        %v3900 = vmul.f32 %v3893, %v3898
        %v3902 = vlaneseq
        %v3903 = vshrl.u32 %v3902, 7
        %v3904 = vsub.s32 0, %v3903
        %v3905 = vrot.slane %v3880, %v3904
        %v3907 = vadd.f32 %v3900, %v3905
        %s3908 = scalar_lea.vmem %s15, 32
        %v3909 = vld [vmem:[%s3908] sm:$0xff]
        %v3910 = vld [vmem:[%s3908 + $0x8] sm:$0xff]
        %v3911 = vld [vmem:[%s3908 + $0x10] sm:$0xff]
        %v3912 = vld [vmem:[%s3908 + $0x18] sm:$0xff]
        %s3913 = scalar_lea.vmem %s17, 1
        %v3914 = vld [vmem:[%s3913] sm:$0x1]
        %v3916 = vlaneseq
        %v3917 = vshrl.u32 %v3916, 7
        %v3918 = vsub.s32 0, %v3917
        %v3919 = vrot.slane %v3914, %v3918
        %v3922 = vsel %vm1375, %v3907, 0
        %3924 = vmatprep.subr.mxu0 0.0
        %3925 = vmatpush1.msra.mxu0 %v3909
        %3926 = vmatprep.subr.mxu0 0.0
        %3927 = vmatpush1.msra.mxu0 %v3910
        %3928 = vmatprep.subr.mxu0 0.0
        %3929 = vmatpush1.msra.mxu0 %v3911
        %3930 = vmatprep.subr.mxu0 0.0
        %3931 = vmatpush1.msra.mxu0 %v3912
        %3932 = vmatprep.subr.mxu0 0.0
        %3933 = vmatpush1.msra.mxu0 0.0
        %3934 = vmatprep.subr.mxu0 0.0
        %3935 = vmatpush1.msra.mxu0 0.0
        %3936 = vmatprep.subr.mxu0 0.0
        %3937 = vmatpush1.msra.mxu0 0.0
        %3938 = vmatprep.subr.mxu0 0.0
        %3939 = vmatpush1.msra.mxu0 0.0
        %3940 = vmatprep.subr.mxu0 0.0
        %3941 = vmatpush1.msra.mxu0 0.0
        %3942 = vmatprep.subr.mxu0 0.0
        %3943 = vmatpush1.msra.mxu0 0.0
        %3944 = vmatprep.subr.mxu0 0.0
        %3945 = vmatpush1.msra.mxu0 0.0
        %3946 = vmatprep.subr.mxu0 0.0
        %3947 = vmatpush1.msra.mxu0 0.0
        %3948 = vmatprep.subr.mxu0 0.0
        %3949 = vmatpush1.msra.mxu0 0.0
        %3950 = vmatprep.subr.mxu0 0.0
        %3951 = vmatpush1.msra.mxu0 0.0
        %3952 = vmatprep.subr.mxu0 0.0
        %3953 = vmatpush1.msra.mxu0 0.0
        %3954 = vmatprep.subr.mxu0 0.0
        %3955 = vmatpush1.msra.mxu0 0.0
        %3956 = vmatprep.subr.mxu0 0.0
        %3957 = vmatpush1.msra.mxu0 0.0
        %3958 = vmatprep.subr.mxu0 0.0
        %3959 = vmatpush1.msra.mxu0 0.0
        %3960 = vmatprep.subr.mxu0 0.0
        %3961 = vmatpush1.msra.mxu0 0.0
        %3962 = vmatprep.subr.mxu0 0.0
        %3963 = vmatpush1.msra.mxu0 0.0
        %3964 = vmatprep.subr.mxu0 0.0
        %3965 = vmatpush1.msra.mxu0 0.0
        %3966 = vmatprep.subr.mxu0 0.0
        %3967 = vmatpush1.msra.mxu0 0.0
        %3968 = vmatprep.subr.mxu0 0.0
        %3969 = vmatpush1.msra.mxu0 0.0
        %3970 = vmatprep.subr.mxu0 0.0
        %3971 = vmatpush1.msra.mxu0 0.0
        %3972 = vmatprep.subr.mxu0 0.0
        %3973 = vmatpush1.msra.mxu0 0.0
        %3974 = vmatprep.subr.mxu0 0.0
        %3975 = vmatpush1.msra.mxu0 0.0
        %3976 = vmatprep.subr.mxu0 0.0
        %3977 = vmatpush1.msra.mxu0 0.0
        %3978 = vmatprep.subr.mxu0 0.0
        %3979 = vmatpush1.msra.mxu0 0.0
        %3980 = vmatprep.subr.mxu0 0.0
        %3981 = vmatpush1.msra.mxu0 0.0
        %3982 = vmatprep.subr.mxu0 0.0
        %3983 = vmatpush1.msra.mxu0 0.0
        %3984 = vmatprep.subr.mxu0 0.0
        %3985 = vmatpush1.msra.mxu0 0.0
        %3986 = vmatprep.subr.mxu0 0.0
        %3987 = vmatpush1.msra.mxu0 0.0
        %3988 = vmatprep.mubr.f32.mxu0 0.0
        %3989 = vmatmul.mubr.f32.gmra.mrb[0].mxu0 %v3922
        %v3990 = vpop.f32.mrb[0].mxu0
        %v3991 = vadd.f32 %v3919, %v3990
        %v3992 = vpop.f32.mrb[0].mxu0
        %3993 = vdwg.mxu0
        %s3994 = scalar_lea.vmem %s19, 32
        %v3995 = vld [vmem:[%s3994] sm:$0xff]
        %v3996 = vld [vmem:[%s3994 + $0x8] sm:$0xff]
        %v3997 = vld [vmem:[%s3994 + $0x10] sm:$0xff]
        %v3998 = vld [vmem:[%s3994 + $0x18] sm:$0xff]
        %4000 = vrot.lane.b32.xlu0 %v3991, 96
        %v4001 = vpop.permute.xlu0 %4000
        %v4002 = vsel %vm1495, %v3991, 0
        %v4004 = vsel %vm1495, %v4001, 0
        %4006 = vmatprep.subr.mxu0 0.0
        %4007 = vmatpush1.xpose.msra.mxu0 %v4004
        %4008 = vmatprep.subr.mxu0 0.0
        %4009 = vmatpush1.xpose.msra.mxu0 0.0
        %4010 = vmatprep.subr.mxu0 0.0
        %4011 = vmatpush1.xpose.msra.mxu0 0.0
        %4012 = vmatprep.subr.mxu0 0.0
        %4013 = vmatpush1.xpose.msra.mxu0 0.0
        %4014 = vmatprep.subr.mxu0 0.0
        %4015 = vmatpush1.xpose.msra.mxu0 0.0
        %4016 = vmatprep.subr.mxu0 0.0
        %4017 = vmatpush1.xpose.msra.mxu0 0.0
        %4018 = vmatprep.subr.mxu0 0.0
        %4019 = vmatpush1.xpose.msra.mxu0 0.0
        %4020 = vmatprep.subr.mxu0 0.0
        %4021 = vmatpush1.xpose.msra.mxu0 0.0
        %4022 = vmatprep.subr.mxu0 0.0
        %4023 = vmatpush1.xpose.msra.mxu0 0.0
        %4024 = vmatprep.subr.mxu0 0.0
        %4025 = vmatpush1.xpose.msra.mxu0 0.0
        %4026 = vmatprep.subr.mxu0 0.0
        %4027 = vmatpush1.xpose.msra.mxu0 0.0
        %4028 = vmatprep.subr.mxu0 0.0
        %4029 = vmatpush1.xpose.msra.mxu0 0.0
        %4030 = vmatprep.subr.mxu0 0.0
        %4031 = vmatpush1.xpose.msra.mxu0 0.0
        %4032 = vmatprep.subr.mxu0 0.0
        %4033 = vmatpush1.xpose.msra.mxu0 0.0
        %4034 = vmatprep.subr.mxu0 0.0
        %4035 = vmatpush1.xpose.msra.mxu0 0.0
        %4036 = vmatprep.subr.mxu0 0.0
        %4037 = vmatpush1.xpose.msra.mxu0 0.0
        %4038 = vmatprep.subr.mxu0 0.0
        %4039 = vmatpush1.xpose.msra.mxu0 0.0
        %4040 = vmatprep.subr.mxu0 0.0
        %4041 = vmatpush1.xpose.msra.mxu0 0.0
        %4042 = vmatprep.subr.mxu0 0.0
        %4043 = vmatpush1.xpose.msra.mxu0 0.0
        %4044 = vmatprep.subr.mxu0 0.0
        %4045 = vmatpush1.xpose.msra.mxu0 0.0
        %4046 = vmatprep.subr.mxu0 0.0
        %4047 = vmatpush1.xpose.msra.mxu0 0.0
        %4048 = vmatprep.subr.mxu0 0.0
        %4049 = vmatpush1.xpose.msra.mxu0 0.0
        %4050 = vmatprep.subr.mxu0 0.0
        %4051 = vmatpush1.xpose.msra.mxu0 0.0
        %4052 = vmatprep.subr.mxu0 0.0
        %4053 = vmatpush1.xpose.msra.mxu0 0.0
        %4054 = vmatprep.subr.mxu0 0.0
        %4055 = vmatpush1.xpose.msra.mxu0 0.0
        %4056 = vmatprep.subr.mxu0 0.0
        %4057 = vmatpush1.xpose.msra.mxu0 0.0
        %4058 = vmatprep.subr.mxu0 0.0
        %4059 = vmatpush1.xpose.msra.mxu0 0.0
        %4060 = vmatprep.subr.mxu0 0.0
        %4061 = vmatpush1.xpose.msra.mxu0 0.0
        %4062 = vmatprep.subr.mxu0 0.0
        %4063 = vmatpush1.xpose.msra.mxu0 0.0
        %4064 = vmatprep.subr.mxu0 0.0
        %4065 = vmatpush1.xpose.msra.mxu0 0.0
        %4066 = vmatprep.subr.mxu0 0.0
        %4067 = vmatpush1.xpose.msra.mxu0 0.0
        %4068 = vmatprep.subr.mxu0 0.0
        %4069 = vmatpush1.xpose.msra.mxu0 0.0
        %4070 = vmatprep.mubr.f32.mxu0 0.0
        %4071 = vmatmul.mubr.f32.gmra.mrb[0].mxu0 %v4002
        %v4072 = vpop.f32.mrb[0].mxu0
        %v4073 = vadd.f32 0.0, %v4072
        %v4074 = vpop.f32.mrb[0].mxu0
        %4075 = vdwg.mxu0
        %v4076 = vmul.f32 %v4073, 0.35355338
        %v4077 = vsel %vm1495, %v4076, -inf
        %4078 = vmax.xlane.f32.xlu0 %v4077
        %v4079 = vpop.xlane.xlu0 %4078
        %v4080 = vsub.f32 %v4076, %v4079
        %v4081 = vmul.f32 %v4080, 1.442695
        %v4082 = vpow.pop %v4081
        %v4083 = vsel %vm1495, %v4082, 0.0
        %4084 = vadd.xlane.f32.xlu0 %v4083
        %v4085 = vpop.xlane.xlu0 %4084
        %v4086 = vrcp.pop %v4085
        %v4087 = vmul.f32 %v4082, %v4086
        %4088 = vrot.lane.b32.xlu0 %v3991, 64
        %v4089 = vpop.permute.xlu0 %4088
        %v4092 = vsel %vm1495, %v4087, 0
        %4094 = vmatprep.subr.mxu0 0.0
        %4095 = vmatpush1.msra.mxu0 %v4089
        %4096 = vmatprep.subr.mxu0 0.0
        %4097 = vmatpush1.msra.mxu0 0.0
        %4098 = vmatprep.subr.mxu0 0.0
        %4099 = vmatpush1.msra.mxu0 0.0
        %4100 = vmatprep.subr.mxu0 0.0
        %4101 = vmatpush1.msra.mxu0 0.0
        %4102 = vmatprep.subr.mxu0 0.0
        %4103 = vmatpush1.msra.mxu0 0.0
        %4104 = vmatprep.subr.mxu0 0.0
        %4105 = vmatpush1.msra.mxu0 0.0
        %4106 = vmatprep.subr.mxu0 0.0
        %4107 = vmatpush1.msra.mxu0 0.0
        %4108 = vmatprep.subr.mxu0 0.0
        %4109 = vmatpush1.msra.mxu0 0.0
        %4110 = vmatprep.subr.mxu0 0.0
        %4111 = vmatpush1.msra.mxu0 0.0
        %4112 = vmatprep.subr.mxu0 0.0
        %4113 = vmatpush1.msra.mxu0 0.0
        %4114 = vmatprep.subr.mxu0 0.0
        %4115 = vmatpush1.msra.mxu0 0.0
        %4116 = vmatprep.subr.mxu0 0.0
        %4117 = vmatpush1.msra.mxu0 0.0
        %4118 = vmatprep.subr.mxu0 0.0
        %4119 = vmatpush1.msra.mxu0 0.0
        %4120 = vmatprep.subr.mxu0 0.0
        %4121 = vmatpush1.msra.mxu0 0.0
        %4122 = vmatprep.subr.mxu0 0.0
        %4123 = vmatpush1.msra.mxu0 0.0
        %4124 = vmatprep.subr.mxu0 0.0
        %4125 = vmatpush1.msra.mxu0 0.0
        %4126 = vmatprep.subr.mxu0 0.0
        %4127 = vmatpush1.msra.mxu0 0.0
        %4128 = vmatprep.subr.mxu0 0.0
        %4129 = vmatpush1.msra.mxu0 0.0
        %4130 = vmatprep.subr.mxu0 0.0
        %4131 = vmatpush1.msra.mxu0 0.0
        %4132 = vmatprep.subr.mxu0 0.0
        %4133 = vmatpush1.msra.mxu0 0.0
        %4134 = vmatprep.subr.mxu0 0.0
        %4135 = vmatpush1.msra.mxu0 0.0
        %4136 = vmatprep.subr.mxu0 0.0
        %4137 = vmatpush1.msra.mxu0 0.0
        %4138 = vmatprep.subr.mxu0 0.0
        %4139 = vmatpush1.msra.mxu0 0.0
        %4140 = vmatprep.subr.mxu0 0.0
        %4141 = vmatpush1.msra.mxu0 0.0
        %4142 = vmatprep.subr.mxu0 0.0
        %4143 = vmatpush1.msra.mxu0 0.0
        %4144 = vmatprep.subr.mxu0 0.0
        %4145 = vmatpush1.msra.mxu0 0.0
        %4146 = vmatprep.subr.mxu0 0.0
        %4147 = vmatpush1.msra.mxu0 0.0
        %4148 = vmatprep.subr.mxu0 0.0
        %4149 = vmatpush1.msra.mxu0 0.0
        %4150 = vmatprep.subr.mxu0 0.0
        %4151 = vmatpush1.msra.mxu0 0.0
        %4152 = vmatprep.subr.mxu0 0.0
        %4153 = vmatpush1.msra.mxu0 0.0
        %4154 = vmatprep.subr.mxu0 0.0
        %4155 = vmatpush1.msra.mxu0 0.0
        %4156 = vmatprep.subr.mxu0 0.0
        %4157 = vmatpush1.msra.mxu0 0.0
        %4158 = vmatprep.mubr.f32.mxu0 0.0
        %4159 = vmatmul.mubr.f32.gmra.mrb[0].mxu0 %v4092
        %v4160 = vpop.f32.mrb[0].mxu0
        %v4161 = vadd.f32 0.0, %v4160
        %v4162 = vpop.f32.mrb[0].mxu0
        %4163 = vdwg.mxu0
        %4164 = vrot.lane.b32.xlu0 %v3991, 120
        %v4165 = vpop.permute.xlu0 %4164
        %4166 = vrot.lane.b32.xlu0 %v3991, 88
        %v4167 = vpop.permute.xlu0 %4166
        %v4168 = vsel %vm1495, %v4165, 0
        %v4170 = vsel %vm1495, %v4167, 0
        %4172 = vmatprep.subr.mxu0 0.0
        %4173 = vmatpush1.xpose.msra.mxu0 %v4170
        %4174 = vmatprep.subr.mxu0 0.0
        %4175 = vmatpush1.xpose.msra.mxu0 0.0
        %4176 = vmatprep.subr.mxu0 0.0
        %4177 = vmatpush1.xpose.msra.mxu0 0.0
        %4178 = vmatprep.subr.mxu0 0.0
        %4179 = vmatpush1.xpose.msra.mxu0 0.0
        %4180 = vmatprep.subr.mxu0 0.0
        %4181 = vmatpush1.xpose.msra.mxu0 0.0
        %4182 = vmatprep.subr.mxu0 0.0
        %4183 = vmatpush1.xpose.msra.mxu0 0.0
        %4184 = vmatprep.subr.mxu0 0.0
        %4185 = vmatpush1.xpose.msra.mxu0 0.0
        %4186 = vmatprep.subr.mxu0 0.0
        %4187 = vmatpush1.xpose.msra.mxu0 0.0
        %4188 = vmatprep.subr.mxu0 0.0
        %4189 = vmatpush1.xpose.msra.mxu0 0.0
        %4190 = vmatprep.subr.mxu0 0.0
        %4191 = vmatpush1.xpose.msra.mxu0 0.0
        %4192 = vmatprep.subr.mxu0 0.0
        %4193 = vmatpush1.xpose.msra.mxu0 0.0
        %4194 = vmatprep.subr.mxu0 0.0
        %4195 = vmatpush1.xpose.msra.mxu0 0.0
        %4196 = vmatprep.subr.mxu0 0.0
        %4197 = vmatpush1.xpose.msra.mxu0 0.0
        %4198 = vmatprep.subr.mxu0 0.0
        %4199 = vmatpush1.xpose.msra.mxu0 0.0
        %4200 = vmatprep.subr.mxu0 0.0
        %4201 = vmatpush1.xpose.msra.mxu0 0.0
        %4202 = vmatprep.subr.mxu0 0.0
        %4203 = vmatpush1.xpose.msra.mxu0 0.0
        %4204 = vmatprep.subr.mxu0 0.0
        %4205 = vmatpush1.xpose.msra.mxu0 0.0
        %4206 = vmatprep.subr.mxu0 0.0
        %4207 = vmatpush1.xpose.msra.mxu0 0.0
        %4208 = vmatprep.subr.mxu0 0.0
        %4209 = vmatpush1.xpose.msra.mxu0 0.0
        %4210 = vmatprep.subr.mxu0 0.0
        %4211 = vmatpush1.xpose.msra.mxu0 0.0
        %4212 = vmatprep.subr.mxu0 0.0
        %4213 = vmatpush1.xpose.msra.mxu0 0.0
        %4214 = vmatprep.subr.mxu0 0.0
        %4215 = vmatpush1.xpose.msra.mxu0 0.0
        %4216 = vmatprep.subr.mxu0 0.0
        %4217 = vmatpush1.xpose.msra.mxu0 0.0
        %4218 = vmatprep.subr.mxu0 0.0
        %4219 = vmatpush1.xpose.msra.mxu0 0.0
        %4220 = vmatprep.subr.mxu0 0.0
        %4221 = vmatpush1.xpose.msra.mxu0 0.0
        %4222 = vmatprep.subr.mxu0 0.0
        %4223 = vmatpush1.xpose.msra.mxu0 0.0
        %4224 = vmatprep.subr.mxu0 0.0
        %4225 = vmatpush1.xpose.msra.mxu0 0.0
        %4226 = vmatprep.subr.mxu0 0.0
        %4227 = vmatpush1.xpose.msra.mxu0 0.0
        %4228 = vmatprep.subr.mxu0 0.0
        %4229 = vmatpush1.xpose.msra.mxu0 0.0
        %4230 = vmatprep.subr.mxu0 0.0
        %4231 = vmatpush1.xpose.msra.mxu0 0.0
        %4232 = vmatprep.subr.mxu0 0.0
        %4233 = vmatpush1.xpose.msra.mxu0 0.0
        %4234 = vmatprep.subr.mxu0 0.0
        %4235 = vmatpush1.xpose.msra.mxu0 0.0
        %4236 = vmatprep.mubr.f32.mxu0 0.0
        %4237 = vmatmul.mubr.f32.gmra.mrb[0].mxu0 %v4168
        %v4238 = vpop.f32.mrb[0].mxu0
        %v4239 = vadd.f32 0.0, %v4238
        %v4240 = vpop.f32.mrb[0].mxu0
        %4241 = vdwg.mxu0
        %v4242 = vmul.f32 %v4239, 0.35355338
        %v4243 = vsel %vm1495, %v4242, -inf
        %4244 = vmax.xlane.f32.xlu0 %v4243
        %v4245 = vpop.xlane.xlu0 %4244
        %v4246 = vsub.f32 %v4242, %v4245
        %v4247 = vmul.f32 %v4246, 1.442695
        %v4248 = vpow.pop %v4247
        %v4249 = vsel %vm1495, %v4248, 0.0
        %4250 = vadd.xlane.f32.xlu0 %v4249
        %v4251 = vpop.xlane.xlu0 %4250
        %v4252 = vrcp.pop %v4251
        %v4253 = vmul.f32 %v4248, %v4252
        %4254 = vrot.lane.b32.xlu0 %v3991, 56
        %v4255 = vpop.permute.xlu0 %4254
        %v4258 = vsel %vm1495, %v4253, 0
        %4260 = vmatprep.subr.mxu0 0.0
        %4261 = vmatpush1.msra.mxu0 %v4255
        %4262 = vmatprep.subr.mxu0 0.0
        %4263 = vmatpush1.msra.mxu0 0.0
        %4264 = vmatprep.subr.mxu0 0.0
        %4265 = vmatpush1.msra.mxu0 0.0
        %4266 = vmatprep.subr.mxu0 0.0
        %4267 = vmatpush1.msra.mxu0 0.0
        %4268 = vmatprep.subr.mxu0 0.0
        %4269 = vmatpush1.msra.mxu0 0.0
        %4270 = vmatprep.subr.mxu0 0.0
        %4271 = vmatpush1.msra.mxu0 0.0
        %4272 = vmatprep.subr.mxu0 0.0
        %4273 = vmatpush1.msra.mxu0 0.0
        %4274 = vmatprep.subr.mxu0 0.0
        %4275 = vmatpush1.msra.mxu0 0.0
        %4276 = vmatprep.subr.mxu0 0.0
        %4277 = vmatpush1.msra.mxu0 0.0
        %4278 = vmatprep.subr.mxu0 0.0
        %4279 = vmatpush1.msra.mxu0 0.0
        %4280 = vmatprep.subr.mxu0 0.0
        %4281 = vmatpush1.msra.mxu0 0.0
        %4282 = vmatprep.subr.mxu0 0.0
        %4283 = vmatpush1.msra.mxu0 0.0
        %4284 = vmatprep.subr.mxu0 0.0
        %4285 = vmatpush1.msra.mxu0 0.0
        %4286 = vmatprep.subr.mxu0 0.0
        %4287 = vmatpush1.msra.mxu0 0.0
        %4288 = vmatprep.subr.mxu0 0.0
        %4289 = vmatpush1.msra.mxu0 0.0
        %4290 = vmatprep.subr.mxu0 0.0
        %4291 = vmatpush1.msra.mxu0 0.0
        %4292 = vmatprep.subr.mxu0 0.0
        %4293 = vmatpush1.msra.mxu0 0.0
        %4294 = vmatprep.subr.mxu0 0.0
        %4295 = vmatpush1.msra.mxu0 0.0
        %4296 = vmatprep.subr.mxu0 0.0
        %4297 = vmatpush1.msra.mxu0 0.0
        %4298 = vmatprep.subr.mxu0 0.0
        %4299 = vmatpush1.msra.mxu0 0.0
        %4300 = vmatprep.subr.mxu0 0.0
        %4301 = vmatpush1.msra.mxu0 0.0
        %4302 = vmatprep.subr.mxu0 0.0
        %4303 = vmatpush1.msra.mxu0 0.0
        %4304 = vmatprep.subr.mxu0 0.0
        %4305 = vmatpush1.msra.mxu0 0.0
        %4306 = vmatprep.subr.mxu0 0.0
        %4307 = vmatpush1.msra.mxu0 0.0
        %4308 = vmatprep.subr.mxu0 0.0
        %4309 = vmatpush1.msra.mxu0 0.0
        %4310 = vmatprep.subr.mxu0 0.0
        %4311 = vmatpush1.msra.mxu0 0.0
        %4312 = vmatprep.subr.mxu0 0.0
        %4313 = vmatpush1.msra.mxu0 0.0
        %4314 = vmatprep.subr.mxu0 0.0
        %4315 = vmatpush1.msra.mxu0 0.0
        %4316 = vmatprep.subr.mxu0 0.0
        %4317 = vmatpush1.msra.mxu0 0.0
        %4318 = vmatprep.subr.mxu0 0.0
        %4319 = vmatpush1.msra.mxu0 0.0
        %4320 = vmatprep.subr.mxu0 0.0
        %4321 = vmatpush1.msra.mxu0 0.0
        %4322 = vmatprep.subr.mxu0 0.0
        %4323 = vmatpush1.msra.mxu0 0.0
        %4324 = vmatprep.mubr.f32.mxu0 0.0
        %4325 = vmatmul.mubr.f32.gmra.mrb[0].mxu0 %v4258
        %v4326 = vpop.f32.mrb[0].mxu0
        %v4327 = vadd.f32 0.0, %v4326
        %v4328 = vpop.f32.mrb[0].mxu0
        %4329 = vdwg.mxu0
        %v4331 = vsel %vm1495, %v4327, 0
        %4333 = vmatprep.subr.mxu0 0.0
        %4334 = vmatpush1.msra.mxu0 %v3996
        %4335 = vmatprep.subr.mxu0 0.0
        %4336 = vmatpush1.msra.mxu0 0.0
        %4337 = vmatprep.subr.mxu0 0.0
        %4338 = vmatpush1.msra.mxu0 0.0
        %4339 = vmatprep.subr.mxu0 0.0
        %4340 = vmatpush1.msra.mxu0 0.0
        %4341 = vmatprep.subr.mxu0 0.0
        %4342 = vmatpush1.msra.mxu0 0.0
        %4343 = vmatprep.subr.mxu0 0.0
        %4344 = vmatpush1.msra.mxu0 0.0
        %4345 = vmatprep.subr.mxu0 0.0
        %4346 = vmatpush1.msra.mxu0 0.0
        %4347 = vmatprep.subr.mxu0 0.0
        %4348 = vmatpush1.msra.mxu0 0.0
        %4349 = vmatprep.subr.mxu0 0.0
        %4350 = vmatpush1.msra.mxu0 0.0
        %4351 = vmatprep.subr.mxu0 0.0
        %4352 = vmatpush1.msra.mxu0 0.0
        %4353 = vmatprep.subr.mxu0 0.0
        %4354 = vmatpush1.msra.mxu0 0.0
        %4355 = vmatprep.subr.mxu0 0.0
        %4356 = vmatpush1.msra.mxu0 0.0
        %4357 = vmatprep.subr.mxu0 0.0
        %4358 = vmatpush1.msra.mxu0 0.0
        %4359 = vmatprep.subr.mxu0 0.0
        %4360 = vmatpush1.msra.mxu0 0.0
        %4361 = vmatprep.subr.mxu0 0.0
        %4362 = vmatpush1.msra.mxu0 0.0
        %4363 = vmatprep.subr.mxu0 0.0
        %4364 = vmatpush1.msra.mxu0 0.0
        %4365 = vmatprep.subr.mxu0 0.0
        %4366 = vmatpush1.msra.mxu0 0.0
        %4367 = vmatprep.subr.mxu0 0.0
        %4368 = vmatpush1.msra.mxu0 0.0
        %4369 = vmatprep.subr.mxu0 0.0
        %4370 = vmatpush1.msra.mxu0 0.0
        %4371 = vmatprep.subr.mxu0 0.0
        %4372 = vmatpush1.msra.mxu0 0.0
        %4373 = vmatprep.subr.mxu0 0.0
        %4374 = vmatpush1.msra.mxu0 0.0
        %4375 = vmatprep.subr.mxu0 0.0
        %4376 = vmatpush1.msra.mxu0 0.0
        %4377 = vmatprep.subr.mxu0 0.0
        %4378 = vmatpush1.msra.mxu0 0.0
        %4379 = vmatprep.subr.mxu0 0.0
        %4380 = vmatpush1.msra.mxu0 0.0
        %4381 = vmatprep.subr.mxu0 0.0
        %4382 = vmatpush1.msra.mxu0 0.0
        %4383 = vmatprep.subr.mxu0 0.0
        %4384 = vmatpush1.msra.mxu0 0.0
        %4385 = vmatprep.subr.mxu0 0.0
        %4386 = vmatpush1.msra.mxu0 0.0
        %4387 = vmatprep.subr.mxu0 0.0
        %4388 = vmatpush1.msra.mxu0 0.0
        %4389 = vmatprep.subr.mxu0 0.0
        %4390 = vmatpush1.msra.mxu0 0.0
        %4391 = vmatprep.subr.mxu0 0.0
        %4392 = vmatpush1.msra.mxu0 0.0
        %4393 = vmatprep.subr.mxu0 0.0
        %4394 = vmatpush1.msra.mxu0 0.0
        %4395 = vmatprep.subr.mxu0 0.0
        %4396 = vmatpush1.msra.mxu0 0.0
        %4397 = vmatprep.mubr.f32.mxu0 0.0
        %4398 = vmatmul.mubr.f32.gmra.mrb[0].mxu0 %v4331
        %v4399 = vpop.f32.mrb[0].mxu0
        %v4400 = vadd.f32 0.0, %v4399
        %v4401 = vpop.f32.mrb[0].mxu0
        %4402 = vdwg.mxu0
        %v4404 = vsel %vm1495, %v4161, 0
        %4406 = vmatprep.subr.mxu0 0.0
        %4407 = vmatpush1.msra.mxu0 %v3995
        %4408 = vmatprep.subr.mxu0 0.0
        %4409 = vmatpush1.msra.mxu0 0.0
        %4410 = vmatprep.subr.mxu0 0.0
        %4411 = vmatpush1.msra.mxu0 0.0
        %4412 = vmatprep.subr.mxu0 0.0
        %4413 = vmatpush1.msra.mxu0 0.0
        %4414 = vmatprep.subr.mxu0 0.0
        %4415 = vmatpush1.msra.mxu0 0.0
        %4416 = vmatprep.subr.mxu0 0.0
        %4417 = vmatpush1.msra.mxu0 0.0
        %4418 = vmatprep.subr.mxu0 0.0
        %4419 = vmatpush1.msra.mxu0 0.0
        %4420 = vmatprep.subr.mxu0 0.0
        %4421 = vmatpush1.msra.mxu0 0.0
        %4422 = vmatprep.subr.mxu0 0.0
        %4423 = vmatpush1.msra.mxu0 0.0
        %4424 = vmatprep.subr.mxu0 0.0
        %4425 = vmatpush1.msra.mxu0 0.0
        %4426 = vmatprep.subr.mxu0 0.0
        %4427 = vmatpush1.msra.mxu0 0.0
        %4428 = vmatprep.subr.mxu0 0.0
        %4429 = vmatpush1.msra.mxu0 0.0
        %4430 = vmatprep.subr.mxu0 0.0
        %4431 = vmatpush1.msra.mxu0 0.0
        %4432 = vmatprep.subr.mxu0 0.0
        %4433 = vmatpush1.msra.mxu0 0.0
        %4434 = vmatprep.subr.mxu0 0.0
        %4435 = vmatpush1.msra.mxu0 0.0
        %4436 = vmatprep.subr.mxu0 0.0
        %4437 = vmatpush1.msra.mxu0 0.0
        %4438 = vmatprep.subr.mxu0 0.0
        %4439 = vmatpush1.msra.mxu0 0.0
        %4440 = vmatprep.subr.mxu0 0.0
        %4441 = vmatpush1.msra.mxu0 0.0
        %4442 = vmatprep.subr.mxu0 0.0
        %4443 = vmatpush1.msra.mxu0 0.0
        %4444 = vmatprep.subr.mxu0 0.0
        %4445 = vmatpush1.msra.mxu0 0.0
        %4446 = vmatprep.subr.mxu0 0.0
        %4447 = vmatpush1.msra.mxu0 0.0
        %4448 = vmatprep.subr.mxu0 0.0
        %4449 = vmatpush1.msra.mxu0 0.0
        %4450 = vmatprep.subr.mxu0 0.0
        %4451 = vmatpush1.msra.mxu0 0.0
        %4452 = vmatprep.subr.mxu0 0.0
        %4453 = vmatpush1.msra.mxu0 0.0
        %4454 = vmatprep.subr.mxu0 0.0
        %4455 = vmatpush1.msra.mxu0 0.0
        %4456 = vmatprep.subr.mxu0 0.0
        %4457 = vmatpush1.msra.mxu0 0.0
        %4458 = vmatprep.subr.mxu0 0.0
        %4459 = vmatpush1.msra.mxu0 0.0
        %4460 = vmatprep.subr.mxu0 0.0
        %4461 = vmatpush1.msra.mxu0 0.0
        %4462 = vmatprep.subr.mxu0 0.0
        %4463 = vmatpush1.msra.mxu0 0.0
        %4464 = vmatprep.subr.mxu0 0.0
        %4465 = vmatpush1.msra.mxu0 0.0
        %4466 = vmatprep.subr.mxu0 0.0
        %4467 = vmatpush1.msra.mxu0 0.0
        %4468 = vmatprep.subr.mxu0 0.0
        %4469 = vmatpush1.msra.mxu0 0.0
        %4470 = vmatprep.mubr.f32.mxu0 0.0
        %4471 = vmatmul.mubr.f32.gmra.mrb[0].mxu0 %v4404
        %v4472 = vpop.f32.mrb[0].mxu0
        %v4473 = vadd.f32 %v4400, %v4472
        %v4474 = vpop.f32.mrb[0].mxu0
        %4475 = vdwg.mxu0
        %4476 = vrot.lane.b32.xlu0 %v3991, 112
        %v4477 = vpop.permute.xlu0 %4476
        %4478 = vrot.lane.b32.xlu0 %v3991, 80
        %v4479 = vpop.permute.xlu0 %4478
        %v4480 = vsel %vm1495, %v4477, 0
        %v4482 = vsel %vm1495, %v4479, 0
        %4484 = vmatprep.subr.mxu0 0.0
        %4485 = vmatpush1.xpose.msra.mxu0 %v4482
        %4486 = vmatprep.subr.mxu0 0.0
        %4487 = vmatpush1.xpose.msra.mxu0 0.0
        %4488 = vmatprep.subr.mxu0 0.0
        %4489 = vmatpush1.xpose.msra.mxu0 0.0
        %4490 = vmatprep.subr.mxu0 0.0
        %4491 = vmatpush1.xpose.msra.mxu0 0.0
        %4492 = vmatprep.subr.mxu0 0.0
        %4493 = vmatpush1.xpose.msra.mxu0 0.0
        %4494 = vmatprep.subr.mxu0 0.0
        %4495 = vmatpush1.xpose.msra.mxu0 0.0
        %4496 = vmatprep.subr.mxu0 0.0
        %4497 = vmatpush1.xpose.msra.mxu0 0.0
        %4498 = vmatprep.subr.mxu0 0.0
        %4499 = vmatpush1.xpose.msra.mxu0 0.0
        %4500 = vmatprep.subr.mxu0 0.0
        %4501 = vmatpush1.xpose.msra.mxu0 0.0
        %4502 = vmatprep.subr.mxu0 0.0
        %4503 = vmatpush1.xpose.msra.mxu0 0.0
        %4504 = vmatprep.subr.mxu0 0.0
        %4505 = vmatpush1.xpose.msra.mxu0 0.0
        %4506 = vmatprep.subr.mxu0 0.0
        %4507 = vmatpush1.xpose.msra.mxu0 0.0
        %4508 = vmatprep.subr.mxu0 0.0
        %4509 = vmatpush1.xpose.msra.mxu0 0.0
        %4510 = vmatprep.subr.mxu0 0.0
        %4511 = vmatpush1.xpose.msra.mxu0 0.0
        %4512 = vmatprep.subr.mxu0 0.0
        %4513 = vmatpush1.xpose.msra.mxu0 0.0
        %4514 = vmatprep.subr.mxu0 0.0
        %4515 = vmatpush1.xpose.msra.mxu0 0.0
        %4516 = vmatprep.subr.mxu0 0.0
        %4517 = vmatpush1.xpose.msra.mxu0 0.0
        %4518 = vmatprep.subr.mxu0 0.0
        %4519 = vmatpush1.xpose.msra.mxu0 0.0
        %4520 = vmatprep.subr.mxu0 0.0
        %4521 = vmatpush1.xpose.msra.mxu0 0.0
        %4522 = vmatprep.subr.mxu0 0.0
        %4523 = vmatpush1.xpose.msra.mxu0 0.0
        %4524 = vmatprep.subr.mxu0 0.0
        %4525 = vmatpush1.xpose.msra.mxu0 0.0
        %4526 = vmatprep.subr.mxu0 0.0
        %4527 = vmatpush1.xpose.msra.mxu0 0.0
        %4528 = vmatprep.subr.mxu0 0.0
        %4529 = vmatpush1.xpose.msra.mxu0 0.0
        %4530 = vmatprep.subr.mxu0 0.0
        %4531 = vmatpush1.xpose.msra.mxu0 0.0
        %4532 = vmatprep.subr.mxu0 0.0
        %4533 = vmatpush1.xpose.msra.mxu0 0.0
        %4534 = vmatprep.subr.mxu0 0.0
        %4535 = vmatpush1.xpose.msra.mxu0 0.0
        %4536 = vmatprep.subr.mxu0 0.0
        %4537 = vmatpush1.xpose.msra.mxu0 0.0
        %4538 = vmatprep.subr.mxu0 0.0
        %4539 = vmatpush1.xpose.msra.mxu0 0.0
        %4540 = vmatprep.subr.mxu0 0.0
        %4541 = vmatpush1.xpose.msra.mxu0 0.0
        %4542 = vmatprep.subr.mxu0 0.0
        %4543 = vmatpush1.xpose.msra.mxu0 0.0
        %4544 = vmatprep.subr.mxu0 0.0
        %4545 = vmatpush1.xpose.msra.mxu0 0.0
        %4546 = vmatprep.subr.mxu0 0.0
        %4547 = vmatpush1.xpose.msra.mxu0 0.0
        %4548 = vmatprep.mubr.f32.mxu0 0.0
        %4549 = vmatmul.mubr.f32.gmra.mrb[0].mxu0 %v4480
        %v4550 = vpop.f32.mrb[0].mxu0
        %v4551 = vadd.f32 0.0, %v4550
        %v4552 = vpop.f32.mrb[0].mxu0
        %4553 = vdwg.mxu0
        %v4554 = vmul.f32 %v4551, 0.35355338
        %v4555 = vsel %vm1495, %v4554, -inf
        %4556 = vmax.xlane.f32.xlu0 %v4555
        %v4557 = vpop.xlane.xlu0 %4556
        %v4558 = vsub.f32 %v4554, %v4557
        %v4559 = vmul.f32 %v4558, 1.442695
        %v4560 = vpow.pop %v4559
        %v4561 = vsel %vm1495, %v4560, 0.0
        %4562 = vadd.xlane.f32.xlu0 %v4561
        %v4563 = vpop.xlane.xlu0 %4562
        %v4564 = vrcp.pop %v4563
        %v4565 = vmul.f32 %v4560, %v4564
        %4566 = vrot.lane.b32.xlu0 %v3991, 48
        %v4567 = vpop.permute.xlu0 %4566
        %v4570 = vsel %vm1495, %v4565, 0
        %4572 = vmatprep.subr.mxu0 0.0
        %4573 = vmatpush1.msra.mxu0 %v4567
        %4574 = vmatprep.subr.mxu0 0.0
        %4575 = vmatpush1.msra.mxu0 0.0
        %4576 = vmatprep.subr.mxu0 0.0
        %4577 = vmatpush1.msra.mxu0 0.0
        %4578 = vmatprep.subr.mxu0 0.0
        %4579 = vmatpush1.msra.mxu0 0.0
        %4580 = vmatprep.subr.mxu0 0.0
        %4581 = vmatpush1.msra.mxu0 0.0
        %4582 = vmatprep.subr.mxu0 0.0
        %4583 = vmatpush1.msra.mxu0 0.0
        %4584 = vmatprep.subr.mxu0 0.0
        %4585 = vmatpush1.msra.mxu0 0.0
        %4586 = vmatprep.subr.mxu0 0.0
        %4587 = vmatpush1.msra.mxu0 0.0
        %4588 = vmatprep.subr.mxu0 0.0
        %4589 = vmatpush1.msra.mxu0 0.0
        %4590 = vmatprep.subr.mxu0 0.0
        %4591 = vmatpush1.msra.mxu0 0.0
        %4592 = vmatprep.subr.mxu0 0.0
        %4593 = vmatpush1.msra.mxu0 0.0
        %4594 = vmatprep.subr.mxu0 0.0
        %4595 = vmatpush1.msra.mxu0 0.0
        %4596 = vmatprep.subr.mxu0 0.0
        %4597 = vmatpush1.msra.mxu0 0.0
        %4598 = vmatprep.subr.mxu0 0.0
        %4599 = vmatpush1.msra.mxu0 0.0
        %4600 = vmatprep.subr.mxu0 0.0
        %4601 = vmatpush1.msra.mxu0 0.0
        %4602 = vmatprep.subr.mxu0 0.0
        %4603 = vmatpush1.msra.mxu0 0.0
        %4604 = vmatprep.subr.mxu0 0.0
        %4605 = vmatpush1.msra.mxu0 0.0
        %4606 = vmatprep.subr.mxu0 0.0
        %4607 = vmatpush1.msra.mxu0 0.0
        %4608 = vmatprep.subr.mxu0 0.0
        %4609 = vmatpush1.msra.mxu0 0.0
        %4610 = vmatprep.subr.mxu0 0.0
        %4611 = vmatpush1.msra.mxu0 0.0
        %4612 = vmatprep.subr.mxu0 0.0
        %4613 = vmatpush1.msra.mxu0 0.0
        %4614 = vmatprep.subr.mxu0 0.0
        %4615 = vmatpush1.msra.mxu0 0.0
        %4616 = vmatprep.subr.mxu0 0.0
        %4617 = vmatpush1.msra.mxu0 0.0
        %4618 = vmatprep.subr.mxu0 0.0
        %4619 = vmatpush1.msra.mxu0 0.0
        %4620 = vmatprep.subr.mxu0 0.0
        %4621 = vmatpush1.msra.mxu0 0.0
        %4622 = vmatprep.subr.mxu0 0.0
        %4623 = vmatpush1.msra.mxu0 0.0
        %4624 = vmatprep.subr.mxu0 0.0
        %4625 = vmatpush1.msra.mxu0 0.0
        %4626 = vmatprep.subr.mxu0 0.0
        %4627 = vmatpush1.msra.mxu0 0.0
        %4628 = vmatprep.subr.mxu0 0.0
        %4629 = vmatpush1.msra.mxu0 0.0
        %4630 = vmatprep.subr.mxu0 0.0
        %4631 = vmatpush1.msra.mxu0 0.0
        %4632 = vmatprep.subr.mxu0 0.0
        %4633 = vmatpush1.msra.mxu0 0.0
        %4634 = vmatprep.subr.mxu0 0.0
        %4635 = vmatpush1.msra.mxu0 0.0
        %4636 = vmatprep.mubr.f32.mxu0 0.0
        %4637 = vmatmul.mubr.f32.gmra.mrb[0].mxu0 %v4570
        %v4638 = vpop.f32.mrb[0].mxu0
        %v4639 = vadd.f32 0.0, %v4638
        %v4640 = vpop.f32.mrb[0].mxu0
        %4641 = vdwg.mxu0
        %v4643 = vsel %vm1495, %v4639, 0
        %4645 = vmatprep.subr.mxu0 0.0
        %4646 = vmatpush1.msra.mxu0 %v3997
        %4647 = vmatprep.subr.mxu0 0.0
        %4648 = vmatpush1.msra.mxu0 0.0
        %4649 = vmatprep.subr.mxu0 0.0
        %4650 = vmatpush1.msra.mxu0 0.0
        %4651 = vmatprep.subr.mxu0 0.0
        %4652 = vmatpush1.msra.mxu0 0.0
        %4653 = vmatprep.subr.mxu0 0.0
        %4654 = vmatpush1.msra.mxu0 0.0
        %4655 = vmatprep.subr.mxu0 0.0
        %4656 = vmatpush1.msra.mxu0 0.0
        %4657 = vmatprep.subr.mxu0 0.0
        %4658 = vmatpush1.msra.mxu0 0.0
        %4659 = vmatprep.subr.mxu0 0.0
        %4660 = vmatpush1.msra.mxu0 0.0
        %4661 = vmatprep.subr.mxu0 0.0
        %4662 = vmatpush1.msra.mxu0 0.0
        %4663 = vmatprep.subr.mxu0 0.0
        %4664 = vmatpush1.msra.mxu0 0.0
        %4665 = vmatprep.subr.mxu0 0.0
        %4666 = vmatpush1.msra.mxu0 0.0
        %4667 = vmatprep.subr.mxu0 0.0
        %4668 = vmatpush1.msra.mxu0 0.0
        %4669 = vmatprep.subr.mxu0 0.0
        %4670 = vmatpush1.msra.mxu0 0.0
        %4671 = vmatprep.subr.mxu0 0.0
        %4672 = vmatpush1.msra.mxu0 0.0
        %4673 = vmatprep.subr.mxu0 0.0
        %4674 = vmatpush1.msra.mxu0 0.0
        %4675 = vmatprep.subr.mxu0 0.0
        %4676 = vmatpush1.msra.mxu0 0.0
        %4677 = vmatprep.subr.mxu0 0.0
        %4678 = vmatpush1.msra.mxu0 0.0
        %4679 = vmatprep.subr.mxu0 0.0
        %4680 = vmatpush1.msra.mxu0 0.0
        %4681 = vmatprep.subr.mxu0 0.0
        %4682 = vmatpush1.msra.mxu0 0.0
        %4683 = vmatprep.subr.mxu0 0.0
        %4684 = vmatpush1.msra.mxu0 0.0
        %4685 = vmatprep.subr.mxu0 0.0
        %4686 = vmatpush1.msra.mxu0 0.0
        %4687 = vmatprep.subr.mxu0 0.0
        %4688 = vmatpush1.msra.mxu0 0.0
        %4689 = vmatprep.subr.mxu0 0.0
        %4690 = vmatpush1.msra.mxu0 0.0
        %4691 = vmatprep.subr.mxu0 0.0
        %4692 = vmatpush1.msra.mxu0 0.0
        %4693 = vmatprep.subr.mxu0 0.0
        %4694 = vmatpush1.msra.mxu0 0.0
        %4695 = vmatprep.subr.mxu0 0.0
        %4696 = vmatpush1.msra.mxu0 0.0
        %4697 = vmatprep.subr.mxu0 0.0
        %4698 = vmatpush1.msra.mxu0 0.0
        %4699 = vmatprep.subr.mxu0 0.0
        %4700 = vmatpush1.msra.mxu0 0.0
        %4701 = vmatprep.subr.mxu0 0.0
        %4702 = vmatpush1.msra.mxu0 0.0
        %4703 = vmatprep.subr.mxu0 0.0
        %4704 = vmatpush1.msra.mxu0 0.0
        %4705 = vmatprep.subr.mxu0 0.0
        %4706 = vmatpush1.msra.mxu0 0.0
        %4707 = vmatprep.subr.mxu0 0.0
        %4708 = vmatpush1.msra.mxu0 0.0
        %4709 = vmatprep.mubr.f32.mxu0 0.0
        %4710 = vmatmul.mubr.f32.gmra.mrb[0].mxu0 %v4643
        %v4711 = vpop.f32.mrb[0].mxu0
        %v4712 = vadd.f32 0.0, %v4711
        %v4713 = vpop.f32.mrb[0].mxu0
        %4714 = vdwg.mxu0
        %v4715 = vadd.f32 %v4473, %v4712
        %4716 = vrot.lane.b32.xlu0 %v3991, 104
        %v4717 = vpop.permute.xlu0 %4716
        %4718 = vrot.lane.b32.xlu0 %v3991, 72
        %v4719 = vpop.permute.xlu0 %4718
        %v4720 = vsel %vm1495, %v4717, 0
        %v4722 = vsel %vm1495, %v4719, 0
        %4724 = vmatprep.subr.mxu0 0.0
        %4725 = vmatpush1.xpose.msra.mxu0 %v4722
        %4726 = vmatprep.subr.mxu0 0.0
        %4727 = vmatpush1.xpose.msra.mxu0 0.0
        %4728 = vmatprep.subr.mxu0 0.0
        %4729 = vmatpush1.xpose.msra.mxu0 0.0
        %4730 = vmatprep.subr.mxu0 0.0
        %4731 = vmatpush1.xpose.msra.mxu0 0.0
        %4732 = vmatprep.subr.mxu0 0.0
        %4733 = vmatpush1.xpose.msra.mxu0 0.0
        %4734 = vmatprep.subr.mxu0 0.0
        %4735 = vmatpush1.xpose.msra.mxu0 0.0
        %4736 = vmatprep.subr.mxu0 0.0
        %4737 = vmatpush1.xpose.msra.mxu0 0.0
        %4738 = vmatprep.subr.mxu0 0.0
        %4739 = vmatpush1.xpose.msra.mxu0 0.0
        %4740 = vmatprep.subr.mxu0 0.0
        %4741 = vmatpush1.xpose.msra.mxu0 0.0
        %4742 = vmatprep.subr.mxu0 0.0
        %4743 = vmatpush1.xpose.msra.mxu0 0.0
        %4744 = vmatprep.subr.mxu0 0.0
        %4745 = vmatpush1.xpose.msra.mxu0 0.0
        %4746 = vmatprep.subr.mxu0 0.0
        %4747 = vmatpush1.xpose.msra.mxu0 0.0
        %4748 = vmatprep.subr.mxu0 0.0
        %4749 = vmatpush1.xpose.msra.mxu0 0.0
        %4750 = vmatprep.subr.mxu0 0.0
        %4751 = vmatpush1.xpose.msra.mxu0 0.0
        %4752 = vmatprep.subr.mxu0 0.0
        %4753 = vmatpush1.xpose.msra.mxu0 0.0
        %4754 = vmatprep.subr.mxu0 0.0
        %4755 = vmatpush1.xpose.msra.mxu0 0.0
        %4756 = vmatprep.subr.mxu0 0.0
        %4757 = vmatpush1.xpose.msra.mxu0 0.0
        %4758 = vmatprep.subr.mxu0 0.0
        %4759 = vmatpush1.xpose.msra.mxu0 0.0
        %4760 = vmatprep.subr.mxu0 0.0
        %4761 = vmatpush1.xpose.msra.mxu0 0.0
        %4762 = vmatprep.subr.mxu0 0.0
        %4763 = vmatpush1.xpose.msra.mxu0 0.0
        %4764 = vmatprep.subr.mxu0 0.0
        %4765 = vmatpush1.xpose.msra.mxu0 0.0
        %4766 = vmatprep.subr.mxu0 0.0
        %4767 = vmatpush1.xpose.msra.mxu0 0.0
        %4768 = vmatprep.subr.mxu0 0.0
        %4769 = vmatpush1.xpose.msra.mxu0 0.0
        %4770 = vmatprep.subr.mxu0 0.0
        %4771 = vmatpush1.xpose.msra.mxu0 0.0
        %4772 = vmatprep.subr.mxu0 0.0
        %4773 = vmatpush1.xpose.msra.mxu0 0.0
        %4774 = vmatprep.subr.mxu0 0.0
        %4775 = vmatpush1.xpose.msra.mxu0 0.0
        %4776 = vmatprep.subr.mxu0 0.0
        %4777 = vmatpush1.xpose.msra.mxu0 0.0
        %4778 = vmatprep.subr.mxu0 0.0
        %4779 = vmatpush1.xpose.msra.mxu0 0.0
        %4780 = vmatprep.subr.mxu0 0.0
        %4781 = vmatpush1.xpose.msra.mxu0 0.0
        %4782 = vmatprep.subr.mxu0 0.0
        %4783 = vmatpush1.xpose.msra.mxu0 0.0
        %4784 = vmatprep.subr.mxu0 0.0
        %4785 = vmatpush1.xpose.msra.mxu0 0.0
        %4786 = vmatprep.subr.mxu0 0.0
        %4787 = vmatpush1.xpose.msra.mxu0 0.0
        %4788 = vmatprep.mubr.f32.mxu0 0.0
        %4789 = vmatmul.mubr.f32.gmra.mrb[0].mxu0 %v4720
        %v4790 = vpop.f32.mrb[0].mxu0
        %v4791 = vadd.f32 0.0, %v4790
        %v4792 = vpop.f32.mrb[0].mxu0
        %4793 = vdwg.mxu0
        %v4794 = vmul.f32 %v4791, 0.35355338
        %v4795 = vsel %vm1495, %v4794, -inf
        %4796 = vmax.xlane.f32.xlu0 %v4795
        %v4797 = vpop.xlane.xlu0 %4796
        %v4798 = vsub.f32 %v4794, %v4797
        %v4799 = vmul.f32 %v4798, 1.442695
        %v4800 = vpow.pop %v4799
        %v4801 = vsel %vm1495, %v4800, 0.0
        %4802 = vadd.xlane.f32.xlu0 %v4801
        %v4803 = vpop.xlane.xlu0 %4802
        %v4804 = vrcp.pop %v4803
        %v4805 = vmul.f32 %v4800, %v4804
        %4806 = vrot.lane.b32.xlu0 %v3991, 40
        %v4807 = vpop.permute.xlu0 %4806
        %v4810 = vsel %vm1495, %v4805, 0
        %4812 = vmatprep.subr.mxu0 0.0
        %4813 = vmatpush1.msra.mxu0 %v4807
        %4814 = vmatprep.subr.mxu0 0.0
        %4815 = vmatpush1.msra.mxu0 0.0
        %4816 = vmatprep.subr.mxu0 0.0
        %4817 = vmatpush1.msra.mxu0 0.0
        %4818 = vmatprep.subr.mxu0 0.0
        %4819 = vmatpush1.msra.mxu0 0.0
        %4820 = vmatprep.subr.mxu0 0.0
        %4821 = vmatpush1.msra.mxu0 0.0
        %4822 = vmatprep.subr.mxu0 0.0
        %4823 = vmatpush1.msra.mxu0 0.0
        %4824 = vmatprep.subr.mxu0 0.0
        %4825 = vmatpush1.msra.mxu0 0.0
        %4826 = vmatprep.subr.mxu0 0.0
        %4827 = vmatpush1.msra.mxu0 0.0
        %4828 = vmatprep.subr.mxu0 0.0
        %4829 = vmatpush1.msra.mxu0 0.0
        %4830 = vmatprep.subr.mxu0 0.0
        %4831 = vmatpush1.msra.mxu0 0.0
        %4832 = vmatprep.subr.mxu0 0.0
        %4833 = vmatpush1.msra.mxu0 0.0
        %4834 = vmatprep.subr.mxu0 0.0
        %4835 = vmatpush1.msra.mxu0 0.0
        %4836 = vmatprep.subr.mxu0 0.0
        %4837 = vmatpush1.msra.mxu0 0.0
        %4838 = vmatprep.subr.mxu0 0.0
        %4839 = vmatpush1.msra.mxu0 0.0
        %4840 = vmatprep.subr.mxu0 0.0
        %4841 = vmatpush1.msra.mxu0 0.0
        %4842 = vmatprep.subr.mxu0 0.0
        %4843 = vmatpush1.msra.mxu0 0.0
        %4844 = vmatprep.subr.mxu0 0.0
        %4845 = vmatpush1.msra.mxu0 0.0
        %4846 = vmatprep.subr.mxu0 0.0
        %4847 = vmatpush1.msra.mxu0 0.0
        %4848 = vmatprep.subr.mxu0 0.0
        %4849 = vmatpush1.msra.mxu0 0.0
        %4850 = vmatprep.subr.mxu0 0.0
        %4851 = vmatpush1.msra.mxu0 0.0
        %4852 = vmatprep.subr.mxu0 0.0
        %4853 = vmatpush1.msra.mxu0 0.0
        %4854 = vmatprep.subr.mxu0 0.0
        %4855 = vmatpush1.msra.mxu0 0.0
        %4856 = vmatprep.subr.mxu0 0.0
        %4857 = vmatpush1.msra.mxu0 0.0
        %4858 = vmatprep.subr.mxu0 0.0
        %4859 = vmatpush1.msra.mxu0 0.0
        %4860 = vmatprep.subr.mxu0 0.0
        %4861 = vmatpush1.msra.mxu0 0.0
        %4862 = vmatprep.subr.mxu0 0.0
        %4863 = vmatpush1.msra.mxu0 0.0
        %4864 = vmatprep.subr.mxu0 0.0
        %4865 = vmatpush1.msra.mxu0 0.0
        %4866 = vmatprep.subr.mxu0 0.0
        %4867 = vmatpush1.msra.mxu0 0.0
        %4868 = vmatprep.subr.mxu0 0.0
        %4869 = vmatpush1.msra.mxu0 0.0
        %4870 = vmatprep.subr.mxu0 0.0
        %4871 = vmatpush1.msra.mxu0 0.0
        %4872 = vmatprep.subr.mxu0 0.0
        %4873 = vmatpush1.msra.mxu0 0.0
        %4874 = vmatprep.subr.mxu0 0.0
        %4875 = vmatpush1.msra.mxu0 0.0
        %4876 = vmatprep.mubr.f32.mxu0 0.0
        %4877 = vmatmul.mubr.f32.gmra.mrb[0].mxu0 %v4810
        %v4878 = vpop.f32.mrb[0].mxu0
        %v4879 = vadd.f32 0.0, %v4878
        %v4880 = vpop.f32.mrb[0].mxu0
        %4881 = vdwg.mxu0
        %v4883 = vsel %vm1495, %v4879, 0
        %4885 = vmatprep.subr.mxu0 0.0
        %4886 = vmatpush1.msra.mxu0 %v3998
        %4887 = vmatprep.subr.mxu0 0.0
        %4888 = vmatpush1.msra.mxu0 0.0
        %4889 = vmatprep.subr.mxu0 0.0
        %4890 = vmatpush1.msra.mxu0 0.0
        %4891 = vmatprep.subr.mxu0 0.0
        %4892 = vmatpush1.msra.mxu0 0.0
        %4893 = vmatprep.subr.mxu0 0.0
        %4894 = vmatpush1.msra.mxu0 0.0
        %4895 = vmatprep.subr.mxu0 0.0
        %4896 = vmatpush1.msra.mxu0 0.0
        %4897 = vmatprep.subr.mxu0 0.0
        %4898 = vmatpush1.msra.mxu0 0.0
        %4899 = vmatprep.subr.mxu0 0.0
        %4900 = vmatpush1.msra.mxu0 0.0
        %4901 = vmatprep.subr.mxu0 0.0
        %4902 = vmatpush1.msra.mxu0 0.0
        %4903 = vmatprep.subr.mxu0 0.0
        %4904 = vmatpush1.msra.mxu0 0.0
        %4905 = vmatprep.subr.mxu0 0.0
        %4906 = vmatpush1.msra.mxu0 0.0
        %4907 = vmatprep.subr.mxu0 0.0
        %4908 = vmatpush1.msra.mxu0 0.0
        %4909 = vmatprep.subr.mxu0 0.0
        %4910 = vmatpush1.msra.mxu0 0.0
        %4911 = vmatprep.subr.mxu0 0.0
        %4912 = vmatpush1.msra.mxu0 0.0
        %4913 = vmatprep.subr.mxu0 0.0
        %4914 = vmatpush1.msra.mxu0 0.0
        %4915 = vmatprep.subr.mxu0 0.0
        %4916 = vmatpush1.msra.mxu0 0.0
        %4917 = vmatprep.subr.mxu0 0.0
        %4918 = vmatpush1.msra.mxu0 0.0
        %4919 = vmatprep.subr.mxu0 0.0
        %4920 = vmatpush1.msra.mxu0 0.0
        %4921 = vmatprep.subr.mxu0 0.0
        %4922 = vmatpush1.msra.mxu0 0.0
        %4923 = vmatprep.subr.mxu0 0.0
        %4924 = vmatpush1.msra.mxu0 0.0
        %4925 = vmatprep.subr.mxu0 0.0
        %4926 = vmatpush1.msra.mxu0 0.0
        %4927 = vmatprep.subr.mxu0 0.0
        %4928 = vmatpush1.msra.mxu0 0.0
        %4929 = vmatprep.subr.mxu0 0.0
        %4930 = vmatpush1.msra.mxu0 0.0
        %4931 = vmatprep.subr.mxu0 0.0
        %4932 = vmatpush1.msra.mxu0 0.0
        %4933 = vmatprep.subr.mxu0 0.0
        %4934 = vmatpush1.msra.mxu0 0.0
        %4935 = vmatprep.subr.mxu0 0.0
        %4936 = vmatpush1.msra.mxu0 0.0
        %4937 = vmatprep.subr.mxu0 0.0
        %4938 = vmatpush1.msra.mxu0 0.0
        %4939 = vmatprep.subr.mxu0 0.0
        %4940 = vmatpush1.msra.mxu0 0.0
        %4941 = vmatprep.subr.mxu0 0.0
        %4942 = vmatpush1.msra.mxu0 0.0
        %4943 = vmatprep.subr.mxu0 0.0
        %4944 = vmatpush1.msra.mxu0 0.0
        %4945 = vmatprep.subr.mxu0 0.0
        %4946 = vmatpush1.msra.mxu0 0.0
        %4947 = vmatprep.subr.mxu0 0.0
        %4948 = vmatpush1.msra.mxu0 0.0
        %4949 = vmatprep.mubr.f32.mxu0 0.0
        %4950 = vmatmul.mubr.f32.gmra.mrb[0].mxu0 %v4883
        %v4951 = vpop.f32.mrb[0].mxu0
        %v4952 = vadd.f32 0.0, %v4951
        %v4953 = vpop.f32.mrb[0].mxu0
        %4954 = vdwg.mxu0
        %v4955 = vadd.f32 %v4715, %v4952
        %s4956 = scalar_lea.vmem [#allocation11], 1
        %v4957 = vld [vmem:[%s4956] sm:$0x1]
        %v4959 = vlaneseq
        %v4960 = vshrl.u32 %v4959, 7
        %v4961 = vsub.s32 0, %v4960
        %v4962 = vrot.slane %v4957, %v4961
        %v4964 = vadd.f32 %v4955, %v4962
        %v4965 = vadd.f32 %v4964, %v3907
        %s4966 = scalar_lea.vmem [#allocation13], 1
        %v4967 = vld [vmem:[%s4966] sm:$0x1]
        %s4968 = scalar_lea.vmem [#allocation14], 1
        %v4969 = vld [vmem:[%s4968] sm:$0x1]
        %v4970 = vsel %vm1375, %v4965, 0.0
        %4971 = vadd.xlane.f32.xlu0 %v4970
        %v4972 = vpop.xlane.xlu0 %4971
        %v4973 = vmul.f32 %v4972, %v1379
        %v4974 = vsub.f32 %v4965, %v4973
        %v4975 = vmul.f32 %v4974, %v4974
        %v4976 = vsel %vm1375, %v4975, 0.0
        %4977 = vadd.xlane.f32.xlu0 %v4976
        %v4978 = vpop.xlane.xlu0 %4977
        %v4979 = vmul.f32 %v4978, %v1379
        %v4980 = vadd.f32 %v4979, 1e-12
        %v4981 = vrsqrt.pop %v4980
        %v4982 = vmul.f32 %v4974, %v4981
        %v4984 = vlaneseq
        %v4985 = vshrl.u32 %v4984, 7
        %v4986 = vsub.s32 0, %v4985
        %v4987 = vrot.slane %v4967, %v4986
        %v4989 = vmul.f32 %v4982, %v4987
        %v4991 = vlaneseq
        %v4992 = vshrl.u32 %v4991, 7
        %v4993 = vsub.s32 0, %v4992
        %v4994 = vrot.slane %v4969, %v4993
        %v4996 = vadd.f32 %v4989, %v4994
        %s4997 = scalar_lea.vmem %s27, 32
        %v4998 = vld [vmem:[%s4997] sm:$0xff]
        %v4999 = vld [vmem:[%s4997 + $0x8] sm:$0xff]
        %v5000 = vld [vmem:[%s4997 + $0x10] sm:$0xff]
        %v5001 = vld [vmem:[%s4997 + $0x18] sm:$0xff]
        %s5002 = scalar_lea.vmem [#allocation16], 1
        %v5003 = vld [vmem:[%s5002] sm:$0x1]
        %v5005 = vlaneseq
        %v5006 = vshrl.u32 %v5005, 7
        %v5007 = vsub.s32 0, %v5006
        %v5008 = vrot.slane %v5003, %v5007
        %v5011 = vsel %vm1375, %v4996, 0
        %5013 = vmatprep.subr.mxu0 0.0
        %5014 = vmatpush1.msra.mxu0 %v4998
        %5015 = vmatprep.subr.mxu0 0.0
        %5016 = vmatpush1.msra.mxu0 %v4999
        %5017 = vmatprep.subr.mxu0 0.0
        %5018 = vmatpush1.msra.mxu0 %v5000
        %5019 = vmatprep.subr.mxu0 0.0
        %5020 = vmatpush1.msra.mxu0 %v5001
        %5021 = vmatprep.subr.mxu0 0.0
        %5022 = vmatpush1.msra.mxu0 0.0
        %5023 = vmatprep.subr.mxu0 0.0
        %5024 = vmatpush1.msra.mxu0 0.0
        %5025 = vmatprep.subr.mxu0 0.0
        %5026 = vmatpush1.msra.mxu0 0.0
        %5027 = vmatprep.subr.mxu0 0.0
        %5028 = vmatpush1.msra.mxu0 0.0
        %5029 = vmatprep.subr.mxu0 0.0
        %5030 = vmatpush1.msra.mxu0 0.0
        %5031 = vmatprep.subr.mxu0 0.0
        %5032 = vmatpush1.msra.mxu0 0.0
        %5033 = vmatprep.subr.mxu0 0.0
        %5034 = vmatpush1.msra.mxu0 0.0
        %5035 = vmatprep.subr.mxu0 0.0
        %5036 = vmatpush1.msra.mxu0 0.0
        %5037 = vmatprep.subr.mxu0 0.0
        %5038 = vmatpush1.msra.mxu0 0.0
        %5039 = vmatprep.subr.mxu0 0.0
        %5040 = vmatpush1.msra.mxu0 0.0
        %5041 = vmatprep.subr.mxu0 0.0
        %5042 = vmatpush1.msra.mxu0 0.0
        %5043 = vmatprep.subr.mxu0 0.0
        %5044 = vmatpush1.msra.mxu0 0.0
        %5045 = vmatprep.subr.mxu0 0.0
        %5046 = vmatpush1.msra.mxu0 0.0
        %5047 = vmatprep.subr.mxu0 0.0
        %5048 = vmatpush1.msra.mxu0 0.0
        %5049 = vmatprep.subr.mxu0 0.0
        %5050 = vmatpush1.msra.mxu0 0.0
        %5051 = vmatprep.subr.mxu0 0.0
        %5052 = vmatpush1.msra.mxu0 0.0
        %5053 = vmatprep.subr.mxu0 0.0
        %5054 = vmatpush1.msra.mxu0 0.0
        %5055 = vmatprep.subr.mxu0 0.0
        %5056 = vmatpush1.msra.mxu0 0.0
        %5057 = vmatprep.subr.mxu0 0.0
        %5058 = vmatpush1.msra.mxu0 0.0
        %5059 = vmatprep.subr.mxu0 0.0
        %5060 = vmatpush1.msra.mxu0 0.0
        %5061 = vmatprep.subr.mxu0 0.0
        %5062 = vmatpush1.msra.mxu0 0.0
        %5063 = vmatprep.subr.mxu0 0.0
        %5064 = vmatpush1.msra.mxu0 0.0
        %5065 = vmatprep.subr.mxu0 0.0
        %5066 = vmatpush1.msra.mxu0 0.0
        %5067 = vmatprep.subr.mxu0 0.0
        %5068 = vmatpush1.msra.mxu0 0.0
        %5069 = vmatprep.subr.mxu0 0.0
        %5070 = vmatpush1.msra.mxu0 0.0
        %5071 = vmatprep.subr.mxu0 0.0
        %5072 = vmatpush1.msra.mxu0 0.0
        %5073 = vmatprep.subr.mxu0 0.0
        %5074 = vmatpush1.msra.mxu0 0.0
        %5075 = vmatprep.subr.mxu0 0.0
        %5076 = vmatpush1.msra.mxu0 0.0
        %5077 = vmatprep.mubr.f32.mxu0 0.0
        %5078 = vmatmul.mubr.f32.gmra.mrb[0].mxu0 %v5011
        %v5079 = vpop.f32.mrb[0].mxu0
        %v5080 = vadd.f32 %v5008, %v5079
        %v5081 = vpop.f32.mrb[0].mxu0
        %5082 = vdwg.mxu0
        %s5083 = scalar_lea.vmem %s31, 32
        %v5084 = vld [vmem:[%s5083] sm:$0xff]
        %v5085 = vld [vmem:[%s5083 + $0x8] sm:$0xff]
        %v5086 = vld [vmem:[%s5083 + $0x10] sm:$0xff]
        %v5087 = vld [vmem:[%s5083 + $0x18] sm:$0xff]
        %s5088 = scalar_lea.vmem [#allocation17], 1
        %v5089 = vld [vmem:[%s5088] sm:$0x1]
        %v5091 = vlaneseq
        %v5092 = vshrl.u32 %v5091, 7
        %v5093 = vsub.s32 0, %v5092
        %v5094 = vrot.slane %v5089, %v5093
        %5096 = vmatprep.subr.mxu0 0.0
        %5097 = vmatpush1.msra.mxu0 %v5084
        %5098 = vmatprep.subr.mxu0 0.0
        %5099 = vmatpush1.msra.mxu0 %v5085
        %5100 = vmatprep.subr.mxu0 0.0
        %5101 = vmatpush1.msra.mxu0 %v5086
        %5102 = vmatprep.subr.mxu0 0.0
        %5103 = vmatpush1.msra.mxu0 %v5087
        %5104 = vmatprep.subr.mxu0 0.0
        %5105 = vmatpush1.msra.mxu0 0.0
        %5106 = vmatprep.subr.mxu0 0.0
        %5107 = vmatpush1.msra.mxu0 0.0
        %5108 = vmatprep.subr.mxu0 0.0
        %5109 = vmatpush1.msra.mxu0 0.0
        %5110 = vmatprep.subr.mxu0 0.0
        %5111 = vmatpush1.msra.mxu0 0.0
        %5112 = vmatprep.subr.mxu0 0.0
        %5113 = vmatpush1.msra.mxu0 0.0
        %5114 = vmatprep.subr.mxu0 0.0
        %5115 = vmatpush1.msra.mxu0 0.0
        %5116 = vmatprep.subr.mxu0 0.0
        %5117 = vmatpush1.msra.mxu0 0.0
        %5118 = vmatprep.subr.mxu0 0.0
        %5119 = vmatpush1.msra.mxu0 0.0
        %5120 = vmatprep.subr.mxu0 0.0
        %5121 = vmatpush1.msra.mxu0 0.0
        %5122 = vmatprep.subr.mxu0 0.0
        %5123 = vmatpush1.msra.mxu0 0.0
        %5124 = vmatprep.subr.mxu0 0.0
        %5125 = vmatpush1.msra.mxu0 0.0
        %5126 = vmatprep.subr.mxu0 0.0
        %5127 = vmatpush1.msra.mxu0 0.0
        %5128 = vmatprep.subr.mxu0 0.0
        %5129 = vmatpush1.msra.mxu0 0.0
        %5130 = vmatprep.subr.mxu0 0.0
        %5131 = vmatpush1.msra.mxu0 0.0
        %5132 = vmatprep.subr.mxu0 0.0
        %5133 = vmatpush1.msra.mxu0 0.0
        %5134 = vmatprep.subr.mxu0 0.0
        %5135 = vmatpush1.msra.mxu0 0.0
        %5136 = vmatprep.subr.mxu0 0.0
        %5137 = vmatpush1.msra.mxu0 0.0
        %5138 = vmatprep.subr.mxu0 0.0
        %5139 = vmatpush1.msra.mxu0 0.0
        %5140 = vmatprep.subr.mxu0 0.0
        %5141 = vmatpush1.msra.mxu0 0.0
        %5142 = vmatprep.subr.mxu0 0.0
        %5143 = vmatpush1.msra.mxu0 0.0
        %5144 = vmatprep.subr.mxu0 0.0
        %5145 = vmatpush1.msra.mxu0 0.0
        %5146 = vmatprep.subr.mxu0 0.0
        %5147 = vmatpush1.msra.mxu0 0.0
        %5148 = vmatprep.subr.mxu0 0.0
        %5149 = vmatpush1.msra.mxu0 0.0
        %5150 = vmatprep.subr.mxu0 0.0
        %5151 = vmatpush1.msra.mxu0 0.0
        %5152 = vmatprep.subr.mxu0 0.0
        %5153 = vmatpush1.msra.mxu0 0.0
        %5154 = vmatprep.subr.mxu0 0.0
        %5155 = vmatpush1.msra.mxu0 0.0
        %5156 = vmatprep.subr.mxu0 0.0
        %5157 = vmatpush1.msra.mxu0 0.0
        %5158 = vmatprep.subr.mxu0 0.0
        %5159 = vmatpush1.msra.mxu0 0.0
        %5160 = vmatprep.mubr.f32.mxu0 0.0
        %5161 = vmatmul.mubr.f32.gmra.mrb[0].mxu0 %v2584
        %v5162 = vpop.f32.mrb[0].mxu0
        %v5163 = vadd.f32 %v5094, %v5162
        %v5164 = vpop.f32.mrb[0].mxu0
        %5165 = vmatprep.mubr.f32.mxu0 0.0
        %5166 = vmatmul.mubr.f32.gmra.mrb[0].mxu0 %v2587
        %v5167 = vpop.f32.mrb[0].mxu0
        %v5168 = vadd.f32 %v5094, %v5167
        %v5169 = vpop.f32.mrb[0].mxu0
        %5170 = vdwg.mxu0
        %s5171 = scalar_lea.vmem %s35, 32
        %v5172 = vld [vmem:[%s5171] sm:$0xff]
        %v5173 = vld [vmem:[%s5171 + $0x8] sm:$0xff]
        %v5174 = vld [vmem:[%s5171 + $0x10] sm:$0xff]
        %v5175 = vld [vmem:[%s5171 + $0x18] sm:$0xff]
        %v5177 = vsel %vm1495, %v5080, 0
        %v5180 = vsel %vm1495, %v5163, 0
        %v5183 = vsel %vm1495, %v5168, 0
        %5185 = vmatprep.subr.mxu0 0.0
        %5186 = vmatpush1.xpose.msra.mxu0 %v5180
        %5187 = vmatprep.subr.mxu0 0.0
        %5188 = vmatpush1.xpose.msra.mxu0 %v5183
        %5189 = vmatprep.subr.mxu0 0.0
        %5190 = vmatpush1.xpose.msra.mxu0 0.0
        %5191 = vmatprep.subr.mxu0 0.0
        %5192 = vmatpush1.xpose.msra.mxu0 0.0
        %5193 = vmatprep.subr.mxu0 0.0
        %5194 = vmatpush1.xpose.msra.mxu0 0.0
        %5195 = vmatprep.subr.mxu0 0.0
        %5196 = vmatpush1.xpose.msra.mxu0 0.0
        %5197 = vmatprep.subr.mxu0 0.0
        %5198 = vmatpush1.xpose.msra.mxu0 0.0
        %5199 = vmatprep.subr.mxu0 0.0
        %5200 = vmatpush1.xpose.msra.mxu0 0.0
        %5201 = vmatprep.subr.mxu0 0.0
        %5202 = vmatpush1.xpose.msra.mxu0 0.0
        %5203 = vmatprep.subr.mxu0 0.0
        %5204 = vmatpush1.xpose.msra.mxu0 0.0
        %5205 = vmatprep.subr.mxu0 0.0
        %5206 = vmatpush1.xpose.msra.mxu0 0.0
        %5207 = vmatprep.subr.mxu0 0.0
        %5208 = vmatpush1.xpose.msra.mxu0 0.0
        %5209 = vmatprep.subr.mxu0 0.0
        %5210 = vmatpush1.xpose.msra.mxu0 0.0
        %5211 = vmatprep.subr.mxu0 0.0
        %5212 = vmatpush1.xpose.msra.mxu0 0.0
        %5213 = vmatprep.subr.mxu0 0.0
        %5214 = vmatpush1.xpose.msra.mxu0 0.0
        %5215 = vmatprep.subr.mxu0 0.0
        %5216 = vmatpush1.xpose.msra.mxu0 0.0
        %5217 = vmatprep.subr.mxu0 0.0
        %5218 = vmatpush1.xpose.msra.mxu0 0.0
        %5219 = vmatprep.subr.mxu0 0.0
        %5220 = vmatpush1.xpose.msra.mxu0 0.0
        %5221 = vmatprep.subr.mxu0 0.0
        %5222 = vmatpush1.xpose.msra.mxu0 0.0
        %5223 = vmatprep.subr.mxu0 0.0
        %5224 = vmatpush1.xpose.msra.mxu0 0.0
        %5225 = vmatprep.subr.mxu0 0.0
        %5226 = vmatpush1.xpose.msra.mxu0 0.0
        %5227 = vmatprep.subr.mxu0 0.0
        %5228 = vmatpush1.xpose.msra.mxu0 0.0
        %5229 = vmatprep.subr.mxu0 0.0
        %5230 = vmatpush1.xpose.msra.mxu0 0.0
        %5231 = vmatprep.subr.mxu0 0.0
        %5232 = vmatpush1.xpose.msra.mxu0 0.0
        %5233 = vmatprep.subr.mxu0 0.0
        %5234 = vmatpush1.xpose.msra.mxu0 0.0
        %5235 = vmatprep.subr.mxu0 0.0
        %5236 = vmatpush1.xpose.msra.mxu0 0.0
        %5237 = vmatprep.subr.mxu0 0.0
        %5238 = vmatpush1.xpose.msra.mxu0 0.0
        %5239 = vmatprep.subr.mxu0 0.0
        %5240 = vmatpush1.xpose.msra.mxu0 0.0
        %5241 = vmatprep.subr.mxu0 0.0
        %5242 = vmatpush1.xpose.msra.mxu0 0.0
        %5243 = vmatprep.subr.mxu0 0.0
        %5244 = vmatpush1.xpose.msra.mxu0 0.0
        %5245 = vmatprep.subr.mxu0 0.0
        %5246 = vmatpush1.xpose.msra.mxu0 0.0
        %5247 = vmatprep.subr.mxu0 0.0
        %5248 = vmatpush1.xpose.msra.mxu0 0.0
        %5249 = vmatprep.mubr.f32.mxu0 0.0
        %5250 = vmatmul.mubr.f32.gmra.mrb[0].mxu0 %v5177
        %v5251 = vpop.f32.mrb[0].mxu0
        %v5252 = vadd.f32 0.0, %v5251
        %v5253 = vpop.f32.mrb[0].mxu0
        %5254 = vdwg.mxu0
        %v5255 = vmul.f32 %v5252, 0.35355338
        %v5256 = vadd.f32 %v5255, %v2752
        %v5257 = vsel %vm2755, %v5256, -inf
        %5258 = vmax.xlane.f32.xlu0 %v5257
        %v5259 = vpop.xlane.xlu0 %5258
        %v5260 = vsub.f32 %v5256, %v5259
        %v5261 = vmul.f32 %v5260, 1.442695
        %v5262 = vpow.pop %v5261
        %v5263 = vsel %vm2755, %v5262, 0.0
        %5264 = vadd.xlane.f32.xlu0 %v5263
        %v5265 = vpop.xlane.xlu0 %5264
        %v5266 = vrcp.pop %v5265
        %v5267 = vmul.f32 %v5262, %v5266
        %5268 = vrot.lane.b32.xlu0 %v5163, 96
        %v5269 = vpop.permute.xlu0 %5268
        %5270 = vrot.lane.b32.xlu0 %v5168, 96
        %v5271 = vpop.permute.xlu0 %5270
        %v5275 = vsel %vm2755, %v5267, 0
        %5277 = vmatprep.subr.mxu0 0.0
        %5278 = vmatpush1.msra.mxu0 %v5269
        %5279 = vmatprep.subr.mxu0 0.0
        %5280 = vmatpush1.msra.mxu0 %v5271
        %5281 = vmatprep.subr.mxu0 0.0
        %5282 = vmatpush1.msra.mxu0 0.0
        %5283 = vmatprep.subr.mxu0 0.0
        %5284 = vmatpush1.msra.mxu0 0.0
        %5285 = vmatprep.subr.mxu0 0.0
        %5286 = vmatpush1.msra.mxu0 0.0
        %5287 = vmatprep.subr.mxu0 0.0
        %5288 = vmatpush1.msra.mxu0 0.0
        %5289 = vmatprep.subr.mxu0 0.0
        %5290 = vmatpush1.msra.mxu0 0.0
        %5291 = vmatprep.subr.mxu0 0.0
        %5292 = vmatpush1.msra.mxu0 0.0
        %5293 = vmatprep.subr.mxu0 0.0
        %5294 = vmatpush1.msra.mxu0 0.0
        %5295 = vmatprep.subr.mxu0 0.0
        %5296 = vmatpush1.msra.mxu0 0.0
        %5297 = vmatprep.subr.mxu0 0.0
        %5298 = vmatpush1.msra.mxu0 0.0
        %5299 = vmatprep.subr.mxu0 0.0
        %5300 = vmatpush1.msra.mxu0 0.0
        %5301 = vmatprep.subr.mxu0 0.0
        %5302 = vmatpush1.msra.mxu0 0.0
        %5303 = vmatprep.subr.mxu0 0.0
        %5304 = vmatpush1.msra.mxu0 0.0
        %5305 = vmatprep.subr.mxu0 0.0
        %5306 = vmatpush1.msra.mxu0 0.0
        %5307 = vmatprep.subr.mxu0 0.0
        %5308 = vmatpush1.msra.mxu0 0.0
        %5309 = vmatprep.subr.mxu0 0.0
        %5310 = vmatpush1.msra.mxu0 0.0
        %5311 = vmatprep.subr.mxu0 0.0
        %5312 = vmatpush1.msra.mxu0 0.0
        %5313 = vmatprep.subr.mxu0 0.0
        %5314 = vmatpush1.msra.mxu0 0.0
        %5315 = vmatprep.subr.mxu0 0.0
        %5316 = vmatpush1.msra.mxu0 0.0
        %5317 = vmatprep.subr.mxu0 0.0
        %5318 = vmatpush1.msra.mxu0 0.0
        %5319 = vmatprep.subr.mxu0 0.0
        %5320 = vmatpush1.msra.mxu0 0.0
        %5321 = vmatprep.subr.mxu0 0.0
        %5322 = vmatpush1.msra.mxu0 0.0
        %5323 = vmatprep.subr.mxu0 0.0
        %5324 = vmatpush1.msra.mxu0 0.0
        %5325 = vmatprep.subr.mxu0 0.0
        %5326 = vmatpush1.msra.mxu0 0.0
        %5327 = vmatprep.subr.mxu0 0.0
        %5328 = vmatpush1.msra.mxu0 0.0
        %5329 = vmatprep.subr.mxu0 0.0
        %5330 = vmatpush1.msra.mxu0 0.0
        %5331 = vmatprep.subr.mxu0 0.0
        %5332 = vmatpush1.msra.mxu0 0.0
        %5333 = vmatprep.subr.mxu0 0.0
        %5334 = vmatpush1.msra.mxu0 0.0
        %5335 = vmatprep.subr.mxu0 0.0
        %5336 = vmatpush1.msra.mxu0 0.0
        %5337 = vmatprep.subr.mxu0 0.0
        %5338 = vmatpush1.msra.mxu0 0.0
        %5339 = vmatprep.subr.mxu0 0.0
        %5340 = vmatpush1.msra.mxu0 0.0
        %5341 = vmatprep.mubr.f32.mxu0 0.0
        %5342 = vmatmul.mubr.f32.gmra.mrb[0].mxu0 %v5275
        %v5343 = vpop.f32.mrb[0].mxu0
        %v5344 = vadd.f32 0.0, %v5343
        %v5345 = vpop.f32.mrb[0].mxu0
        %5346 = vdwg.mxu0
        %5347 = vrot.lane.b32.xlu0 %v5080, 120
        %v5348 = vpop.permute.xlu0 %5347
        %5349 = vrot.lane.b32.xlu0 %v5163, 120
        %v5350 = vpop.permute.xlu0 %5349
        %5351 = vrot.lane.b32.xlu0 %v5168, 120
        %v5352 = vpop.permute.xlu0 %5351
        %v5353 = vsel %vm1495, %v5348, 0
        %v5355 = vsel %vm1495, %v5350, 0
        %v5357 = vsel %vm1495, %v5352, 0
        %5359 = vmatprep.subr.mxu0 0.0
        %5360 = vmatpush1.xpose.msra.mxu0 %v5355
        %5361 = vmatprep.subr.mxu0 0.0
        %5362 = vmatpush1.xpose.msra.mxu0 %v5357
        %5363 = vmatprep.subr.mxu0 0.0
        %5364 = vmatpush1.xpose.msra.mxu0 0.0
        %5365 = vmatprep.subr.mxu0 0.0
        %5366 = vmatpush1.xpose.msra.mxu0 0.0
        %5367 = vmatprep.subr.mxu0 0.0
        %5368 = vmatpush1.xpose.msra.mxu0 0.0
        %5369 = vmatprep.subr.mxu0 0.0
        %5370 = vmatpush1.xpose.msra.mxu0 0.0
        %5371 = vmatprep.subr.mxu0 0.0
        %5372 = vmatpush1.xpose.msra.mxu0 0.0
        %5373 = vmatprep.subr.mxu0 0.0
        %5374 = vmatpush1.xpose.msra.mxu0 0.0
        %5375 = vmatprep.subr.mxu0 0.0
        %5376 = vmatpush1.xpose.msra.mxu0 0.0
        %5377 = vmatprep.subr.mxu0 0.0
        %5378 = vmatpush1.xpose.msra.mxu0 0.0
        %5379 = vmatprep.subr.mxu0 0.0
        %5380 = vmatpush1.xpose.msra.mxu0 0.0
        %5381 = vmatprep.subr.mxu0 0.0
        %5382 = vmatpush1.xpose.msra.mxu0 0.0
        %5383 = vmatprep.subr.mxu0 0.0
        %5384 = vmatpush1.xpose.msra.mxu0 0.0
        %5385 = vmatprep.subr.mxu0 0.0
        %5386 = vmatpush1.xpose.msra.mxu0 0.0
        %5387 = vmatprep.subr.mxu0 0.0
        %5388 = vmatpush1.xpose.msra.mxu0 0.0
        %5389 = vmatprep.subr.mxu0 0.0
        %5390 = vmatpush1.xpose.msra.mxu0 0.0
        %5391 = vmatprep.subr.mxu0 0.0
        %5392 = vmatpush1.xpose.msra.mxu0 0.0
        %5393 = vmatprep.subr.mxu0 0.0
        %5394 = vmatpush1.xpose.msra.mxu0 0.0
        %5395 = vmatprep.subr.mxu0 0.0
        %5396 = vmatpush1.xpose.msra.mxu0 0.0
        %5397 = vmatprep.subr.mxu0 0.0
        %5398 = vmatpush1.xpose.msra.mxu0 0.0
        %5399 = vmatprep.subr.mxu0 0.0
        %5400 = vmatpush1.xpose.msra.mxu0 0.0
        %5401 = vmatprep.subr.mxu0 0.0
        %5402 = vmatpush1.xpose.msra.mxu0 0.0
        %5403 = vmatprep.subr.mxu0 0.0
        %5404 = vmatpush1.xpose.msra.mxu0 0.0
        %5405 = vmatprep.subr.mxu0 0.0
        %5406 = vmatpush1.xpose.msra.mxu0 0.0
        %5407 = vmatprep.subr.mxu0 0.0
        %5408 = vmatpush1.xpose.msra.mxu0 0.0
        %5409 = vmatprep.subr.mxu0 0.0
        %5410 = vmatpush1.xpose.msra.mxu0 0.0
        %5411 = vmatprep.subr.mxu0 0.0
        %5412 = vmatpush1.xpose.msra.mxu0 0.0
        %5413 = vmatprep.subr.mxu0 0.0
        %5414 = vmatpush1.xpose.msra.mxu0 0.0
        %5415 = vmatprep.subr.mxu0 0.0
        %5416 = vmatpush1.xpose.msra.mxu0 0.0
        %5417 = vmatprep.subr.mxu0 0.0
        %5418 = vmatpush1.xpose.msra.mxu0 0.0
        %5419 = vmatprep.subr.mxu0 0.0
        %5420 = vmatpush1.xpose.msra.mxu0 0.0
        %5421 = vmatprep.subr.mxu0 0.0
        %5422 = vmatpush1.xpose.msra.mxu0 0.0
        %5423 = vmatprep.mubr.f32.mxu0 0.0
        %5424 = vmatmul.mubr.f32.gmra.mrb[0].mxu0 %v5353
        %v5425 = vpop.f32.mrb[0].mxu0
        %v5426 = vadd.f32 0.0, %v5425
        %v5427 = vpop.f32.mrb[0].mxu0
        %5428 = vdwg.mxu0
        %v5429 = vmul.f32 %v5426, 0.35355338
        %v5430 = vadd.f32 %v5429, %v2752
        %v5431 = vsel %vm2755, %v5430, -inf
        %5432 = vmax.xlane.f32.xlu0 %v5431
        %v5433 = vpop.xlane.xlu0 %5432
        %v5434 = vsub.f32 %v5430, %v5433
        %v5435 = vmul.f32 %v5434, 1.442695
        %v5436 = vpow.pop %v5435
        %v5437 = vsel %vm2755, %v5436, 0.0
        %5438 = vadd.xlane.f32.xlu0 %v5437
        %v5439 = vpop.xlane.xlu0 %5438
        %v5440 = vrcp.pop %v5439
        %v5441 = vmul.f32 %v5436, %v5440
        %5442 = vrot.lane.b32.xlu0 %v5163, 88
        %v5443 = vpop.permute.xlu0 %5442
        %5444 = vrot.lane.b32.xlu0 %v5168, 88
        %v5445 = vpop.permute.xlu0 %5444
        %v5449 = vsel %vm2755, %v5441, 0
        %5451 = vmatprep.subr.mxu0 0.0
        %5452 = vmatpush1.msra.mxu0 %v5443
        %5453 = vmatprep.subr.mxu0 0.0
        %5454 = vmatpush1.msra.mxu0 %v5445
        %5455 = vmatprep.subr.mxu0 0.0
        %5456 = vmatpush1.msra.mxu0 0.0
        %5457 = vmatprep.subr.mxu0 0.0
        %5458 = vmatpush1.msra.mxu0 0.0
        %5459 = vmatprep.subr.mxu0 0.0
        %5460 = vmatpush1.msra.mxu0 0.0
        %5461 = vmatprep.subr.mxu0 0.0
        %5462 = vmatpush1.msra.mxu0 0.0
        %5463 = vmatprep.subr.mxu0 0.0
        %5464 = vmatpush1.msra.mxu0 0.0
        %5465 = vmatprep.subr.mxu0 0.0
        %5466 = vmatpush1.msra.mxu0 0.0
        %5467 = vmatprep.subr.mxu0 0.0
        %5468 = vmatpush1.msra.mxu0 0.0
        %5469 = vmatprep.subr.mxu0 0.0
        %5470 = vmatpush1.msra.mxu0 0.0
        %5471 = vmatprep.subr.mxu0 0.0
        %5472 = vmatpush1.msra.mxu0 0.0
        %5473 = vmatprep.subr.mxu0 0.0
        %5474 = vmatpush1.msra.mxu0 0.0
        %5475 = vmatprep.subr.mxu0 0.0
        %5476 = vmatpush1.msra.mxu0 0.0
        %5477 = vmatprep.subr.mxu0 0.0
        %5478 = vmatpush1.msra.mxu0 0.0
        %5479 = vmatprep.subr.mxu0 0.0
        %5480 = vmatpush1.msra.mxu0 0.0
        %5481 = vmatprep.subr.mxu0 0.0
        %5482 = vmatpush1.msra.mxu0 0.0
        %5483 = vmatprep.subr.mxu0 0.0
        %5484 = vmatpush1.msra.mxu0 0.0
        %5485 = vmatprep.subr.mxu0 0.0
        %5486 = vmatpush1.msra.mxu0 0.0
        %5487 = vmatprep.subr.mxu0 0.0
        %5488 = vmatpush1.msra.mxu0 0.0
        %5489 = vmatprep.subr.mxu0 0.0
        %5490 = vmatpush1.msra.mxu0 0.0
        %5491 = vmatprep.subr.mxu0 0.0
        %5492 = vmatpush1.msra.mxu0 0.0
        %5493 = vmatprep.subr.mxu0 0.0
        %5494 = vmatpush1.msra.mxu0 0.0
        %5495 = vmatprep.subr.mxu0 0.0
        %5496 = vmatpush1.msra.mxu0 0.0
        %5497 = vmatprep.subr.mxu0 0.0
        %5498 = vmatpush1.msra.mxu0 0.0
        %5499 = vmatprep.subr.mxu0 0.0
        %5500 = vmatpush1.msra.mxu0 0.0
        %5501 = vmatprep.subr.mxu0 0.0
        %5502 = vmatpush1.msra.mxu0 0.0
        %5503 = vmatprep.subr.mxu0 0.0
        %5504 = vmatpush1.msra.mxu0 0.0
        %5505 = vmatprep.subr.mxu0 0.0
        %5506 = vmatpush1.msra.mxu0 0.0
        %5507 = vmatprep.subr.mxu0 0.0
        %5508 = vmatpush1.msra.mxu0 0.0
        %5509 = vmatprep.subr.mxu0 0.0
        %5510 = vmatpush1.msra.mxu0 0.0
        %5511 = vmatprep.subr.mxu0 0.0
        %5512 = vmatpush1.msra.mxu0 0.0
        %5513 = vmatprep.subr.mxu0 0.0
        %5514 = vmatpush1.msra.mxu0 0.0
        %5515 = vmatprep.mubr.f32.mxu0 0.0
        %5516 = vmatmul.mubr.f32.gmra.mrb[0].mxu0 %v5449
        %v5517 = vpop.f32.mrb[0].mxu0
        %v5518 = vadd.f32 0.0, %v5517
        %v5519 = vpop.f32.mrb[0].mxu0
        %5520 = vdwg.mxu0
        %v5522 = vsel %vm1495, %v5518, 0
        %5524 = vmatprep.subr.mxu0 0.0
        %5525 = vmatpush1.msra.mxu0 %v5173
        %5526 = vmatprep.subr.mxu0 0.0
        %5527 = vmatpush1.msra.mxu0 0.0
        %5528 = vmatprep.subr.mxu0 0.0
        %5529 = vmatpush1.msra.mxu0 0.0
        %5530 = vmatprep.subr.mxu0 0.0
        %5531 = vmatpush1.msra.mxu0 0.0
        %5532 = vmatprep.subr.mxu0 0.0
        %5533 = vmatpush1.msra.mxu0 0.0
        %5534 = vmatprep.subr.mxu0 0.0
        %5535 = vmatpush1.msra.mxu0 0.0
        %5536 = vmatprep.subr.mxu0 0.0
        %5537 = vmatpush1.msra.mxu0 0.0
        %5538 = vmatprep.subr.mxu0 0.0
        %5539 = vmatpush1.msra.mxu0 0.0
        %5540 = vmatprep.subr.mxu0 0.0
        %5541 = vmatpush1.msra.mxu0 0.0
        %5542 = vmatprep.subr.mxu0 0.0
        %5543 = vmatpush1.msra.mxu0 0.0
        %5544 = vmatprep.subr.mxu0 0.0
        %5545 = vmatpush1.msra.mxu0 0.0
        %5546 = vmatprep.subr.mxu0 0.0
        %5547 = vmatpush1.msra.mxu0 0.0
        %5548 = vmatprep.subr.mxu0 0.0
        %5549 = vmatpush1.msra.mxu0 0.0
        %5550 = vmatprep.subr.mxu0 0.0
        %5551 = vmatpush1.msra.mxu0 0.0
        %5552 = vmatprep.subr.mxu0 0.0
        %5553 = vmatpush1.msra.mxu0 0.0
        %5554 = vmatprep.subr.mxu0 0.0
        %5555 = vmatpush1.msra.mxu0 0.0
        %5556 = vmatprep.subr.mxu0 0.0
        %5557 = vmatpush1.msra.mxu0 0.0
        %5558 = vmatprep.subr.mxu0 0.0
        %5559 = vmatpush1.msra.mxu0 0.0
        %5560 = vmatprep.subr.mxu0 0.0
        %5561 = vmatpush1.msra.mxu0 0.0
        %5562 = vmatprep.subr.mxu0 0.0
        %5563 = vmatpush1.msra.mxu0 0.0
        %5564 = vmatprep.subr.mxu0 0.0
        %5565 = vmatpush1.msra.mxu0 0.0
        %5566 = vmatprep.subr.mxu0 0.0
        %5567 = vmatpush1.msra.mxu0 0.0
        %5568 = vmatprep.subr.mxu0 0.0
        %5569 = vmatpush1.msra.mxu0 0.0
        %5570 = vmatprep.subr.mxu0 0.0
        %5571 = vmatpush1.msra.mxu0 0.0
        %5572 = vmatprep.subr.mxu0 0.0
        %5573 = vmatpush1.msra.mxu0 0.0
        %5574 = vmatprep.subr.mxu0 0.0
        %5575 = vmatpush1.msra.mxu0 0.0
        %5576 = vmatprep.subr.mxu0 0.0
        %5577 = vmatpush1.msra.mxu0 0.0
        %5578 = vmatprep.subr.mxu0 0.0
        %5579 = vmatpush1.msra.mxu0 0.0
        %5580 = vmatprep.subr.mxu0 0.0
        %5581 = vmatpush1.msra.mxu0 0.0
        %5582 = vmatprep.subr.mxu0 0.0
        %5583 = vmatpush1.msra.mxu0 0.0
        %5584 = vmatprep.subr.mxu0 0.0
        %5585 = vmatpush1.msra.mxu0 0.0
        %5586 = vmatprep.subr.mxu0 0.0
        %5587 = vmatpush1.msra.mxu0 0.0
        %5588 = vmatprep.mubr.f32.mxu0 0.0
        %5589 = vmatmul.mubr.f32.gmra.mrb[0].mxu0 %v5522
        %v5590 = vpop.f32.mrb[0].mxu0
        %v5591 = vadd.f32 0.0, %v5590
        %v5592 = vpop.f32.mrb[0].mxu0
        %5593 = vdwg.mxu0
        %v5595 = vsel %vm1495, %v5344, 0
        %5597 = vmatprep.subr.mxu0 0.0
        %5598 = vmatpush1.msra.mxu0 %v5172
        %5599 = vmatprep.subr.mxu0 0.0
        %5600 = vmatpush1.msra.mxu0 0.0
        %5601 = vmatprep.subr.mxu0 0.0
        %5602 = vmatpush1.msra.mxu0 0.0
        %5603 = vmatprep.subr.mxu0 0.0
        %5604 = vmatpush1.msra.mxu0 0.0
        %5605 = vmatprep.subr.mxu0 0.0
        %5606 = vmatpush1.msra.mxu0 0.0
        %5607 = vmatprep.subr.mxu0 0.0
        %5608 = vmatpush1.msra.mxu0 0.0
        %5609 = vmatprep.subr.mxu0 0.0
        %5610 = vmatpush1.msra.mxu0 0.0
        %5611 = vmatprep.subr.mxu0 0.0
        %5612 = vmatpush1.msra.mxu0 0.0
        %5613 = vmatprep.subr.mxu0 0.0
        %5614 = vmatpush1.msra.mxu0 0.0
        %5615 = vmatprep.subr.mxu0 0.0
        %5616 = vmatpush1.msra.mxu0 0.0
        %5617 = vmatprep.subr.mxu0 0.0
        %5618 = vmatpush1.msra.mxu0 0.0
        %5619 = vmatprep.subr.mxu0 0.0
        %5620 = vmatpush1.msra.mxu0 0.0
        %5621 = vmatprep.subr.mxu0 0.0
        %5622 = vmatpush1.msra.mxu0 0.0
        %5623 = vmatprep.subr.mxu0 0.0
        %5624 = vmatpush1.msra.mxu0 0.0
        %5625 = vmatprep.subr.mxu0 0.0
        %5626 = vmatpush1.msra.mxu0 0.0
        %5627 = vmatprep.subr.mxu0 0.0
        %5628 = vmatpush1.msra.mxu0 0.0
        %5629 = vmatprep.subr.mxu0 0.0
        %5630 = vmatpush1.msra.mxu0 0.0
        %5631 = vmatprep.subr.mxu0 0.0
        %5632 = vmatpush1.msra.mxu0 0.0
        %5633 = vmatprep.subr.mxu0 0.0
        %5634 = vmatpush1.msra.mxu0 0.0
        %5635 = vmatprep.subr.mxu0 0.0
        %5636 = vmatpush1.msra.mxu0 0.0
        %5637 = vmatprep.subr.mxu0 0.0
        %5638 = vmatpush1.msra.mxu0 0.0
        %5639 = vmatprep.subr.mxu0 0.0
        %5640 = vmatpush1.msra.mxu0 0.0
        %5641 = vmatprep.subr.mxu0 0.0
        %5642 = vmatpush1.msra.mxu0 0.0
        %5643 = vmatprep.subr.mxu0 0.0
        %5644 = vmatpush1.msra.mxu0 0.0
        %5645 = vmatprep.subr.mxu0 0.0
        %5646 = vmatpush1.msra.mxu0 0.0
        %5647 = vmatprep.subr.mxu0 0.0
        %5648 = vmatpush1.msra.mxu0 0.0
        %5649 = vmatprep.subr.mxu0 0.0
        %5650 = vmatpush1.msra.mxu0 0.0
        %5651 = vmatprep.subr.mxu0 0.0
        %5652 = vmatpush1.msra.mxu0 0.0
        %5653 = vmatprep.subr.mxu0 0.0
        %5654 = vmatpush1.msra.mxu0 0.0
        %5655 = vmatprep.subr.mxu0 0.0
        %5656 = vmatpush1.msra.mxu0 0.0
        %5657 = vmatprep.subr.mxu0 0.0
        %5658 = vmatpush1.msra.mxu0 0.0
        %5659 = vmatprep.subr.mxu0 0.0
        %5660 = vmatpush1.msra.mxu0 0.0
        %5661 = vmatprep.mubr.f32.mxu0 0.0
        %5662 = vmatmul.mubr.f32.gmra.mrb[0].mxu0 %v5595
        %v5663 = vpop.f32.mrb[0].mxu0
        %v5664 = vadd.f32 %v5591, %v5663
        %v5665 = vpop.f32.mrb[0].mxu0
        %5666 = vdwg.mxu0
        %5667 = vrot.lane.b32.xlu0 %v5080, 112
        %v5668 = vpop.permute.xlu0 %5667
        %5669 = vrot.lane.b32.xlu0 %v5163, 112
        %v5670 = vpop.permute.xlu0 %5669
        %5671 = vrot.lane.b32.xlu0 %v5168, 112
        %v5672 = vpop.permute.xlu0 %5671
        %v5673 = vsel %vm1495, %v5668, 0
        %v5675 = vsel %vm1495, %v5670, 0
        %v5677 = vsel %vm1495, %v5672, 0
        %5679 = vmatprep.subr.mxu0 0.0
        %5680 = vmatpush1.xpose.msra.mxu0 %v5675
        %5681 = vmatprep.subr.mxu0 0.0
        %5682 = vmatpush1.xpose.msra.mxu0 %v5677
        %5683 = vmatprep.subr.mxu0 0.0
        %5684 = vmatpush1.xpose.msra.mxu0 0.0
        %5685 = vmatprep.subr.mxu0 0.0
        %5686 = vmatpush1.xpose.msra.mxu0 0.0
        %5687 = vmatprep.subr.mxu0 0.0
        %5688 = vmatpush1.xpose.msra.mxu0 0.0
        %5689 = vmatprep.subr.mxu0 0.0
        %5690 = vmatpush1.xpose.msra.mxu0 0.0
        %5691 = vmatprep.subr.mxu0 0.0
        %5692 = vmatpush1.xpose.msra.mxu0 0.0
        %5693 = vmatprep.subr.mxu0 0.0
        %5694 = vmatpush1.xpose.msra.mxu0 0.0
        %5695 = vmatprep.subr.mxu0 0.0
        %5696 = vmatpush1.xpose.msra.mxu0 0.0
        %5697 = vmatprep.subr.mxu0 0.0
        %5698 = vmatpush1.xpose.msra.mxu0 0.0
        %5699 = vmatprep.subr.mxu0 0.0
        %5700 = vmatpush1.xpose.msra.mxu0 0.0
        %5701 = vmatprep.subr.mxu0 0.0
        %5702 = vmatpush1.xpose.msra.mxu0 0.0
        %5703 = vmatprep.subr.mxu0 0.0
        %5704 = vmatpush1.xpose.msra.mxu0 0.0
        %5705 = vmatprep.subr.mxu0 0.0
        %5706 = vmatpush1.xpose.msra.mxu0 0.0
        %5707 = vmatprep.subr.mxu0 0.0
        %5708 = vmatpush1.xpose.msra.mxu0 0.0
        %5709 = vmatprep.subr.mxu0 0.0
        %5710 = vmatpush1.xpose.msra.mxu0 0.0
        %5711 = vmatprep.subr.mxu0 0.0
        %5712 = vmatpush1.xpose.msra.mxu0 0.0
        %5713 = vmatprep.subr.mxu0 0.0
        %5714 = vmatpush1.xpose.msra.mxu0 0.0
        %5715 = vmatprep.subr.mxu0 0.0
        %5716 = vmatpush1.xpose.msra.mxu0 0.0
        %5717 = vmatprep.subr.mxu0 0.0
        %5718 = vmatpush1.xpose.msra.mxu0 0.0
        %5719 = vmatprep.subr.mxu0 0.0
        %5720 = vmatpush1.xpose.msra.mxu0 0.0
        %5721 = vmatprep.subr.mxu0 0.0
        %5722 = vmatpush1.xpose.msra.mxu0 0.0
        %5723 = vmatprep.subr.mxu0 0.0
        %5724 = vmatpush1.xpose.msra.mxu0 0.0
        %5725 = vmatprep.subr.mxu0 0.0
        %5726 = vmatpush1.xpose.msra.mxu0 0.0
        %5727 = vmatprep.subr.mxu0 0.0
        %5728 = vmatpush1.xpose.msra.mxu0 0.0
        %5729 = vmatprep.subr.mxu0 0.0
        %5730 = vmatpush1.xpose.msra.mxu0 0.0
        %5731 = vmatprep.subr.mxu0 0.0
        %5732 = vmatpush1.xpose.msra.mxu0 0.0
        %5733 = vmatprep.subr.mxu0 0.0
        %5734 = vmatpush1.xpose.msra.mxu0 0.0
        %5735 = vmatprep.subr.mxu0 0.0
        %5736 = vmatpush1.xpose.msra.mxu0 0.0
        %5737 = vmatprep.subr.mxu0 0.0
        %5738 = vmatpush1.xpose.msra.mxu0 0.0
        %5739 = vmatprep.subr.mxu0 0.0
        %5740 = vmatpush1.xpose.msra.mxu0 0.0
        %5741 = vmatprep.subr.mxu0 0.0
        %5742 = vmatpush1.xpose.msra.mxu0 0.0
        %5743 = vmatprep.mubr.f32.mxu0 0.0
        %5744 = vmatmul.mubr.f32.gmra.mrb[0].mxu0 %v5673
        %v5745 = vpop.f32.mrb[0].mxu0
        %v5746 = vadd.f32 0.0, %v5745
        %v5747 = vpop.f32.mrb[0].mxu0
        %5748 = vdwg.mxu0
        %v5749 = vmul.f32 %v5746, 0.35355338
        %v5750 = vadd.f32 %v5749, %v2752
        %v5751 = vsel %vm2755, %v5750, -inf
        %5752 = vmax.xlane.f32.xlu0 %v5751
        %v5753 = vpop.xlane.xlu0 %5752
        %v5754 = vsub.f32 %v5750, %v5753
        %v5755 = vmul.f32 %v5754, 1.442695
        %v5756 = vpow.pop %v5755
        %v5757 = vsel %vm2755, %v5756, 0.0
        %5758 = vadd.xlane.f32.xlu0 %v5757
        %v5759 = vpop.xlane.xlu0 %5758
        %v5760 = vrcp.pop %v5759
        %v5761 = vmul.f32 %v5756, %v5760
        %5762 = vrot.lane.b32.xlu0 %v5163, 80
        %v5763 = vpop.permute.xlu0 %5762
        %5764 = vrot.lane.b32.xlu0 %v5168, 80
        %v5765 = vpop.permute.xlu0 %5764
        %v5769 = vsel %vm2755, %v5761, 0
        %5771 = vmatprep.subr.mxu0 0.0
        %5772 = vmatpush1.msra.mxu0 %v5763
        %5773 = vmatprep.subr.mxu0 0.0
        %5774 = vmatpush1.msra.mxu0 %v5765
        %5775 = vmatprep.subr.mxu0 0.0
        %5776 = vmatpush1.msra.mxu0 0.0
        %5777 = vmatprep.subr.mxu0 0.0
        %5778 = vmatpush1.msra.mxu0 0.0
        %5779 = vmatprep.subr.mxu0 0.0
        %5780 = vmatpush1.msra.mxu0 0.0
        %5781 = vmatprep.subr.mxu0 0.0
        %5782 = vmatpush1.msra.mxu0 0.0
        %5783 = vmatprep.subr.mxu0 0.0
        %5784 = vmatpush1.msra.mxu0 0.0
        %5785 = vmatprep.subr.mxu0 0.0
        %5786 = vmatpush1.msra.mxu0 0.0
        %5787 = vmatprep.subr.mxu0 0.0
        %5788 = vmatpush1.msra.mxu0 0.0
        %5789 = vmatprep.subr.mxu0 0.0
        %5790 = vmatpush1.msra.mxu0 0.0
        %5791 = vmatprep.subr.mxu0 0.0
        %5792 = vmatpush1.msra.mxu0 0.0
        %5793 = vmatprep.subr.mxu0 0.0
        %5794 = vmatpush1.msra.mxu0 0.0
        %5795 = vmatprep.subr.mxu0 0.0
        %5796 = vmatpush1.msra.mxu0 0.0
        %5797 = vmatprep.subr.mxu0 0.0
        %5798 = vmatpush1.msra.mxu0 0.0
        %5799 = vmatprep.subr.mxu0 0.0
        %5800 = vmatpush1.msra.mxu0 0.0
        %5801 = vmatprep.subr.mxu0 0.0
        %5802 = vmatpush1.msra.mxu0 0.0
        %5803 = vmatprep.subr.mxu0 0.0
        %5804 = vmatpush1.msra.mxu0 0.0
        %5805 = vmatprep.subr.mxu0 0.0
        %5806 = vmatpush1.msra.mxu0 0.0
        %5807 = vmatprep.subr.mxu0 0.0
        %5808 = vmatpush1.msra.mxu0 0.0
        %5809 = vmatprep.subr.mxu0 0.0
        %5810 = vmatpush1.msra.mxu0 0.0
        %5811 = vmatprep.subr.mxu0 0.0
        %5812 = vmatpush1.msra.mxu0 0.0
        %5813 = vmatprep.subr.mxu0 0.0
        %5814 = vmatpush1.msra.mxu0 0.0
        %5815 = vmatprep.subr.mxu0 0.0
        %5816 = vmatpush1.msra.mxu0 0.0
        %5817 = vmatprep.subr.mxu0 0.0
        %5818 = vmatpush1.msra.mxu0 0.0
        %5819 = vmatprep.subr.mxu0 0.0
        %5820 = vmatpush1.msra.mxu0 0.0
        %5821 = vmatprep.subr.mxu0 0.0
        %5822 = vmatpush1.msra.mxu0 0.0
        %5823 = vmatprep.subr.mxu0 0.0
        %5824 = vmatpush1.msra.mxu0 0.0
        %5825 = vmatprep.subr.mxu0 0.0
        %5826 = vmatpush1.msra.mxu0 0.0
        %5827 = vmatprep.subr.mxu0 0.0
        %5828 = vmatpush1.msra.mxu0 0.0
        %5829 = vmatprep.subr.mxu0 0.0
        %5830 = vmatpush1.msra.mxu0 0.0
        %5831 = vmatprep.subr.mxu0 0.0
        %5832 = vmatpush1.msra.mxu0 0.0
        %5833 = vmatprep.subr.mxu0 0.0
        %5834 = vmatpush1.msra.mxu0 0.0
        %5835 = vmatprep.mubr.f32.mxu0 0.0
        %5836 = vmatmul.mubr.f32.gmra.mrb[0].mxu0 %v5769
        %v5837 = vpop.f32.mrb[0].mxu0
        %v5838 = vadd.f32 0.0, %v5837
        %v5839 = vpop.f32.mrb[0].mxu0
        %5840 = vdwg.mxu0
        %v5842 = vsel %vm1495, %v5838, 0
        %5844 = vmatprep.subr.mxu0 0.0
        %5845 = vmatpush1.msra.mxu0 %v5174
        %5846 = vmatprep.subr.mxu0 0.0
        %5847 = vmatpush1.msra.mxu0 0.0
        %5848 = vmatprep.subr.mxu0 0.0
        %5849 = vmatpush1.msra.mxu0 0.0
        %5850 = vmatprep.subr.mxu0 0.0
        %5851 = vmatpush1.msra.mxu0 0.0
        %5852 = vmatprep.subr.mxu0 0.0
        %5853 = vmatpush1.msra.mxu0 0.0
        %5854 = vmatprep.subr.mxu0 0.0
        %5855 = vmatpush1.msra.mxu0 0.0
        %5856 = vmatprep.subr.mxu0 0.0
        %5857 = vmatpush1.msra.mxu0 0.0
        %5858 = vmatprep.subr.mxu0 0.0
        %5859 = vmatpush1.msra.mxu0 0.0
        %5860 = vmatprep.subr.mxu0 0.0
        %5861 = vmatpush1.msra.mxu0 0.0
        %5862 = vmatprep.subr.mxu0 0.0
        %5863 = vmatpush1.msra.mxu0 0.0
        %5864 = vmatprep.subr.mxu0 0.0
        %5865 = vmatpush1.msra.mxu0 0.0
        %5866 = vmatprep.subr.mxu0 0.0
        %5867 = vmatpush1.msra.mxu0 0.0
        %5868 = vmatprep.subr.mxu0 0.0
        %5869 = vmatpush1.msra.mxu0 0.0
        %5870 = vmatprep.subr.mxu0 0.0
        %5871 = vmatpush1.msra.mxu0 0.0
        %5872 = vmatprep.subr.mxu0 0.0
        %5873 = vmatpush1.msra.mxu0 0.0
        %5874 = vmatprep.subr.mxu0 0.0
        %5875 = vmatpush1.msra.mxu0 0.0
        %5876 = vmatprep.subr.mxu0 0.0
        %5877 = vmatpush1.msra.mxu0 0.0
        %5878 = vmatprep.subr.mxu0 0.0
        %5879 = vmatpush1.msra.mxu0 0.0
        %5880 = vmatprep.subr.mxu0 0.0
        %5881 = vmatpush1.msra.mxu0 0.0
        %5882 = vmatprep.subr.mxu0 0.0
        %5883 = vmatpush1.msra.mxu0 0.0
        %5884 = vmatprep.subr.mxu0 0.0
        %5885 = vmatpush1.msra.mxu0 0.0
        %5886 = vmatprep.subr.mxu0 0.0
        %5887 = vmatpush1.msra.mxu0 0.0
        %5888 = vmatprep.subr.mxu0 0.0
        %5889 = vmatpush1.msra.mxu0 0.0
        %5890 = vmatprep.subr.mxu0 0.0
        %5891 = vmatpush1.msra.mxu0 0.0
        %5892 = vmatprep.subr.mxu0 0.0
        %5893 = vmatpush1.msra.mxu0 0.0
        %5894 = vmatprep.subr.mxu0 0.0
        %5895 = vmatpush1.msra.mxu0 0.0
        %5896 = vmatprep.subr.mxu0 0.0
        %5897 = vmatpush1.msra.mxu0 0.0
        %5898 = vmatprep.subr.mxu0 0.0
        %5899 = vmatpush1.msra.mxu0 0.0
        %5900 = vmatprep.subr.mxu0 0.0
        %5901 = vmatpush1.msra.mxu0 0.0
        %5902 = vmatprep.subr.mxu0 0.0
        %5903 = vmatpush1.msra.mxu0 0.0
        %5904 = vmatprep.subr.mxu0 0.0
        %5905 = vmatpush1.msra.mxu0 0.0
        %5906 = vmatprep.subr.mxu0 0.0
        %5907 = vmatpush1.msra.mxu0 0.0
        %5908 = vmatprep.mubr.f32.mxu0 0.0
        %5909 = vmatmul.mubr.f32.gmra.mrb[0].mxu0 %v5842
        %v5910 = vpop.f32.mrb[0].mxu0
        %v5911 = vadd.f32 0.0, %v5910
        %v5912 = vpop.f32.mrb[0].mxu0
        %5913 = vdwg.mxu0
        %v5914 = vadd.f32 %v5664, %v5911
        %5915 = vrot.lane.b32.xlu0 %v5080, 104
        %v5916 = vpop.permute.xlu0 %5915
        %5917 = vrot.lane.b32.xlu0 %v5163, 104
        %v5918 = vpop.permute.xlu0 %5917
        %5919 = vrot.lane.b32.xlu0 %v5168, 104
        %v5920 = vpop.permute.xlu0 %5919
        %v5921 = vsel %vm1495, %v5916, 0
        %v5923 = vsel %vm1495, %v5918, 0
        %v5925 = vsel %vm1495, %v5920, 0
        %5927 = vmatprep.subr.mxu0 0.0
        %5928 = vmatpush1.xpose.msra.mxu0 %v5923
        %5929 = vmatprep.subr.mxu0 0.0
        %5930 = vmatpush1.xpose.msra.mxu0 %v5925
        %5931 = vmatprep.subr.mxu0 0.0
        %5932 = vmatpush1.xpose.msra.mxu0 0.0
        %5933 = vmatprep.subr.mxu0 0.0
        %5934 = vmatpush1.xpose.msra.mxu0 0.0
        %5935 = vmatprep.subr.mxu0 0.0
        %5936 = vmatpush1.xpose.msra.mxu0 0.0
        %5937 = vmatprep.subr.mxu0 0.0
        %5938 = vmatpush1.xpose.msra.mxu0 0.0
        %5939 = vmatprep.subr.mxu0 0.0
        %5940 = vmatpush1.xpose.msra.mxu0 0.0
        %5941 = vmatprep.subr.mxu0 0.0
        %5942 = vmatpush1.xpose.msra.mxu0 0.0
        %5943 = vmatprep.subr.mxu0 0.0
        %5944 = vmatpush1.xpose.msra.mxu0 0.0
        %5945 = vmatprep.subr.mxu0 0.0
        %5946 = vmatpush1.xpose.msra.mxu0 0.0
        %5947 = vmatprep.subr.mxu0 0.0
        %5948 = vmatpush1.xpose.msra.mxu0 0.0
        %5949 = vmatprep.subr.mxu0 0.0
        %5950 = vmatpush1.xpose.msra.mxu0 0.0
        %5951 = vmatprep.subr.mxu0 0.0
        %5952 = vmatpush1.xpose.msra.mxu0 0.0
        %5953 = vmatprep.subr.mxu0 0.0
        %5954 = vmatpush1.xpose.msra.mxu0 0.0
        %5955 = vmatprep.subr.mxu0 0.0
        %5956 = vmatpush1.xpose.msra.mxu0 0.0
        %5957 = vmatprep.subr.mxu0 0.0
        %5958 = vmatpush1.xpose.msra.mxu0 0.0
        %5959 = vmatprep.subr.mxu0 0.0
        %5960 = vmatpush1.xpose.msra.mxu0 0.0
        %5961 = vmatprep.subr.mxu0 0.0
        %5962 = vmatpush1.xpose.msra.mxu0 0.0
        %5963 = vmatprep.subr.mxu0 0.0
        %5964 = vmatpush1.xpose.msra.mxu0 0.0
        %5965 = vmatprep.subr.mxu0 0.0
        %5966 = vmatpush1.xpose.msra.mxu0 0.0
        %5967 = vmatprep.subr.mxu0 0.0
        %5968 = vmatpush1.xpose.msra.mxu0 0.0
        %5969 = vmatprep.subr.mxu0 0.0
        %5970 = vmatpush1.xpose.msra.mxu0 0.0
        %5971 = vmatprep.subr.mxu0 0.0
        %5972 = vmatpush1.xpose.msra.mxu0 0.0
        %5973 = vmatprep.subr.mxu0 0.0
        %5974 = vmatpush1.xpose.msra.mxu0 0.0
        %5975 = vmatprep.subr.mxu0 0.0
        %5976 = vmatpush1.xpose.msra.mxu0 0.0
        %5977 = vmatprep.subr.mxu0 0.0
        %5978 = vmatpush1.xpose.msra.mxu0 0.0
        %5979 = vmatprep.subr.mxu0 0.0
        %5980 = vmatpush1.xpose.msra.mxu0 0.0
        %5981 = vmatprep.subr.mxu0 0.0
        %5982 = vmatpush1.xpose.msra.mxu0 0.0
        %5983 = vmatprep.subr.mxu0 0.0
        %5984 = vmatpush1.xpose.msra.mxu0 0.0
        %5985 = vmatprep.subr.mxu0 0.0
        %5986 = vmatpush1.xpose.msra.mxu0 0.0
        %5987 = vmatprep.subr.mxu0 0.0
        %5988 = vmatpush1.xpose.msra.mxu0 0.0
        %5989 = vmatprep.subr.mxu0 0.0
        %5990 = vmatpush1.xpose.msra.mxu0 0.0
        %5991 = vmatprep.mubr.f32.mxu0 0.0
        %5992 = vmatmul.mubr.f32.gmra.mrb[0].mxu0 %v5921
        %v5993 = vpop.f32.mrb[0].mxu0
        %v5994 = vadd.f32 0.0, %v5993
        %v5995 = vpop.f32.mrb[0].mxu0
        %5996 = vdwg.mxu0
        %v5997 = vmul.f32 %v5994, 0.35355338
        %v5998 = vadd.f32 %v5997, %v2752
        %v5999 = vsel %vm2755, %v5998, -inf
        %6000 = vmax.xlane.f32.xlu0 %v5999
        %v6001 = vpop.xlane.xlu0 %6000
        %v6002 = vsub.f32 %v5998, %v6001
        %v6003 = vmul.f32 %v6002, 1.442695
        %v6004 = vpow.pop %v6003
        %v6005 = vsel %vm2755, %v6004, 0.0
        %6006 = vadd.xlane.f32.xlu0 %v6005
        %v6007 = vpop.xlane.xlu0 %6006
        %v6008 = vrcp.pop %v6007
        %v6009 = vmul.f32 %v6004, %v6008
        %6010 = vrot.lane.b32.xlu0 %v5163, 72
        %v6011 = vpop.permute.xlu0 %6010
        %6012 = vrot.lane.b32.xlu0 %v5168, 72
        %v6013 = vpop.permute.xlu0 %6012
        %v6017 = vsel %vm2755, %v6009, 0
        %6019 = vmatprep.subr.mxu0 0.0
        %6020 = vmatpush1.msra.mxu0 %v6011
        %6021 = vmatprep.subr.mxu0 0.0
        %6022 = vmatpush1.msra.mxu0 %v6013
        %6023 = vmatprep.subr.mxu0 0.0
        %6024 = vmatpush1.msra.mxu0 0.0
        %6025 = vmatprep.subr.mxu0 0.0
        %6026 = vmatpush1.msra.mxu0 0.0
        %6027 = vmatprep.subr.mxu0 0.0
        %6028 = vmatpush1.msra.mxu0 0.0
        %6029 = vmatprep.subr.mxu0 0.0
        %6030 = vmatpush1.msra.mxu0 0.0
        %6031 = vmatprep.subr.mxu0 0.0
        %6032 = vmatpush1.msra.mxu0 0.0
        %6033 = vmatprep.subr.mxu0 0.0
        %6034 = vmatpush1.msra.mxu0 0.0
        %6035 = vmatprep.subr.mxu0 0.0
        %6036 = vmatpush1.msra.mxu0 0.0
        %6037 = vmatprep.subr.mxu0 0.0
        %6038 = vmatpush1.msra.mxu0 0.0
        %6039 = vmatprep.subr.mxu0 0.0
        %6040 = vmatpush1.msra.mxu0 0.0
        %6041 = vmatprep.subr.mxu0 0.0
        %6042 = vmatpush1.msra.mxu0 0.0
        %6043 = vmatprep.subr.mxu0 0.0
        %6044 = vmatpush1.msra.mxu0 0.0
        %6045 = vmatprep.subr.mxu0 0.0
        %6046 = vmatpush1.msra.mxu0 0.0
        %6047 = vmatprep.subr.mxu0 0.0
        %6048 = vmatpush1.msra.mxu0 0.0
        %6049 = vmatprep.subr.mxu0 0.0
        %6050 = vmatpush1.msra.mxu0 0.0
        %6051 = vmatprep.subr.mxu0 0.0
        %6052 = vmatpush1.msra.mxu0 0.0
        %6053 = vmatprep.subr.mxu0 0.0
        %6054 = vmatpush1.msra.mxu0 0.0
        %6055 = vmatprep.subr.mxu0 0.0
        %6056 = vmatpush1.msra.mxu0 0.0
        %6057 = vmatprep.subr.mxu0 0.0
        %6058 = vmatpush1.msra.mxu0 0.0
        %6059 = vmatprep.subr.mxu0 0.0
        %6060 = vmatpush1.msra.mxu0 0.0
        %6061 = vmatprep.subr.mxu0 0.0
        %6062 = vmatpush1.msra.mxu0 0.0
        %6063 = vmatprep.subr.mxu0 0.0
        %6064 = vmatpush1.msra.mxu0 0.0
        %6065 = vmatprep.subr.mxu0 0.0
        %6066 = vmatpush1.msra.mxu0 0.0
        %6067 = vmatprep.subr.mxu0 0.0
        %6068 = vmatpush1.msra.mxu0 0.0
        %6069 = vmatprep.subr.mxu0 0.0
        %6070 = vmatpush1.msra.mxu0 0.0
        %6071 = vmatprep.subr.mxu0 0.0
        %6072 = vmatpush1.msra.mxu0 0.0
        %6073 = vmatprep.subr.mxu0 0.0
        %6074 = vmatpush1.msra.mxu0 0.0
        %6075 = vmatprep.subr.mxu0 0.0
        %6076 = vmatpush1.msra.mxu0 0.0
        %6077 = vmatprep.subr.mxu0 0.0
        %6078 = vmatpush1.msra.mxu0 0.0
        %6079 = vmatprep.subr.mxu0 0.0
        %6080 = vmatpush1.msra.mxu0 0.0
        %6081 = vmatprep.subr.mxu0 0.0
        %6082 = vmatpush1.msra.mxu0 0.0
        %6083 = vmatprep.mubr.f32.mxu0 0.0
        %6084 = vmatmul.mubr.f32.gmra.mrb[0].mxu0 %v6017
        %v6085 = vpop.f32.mrb[0].mxu0
        %v6086 = vadd.f32 0.0, %v6085
        %v6087 = vpop.f32.mrb[0].mxu0
        %6088 = vdwg.mxu0
        %v6090 = vsel %vm1495, %v6086, 0
        %6092 = vmatprep.subr.mxu0 0.0
        %6093 = vmatpush1.msra.mxu0 %v5175
        %6094 = vmatprep.subr.mxu0 0.0
        %6095 = vmatpush1.msra.mxu0 0.0
        %6096 = vmatprep.subr.mxu0 0.0
        %6097 = vmatpush1.msra.mxu0 0.0
        %6098 = vmatprep.subr.mxu0 0.0
        %6099 = vmatpush1.msra.mxu0 0.0
        %6100 = vmatprep.subr.mxu0 0.0
        %6101 = vmatpush1.msra.mxu0 0.0
        %6102 = vmatprep.subr.mxu0 0.0
        %6103 = vmatpush1.msra.mxu0 0.0
        %6104 = vmatprep.subr.mxu0 0.0
        %6105 = vmatpush1.msra.mxu0 0.0
        %6106 = vmatprep.subr.mxu0 0.0
        %6107 = vmatpush1.msra.mxu0 0.0
        %6108 = vmatprep.subr.mxu0 0.0
        %6109 = vmatpush1.msra.mxu0 0.0
        %6110 = vmatprep.subr.mxu0 0.0
        %6111 = vmatpush1.msra.mxu0 0.0
        %6112 = vmatprep.subr.mxu0 0.0
        %6113 = vmatpush1.msra.mxu0 0.0
        %6114 = vmatprep.subr.mxu0 0.0
        %6115 = vmatpush1.msra.mxu0 0.0
        %6116 = vmatprep.subr.mxu0 0.0
        %6117 = vmatpush1.msra.mxu0 0.0
        %6118 = vmatprep.subr.mxu0 0.0
        %6119 = vmatpush1.msra.mxu0 0.0
        %6120 = vmatprep.subr.mxu0 0.0
        %6121 = vmatpush1.msra.mxu0 0.0
        %6122 = vmatprep.subr.mxu0 0.0
        %6123 = vmatpush1.msra.mxu0 0.0
        %6124 = vmatprep.subr.mxu0 0.0
        %6125 = vmatpush1.msra.mxu0 0.0
        %6126 = vmatprep.subr.mxu0 0.0
        %6127 = vmatpush1.msra.mxu0 0.0
        %6128 = vmatprep.subr.mxu0 0.0
        %6129 = vmatpush1.msra.mxu0 0.0
        %6130 = vmatprep.subr.mxu0 0.0
        %6131 = vmatpush1.msra.mxu0 0.0
        %6132 = vmatprep.subr.mxu0 0.0
        %6133 = vmatpush1.msra.mxu0 0.0
        %6134 = vmatprep.subr.mxu0 0.0
        %6135 = vmatpush1.msra.mxu0 0.0
        %6136 = vmatprep.subr.mxu0 0.0
        %6137 = vmatpush1.msra.mxu0 0.0
        %6138 = vmatprep.subr.mxu0 0.0
        %6139 = vmatpush1.msra.mxu0 0.0
        %6140 = vmatprep.subr.mxu0 0.0
        %6141 = vmatpush1.msra.mxu0 0.0
        %6142 = vmatprep.subr.mxu0 0.0
        %6143 = vmatpush1.msra.mxu0 0.0
        %6144 = vmatprep.subr.mxu0 0.0
        %6145 = vmatpush1.msra.mxu0 0.0
        %6146 = vmatprep.subr.mxu0 0.0
        %6147 = vmatpush1.msra.mxu0 0.0
        %6148 = vmatprep.subr.mxu0 0.0
        %6149 = vmatpush1.msra.mxu0 0.0
        %6150 = vmatprep.subr.mxu0 0.0
        %6151 = vmatpush1.msra.mxu0 0.0
        %6152 = vmatprep.subr.mxu0 0.0
        %6153 = vmatpush1.msra.mxu0 0.0
        %6154 = vmatprep.subr.mxu0 0.0
        %6155 = vmatpush1.msra.mxu0 0.0
        %6156 = vmatprep.mubr.f32.mxu0 0.0
        %6157 = vmatmul.mubr.f32.gmra.mrb[0].mxu0 %v6090
        %v6158 = vpop.f32.mrb[0].mxu0
        %v6159 = vadd.f32 0.0, %v6158
        %v6160 = vpop.f32.mrb[0].mxu0
        %6161 = vdwg.mxu0
        %v6162 = vadd.f32 %v5914, %v6159
        %s6163 = scalar_lea.vmem [#allocation19], 1
        %v6164 = vld [vmem:[%s6163] sm:$0x1]
        %v6166 = vlaneseq
        %v6167 = vshrl.u32 %v6166, 7
        %v6168 = vsub.s32 0, %v6167
        %v6169 = vrot.slane %v6164, %v6168
        %v6171 = vadd.f32 %v6162, %v6169
        %v6172 = vadd.f32 %v6171, %v4996
        %s6173 = scalar_lea.vmem [#allocation20], 1
        %v6174 = vld [vmem:[%s6173] sm:$0x1]
        %s6175 = scalar_lea.vmem [#allocation22], 1
        %v6176 = vld [vmem:[%s6175] sm:$0x1]
        %v6177 = vsel %vm1375, %v6172, 0.0
        %6178 = vadd.xlane.f32.xlu0 %v6177
        %v6179 = vpop.xlane.xlu0 %6178
        %v6180 = vmul.f32 %v6179, %v1379
        %v6181 = vsub.f32 %v6172, %v6180
        %v6182 = vmul.f32 %v6181, %v6181
        %v6183 = vsel %vm1375, %v6182, 0.0
        %6184 = vadd.xlane.f32.xlu0 %v6183
        %v6185 = vpop.xlane.xlu0 %6184
        %v6186 = vmul.f32 %v6185, %v1379
        %v6187 = vadd.f32 %v6186, 1e-12
        %v6188 = vrsqrt.pop %v6187
        %v6189 = vmul.f32 %v6181, %v6188
        %v6191 = vlaneseq
        %v6192 = vshrl.u32 %v6191, 7
        %v6193 = vsub.s32 0, %v6192
        %v6194 = vrot.slane %v6174, %v6193
        %v6196 = vmul.f32 %v6189, %v6194
        %v6198 = vlaneseq
        %v6199 = vshrl.u32 %v6198, 7
        %v6200 = vsub.s32 0, %v6199
        %v6201 = vrot.slane %v6176, %v6200
        %v6203 = vadd.f32 %v6196, %v6201
        %s6204 = scalar_lea.vmem %s43, 32
        %v6205 = vld [vmem:[%s6204] sm:$0xff]
        %v6206 = vld [vmem:[%s6204 + $0x8] sm:$0xff]
        %v6207 = vld [vmem:[%s6204 + $0x10] sm:$0xff]
        %v6208 = vld [vmem:[%s6204 + $0x18] sm:$0xff]
        %s6209 = scalar_lea.vmem [#allocation23], 1
        %v6210 = vld [vmem:[%s6209] sm:$0x1]
        %v6212 = vlaneseq
        %v6213 = vshrl.u32 %v6212, 7
        %v6214 = vsub.s32 0, %v6213
        %v6215 = vrot.slane %v6210, %v6214
        %v6218 = vsel %vm1375, %v6203, 0
        %6220 = vmatprep.subr.mxu0 0.0
        %6221 = vmatpush1.msra.mxu0 %v6205
        %6222 = vmatprep.subr.mxu0 0.0
        %6223 = vmatpush1.msra.mxu0 %v6206
        %6224 = vmatprep.subr.mxu0 0.0
        %6225 = vmatpush1.msra.mxu0 %v6207
        %6226 = vmatprep.subr.mxu0 0.0
        %6227 = vmatpush1.msra.mxu0 %v6208
        %6228 = vmatprep.subr.mxu0 0.0
        %6229 = vmatpush1.msra.mxu0 0.0
        %6230 = vmatprep.subr.mxu0 0.0
        %6231 = vmatpush1.msra.mxu0 0.0
        %6232 = vmatprep.subr.mxu0 0.0
        %6233 = vmatpush1.msra.mxu0 0.0
        %6234 = vmatprep.subr.mxu0 0.0
        %6235 = vmatpush1.msra.mxu0 0.0
        %6236 = vmatprep.subr.mxu0 0.0
        %6237 = vmatpush1.msra.mxu0 0.0
        %6238 = vmatprep.subr.mxu0 0.0
        %6239 = vmatpush1.msra.mxu0 0.0
        %6240 = vmatprep.subr.mxu0 0.0
        %6241 = vmatpush1.msra.mxu0 0.0
        %6242 = vmatprep.subr.mxu0 0.0
        %6243 = vmatpush1.msra.mxu0 0.0
        %6244 = vmatprep.subr.mxu0 0.0
        %6245 = vmatpush1.msra.mxu0 0.0
        %6246 = vmatprep.subr.mxu0 0.0
        %6247 = vmatpush1.msra.mxu0 0.0
        %6248 = vmatprep.subr.mxu0 0.0
        %6249 = vmatpush1.msra.mxu0 0.0
        %6250 = vmatprep.subr.mxu0 0.0
        %6251 = vmatpush1.msra.mxu0 0.0
        %6252 = vmatprep.subr.mxu0 0.0
        %6253 = vmatpush1.msra.mxu0 0.0
        %6254 = vmatprep.subr.mxu0 0.0
        %6255 = vmatpush1.msra.mxu0 0.0
        %6256 = vmatprep.subr.mxu0 0.0
        %6257 = vmatpush1.msra.mxu0 0.0
        %6258 = vmatprep.subr.mxu0 0.0
        %6259 = vmatpush1.msra.mxu0 0.0
        %6260 = vmatprep.subr.mxu0 0.0
        %6261 = vmatpush1.msra.mxu0 0.0
        %6262 = vmatprep.subr.mxu0 0.0
        %6263 = vmatpush1.msra.mxu0 0.0
        %6264 = vmatprep.subr.mxu0 0.0
        %6265 = vmatpush1.msra.mxu0 0.0
        %6266 = vmatprep.subr.mxu0 0.0
        %6267 = vmatpush1.msra.mxu0 0.0
        %6268 = vmatprep.subr.mxu0 0.0
        %6269 = vmatpush1.msra.mxu0 0.0
        %6270 = vmatprep.subr.mxu0 0.0
        %6271 = vmatpush1.msra.mxu0 0.0
        %6272 = vmatprep.subr.mxu0 0.0
        %6273 = vmatpush1.msra.mxu0 0.0
        %6274 = vmatprep.subr.mxu0 0.0
        %6275 = vmatpush1.msra.mxu0 0.0
        %6276 = vmatprep.subr.mxu0 0.0
        %6277 = vmatpush1.msra.mxu0 0.0
        %6278 = vmatprep.subr.mxu0 0.0
        %6279 = vmatpush1.msra.mxu0 0.0
        %6280 = vmatprep.subr.mxu0 0.0
        %6281 = vmatpush1.msra.mxu0 0.0
        %6282 = vmatprep.subr.mxu0 0.0
        %6283 = vmatpush1.msra.mxu0 0.0
        %6284 = vmatprep.mubr.f32.mxu0 0.0
        %6285 = vmatmul.mubr.f32.gmra.mrb[0].mxu0 %v6218
        %v6286 = vpop.f32.mrb[0].mxu0
        %v6287 = vadd.f32 %v6215, %v6286
        %v6288 = vpop.f32.mrb[0].mxu0
        %6289 = vdwg.mxu0
        %v6290 = vmul.f32 %v6287, 0.5
        %v6291 = vmul.f32 %v6287, 0.70710677
        %v6292 = verf.f32.pop %v6291
        %v6293 = vadd.f32 %v6292, 1.0
        %v6294 = vmul.f32 %v6290, %v6293
        %s6295 = scalar_lea.vmem %s47, 64
        %v6296 = vld [vmem:[%s6295] sm:$0xff]
        %v6297 = vld [vmem:[%s6295 + $0x8] sm:$0xff]
        %v6298 = vld [vmem:[%s6295 + $0x10] sm:$0xff]
        %v6299 = vld [vmem:[%s6295 + $0x18] sm:$0xff]
        %v6300 = vld [vmem:[%s6295 + $0x20] sm:$0xff]
        %v6301 = vld [vmem:[%s6295 + $0x28] sm:$0xff]
        %v6302 = vld [vmem:[%s6295 + $0x30] sm:$0xff]
        %v6303 = vld [vmem:[%s6295 + $0x38] sm:$0xff]
        %s6304 = scalar_lea.vmem [#allocation25], 1
        %v6305 = vld [vmem:[%s6304] sm:$0x1]
        %v6307 = vlaneseq
        %v6308 = vshrl.u32 %v6307, 7
        %v6309 = vsub.s32 0, %v6308
        %v6310 = vrot.slane %v6305, %v6309
        %v6313 = vsel %vm3804, %v6294, 0
        %6315 = vmatprep.subr.mxu0 0.0
        %6316 = vmatpush1.msra.mxu0 %v6296
        %6317 = vmatprep.subr.mxu0 0.0
        %6318 = vmatpush1.msra.mxu0 %v6297
        %6319 = vmatprep.subr.mxu0 0.0
        %6320 = vmatpush1.msra.mxu0 %v6298
        %6321 = vmatprep.subr.mxu0 0.0
        %6322 = vmatpush1.msra.mxu0 %v6299
        %6323 = vmatprep.subr.mxu0 0.0
        %6324 = vmatpush1.msra.mxu0 %v6300
        %6325 = vmatprep.subr.mxu0 0.0
        %6326 = vmatpush1.msra.mxu0 %v6301
        %6327 = vmatprep.subr.mxu0 0.0
        %6328 = vmatpush1.msra.mxu0 %v6302
        %6329 = vmatprep.subr.mxu0 0.0
        %6330 = vmatpush1.msra.mxu0 %v6303
        %6331 = vmatprep.subr.mxu0 0.0
        %6332 = vmatpush1.msra.mxu0 0.0
        %6333 = vmatprep.subr.mxu0 0.0
        %6334 = vmatpush1.msra.mxu0 0.0
        %6335 = vmatprep.subr.mxu0 0.0
        %6336 = vmatpush1.msra.mxu0 0.0
        %6337 = vmatprep.subr.mxu0 0.0
        %6338 = vmatpush1.msra.mxu0 0.0
        %6339 = vmatprep.subr.mxu0 0.0
        %6340 = vmatpush1.msra.mxu0 0.0
        %6341 = vmatprep.subr.mxu0 0.0
        %6342 = vmatpush1.msra.mxu0 0.0
        %6343 = vmatprep.subr.mxu0 0.0
        %6344 = vmatpush1.msra.mxu0 0.0
        %6345 = vmatprep.subr.mxu0 0.0
        %6346 = vmatpush1.msra.mxu0 0.0
        %6347 = vmatprep.subr.mxu0 0.0
        %6348 = vmatpush1.msra.mxu0 0.0
        %6349 = vmatprep.subr.mxu0 0.0
        %6350 = vmatpush1.msra.mxu0 0.0
        %6351 = vmatprep.subr.mxu0 0.0
        %6352 = vmatpush1.msra.mxu0 0.0
        %6353 = vmatprep.subr.mxu0 0.0
        %6354 = vmatpush1.msra.mxu0 0.0
        %6355 = vmatprep.subr.mxu0 0.0
        %6356 = vmatpush1.msra.mxu0 0.0
        %6357 = vmatprep.subr.mxu0 0.0
        %6358 = vmatpush1.msra.mxu0 0.0
        %6359 = vmatprep.subr.mxu0 0.0
        %6360 = vmatpush1.msra.mxu0 0.0
        %6361 = vmatprep.subr.mxu0 0.0
        %6362 = vmatpush1.msra.mxu0 0.0
        %6363 = vmatprep.subr.mxu0 0.0
        %6364 = vmatpush1.msra.mxu0 0.0
        %6365 = vmatprep.subr.mxu0 0.0
        %6366 = vmatpush1.msra.mxu0 0.0
        %6367 = vmatprep.subr.mxu0 0.0
        %6368 = vmatpush1.msra.mxu0 0.0
        %6369 = vmatprep.subr.mxu0 0.0
        %6370 = vmatpush1.msra.mxu0 0.0
        %6371 = vmatprep.subr.mxu0 0.0
        %6372 = vmatpush1.msra.mxu0 0.0
        %6373 = vmatprep.subr.mxu0 0.0
        %6374 = vmatpush1.msra.mxu0 0.0
        %6375 = vmatprep.subr.mxu0 0.0
        %6376 = vmatpush1.msra.mxu0 0.0
        %6377 = vmatprep.subr.mxu0 0.0
        %6378 = vmatpush1.msra.mxu0 0.0
        %6379 = vmatprep.mubr.f32.mxu0 0.0
        %6380 = vmatmul.mubr.f32.gmra.mrb[0].mxu0 %v6313
        %v6381 = vpop.f32.mrb[0].mxu0
        %v6382 = vadd.f32 %v6310, %v6381
        %v6383 = vpop.f32.mrb[0].mxu0
        %6384 = vdwg.mxu0
        %v6385 = vadd.f32 %v6382, %v6203
        %s6386 = scalar_lea.vmem [#allocation26], 1
        %v6387 = vld [vmem:[%s6386] sm:$0x1]
        %s6388 = scalar_lea.vmem %s53, 1
        %v6389 = vld [vmem:[%s6388] sm:$0x1]
        %v6390 = vsel %vm1375, %v6385, 0.0
        %6391 = vadd.xlane.f32.xlu0 %v6390
        %v6392 = vpop.xlane.xlu0 %6391
        %v6393 = vmul.f32 %v6392, %v1379
        %v6394 = vsub.f32 %v6385, %v6393
        %v6395 = vmul.f32 %v6394, %v6394
        %v6396 = vsel %vm1375, %v6395, 0.0
        %6397 = vadd.xlane.f32.xlu0 %v6396
        %v6398 = vpop.xlane.xlu0 %6397
        %v6399 = vmul.f32 %v6398, %v1379
        %v6400 = vadd.f32 %v6399, 1e-12
        %v6401 = vrsqrt.pop %v6400
        %v6402 = vmul.f32 %v6394, %v6401
        %v6404 = vlaneseq
        %v6405 = vshrl.u32 %v6404, 7
        %v6406 = vsub.s32 0, %v6405
        %v6407 = vrot.slane %v6387, %v6406
        %v6409 = vmul.f32 %v6402, %v6407
        %v6411 = vlaneseq
        %v6412 = vshrl.u32 %v6411, 7
        %v6413 = vsub.s32 0, %v6412
        %v6414 = vrot.slane %v6389, %v6413
        %v6416 = vadd.f32 %v6409, %v6414
        %6417 = vst.msk [vmem:[%s1351] sm:$0xff] %vm1375, %v6416
        %v6418 = vld [vmem:[%s55] sm:$0xff]
        %v6419 = vld [vmem:[%s55 + $0x8] sm:$0xff]
        %v6420 = vld [vmem:[%s55 + $0x10] sm:$0xff]
        %v6421 = vld [vmem:[%s55 + $0x18] sm:$0xff]
        %v6422 = vld [vmem:[%s57] sm:$0x1]
        %v6424 = vlaneseq
        %v6425 = vshrl.u32 %v6424, 7
        %v6426 = vsub.s32 0, %v6425
        %v6427 = vrot.slane %v6422, %v6426
        %v6430 = vsel %vm1375, %v6416, 0
        %6432 = vmatprep.subr.mxu0 0.0
        %6433 = vmatpush1.msra.mxu0 %v6418
        %6434 = vmatprep.subr.mxu0 0.0
        %6435 = vmatpush1.msra.mxu0 %v6419
        %6436 = vmatprep.subr.mxu0 0.0
        %6437 = vmatpush1.msra.mxu0 %v6420
        %6438 = vmatprep.subr.mxu0 0.0
        %6439 = vmatpush1.msra.mxu0 %v6421
        %6440 = vmatprep.subr.mxu0 0.0
        %6441 = vmatpush1.msra.mxu0 0.0
        %6442 = vmatprep.subr.mxu0 0.0
        %6443 = vmatpush1.msra.mxu0 0.0
        %6444 = vmatprep.subr.mxu0 0.0
        %6445 = vmatpush1.msra.mxu0 0.0
        %6446 = vmatprep.subr.mxu0 0.0
        %6447 = vmatpush1.msra.mxu0 0.0
        %6448 = vmatprep.subr.mxu0 0.0
        %6449 = vmatpush1.msra.mxu0 0.0
        %6450 = vmatprep.subr.mxu0 0.0
        %6451 = vmatpush1.msra.mxu0 0.0
        %6452 = vmatprep.subr.mxu0 0.0
        %6453 = vmatpush1.msra.mxu0 0.0
        %6454 = vmatprep.subr.mxu0 0.0
        %6455 = vmatpush1.msra.mxu0 0.0
        %6456 = vmatprep.subr.mxu0 0.0
        %6457 = vmatpush1.msra.mxu0 0.0
        %6458 = vmatprep.subr.mxu0 0.0
        %6459 = vmatpush1.msra.mxu0 0.0
        %6460 = vmatprep.subr.mxu0 0.0
        %6461 = vmatpush1.msra.mxu0 0.0
        %6462 = vmatprep.subr.mxu0 0.0
        %6463 = vmatpush1.msra.mxu0 0.0
        %6464 = vmatprep.subr.mxu0 0.0
        %6465 = vmatpush1.msra.mxu0 0.0
        %6466 = vmatprep.subr.mxu0 0.0
        %6467 = vmatpush1.msra.mxu0 0.0
        %6468 = vmatprep.subr.mxu0 0.0
        %6469 = vmatpush1.msra.mxu0 0.0
        %6470 = vmatprep.subr.mxu0 0.0
        %6471 = vmatpush1.msra.mxu0 0.0
        %6472 = vmatprep.subr.mxu0 0.0
        %6473 = vmatpush1.msra.mxu0 0.0
        %6474 = vmatprep.subr.mxu0 0.0
        %6475 = vmatpush1.msra.mxu0 0.0
        %6476 = vmatprep.subr.mxu0 0.0
        %6477 = vmatpush1.msra.mxu0 0.0
        %6478 = vmatprep.subr.mxu0 0.0
        %6479 = vmatpush1.msra.mxu0 0.0
        %6480 = vmatprep.subr.mxu0 0.0
        %6481 = vmatpush1.msra.mxu0 0.0
        %6482 = vmatprep.subr.mxu0 0.0
        %6483 = vmatpush1.msra.mxu0 0.0
        %6484 = vmatprep.subr.mxu0 0.0
        %6485 = vmatpush1.msra.mxu0 0.0
        %6486 = vmatprep.subr.mxu0 0.0
        %6487 = vmatpush1.msra.mxu0 0.0
        %6488 = vmatprep.subr.mxu0 0.0
        %6489 = vmatpush1.msra.mxu0 0.0
        %6490 = vmatprep.subr.mxu0 0.0
        %6491 = vmatpush1.msra.mxu0 0.0
        %6492 = vmatprep.subr.mxu0 0.0
        %6493 = vmatpush1.msra.mxu0 0.0
        %6494 = vmatprep.subr.mxu0 0.0
        %6495 = vmatpush1.msra.mxu0 0.0
        %6496 = vmatprep.mubr.f32.mxu0 0.0
        %6497 = vmatmul.mubr.f32.gmra.mrb[0].mxu0 %v6430
        %v6498 = vpop.f32.mrb[0].mxu0
        %v6499 = vadd.f32 %v6427, %v6498
        %v6500 = vpop.f32.mrb[0].mxu0
        %6501 = vdwg.mxu0
        %vm6502 = vcmask 39936
        %6503 = vst.msk [vmem:[%s1368] sm:$0xff] %vm6502, %v6499
        %v6504 = vld [vmem:[%s59] sm:$0xff]
        %v6505 = vld [vmem:[%s59 + $0x8] sm:$0xff]
        %v6506 = vld [vmem:[%s59 + $0x10] sm:$0xff]
        %v6507 = vld [vmem:[%s59 + $0x18] sm:$0xff]
        %v6508 = vld [vmem:[%s59 + $0x20] sm:$0xff]
        %v6509 = vld [vmem:[%s59 + $0x28] sm:$0xff]
        %v6510 = vld [vmem:[%s59 + $0x30] sm:$0xff]
        %v6511 = vld [vmem:[%s59 + $0x38] sm:$0xff]
        %v6512 = vld [vmem:[%s61] sm:$0x3]
        %v6514 = vlaneseq
        %v6515 = vshrl.u32 %v6514, 7
        %v6516 = vsub.s32 0, %v6515
        %v6517 = vrot.slane %v6512, %v6516
        %v6518 = vlaneseq
        %v6519 = vshrl.u32 %v6518, 7
        %v6520 = vsub.s32 1, %v6519
        %v6521 = vrot.slane %v6512, %v6520
        %6524 = vmatprep.subr.mxu0 %v6505
        %6525 = vmatpush1.msra.mxu0 %v6504
        %6526 = vmatprep.subr.mxu0 %v6507
        %6527 = vmatpush1.msra.mxu0 %v6506
        %6528 = vmatprep.subr.mxu0 %v6509
        %6529 = vmatpush1.msra.mxu0 %v6508
        %6530 = vmatprep.subr.mxu0 %v6511
        %6531 = vmatpush1.msra.mxu0 %v6510
        %6532 = vmatprep.subr.mxu0 0.0
        %6533 = vmatpush1.msra.mxu0 0.0
        %6534 = vmatprep.subr.mxu0 0.0
        %6535 = vmatpush1.msra.mxu0 0.0
        %6536 = vmatprep.subr.mxu0 0.0
        %6537 = vmatpush1.msra.mxu0 0.0
        %6538 = vmatprep.subr.mxu0 0.0
        %6539 = vmatpush1.msra.mxu0 0.0
        %6540 = vmatprep.subr.mxu0 0.0
        %6541 = vmatpush1.msra.mxu0 0.0
        %6542 = vmatprep.subr.mxu0 0.0
        %6543 = vmatpush1.msra.mxu0 0.0
        %6544 = vmatprep.subr.mxu0 0.0
        %6545 = vmatpush1.msra.mxu0 0.0
        %6546 = vmatprep.subr.mxu0 0.0
        %6547 = vmatpush1.msra.mxu0 0.0
        %6548 = vmatprep.subr.mxu0 0.0
        %6549 = vmatpush1.msra.mxu0 0.0
        %6550 = vmatprep.subr.mxu0 0.0
        %6551 = vmatpush1.msra.mxu0 0.0
        %6552 = vmatprep.subr.mxu0 0.0
        %6553 = vmatpush1.msra.mxu0 0.0
        %6554 = vmatprep.subr.mxu0 0.0
        %6555 = vmatpush1.msra.mxu0 0.0
        %6556 = vmatprep.subr.mxu0 0.0
        %6557 = vmatpush1.msra.mxu0 0.0
        %6558 = vmatprep.subr.mxu0 0.0
        %6559 = vmatpush1.msra.mxu0 0.0
        %6560 = vmatprep.subr.mxu0 0.0
        %6561 = vmatpush1.msra.mxu0 0.0
        %6562 = vmatprep.subr.mxu0 0.0
        %6563 = vmatpush1.msra.mxu0 0.0
        %6564 = vmatprep.subr.mxu0 0.0
        %6565 = vmatpush1.msra.mxu0 0.0
        %6566 = vmatprep.subr.mxu0 0.0
        %6567 = vmatpush1.msra.mxu0 0.0
        %6568 = vmatprep.subr.mxu0 0.0
        %6569 = vmatpush1.msra.mxu0 0.0
        %6570 = vmatprep.subr.mxu0 0.0
        %6571 = vmatpush1.msra.mxu0 0.0
        %6572 = vmatprep.subr.mxu0 0.0
        %6573 = vmatpush1.msra.mxu0 0.0
        %6574 = vmatprep.subr.mxu0 0.0
        %6575 = vmatpush1.msra.mxu0 0.0
        %6576 = vmatprep.subr.mxu0 0.0
        %6577 = vmatpush1.msra.mxu0 0.0
        %6578 = vmatprep.subr.mxu0 0.0
        %6579 = vmatpush1.msra.mxu0 0.0
        %6580 = vmatprep.subr.mxu0 0.0
        %6581 = vmatpush1.msra.mxu0 0.0
        %6582 = vmatprep.subr.mxu0 0.0
        %6583 = vmatpush1.msra.mxu0 0.0
        %6584 = vmatprep.subr.mxu0 0.0
        %6585 = vmatpush1.msra.mxu0 0.0
        %6586 = vmatprep.subr.mxu0 0.0
        %6587 = vmatpush1.msra.mxu0 0.0
        %6588 = vmatprep.mubr.f32.mxu0 0.0
        %6589 = vmatmul.mubr.f32.gmra.mrb[0].mxu0 %v6430
        %v6590 = vpop.f32.mrb[0].mxu0
        %v6591 = vadd.f32 %v6517, %v6590
        %v6592 = vpop.f32.mrb[0].mxu0
        %v6593 = vadd.f32 %v6521, %v6592
        %6594 = vdwg.mxu0
        %v6595 = vld [vmem:[%s63] sm:$0xff]
        %v6596 = vld [vmem:[%s63 + $0x8] sm:$0xff]
        %v6597 = vld [vmem:[%s63 + $0x10] sm:$0xff]
        %v6598 = vld [vmem:[%s63 + $0x18] sm:$0xff]
        %v6599 = vld [vmem:[%s63 + $0x20] sm:$0xff]
        %v6600 = vld [vmem:[%s63 + $0x28] sm:$0xff]
        %v6601 = vld [vmem:[%s63 + $0x30] sm:$0xff]
        %v6602 = vld [vmem:[%s63 + $0x38] sm:$0xff]
        %v6603 = vld [vmem:[%s65] sm:$0x3]
        %v6605 = vlaneseq
        %v6606 = vshrl.u32 %v6605, 7
        %v6607 = vsub.s32 0, %v6606
        %v6608 = vrot.slane %v6603, %v6607
        %v6609 = vlaneseq
        %v6610 = vshrl.u32 %v6609, 7
        %v6611 = vsub.s32 1, %v6610
        %v6612 = vrot.slane %v6603, %v6611
        %6615 = vmatprep.subr.mxu0 %v6596
        %6616 = vmatpush1.msra.mxu0 %v6595
        %6617 = vmatprep.subr.mxu0 %v6598
        %6618 = vmatpush1.msra.mxu0 %v6597
        %6619 = vmatprep.subr.mxu0 %v6600
        %6620 = vmatpush1.msra.mxu0 %v6599
        %6621 = vmatprep.subr.mxu0 %v6602
        %6622 = vmatpush1.msra.mxu0 %v6601
        %6623 = vmatprep.subr.mxu0 0.0
        %6624 = vmatpush1.msra.mxu0 0.0
        %6625 = vmatprep.subr.mxu0 0.0
        %6626 = vmatpush1.msra.mxu0 0.0
        %6627 = vmatprep.subr.mxu0 0.0
        %6628 = vmatpush1.msra.mxu0 0.0
        %6629 = vmatprep.subr.mxu0 0.0
        %6630 = vmatpush1.msra.mxu0 0.0
        %6631 = vmatprep.subr.mxu0 0.0
        %6632 = vmatpush1.msra.mxu0 0.0
        %6633 = vmatprep.subr.mxu0 0.0
        %6634 = vmatpush1.msra.mxu0 0.0
        %6635 = vmatprep.subr.mxu0 0.0
        %6636 = vmatpush1.msra.mxu0 0.0
        %6637 = vmatprep.subr.mxu0 0.0
        %6638 = vmatpush1.msra.mxu0 0.0
        %6639 = vmatprep.subr.mxu0 0.0
        %6640 = vmatpush1.msra.mxu0 0.0
        %6641 = vmatprep.subr.mxu0 0.0
        %6642 = vmatpush1.msra.mxu0 0.0
        %6643 = vmatprep.subr.mxu0 0.0
        %6644 = vmatpush1.msra.mxu0 0.0
        %6645 = vmatprep.subr.mxu0 0.0
        %6646 = vmatpush1.msra.mxu0 0.0
        %6647 = vmatprep.subr.mxu0 0.0
        %6648 = vmatpush1.msra.mxu0 0.0
        %6649 = vmatprep.subr.mxu0 0.0
        %6650 = vmatpush1.msra.mxu0 0.0
        %6651 = vmatprep.subr.mxu0 0.0
        %6652 = vmatpush1.msra.mxu0 0.0
        %6653 = vmatprep.subr.mxu0 0.0
        %6654 = vmatpush1.msra.mxu0 0.0
        %6655 = vmatprep.subr.mxu0 0.0
        %6656 = vmatpush1.msra.mxu0 0.0
        %6657 = vmatprep.subr.mxu0 0.0
        %6658 = vmatpush1.msra.mxu0 0.0
        %6659 = vmatprep.subr.mxu0 0.0
        %6660 = vmatpush1.msra.mxu0 0.0
        %6661 = vmatprep.subr.mxu0 0.0
        %6662 = vmatpush1.msra.mxu0 0.0
        %6663 = vmatprep.subr.mxu0 0.0
        %6664 = vmatpush1.msra.mxu0 0.0
        %6665 = vmatprep.subr.mxu0 0.0
        %6666 = vmatpush1.msra.mxu0 0.0
        %6667 = vmatprep.subr.mxu0 0.0
        %6668 = vmatpush1.msra.mxu0 0.0
        %6669 = vmatprep.subr.mxu0 0.0
        %6670 = vmatpush1.msra.mxu0 0.0
        %6671 = vmatprep.subr.mxu0 0.0
        %6672 = vmatpush1.msra.mxu0 0.0
        %6673 = vmatprep.subr.mxu0 0.0
        %6674 = vmatpush1.msra.mxu0 0.0
        %6675 = vmatprep.subr.mxu0 0.0
        %6676 = vmatpush1.msra.mxu0 0.0
        %6677 = vmatprep.subr.mxu0 0.0
        %6678 = vmatpush1.msra.mxu0 0.0
        %6679 = vmatprep.mubr.f32.mxu0 0.0
        %6680 = vmatmul.mubr.f32.gmra.mrb[0].mxu0 %v2584
        %v6681 = vpop.f32.mrb[0].mxu0
        %v6682 = vadd.f32 %v6608, %v6681
        %v6683 = vpop.f32.mrb[0].mxu0
        %v6684 = vadd.f32 %v6612, %v6683
        %6685 = vmatprep.mubr.f32.mxu0 0.0
        %6686 = vmatmul.mubr.f32.gmra.mrb[0].mxu0 %v2587
        %v6687 = vpop.f32.mrb[0].mxu0
        %v6688 = vadd.f32 %v6608, %v6687
        %v6689 = vpop.f32.mrb[0].mxu0
        %v6690 = vadd.f32 %v6612, %v6689
        %6691 = vdwg.mxu0
        %v6692 = vld [vmem:[%s5] sm:$0xff]
        %v6693 = vld [vmem:[%s5 + $0x8] sm:$0xff]
        %v6694 = vld [vmem:[%s5 + $0x10] sm:$0xff]
        %v6695 = vld [vmem:[%s5 + $0x18] sm:$0xff]
        %v6696 = vld [vmem:[%s5 + $0x20] sm:$0xff]
        %v6697 = vld [vmem:[%s5 + $0x28] sm:$0xff]
        %v6698 = vld [vmem:[%s5 + $0x30] sm:$0xff]
        %v6699 = vld [vmem:[%s5 + $0x38] sm:$0xff]
        %v6700 = vld [vmem:[%s5 + $0x40] sm:$0xff]
        %v6701 = vld [vmem:[%s5 + $0x48] sm:$0xff]
        %v6702 = vld [vmem:[%s5 + $0x50] sm:$0xff]
        %v6703 = vld [vmem:[%s5 + $0x58] sm:$0xff]
        %v6704 = vld [vmem:[%s5 + $0x60] sm:$0xff]
        %v6705 = vld [vmem:[%s5 + $0x68] sm:$0xff]
        %v6706 = vld [vmem:[%s5 + $0x70] sm:$0xff]
        %v6707 = vld [vmem:[%s5 + $0x78] sm:$0xff]
        %v6708 = vld [vmem:[%s7] sm:$0xff]
        %v6709 = vld [vmem:[%s7 + $0x8] sm:$0xff]
        %v6710 = vld [vmem:[%s7 + $0x10] sm:$0xff]
        %v6711 = vld [vmem:[%s7 + $0x18] sm:$0xff]
        %v6712 = vld [vmem:[%s7 + $0x20] sm:$0xff]
        %v6713 = vld [vmem:[%s7 + $0x28] sm:$0xff]
        %v6714 = vld [vmem:[%s7 + $0x30] sm:$0xff]
        %v6715 = vld [vmem:[%s7 + $0x38] sm:$0xff]
        %v6716 = vld [vmem:[%s7 + $0x40] sm:$0xff]
        %v6717 = vld [vmem:[%s7 + $0x48] sm:$0xff]
        %v6718 = vld [vmem:[%s7 + $0x50] sm:$0xff]
        %v6719 = vld [vmem:[%s7 + $0x58] sm:$0xff]
        %v6720 = vld [vmem:[%s7 + $0x60] sm:$0xff]
        %v6721 = vld [vmem:[%s7 + $0x68] sm:$0xff]
        %v6722 = vld [vmem:[%s7 + $0x70] sm:$0xff]
        %v6723 = vld [vmem:[%s7 + $0x78] sm:$0xff]
        %v6725 = vsel %vm2755, %v6708, 0
        %v6728 = vsel %vm2755, %v6709, 0
        %v6731 = vsel %vm2755, %v6710, 0
        %v6734 = vsel %vm2755, %v6711, 0
        %v6737 = vsel %vm2755, %v6712, 0
        %v6740 = vsel %vm2755, %v6713, 0
        %v6743 = vsel %vm2755, %v6714, 0
        %v6746 = vsel %vm2755, %v6715, 0
        %v6749 = vsel %vm2755, %v6716, 0
        %v6752 = vsel %vm2755, %v6717, 0
        %v6755 = vsel %vm2755, %v6718, 0
        %v6758 = vsel %vm2755, %v6719, 0
        %v6761 = vsel %vm2755, %v6720, 0
        %v6764 = vsel %vm2755, %v6721, 0
        %v6767 = vsel %vm2755, %v6722, 0
        %v6770 = vsel %vm2755, %v6723, 0
        %6772 = vmatprep.subr.mxu0 %v6684
        %6773 = vmatpush1.msra.mxu0 %v6682
        %6774 = vmatprep.subr.mxu0 %v6690
        %6775 = vmatpush1.msra.mxu0 %v6688
        %6776 = vmatprep.subr.mxu0 0.0
        %6777 = vmatpush1.msra.mxu0 0.0
        %6778 = vmatprep.subr.mxu0 0.0
        %6779 = vmatpush1.msra.mxu0 0.0
        %6780 = vmatprep.subr.mxu0 0.0
        %6781 = vmatpush1.msra.mxu0 0.0
        %6782 = vmatprep.subr.mxu0 0.0
        %6783 = vmatpush1.msra.mxu0 0.0
        %6784 = vmatprep.subr.mxu0 0.0
        %6785 = vmatpush1.msra.mxu0 0.0
        %6786 = vmatprep.subr.mxu0 0.0
        %6787 = vmatpush1.msra.mxu0 0.0
        %6788 = vmatprep.subr.mxu0 0.0
        %6789 = vmatpush1.msra.mxu0 0.0
        %6790 = vmatprep.subr.mxu0 0.0
        %6791 = vmatpush1.msra.mxu0 0.0
        %6792 = vmatprep.subr.mxu0 0.0
        %6793 = vmatpush1.msra.mxu0 0.0
        %6794 = vmatprep.subr.mxu0 0.0
        %6795 = vmatpush1.msra.mxu0 0.0
        %6796 = vmatprep.subr.mxu0 0.0
        %6797 = vmatpush1.msra.mxu0 0.0
        %6798 = vmatprep.subr.mxu0 0.0
        %6799 = vmatpush1.msra.mxu0 0.0
        %6800 = vmatprep.subr.mxu0 0.0
        %6801 = vmatpush1.msra.mxu0 0.0
        %6802 = vmatprep.subr.mxu0 0.0
        %6803 = vmatpush1.msra.mxu0 0.0
        %6804 = vmatprep.subr.mxu0 0.0
        %6805 = vmatpush1.msra.mxu0 0.0
        %6806 = vmatprep.subr.mxu0 0.0
        %6807 = vmatpush1.msra.mxu0 0.0
        %6808 = vmatprep.subr.mxu0 0.0
        %6809 = vmatpush1.msra.mxu0 0.0
        %6810 = vmatprep.subr.mxu0 0.0
        %6811 = vmatpush1.msra.mxu0 0.0
        %6812 = vmatprep.subr.mxu0 0.0
        %6813 = vmatpush1.msra.mxu0 0.0
        %6814 = vmatprep.subr.mxu0 0.0
        %6815 = vmatpush1.msra.mxu0 0.0
        %6816 = vmatprep.subr.mxu0 0.0
        %6817 = vmatpush1.msra.mxu0 0.0
        %6818 = vmatprep.subr.mxu0 0.0
        %6819 = vmatpush1.msra.mxu0 0.0
        %6820 = vmatprep.subr.mxu0 0.0
        %6821 = vmatpush1.msra.mxu0 0.0
        %6822 = vmatprep.subr.mxu0 0.0
        %6823 = vmatpush1.msra.mxu0 0.0
        %6824 = vmatprep.subr.mxu0 0.0
        %6825 = vmatpush1.msra.mxu0 0.0
        %6826 = vmatprep.subr.mxu0 0.0
        %6827 = vmatpush1.msra.mxu0 0.0
        %6828 = vmatprep.subr.mxu0 0.0
        %6829 = vmatpush1.msra.mxu0 0.0
        %6830 = vmatprep.subr.mxu0 0.0
        %6831 = vmatpush1.msra.mxu0 0.0
        %6832 = vmatprep.subr.mxu0 0.0
        %6833 = vmatpush1.msra.mxu0 0.0
        %6834 = vmatprep.subr.mxu0 0.0
        %6835 = vmatpush1.msra.mxu0 0.0
        %6836 = vmatprep.mubr.f32.mxu0 0.0
        %6837 = vmatmul.mubr.f32.gmra.mrb[0].mxu0 %v6725
        %v6838 = vpop.f32.mrb[0].mxu0
        %v6839 = vadd.f32 0.0, %v6838
        %v6840 = vpop.f32.mrb[0].mxu0
        %v6841 = vadd.f32 0.0, %v6840
        %6842 = vmatprep.mubr.f32.mxu0 0.0
        %6843 = vmatmul.mubr.f32.gmra.mrb[0].mxu0 %v6728
        %v6844 = vpop.f32.mrb[0].mxu0
        %v6845 = vadd.f32 0.0, %v6844
        %v6846 = vpop.f32.mrb[0].mxu0
        %v6847 = vadd.f32 0.0, %v6846
        %6848 = vmatprep.mubr.f32.mxu0 0.0
        %6849 = vmatmul.mubr.f32.gmra.mrb[0].mxu0 %v6731
        %v6850 = vpop.f32.mrb[0].mxu0
        %v6851 = vadd.f32 0.0, %v6850
        %v6852 = vpop.f32.mrb[0].mxu0
        %v6853 = vadd.f32 0.0, %v6852
        %6854 = vmatprep.mubr.f32.mxu0 0.0
        %6855 = vmatmul.mubr.f32.gmra.mrb[0].mxu0 %v6734
        %v6856 = vpop.f32.mrb[0].mxu0
        %v6857 = vadd.f32 0.0, %v6856
        %v6858 = vpop.f32.mrb[0].mxu0
        %v6859 = vadd.f32 0.0, %v6858
        %6860 = vmatprep.mubr.f32.mxu0 0.0
        %6861 = vmatmul.mubr.f32.gmra.mrb[0].mxu0 %v6737
        %v6862 = vpop.f32.mrb[0].mxu0
        %v6863 = vadd.f32 0.0, %v6862
        %v6864 = vpop.f32.mrb[0].mxu0
        %v6865 = vadd.f32 0.0, %v6864
        %6866 = vmatprep.mubr.f32.mxu0 0.0
        %6867 = vmatmul.mubr.f32.gmra.mrb[0].mxu0 %v6740
        %v6868 = vpop.f32.mrb[0].mxu0
        %v6869 = vadd.f32 0.0, %v6868
        %v6870 = vpop.f32.mrb[0].mxu0
        %v6871 = vadd.f32 0.0, %v6870
        %6872 = vmatprep.mubr.f32.mxu0 0.0
        %6873 = vmatmul.mubr.f32.gmra.mrb[0].mxu0 %v6743
        %v6874 = vpop.f32.mrb[0].mxu0
        %v6875 = vadd.f32 0.0, %v6874
        %v6876 = vpop.f32.mrb[0].mxu0
        %v6877 = vadd.f32 0.0, %v6876
        %6878 = vmatprep.mubr.f32.mxu0 0.0
        %6879 = vmatmul.mubr.f32.gmra.mrb[0].mxu0 %v6746
        %v6880 = vpop.f32.mrb[0].mxu0
        %v6881 = vadd.f32 0.0, %v6880
        %v6882 = vpop.f32.mrb[0].mxu0
        %v6883 = vadd.f32 0.0, %v6882
        %6884 = vmatprep.mubr.f32.mxu0 0.0
        %6885 = vmatmul.mubr.f32.gmra.mrb[0].mxu0 %v6749
        %v6886 = vpop.f32.mrb[0].mxu0
        %v6887 = vadd.f32 0.0, %v6886
        %v6888 = vpop.f32.mrb[0].mxu0
        %v6889 = vadd.f32 0.0, %v6888
        %6890 = vmatprep.mubr.f32.mxu0 0.0
        %6891 = vmatmul.mubr.f32.gmra.mrb[0].mxu0 %v6752
        %v6892 = vpop.f32.mrb[0].mxu0
        %v6893 = vadd.f32 0.0, %v6892
        %v6894 = vpop.f32.mrb[0].mxu0
        %v6895 = vadd.f32 0.0, %v6894
        %6896 = vmatprep.mubr.f32.mxu0 0.0
        %6897 = vmatmul.mubr.f32.gmra.mrb[0].mxu0 %v6755
        %v6898 = vpop.f32.mrb[0].mxu0
        %v6899 = vadd.f32 0.0, %v6898
        %v6900 = vpop.f32.mrb[0].mxu0
        %v6901 = vadd.f32 0.0, %v6900
        %6902 = vmatprep.mubr.f32.mxu0 0.0
        %6903 = vmatmul.mubr.f32.gmra.mrb[0].mxu0 %v6758
        %v6904 = vpop.f32.mrb[0].mxu0
        %v6905 = vadd.f32 0.0, %v6904
        %v6906 = vpop.f32.mrb[0].mxu0
        %v6907 = vadd.f32 0.0, %v6906
        %6908 = vmatprep.mubr.f32.mxu0 0.0
        %6909 = vmatmul.mubr.f32.gmra.mrb[0].mxu0 %v6761
        %v6910 = vpop.f32.mrb[0].mxu0
        %v6911 = vadd.f32 0.0, %v6910
        %v6912 = vpop.f32.mrb[0].mxu0
        %v6913 = vadd.f32 0.0, %v6912
        %6914 = vmatprep.mubr.f32.mxu0 0.0
        %6915 = vmatmul.mubr.f32.gmra.mrb[0].mxu0 %v6764
        %v6916 = vpop.f32.mrb[0].mxu0
        %v6917 = vadd.f32 0.0, %v6916
        %v6918 = vpop.f32.mrb[0].mxu0
        %v6919 = vadd.f32 0.0, %v6918
        %6920 = vmatprep.mubr.f32.mxu0 0.0
        %6921 = vmatmul.mubr.f32.gmra.mrb[0].mxu0 %v6767
        %v6922 = vpop.f32.mrb[0].mxu0
        %v6923 = vadd.f32 0.0, %v6922
        %v6924 = vpop.f32.mrb[0].mxu0
        %v6925 = vadd.f32 0.0, %v6924
        %6926 = vmatprep.mubr.f32.mxu0 0.0
        %6927 = vmatmul.mubr.f32.gmra.mrb[0].mxu0 %v6770
        %v6928 = vpop.f32.mrb[0].mxu0
        %v6929 = vadd.f32 0.0, %v6928
        %v6930 = vpop.f32.mrb[0].mxu0
        %v6931 = vadd.f32 0.0, %v6930
        %6932 = vdwg.mxu0
        %v6934 = vsel %vm1495, %v6692, 0
        %v6937 = vsel %vm1495, %v6693, 0
        %v6940 = vsel %vm1495, %v6694, 0
        %v6943 = vsel %vm1495, %v6695, 0
        %v6946 = vsel %vm1495, %v6696, 0
        %v6949 = vsel %vm1495, %v6697, 0
        %v6952 = vsel %vm1495, %v6698, 0
        %v6955 = vsel %vm1495, %v6699, 0
        %v6958 = vsel %vm1495, %v6700, 0
        %v6961 = vsel %vm1495, %v6701, 0
        %v6964 = vsel %vm1495, %v6702, 0
        %v6967 = vsel %vm1495, %v6703, 0
        %v6970 = vsel %vm1495, %v6704, 0
        %v6973 = vsel %vm1495, %v6705, 0
        %v6976 = vsel %vm1495, %v6706, 0
        %v6979 = vsel %vm1495, %v6707, 0
        %6981 = vmatprep.subr.mxu0 %v6593
        %6982 = vmatpush1.msra.mxu0 %v6591
        %6983 = vmatprep.subr.mxu0 0.0
        %6984 = vmatpush1.msra.mxu0 0.0
        %6985 = vmatprep.subr.mxu0 0.0
        %6986 = vmatpush1.msra.mxu0 0.0
        %6987 = vmatprep.subr.mxu0 0.0
        %6988 = vmatpush1.msra.mxu0 0.0
        %6989 = vmatprep.subr.mxu0 0.0
        %6990 = vmatpush1.msra.mxu0 0.0
        %6991 = vmatprep.subr.mxu0 0.0
        %6992 = vmatpush1.msra.mxu0 0.0
        %6993 = vmatprep.subr.mxu0 0.0
        %6994 = vmatpush1.msra.mxu0 0.0
        %6995 = vmatprep.subr.mxu0 0.0
        %6996 = vmatpush1.msra.mxu0 0.0
        %6997 = vmatprep.subr.mxu0 0.0
        %6998 = vmatpush1.msra.mxu0 0.0
        %6999 = vmatprep.subr.mxu0 0.0
        %7000 = vmatpush1.msra.mxu0 0.0
        %7001 = vmatprep.subr.mxu0 0.0
        %7002 = vmatpush1.msra.mxu0 0.0
        %7003 = vmatprep.subr.mxu0 0.0
        %7004 = vmatpush1.msra.mxu0 0.0
        %7005 = vmatprep.subr.mxu0 0.0
        %7006 = vmatpush1.msra.mxu0 0.0
        %7007 = vmatprep.subr.mxu0 0.0
        %7008 = vmatpush1.msra.mxu0 0.0
        %7009 = vmatprep.subr.mxu0 0.0
        %7010 = vmatpush1.msra.mxu0 0.0
        %7011 = vmatprep.subr.mxu0 0.0
        %7012 = vmatpush1.msra.mxu0 0.0
        %7013 = vmatprep.subr.mxu0 0.0
        %7014 = vmatpush1.msra.mxu0 0.0
        %7015 = vmatprep.subr.mxu0 0.0
        %7016 = vmatpush1.msra.mxu0 0.0
        %7017 = vmatprep.subr.mxu0 0.0
        %7018 = vmatpush1.msra.mxu0 0.0
        %7019 = vmatprep.subr.mxu0 0.0
        %7020 = vmatpush1.msra.mxu0 0.0
        %7021 = vmatprep.subr.mxu0 0.0
        %7022 = vmatpush1.msra.mxu0 0.0
        %7023 = vmatprep.subr.mxu0 0.0
        %7024 = vmatpush1.msra.mxu0 0.0
        %7025 = vmatprep.subr.mxu0 0.0
        %7026 = vmatpush1.msra.mxu0 0.0
        %7027 = vmatprep.subr.mxu0 0.0
        %7028 = vmatpush1.msra.mxu0 0.0
        %7029 = vmatprep.subr.mxu0 0.0
        %7030 = vmatpush1.msra.mxu0 0.0
        %7031 = vmatprep.subr.mxu0 0.0
        %7032 = vmatpush1.msra.mxu0 0.0
        %7033 = vmatprep.subr.mxu0 0.0
        %7034 = vmatpush1.msra.mxu0 0.0
        %7035 = vmatprep.subr.mxu0 0.0
        %7036 = vmatpush1.msra.mxu0 0.0
        %7037 = vmatprep.subr.mxu0 0.0
        %7038 = vmatpush1.msra.mxu0 0.0
        %7039 = vmatprep.subr.mxu0 0.0
        %7040 = vmatpush1.msra.mxu0 0.0
        %7041 = vmatprep.subr.mxu0 0.0
        %7042 = vmatpush1.msra.mxu0 0.0
        %7043 = vmatprep.subr.mxu0 0.0
        %7044 = vmatpush1.msra.mxu0 0.0
        %7045 = vmatprep.mubr.f32.mxu0 0.0
        %7046 = vmatmul.mubr.f32.gmra.mrb[0].mxu0 %v6934
        %v7047 = vpop.f32.mrb[0].mxu0
        %v7048 = vadd.f32 %v6839, %v7047
        %v7049 = vpop.f32.mrb[0].mxu0
        %v7050 = vadd.f32 %v6841, %v7049
        %7051 = vmatprep.mubr.f32.mxu0 0.0
        %7052 = vmatmul.mubr.f32.gmra.mrb[0].mxu0 %v6937
        %v7053 = vpop.f32.mrb[0].mxu0
        %v7054 = vadd.f32 %v6845, %v7053
        %v7055 = vpop.f32.mrb[0].mxu0
        %v7056 = vadd.f32 %v6847, %v7055
        %7057 = vmatprep.mubr.f32.mxu0 0.0
        %7058 = vmatmul.mubr.f32.gmra.mrb[0].mxu0 %v6940
        %v7059 = vpop.f32.mrb[0].mxu0
        %v7060 = vadd.f32 %v6851, %v7059
        %v7061 = vpop.f32.mrb[0].mxu0
        %v7062 = vadd.f32 %v6853, %v7061
        %7063 = vmatprep.mubr.f32.mxu0 0.0
        %7064 = vmatmul.mubr.f32.gmra.mrb[0].mxu0 %v6943
        %v7065 = vpop.f32.mrb[0].mxu0
        %v7066 = vadd.f32 %v6857, %v7065
        %v7067 = vpop.f32.mrb[0].mxu0
        %v7068 = vadd.f32 %v6859, %v7067
        %7069 = vmatprep.mubr.f32.mxu0 0.0
        %7070 = vmatmul.mubr.f32.gmra.mrb[0].mxu0 %v6946
        %v7071 = vpop.f32.mrb[0].mxu0
        %v7072 = vadd.f32 %v6863, %v7071
        %v7073 = vpop.f32.mrb[0].mxu0
        %v7074 = vadd.f32 %v6865, %v7073
        %7075 = vmatprep.mubr.f32.mxu0 0.0
        %7076 = vmatmul.mubr.f32.gmra.mrb[0].mxu0 %v6949
        %v7077 = vpop.f32.mrb[0].mxu0
        %v7078 = vadd.f32 %v6869, %v7077
        %v7079 = vpop.f32.mrb[0].mxu0
        %v7080 = vadd.f32 %v6871, %v7079
        %7081 = vmatprep.mubr.f32.mxu0 0.0
        %7082 = vmatmul.mubr.f32.gmra.mrb[0].mxu0 %v6952
        %v7083 = vpop.f32.mrb[0].mxu0
        %v7084 = vadd.f32 %v6875, %v7083
        %v7085 = vpop.f32.mrb[0].mxu0
        %v7086 = vadd.f32 %v6877, %v7085
        %7087 = vmatprep.mubr.f32.mxu0 0.0
        %7088 = vmatmul.mubr.f32.gmra.mrb[0].mxu0 %v6955
        %v7089 = vpop.f32.mrb[0].mxu0
        %v7090 = vadd.f32 %v6881, %v7089
        %v7091 = vpop.f32.mrb[0].mxu0
        %v7092 = vadd.f32 %v6883, %v7091
        %7093 = vmatprep.mubr.f32.mxu0 0.0
        %7094 = vmatmul.mubr.f32.gmra.mrb[0].mxu0 %v6958
        %v7095 = vpop.f32.mrb[0].mxu0
        %v7096 = vadd.f32 %v6887, %v7095
        %v7097 = vpop.f32.mrb[0].mxu0
        %v7098 = vadd.f32 %v6889, %v7097
        %7099 = vmatprep.mubr.f32.mxu0 0.0
        %7100 = vmatmul.mubr.f32.gmra.mrb[0].mxu0 %v6961
        %v7101 = vpop.f32.mrb[0].mxu0
        %v7102 = vadd.f32 %v6893, %v7101
        %v7103 = vpop.f32.mrb[0].mxu0
        %v7104 = vadd.f32 %v6895, %v7103
        %7105 = vmatprep.mubr.f32.mxu0 0.0
        %7106 = vmatmul.mubr.f32.gmra.mrb[0].mxu0 %v6964
        %v7107 = vpop.f32.mrb[0].mxu0
        %v7108 = vadd.f32 %v6899, %v7107
        %v7109 = vpop.f32.mrb[0].mxu0
        %v7110 = vadd.f32 %v6901, %v7109
        %7111 = vmatprep.mubr.f32.mxu0 0.0
        %7112 = vmatmul.mubr.f32.gmra.mrb[0].mxu0 %v6967
        %v7113 = vpop.f32.mrb[0].mxu0
        %v7114 = vadd.f32 %v6905, %v7113
        %v7115 = vpop.f32.mrb[0].mxu0
        %v7116 = vadd.f32 %v6907, %v7115
        %7117 = vmatprep.mubr.f32.mxu0 0.0
        %7118 = vmatmul.mubr.f32.gmra.mrb[0].mxu0 %v6970
        %v7119 = vpop.f32.mrb[0].mxu0
        %v7120 = vadd.f32 %v6911, %v7119
        %v7121 = vpop.f32.mrb[0].mxu0
        %v7122 = vadd.f32 %v6913, %v7121
        %7123 = vmatprep.mubr.f32.mxu0 0.0
        %7124 = vmatmul.mubr.f32.gmra.mrb[0].mxu0 %v6973
        %v7125 = vpop.f32.mrb[0].mxu0
        %v7126 = vadd.f32 %v6917, %v7125
        %v7127 = vpop.f32.mrb[0].mxu0
        %v7128 = vadd.f32 %v6919, %v7127
        %7129 = vmatprep.mubr.f32.mxu0 0.0
        %7130 = vmatmul.mubr.f32.gmra.mrb[0].mxu0 %v6976
        %v7131 = vpop.f32.mrb[0].mxu0
        %v7132 = vadd.f32 %v6923, %v7131
        %v7133 = vpop.f32.mrb[0].mxu0
        %v7134 = vadd.f32 %v6925, %v7133
        %7135 = vmatprep.mubr.f32.mxu0 0.0
        %7136 = vmatmul.mubr.f32.gmra.mrb[0].mxu0 %v6979
        %v7137 = vpop.f32.mrb[0].mxu0
        %v7138 = vadd.f32 %v6929, %v7137
        %v7139 = vpop.f32.mrb[0].mxu0
        %v7140 = vadd.f32 %v6931, %v7139
        %7141 = vdwg.mxu0
        %v7142 = vtanh.pop %v7048
        %v7143 = vtanh.pop %v7050
        %v7144 = vtanh.pop %v7054
        %v7145 = vtanh.pop %v7056
        %v7146 = vtanh.pop %v7060
        %v7147 = vtanh.pop %v7062
        %v7148 = vtanh.pop %v7066
        %v7149 = vtanh.pop %v7068
        %v7150 = vtanh.pop %v7072
        %v7151 = vtanh.pop %v7074
        %v7152 = vtanh.pop %v7078
        %v7153 = vtanh.pop %v7080
        %v7154 = vtanh.pop %v7084
        %v7155 = vtanh.pop %v7086
        %v7156 = vtanh.pop %v7090
        %v7157 = vtanh.pop %v7092
        %v7158 = vtanh.pop %v7096
        %v7159 = vtanh.pop %v7098
        %v7160 = vtanh.pop %v7102
        %v7161 = vtanh.pop %v7104
        %v7162 = vtanh.pop %v7108
        %v7163 = vtanh.pop %v7110
        %v7164 = vtanh.pop %v7114
        %v7165 = vtanh.pop %v7116
        %v7166 = vtanh.pop %v7120
        %v7167 = vtanh.pop %v7122
        %v7168 = vtanh.pop %v7126
        %v7169 = vtanh.pop %v7128
        %v7170 = vtanh.pop %v7132
        %v7171 = vtanh.pop %v7134
        %v7172 = vtanh.pop %v7138
        %v7173 = vtanh.pop %v7140
        %v7174 = vld [vmem:[%s67] sm:$0xff]
        %v7175 = vld [vmem:[%s67 + $0x8] sm:$0xff]
        %7176 = vmatprep.subr.mxu0 %v7143
        %7177 = vmatpush1.xpose.msra.mxu0 %v7142
        %7178 = vmatprep.subr.mxu0 %v7145
        %7179 = vmatpush1.xpose.msra.mxu0 %v7144
        %7180 = vmatprep.subr.mxu0 %v7147
        %7181 = vmatpush1.xpose.msra.mxu0 %v7146
        %7182 = vmatprep.subr.mxu0 %v7149
        %7183 = vmatpush1.xpose.msra.mxu0 %v7148
        %7184 = vmatprep.subr.mxu0 %v7151
        %7185 = vmatpush1.xpose.msra.mxu0 %v7150
        %7186 = vmatprep.subr.mxu0 %v7153
        %7187 = vmatpush1.xpose.msra.mxu0 %v7152
        %7188 = vmatprep.subr.mxu0 %v7155
        %7189 = vmatpush1.xpose.msra.mxu0 %v7154
        %7190 = vmatprep.subr.mxu0 %v7157
        %7191 = vmatpush1.xpose.msra.mxu0 %v7156
        %7192 = vmatprep.subr.mxu0 %v7159
        %7193 = vmatpush1.xpose.msra.mxu0 %v7158
        %7194 = vmatprep.subr.mxu0 %v7161
        %7195 = vmatpush1.xpose.msra.mxu0 %v7160
        %7196 = vmatprep.subr.mxu0 %v7163
        %7197 = vmatpush1.xpose.msra.mxu0 %v7162
        %7198 = vmatprep.subr.mxu0 %v7165
        %7199 = vmatpush1.xpose.msra.mxu0 %v7164
        %7200 = vmatprep.subr.mxu0 %v7167
        %7201 = vmatpush1.xpose.msra.mxu0 %v7166
        %7202 = vmatprep.subr.mxu0 %v7169
        %7203 = vmatpush1.xpose.msra.mxu0 %v7168
        %7204 = vmatprep.subr.mxu0 %v7171
        %7205 = vmatpush1.xpose.msra.mxu0 %v7170
        %7206 = vmatprep.subr.mxu0 %v7173
        %7207 = vmatpush1.xpose.msra.mxu0 %v7172
        %7208 = vmatprep.subr.mxu0 0.0
        %7209 = vmatpush1.xpose.msra.mxu0 0.0
        %7210 = vmatprep.subr.mxu0 0.0
        %7211 = vmatpush1.xpose.msra.mxu0 0.0
        %7212 = vmatprep.subr.mxu0 0.0
        %7213 = vmatpush1.xpose.msra.mxu0 0.0
        %7214 = vmatprep.subr.mxu0 0.0
        %7215 = vmatpush1.xpose.msra.mxu0 0.0
        %7216 = vmatprep.subr.mxu0 0.0
        %7217 = vmatpush1.xpose.msra.mxu0 0.0
        %7218 = vmatprep.subr.mxu0 0.0
        %7219 = vmatpush1.xpose.msra.mxu0 0.0
        %7220 = vmatprep.subr.mxu0 0.0
        %7221 = vmatpush1.xpose.msra.mxu0 0.0
        %7222 = vmatprep.subr.mxu0 0.0
        %7223 = vmatpush1.xpose.msra.mxu0 0.0
        %7224 = vmatprep.subr.mxu0 0.0
        %7225 = vmatpush1.xpose.msra.mxu0 0.0
        %7226 = vmatprep.subr.mxu0 0.0
        %7227 = vmatpush1.xpose.msra.mxu0 0.0
        %7228 = vmatprep.subr.mxu0 0.0
        %7229 = vmatpush1.xpose.msra.mxu0 0.0
        %7230 = vmatprep.subr.mxu0 0.0
        %7231 = vmatpush1.xpose.msra.mxu0 0.0
        %7232 = vmatprep.subr.mxu0 0.0
        %7233 = vmatpush1.xpose.msra.mxu0 0.0
        %7234 = vmatprep.subr.mxu0 0.0
        %7235 = vmatpush1.xpose.msra.mxu0 0.0
        %7236 = vmatprep.subr.mxu0 0.0
        %7237 = vmatpush1.xpose.msra.mxu0 0.0
        %7238 = vmatprep.subr.mxu0 0.0
        %7239 = vmatpush1.xpose.msra.mxu0 0.0
        %7240 = vmatprep.mubr.f32.mxu0 %v7175
        %7241 = vmatmul.mubr.f32.gmra.mrb[0].mxu0 %v7174
        %v7242 = vpop.f32.mrb[0].mxu0
        %v7243 = vadd.f32 0.0, %v7242
        %v7244 = vpop.f32.mrb[0].mxu0
        %7245 = vdwg.mxu0
        %7246 = vst [vmem:[%s1364] sm:$0xff] %v7243
        %s7247 = sand.u32 %s836, 1
        %s7248 = scalar_lea.sflag [#allocation4], %s7247
        %s7249 = sand.u32 %s836, 1
        %s7250 = smul.addr %s7249, 8
        %s7251 = scalar_lea.vmem [#allocation28], %s7250
        %p7252 = scmp.lt.s32.totalorder %s104, 1
        %s7253 = scalar_select %p7252, %s104, 1
        %s7254 = smul.addr %s7253, 8
        %s7255 = scalar_lea.vmem %s71, %s7254
        %s7256 = sand.u32 %s888, 1
        %s7257 = scalar_lea.sflag [#allocation30], %s7256
        %s7258 = sand.u32 %s888, 1
        %s7259 = smul.addr %s7258, 8
        %s7260 = scalar_lea.vmem [#allocation29], %s7259
        // Predicated region
        $region221: #{tpu_custom_call.1} parent=155 // pred_check
          %p7261 = pneg %p846
        $region222: #{tpu_custom_call.1} parent=155 // pred_check_branch
          %7263 = sbr.rel (%p7261) target = $region224
        $region223: #{tpu_custom_call.1} parent=155 // pred_region
          %s7265 = ssub.s32 128, 128
          %7266 = vsyncadd %s7248, %s7265
          %s7267 = smul.addr %s104, 128
          %s7268 = scalar_lea.hbm %s69, %s7267
          %s7270 = sshll.u32 %s7251, 4
          %s7271 = int_to_ptr.vmem [resolvable:$true] %s7270
          %7273 = dma.vmem_to_hbm [thread:$0]  %s7271, 128, %s7268, %s7248
        $region224: #{tpu_custom_call.1} parent=155 // pred_fallthru
          _
        // Predicated region
        $region225: #{tpu_custom_call.1} parent=155 // pred_check
          %p7274 = pneg %p872
        $region226: #{tpu_custom_call.1} parent=155 // pred_check_branch
          %7276 = sbr.rel (%p7274) target = $region228
        $region227: #{tpu_custom_call.1} parent=155 // pred_region
          _
        $region228: #{tpu_custom_call.1} parent=155 // pred_fallthru
          _
        // Predicated region
        $region229: #{tpu_custom_call.1} parent=155 // pred_check
          %p7277 = pneg %p898
        $region230: #{tpu_custom_call.1} parent=155 // pred_check_branch
          %7279 = sbr.rel (%p7277) target = $region232
        $region231: #{tpu_custom_call.1} parent=155 // pred_region
          %s7281 = ssub.s32 128, 128
          %7282 = vsyncadd %s7257, %s7281
          %s7283 = smul.addr %s104, 128
          %s7284 = scalar_lea.hbm %s73, %s7283
          %s7286 = sshll.u32 %s7260, 4
          %s7287 = int_to_ptr.vmem [resolvable:$true] %s7286
          %7289 = dma.vmem_to_hbm [thread:$0]  %s7287, 128, %s7284, %s7257
        $region232: #{tpu_custom_call.1} parent=155 // pred_fallthru
          _
      $region156: #{tpu_custom_call.1} parent=5 // pred_fallthru
        _
      %p7290 = scmp.le.s32.totalorder 2, %s99
      // Predicated region
      $region233: #{tpu_custom_call.1} parent=5 // pred_check
        %p7291 = pneg %p7290
      $region234: #{tpu_custom_call.1} parent=5 // pred_check_branch
        %7293 = sbr.rel (%p7291) target = $region236
      $region235: #{tpu_custom_call.1} parent=5 // pred_region
        %s7294 = ssub.s32 %s99, 2
        // Predicated region
        $region237: #{tpu_custom_call.1} parent=235 // pred_check
          %p7295 = pneg %p852
        $region238: #{tpu_custom_call.1} parent=235 // pred_check_branch
          %7297 = sbr.rel (%p7295) target = $region240
        $region239: #{tpu_custom_call.1} parent=235 // pred_region
          %s7298 = sand.u32 %s837, 1
          %s7299 = scalar_lea.sflag [#allocation4], %s7298
          %s7300 = sand.u32 %s837, 1
          %s7301 = smul.addr %s7300, 8
          %s7302 = scalar_lea.vmem [#allocation28], %s7301
          %7303 = dma.done %s7299, 128
        $region240: #{tpu_custom_call.1} parent=235 // pred_fallthru
          _
        // Predicated region
        $region241: #{tpu_custom_call.1} parent=235 // pred_check
          %p7304 = pneg %p878
        $region242: #{tpu_custom_call.1} parent=235 // pred_check_branch
          %7306 = sbr.rel (%p7304) target = $region244
        $region243: #{tpu_custom_call.1} parent=235 // pred_region
          %p7307 = scmp.lt.s32.totalorder %s105, 1
          %s7308 = scalar_select %p7307, %s105, 1
          %s7309 = smul.addr %s7308, 8
          %s7310 = scalar_lea.vmem %s71, %s7309
        $region244: #{tpu_custom_call.1} parent=235 // pred_fallthru
          _
        // Predicated region
        $region245: #{tpu_custom_call.1} parent=235 // pred_check
          %p7311 = pneg %p904
        $region246: #{tpu_custom_call.1} parent=235 // pred_check_branch
          %7313 = sbr.rel (%p7311) target = $region248
        $region247: #{tpu_custom_call.1} parent=235 // pred_region
          %s7314 = sand.u32 %s889, 1
          %s7315 = scalar_lea.sflag [#allocation30], %s7314
          %s7316 = sand.u32 %s889, 1
          %s7317 = smul.addr %s7316, 8
          %s7318 = scalar_lea.vmem [#allocation29], %s7317
          %7319 = dma.done %s7315, 128
        $region248: #{tpu_custom_call.1} parent=235 // pred_fallthru
          _
      $region236: #{tpu_custom_call.1} parent=5 // pred_fallthru
        _
    $region6: #{tpu_custom_call.1} parent=1 // loop_footer
      %s103 = sadd.s32 1, %s99
    $region7: #{tpu_custom_call.1} parent=1 // loop_footer_branch
      %98 = sbr.rel target = $region3
    $region8: #{tpu_custom_call.1} parent=1 // loop_exit
      _
    %7320 = vsyncpa [#allocation3], 1
    %s7321 = scalar_lea.sflag [#allocation3], 1
    %7322 = vsyncpa %s7321, 1
    %7323 = vsyncpa [#allocation6], 1
    %s7324 = scalar_lea.sflag [#allocation6], 1
    %7325 = vsyncpa %s7324, 1
    %7326 = vsyncpa [#allocation9], 1
    %7327 = vsyncpa [#allocation12], 1
    %7328 = vsyncpa [#allocation15], 1
    %7329 = vsyncpa [#allocation18], 1
    %7330 = vsyncpa [#allocation21], 1
    %7331 = vsyncpa [#allocation24], 1
    %7332 = vsyncpa [#allocation27], 1
    %7333 = vsyncpa [#allocation4], 1
    %s7334 = scalar_lea.sflag [#allocation4], 1
    %7335 = vsyncpa %s7334, 1
    %7336 = vsyncpa [#allocation30], 1
    %s7337 = scalar_lea.sflag [#allocation30], 1
    %7338 = vsyncpa %s7337, 1

</llo_original>
